<compile_context>
chip_gen: v7x
topology: tpu7x:2x2x1
jax: 0.10.0
libtpu: 0.0.40
codegen_flags: <defaults>
</compile_context>

<pallas_src>
import math
from functools import partial

import jax
import jax.numpy as jnp
from jax.experimental import pallas as pl
from jax.experimental.pallas import tpu as pltpu

_EPS = 1e-6
_VMEM_LIMIT = 32 * 1024 * 1024  # safe on v5e/v6e/v7x; usage here is ~6 MB


# ----------------------------------------------------------------------------
# In-kernel helpers
# ----------------------------------------------------------------------------
def _layernorm(x, alpha, bias, eps):
    # torch Norm: alpha * (x - mean) / (x.std(unbiased=True) + eps) + bias
    d = x.shape[-1]
    mean = jnp.mean(x, axis=-1, keepdims=True)
    xc = x - mean
    var = jnp.sum(xc * xc, axis=-1, keepdims=True) * (1.0 / (d - 1))
    inv = pl.reciprocal(jnp.sqrt(var) + eps, approx=True)       # EUP slot
    return alpha * xc * inv + bias


def _mha(q, k, v, neg_mask, wo, bo, heads, d_k):
    """q:(Sq,D), k/v:(Sk,D) f32 (1/sqrt(d_k) already folded into q).
    neg_mask: bool (Mq,Sk), True => masked.  Heads are lane slices; per-head
    contexts are concatenated along lanes so the output projection is a
    single K=D matmul (no per-head K=32 Wo matmuls)."""
    qb = q.astype(jnp.bfloat16)        # single full-width casts (no per-head
    kb = k.astype(jnp.bfloat16)        # sub-tile casts)
    vb = v.astype(jnp.bfloat16)
    ctxs = []
    for h in range(heads):             # static unroll; heads is small (4)
        lo = h * d_k
        s = jax.lax.dot_general(qb[:, lo:lo + d_k], kb[:, lo:lo + d_k],
                                (((1,), (1,)), ((), ())),
                                preferred_element_type=jnp.float32)   # (Sq,Sk)
        s = jnp.where(neg_mask, -1e9, s)
        s = s - jnp.max(s, axis=-1, keepdims=True)
        p = jnp.exp(s)
        p = p * pl.reciprocal(jnp.sum(p, axis=-1, keepdims=True), approx=True)
        ctxs.append(jnp.dot(p.astype(jnp.bfloat16), vb[:, lo:lo + d_k],
                            preferred_element_type=jnp.float32))      # (Sq,d_k)
    ctx = jnp.concatenate(ctxs, axis=-1)                              # (Sq, D)
    return jnp.dot(ctx.astype(jnp.bfloat16), wo,
                   preferred_element_type=jnp.float32) + bo


# ----------------------------------------------------------------------------
# Single fused kernel: all decoder layers + final norm, grid over batch.
# ----------------------------------------------------------------------------
def _decoder_kernel(x_ref, enc_ref, trg_mask_ref, src_mask_ref,
                    n1a_ref, n1b_ref, wqkv_ref, bqkv_ref, wo1_ref, bo1_ref,
                    n2a_ref, n2b_ref, wq2_ref, bq2_ref, wkv2_ref, bkv2_ref,
                    wo2_ref, bo2_ref,
                    n3a_ref, n3b_ref, w1_ref, b1_ref, w2_ref, b2_ref,
                    nfa_ref, nfb_ref,
                    o_ref, *, n_layers, heads, d_k, eps):
    D = heads * d_k
    x = x_ref[0]                                   # (Sq, D) f32, VMEM-resident
    enc_b = enc_ref[0].astype(jnp.bfloat16)        # (Sk, D) bf16, hoisted once
    trg_masked = trg_mask_ref[0] == 0              # (Mq_t, Sq) bool
    src_masked = src_mask_ref[0] == 0              # (Mq_s, Sk) bool

    for li in range(n_layers):                     # static unroll over layers
        # ---- self-attention: x += MHA(norm1(x), trg_mask) -----------------
        xn = _layernorm(x, n1a_ref[li], n1b_ref[li], eps)
        qkv = jnp.dot(xn.astype(jnp.bfloat16), wqkv_ref[li],
                      preferred_element_type=jnp.float32) + bqkv_ref[li]
        x = x + _mha(qkv[:, :D], qkv[:, D:2 * D], qkv[:, 2 * D:],
                     trg_masked, wo1_ref[li], bo1_ref[li], heads, d_k)

        # ---- cross-attention: x += MHA(norm2(x), e_outputs, src_mask) ----
        xn = _layernorm(x, n2a_ref[li], n2b_ref[li], eps)
        q = jnp.dot(xn.astype(jnp.bfloat16), wq2_ref[li],
                    preferred_element_type=jnp.float32) + bq2_ref[li]
        kv = jnp.dot(enc_b, wkv2_ref[li],
                     preferred_element_type=jnp.float32) + bkv2_ref[li]
        x = x + _mha(q, kv[:, :D], kv[:, D:],
                     src_masked, wo2_ref[li], bo2_ref[li], heads, d_k)

        # ---- feed-forward: x += W2 relu(W1 norm3(x) + b1) + b2 -------------
        xn = _layernorm(x, n3a_ref[li], n3b_ref[li], eps)
        h = jnp.dot(xn.astype(jnp.bfloat16), w1_ref[li],
                    preferred_element_type=jnp.float32) + b1_ref[li]
        h = jnp.maximum(h, 0.0)
        x = x + jnp.dot(h.astype(jnp.bfloat16), w2_ref[li],
                        preferred_element_type=jnp.float32) + b2_ref[li]

    # final Norm
    o_ref[0] = _layernorm(x, nfa_ref[...], nfb_ref[...], eps)


def decoder_stack(x, e_outputs, trg_mask, src_mask, p, *, heads, n_layers,
                  eps=_EPS):
    """x: (B, Sq, D) f32 (embedded + PE); e_outputs: (B, Sk, D) f32;
    masks: int32, trg_mask (B, Mq_t, Sq), src_mask (B, Mq_s, Sk); 0 => masked."""
    B, Sq, D = x.shape
    Sk = e_outputs.shape[1]
    d_k = D // heads
    Mq_t = trg_mask.shape[1]
    Mq_s = src_mask.shape[1]
    d_ff = p["w1"].shape[-1]
    L = n_layers

    def bcast(shape):          # whole array, same block every grid step
        nd = len(shape)
        return pl.BlockSpec(shape, lambda b: (0,) * nd)

    def per_b(shape):          # per-batch block
        nd = len(shape)
        return pl.BlockSpec(shape, lambda b: (b,) + (0,) * (nd - 1))

    in_specs = [
        per_b((1, Sq, D)),                              # x
        per_b((1, Sk, D)),                              # e_outputs
        per_b((1, Mq_t, Sq)),                           # trg_mask
        per_b((1, Mq_s, Sk)),                           # src_mask
        bcast((L, 1, D)), bcast((L, 1, D)),             # norm1 alpha, bias
        bcast((L, D, 3 * D)), bcast((L, 1, 3 * D)),     # Wqkv, bqkv (self)
        bcast((L, D, D)), bcast((L, 1, D)),             # Wo1, bo1
        bcast((L, 1, D)), bcast((L, 1, D)),             # norm2 alpha, bias
        bcast((L, D, D)), bcast((L, 1, D)),             # Wq2, bq2 (cross)
        bcast((L, D, 2 * D)), bcast((L, 1, 2 * D)),     # Wkv2, bkv2 (cross)
        bcast((L, D, D)), bcast((L, 1, D)),             # Wo2, bo2
        bcast((L, 1, D)), bcast((L, 1, D)),             # norm3 alpha, bias
        bcast((L, D, d_ff)), bcast((L, 1, d_ff)),       # W1, b1
        bcast((L, d_ff, D)), bcast((L, 1, D)),          # W2, b2
        bcast((1, D)), bcast((1, D)),                   # final norm alpha, bias
    ]
    args = (x, e_outputs, trg_mask, src_mask,
            p["n1_a"], p["n1_b"], p["wqkv"], p["bqkv"], p["wo1"], p["bo1"],
            p["n2_a"], p["n2_b"], p["wq2"], p["bq2"], p["wkv2"], p["bkv2"],
            p["wo2"], p["bo2"],
            p["n3_a"], p["n3_b"], p["w1"], p["b1"], p["w2"], p["b2"],
            p["nf_a"], p["nf_b"])

    return pl.pallas_call(
        partial(_decoder_kernel, n_layers=n_layers, heads=heads, d_k=d_k,
                eps=eps),
        out_shape=jax.ShapeDtypeStruct((B, Sq, D), x.dtype),
        grid=(B,),
        in_specs=in_specs,
        out_specs=per_b((1, Sq, D)),
        compiler_params=pltpu.CompilerParams(
            dimension_semantics=("parallel",),
            vmem_limit_bytes=_VMEM_LIMIT),
    )(*args)


# ----------------------------------------------------------------------------
# Parameter construction (deterministic, kernel-ready stacked layout)
# ----------------------------------------------------------------------------
def make_positional_encoding(max_seq_len, d_model):
    pos = jnp.arange(max_seq_len, dtype=jnp.float32)[:, None]
    i = jnp.arange(0, d_model, 2, dtype=jnp.float32)[None, :]
    pe = jnp.zeros((max_seq_len, d_model), jnp.float32)
    pe = pe.at[:, 0::2].set(jnp.sin(pos / (10000.0 ** (2.0 * i / d_model))))
    pe = pe.at[:, 1::2].set(jnp.cos(pos / (10000.0 ** (2.0 * (i + 1.0) / d_model))))
    return pe


def init_params(key, vocab_size, d_model, n_layers, heads, d_ff=2048):
    d_k = d_model // heads
    inv_sqrt_dk = 1.0 / math.sqrt(d_k)
    scale = 0.05

    def lin(k, fan_in, fan_out, mult=1.0):
        kw, kb = jax.random.split(k)
        w = jax.random.normal(kw, (fan_in, fan_out), jnp.float32) * scale * mult
        b = jax.random.normal(kb, (1, fan_out), jnp.float32) * scale * mult
        return w, b

    keys = jax.random.split(key, 1 + n_layers)
    embed = jax.random.normal(keys[0], (vocab_size, d_model), jnp.float32)

    ones = jnp.ones((1, d_model), jnp.float32)
    zeros = jnp.zeros((1, d_model), jnp.float32)

    names = ["n1_a", "n1_b", "wqkv", "bqkv", "wo1", "bo1",
             "n2_a", "n2_b", "wq2", "bq2", "wkv2", "bkv2", "wo2", "bo2",
             "n3_a", "n3_b", "w1", "b1", "w2", "b2"]
    acc = {n: [] for n in names}

    for li in range(n_layers):
        lk = jax.random.split(keys[1 + li], 10)
        # self-attention: QKV fused; attention 1/sqrt(d_k) folded into Q part
        wq, bq = lin(lk[0], d_model, d_model, inv_sqrt_dk)
        wk, bk = lin(lk[1], d_model, d_model)
        wv, bv = lin(lk[2], d_model, d_model)
        wo, bo = lin(lk[3], d_model, d_model)
        acc["wqkv"].append(jnp.concatenate([wq, wk, wv], axis=1))
        acc["bqkv"].append(jnp.concatenate([bq, bk, bv], axis=1))
        acc["wo1"].append(wo)
        acc["bo1"].append(bo)
        # cross-attention: Q separate (from norm2(x)), K|V fused (from e_outputs)
        wq2, bq2 = lin(lk[4], d_model, d_model, inv_sqrt_dk)
        wk2, bk2 = lin(lk[5], d_model, d_model)
        wv2, bv2 = lin(lk[6], d_model, d_model)
        wo2, bo2 = lin(lk[7], d_model, d_model)
        acc["wq2"].append(wq2)
        acc["bq2"].append(bq2)
        acc["wkv2"].append(jnp.concatenate([wk2, wv2], axis=1))
        acc["bkv2"].append(jnp.concatenate([bk2, bv2], axis=1))
        acc["wo2"].append(wo2)
        acc["bo2"].append(bo2)
        # feed-forward
        w1, b1 = lin(lk[8], d_model, d_ff)
        w2, b2 = lin(lk[9], d_ff, d_model)
        acc["w1"].append(w1)
        acc["b1"].append(b1)
        acc["w2"].append(w2)
        acc["b2"].append(b2)
        for n in ("n1", "n2", "n3"):
            acc[n + "_a"].append(ones)
            acc[n + "_b"].append(zeros)

    params = {"embed": embed, "nf_a": ones, "nf_b": zeros}
    for name, lst in acc.items():
        stacked = jnp.stack(lst, axis=0)
        if name.startswith("w"):          # matmul weights -> bf16 MXU operands
            stacked = stacked.astype(jnp.bfloat16)
        params[name] = stacked            # biases / norm params stay f32
    return params


def decoder_forward(params, trg, e_outputs, src_mask, trg_mask,
                    d_model, heads, n_layers, pe_table):
    B, S = trg.shape
    # Embedder + PositionalEncoder kept in plain JAX (XLA gather); dropout is
    # identity (eval mode).
    x = jnp.take(params["embed"], trg, axis=0) * math.sqrt(d_model) \
        + pe_table[:S][None, :, :]

    # Masks stay compact (broadcast over queries happens in-kernel) and are
    # carried as int32 so the in-kernel "== 0" is an exact integer compare.
    def prep_mask(m):
        m = m.astype(jnp.int32)
        if m.ndim == 2:
            m = m[None]
        return jnp.broadcast_to(m, (B,) + m.shape[1:])

    return decoder_stack(x, e_outputs, prep_mask(trg_mask), prep_mask(src_mask),
                         params, heads=heads, n_layers=n_layers)


if __name__ == "__main__":
    vocab_size, d_model, n_layers, heads = 50, 128, 2, 4   # lane-dense d_model
    B, S_trg, S_src = 2, 8, 10
    d_ff = 2048  # torch FeedForward default

    key = jax.random.PRNGKey(0)
    k_par, k_trg, k_enc = jax.random.split(key, 3)

    params = init_params(k_par, vocab_size, d_model, n_layers, heads, d_ff)
    pe_table = make_positional_encoding(200, d_model)

    trg = jax.random.randint(k_trg, (B, S_trg), 0, vocab_size)
    e_outputs = jax.random.normal(k_enc, (B, S_src, d_model), jnp.float32)
    src_mask = jnp.ones((B, 1, S_src), jnp.int32)                     # compact
    trg_mask = jnp.broadcast_to(
        jnp.tril(jnp.ones((S_trg, S_trg), jnp.int32))[None],
        (B, S_trg, S_trg))

    fwd = jax.jit(partial(decoder_forward, d_model=d_model, heads=heads,
                          n_layers=n_layers, pe_table=pe_table))
    out = fwd(params, trg, e_outputs, src_mask, trg_mask)
    out = jax.block_until_ready(out)
    assert out.shape == (B, S_trg, d_model)
    assert bool(jnp.all(jnp.isfinite(out)))
    print("KERNEL_OK")
</pallas_src>

<mosaic_0001>
module attributes {stable_mosaic.version = 11 : i64} {
  func.func @_decoder_kernel(%arg0: i32, %arg1: memref<1x8x128xf32, #tpu.memory_space<vmem>>, %arg2: memref<1x10x128xf32, #tpu.memory_space<vmem>>, %arg3: memref<1x8x8xi32, #tpu.memory_space<vmem>>, %arg4: memref<1x1x10xi32, #tpu.memory_space<vmem>>, %arg5: memref<2x1x128xf32, #tpu.memory_space<vmem>>, %arg6: memref<2x1x128xf32, #tpu.memory_space<vmem>>, %arg7: memref<2x128x384xbf16, #tpu.memory_space<vmem>>, %arg8: memref<2x1x384xf32, #tpu.memory_space<vmem>>, %arg9: memref<2x128x128xbf16, #tpu.memory_space<vmem>>, %arg10: memref<2x1x128xf32, #tpu.memory_space<vmem>>, %arg11: memref<2x1x128xf32, #tpu.memory_space<vmem>>, %arg12: memref<2x1x128xf32, #tpu.memory_space<vmem>>, %arg13: memref<2x128x128xbf16, #tpu.memory_space<vmem>>, %arg14: memref<2x1x128xf32, #tpu.memory_space<vmem>>, %arg15: memref<2x128x256xbf16, #tpu.memory_space<vmem>>, %arg16: memref<2x1x256xf32, #tpu.memory_space<vmem>>, %arg17: memref<2x128x128xbf16, #tpu.memory_space<vmem>>, %arg18: memref<2x1x128xf32, #tpu.memory_space<vmem>>, %arg19: memref<2x1x128xf32, #tpu.memory_space<vmem>>, %arg20: memref<2x1x128xf32, #tpu.memory_space<vmem>>, %arg21: memref<2x128x2048xbf16, #tpu.memory_space<vmem>>, %arg22: memref<2x1x2048xf32, #tpu.memory_space<vmem>>, %arg23: memref<2x2048x128xbf16, #tpu.memory_space<vmem>>, %arg24: memref<2x1x128xf32, #tpu.memory_space<vmem>>, %arg25: memref<1x128xf32, #tpu.memory_space<vmem>>, %arg26: memref<1x128xf32, #tpu.memory_space<vmem>>, %arg27: memref<1x8x128xf32, #tpu.memory_space<vmem>>) attributes {dimension_semantics = [#tpu.dimension_semantics<parallel>], iteration_bounds = array<i64: 2>, scalar_prefetch = 0 : i64, scratch_operands = 0 : i64, tpu.core_type = #tpu.core_type<tc>, window_params = [{transform_indices = @transform_0, window_bounds = array<i64: 1, 8, 128>}, {transform_indices = @transform_1, window_bounds = array<i64: 1, 10, 128>}, {transform_indices = @transform_2, window_bounds = array<i64: 1, 8, 8>}, {transform_indices = @transform_3, window_bounds = array<i64: 1, 1, 10>}, {pipeline_mode = #tpu.pipeline_mode<synchronous>, transform_indices = @transform_4, window_bounds = array<i64: 2, 1, 128>}, {pipeline_mode = #tpu.pipeline_mode<synchronous>, transform_indices = @transform_5, window_bounds = array<i64: 2, 1, 128>}, {pipeline_mode = #tpu.pipeline_mode<synchronous>, transform_indices = @transform_6, window_bounds = array<i64: 2, 128, 384>}, {pipeline_mode = #tpu.pipeline_mode<synchronous>, transform_indices = @transform_7, window_bounds = array<i64: 2, 1, 384>}, {pipeline_mode = #tpu.pipeline_mode<synchronous>, transform_indices = @transform_8, window_bounds = array<i64: 2, 128, 128>}, {pipeline_mode = #tpu.pipeline_mode<synchronous>, transform_indices = @transform_9, window_bounds = array<i64: 2, 1, 128>}, {pipeline_mode = #tpu.pipeline_mode<synchronous>, transform_indices = @transform_10, window_bounds = array<i64: 2, 1, 128>}, {pipeline_mode = #tpu.pipeline_mode<synchronous>, transform_indices = @transform_11, window_bounds = array<i64: 2, 1, 128>}, {pipeline_mode = #tpu.pipeline_mode<synchronous>, transform_indices = @transform_12, window_bounds = array<i64: 2, 128, 128>}, {pipeline_mode = #tpu.pipeline_mode<synchronous>, transform_indices = @transform_13, window_bounds = array<i64: 2, 1, 128>}, {pipeline_mode = #tpu.pipeline_mode<synchronous>, transform_indices = @transform_14, window_bounds = array<i64: 2, 128, 256>}, {pipeline_mode = #tpu.pipeline_mode<synchronous>, transform_indices = @transform_15, window_bounds = array<i64: 2, 1, 256>}, {pipeline_mode = #tpu.pipeline_mode<synchronous>, transform_indices = @transform_16, window_bounds = array<i64: 2, 128, 128>}, {pipeline_mode = #tpu.pipeline_mode<synchronous>, transform_indices = @transform_17, window_bounds = array<i64: 2, 1, 128>}, {pipeline_mode = #tpu.pipeline_mode<synchronous>, transform_indices = @transform_18, window_bounds = array<i64: 2, 1, 128>}, {pipeline_mode = #tpu.pipeline_mode<synchronous>, transform_indices = @transform_19, window_bounds = array<i64: 2, 1, 128>}, {pipeline_mode = #tpu.pipeline_mode<synchronous>, transform_indices = @transform_20, window_bounds = array<i64: 2, 128, 2048>}, {pipeline_mode = #tpu.pipeline_mode<synchronous>, transform_indices = @transform_21, window_bounds = array<i64: 2, 1, 2048>}, {pipeline_mode = #tpu.pipeline_mode<synchronous>, transform_indices = @transform_22, window_bounds = array<i64: 2, 2048, 128>}, {pipeline_mode = #tpu.pipeline_mode<synchronous>, transform_indices = @transform_23, window_bounds = array<i64: 2, 1, 128>}, {pipeline_mode = #tpu.pipeline_mode<synchronous>, transform_indices = @transform_24, window_bounds = array<i64: 1, 128>}, {pipeline_mode = #tpu.pipeline_mode<synchronous>, transform_indices = @transform_25, window_bounds = array<i64: 1, 128>}, {transform_indices = @transform_26, window_bounds = array<i64: 1, 8, 128>}]} {
    %c0 = arith.constant 0 : index
    %c0_0 = arith.constant 0 : index
    %c0_1 = arith.constant 0 : index
    %0 = vector.load %arg1[%c0, %c0_0, %c0_1] : memref<1x8x128xf32, #tpu.memory_space<vmem>>, vector<1x8x128xf32>
    %1 = vector.shape_cast %0 : vector<1x8x128xf32> to vector<8x128xf32>
    %c0_2 = arith.constant 0 : index
    %c0_3 = arith.constant 0 : index
    %c0_4 = arith.constant 0 : index
    %2 = vector.load %arg2[%c0_2, %c0_3, %c0_4] : memref<1x10x128xf32, #tpu.memory_space<vmem>>, vector<1x10x128xf32>
    %3 = vector.shape_cast %2 : vector<1x10x128xf32> to vector<10x128xf32>
    %4 = arith.truncf %3 : vector<10x128xf32> to vector<10x128xbf16>
    %c0_5 = arith.constant 0 : index
    %c0_6 = arith.constant 0 : index
    %c0_7 = arith.constant 0 : index
    %5 = vector.load %arg3[%c0_5, %c0_6, %c0_7] : memref<1x8x8xi32, #tpu.memory_space<vmem>>, vector<1x8x8xi32>
    %6 = vector.shape_cast %5 : vector<1x8x8xi32> to vector<8x8xi32>
    %c0_i32 = arith.constant 0 : i32
    %7 = vector.broadcast %c0_i32 : i32 to vector<8x8xi32>
    %8 = arith.cmpi eq, %6, %7 : vector<8x8xi32>
    %c0_8 = arith.constant 0 : index
    %c0_9 = arith.constant 0 : index
    %c0_10 = arith.constant 0 : index
    %9 = vector.load %arg4[%c0_8, %c0_9, %c0_10] : memref<1x1x10xi32, #tpu.memory_space<vmem>>, vector<1x1x10xi32>
    %10 = vector.shape_cast %9 : vector<1x1x10xi32> to vector<1x10xi32>
    %c0_i32_11 = arith.constant 0 : i32
    %11 = vector.broadcast %c0_i32_11 : i32 to vector<1x10xi32>
    %12 = arith.cmpi eq, %10, %11 : vector<1x10xi32>
    %c0_12 = arith.constant 0 : index
    %c0_13 = arith.constant 0 : index
    %c0_14 = arith.constant 0 : index
    %13 = vector.load %arg5[%c0_12, %c0_13, %c0_14] : memref<2x1x128xf32, #tpu.memory_space<vmem>>, vector<1x1x128xf32>
    %14 = vector.shape_cast %13 : vector<1x1x128xf32> to vector<1x128xf32>
    %c0_15 = arith.constant 0 : index
    %c0_16 = arith.constant 0 : index
    %c0_17 = arith.constant 0 : index
    %15 = vector.load %arg6[%c0_15, %c0_16, %c0_17] : memref<2x1x128xf32, #tpu.memory_space<vmem>>, vector<1x1x128xf32>
    %16 = vector.shape_cast %15 : vector<1x1x128xf32> to vector<1x128xf32>
    %cst = arith.constant dense<0.000000e+00> : vector<8xf32>
    %17 = vector.multi_reduction <add>, %1, %cst [1] : vector<8x128xf32> to vector<8xf32>
    %18 = vector.shape_cast %17 : vector<8xf32> to vector<8x1xf32>
    %cst_18 = arith.constant 1.280000e+02 : f32
    %19 = vector.broadcast %cst_18 : f32 to vector<8x1xf32>
    %20 = arith.divf %18, %19 : vector<8x1xf32>
    %21 = vector.broadcast %20 : vector<8x1xf32> to vector<8x128xf32>
    %22 = arith.subf %1, %21 : vector<8x128xf32>
    %23 = arith.mulf %22, %22 : vector<8x128xf32>
    %cst_19 = arith.constant dense<0.000000e+00> : vector<8xf32>
    %24 = vector.multi_reduction <add>, %23, %cst_19 [1] : vector<8x128xf32> to vector<8xf32>
    %25 = vector.shape_cast %24 : vector<8xf32> to vector<8x1xf32>
    %cst_20 = arith.constant 0.00787401571 : f32
    %26 = vector.broadcast %cst_20 : f32 to vector<8x1xf32>
    %27 = arith.mulf %25, %26 : vector<8x1xf32>
    %28 = math.sqrt %27 : vector<8x1xf32>
    %cst_21 = arith.constant 9.99999997E-7 : f32
    %29 = vector.broadcast %cst_21 : f32 to vector<8x1xf32>
    %30 = arith.addf %28, %29 : vector<8x1xf32>
    %31 = tpu.reciprocal %30 {approx = true} : vector<8x1xf32> -> vector<8x1xf32>
    %32 = vector.broadcast %14 : vector<1x128xf32> to vector<8x128xf32>
    %33 = arith.mulf %32, %22 : vector<8x128xf32>
    %34 = vector.broadcast %31 : vector<8x1xf32> to vector<8x128xf32>
    %35 = arith.mulf %33, %34 : vector<8x128xf32>
    %36 = vector.broadcast %16 : vector<1x128xf32> to vector<8x128xf32>
    %37 = arith.addf %35, %36 : vector<8x128xf32>
    %38 = arith.truncf %37 : vector<8x128xf32> to vector<8x128xbf16>
    %c0_22 = arith.constant 0 : index
    %c0_23 = arith.constant 0 : index
    %c0_24 = arith.constant 0 : index
    %39 = vector.load %arg7[%c0_22, %c0_23, %c0_24] : memref<2x128x384xbf16, #tpu.memory_space<vmem>>, vector<1x128x384xbf16>
    %40 = vector.shape_cast %39 : vector<1x128x384xbf16> to vector<128x384xbf16>
    %cst_25 = arith.constant dense<0.000000e+00> : vector<8x384xf32>
    %41 = tpu.matmul %38, %40, %cst_25 {dimension_numbers = #tpu.dot_dimension_numbers<[1], [0], [0], [1], [0, 0, 1, 1], [], []>} : vector<8x128xbf16>, vector<128x384xbf16>, vector<8x384xf32> -> vector<8x384xf32>
    %c0_26 = arith.constant 0 : index
    %c0_27 = arith.constant 0 : index
    %c0_28 = arith.constant 0 : index
    %42 = vector.load %arg8[%c0_26, %c0_27, %c0_28] : memref<2x1x384xf32, #tpu.memory_space<vmem>>, vector<1x1x384xf32>
    %43 = vector.shape_cast %42 : vector<1x1x384xf32> to vector<1x384xf32>
    %44 = vector.broadcast %43 : vector<1x384xf32> to vector<8x384xf32>
    %45 = arith.addf %41, %44 : vector<8x384xf32>
    %46 = vector.extract_strided_slice %45 {offsets = [0, 0], sizes = [8, 128], strides = [1, 1]} : vector<8x384xf32> to vector<8x128xf32>
    %47 = vector.extract_strided_slice %45 {offsets = [0, 128], sizes = [8, 128], strides = [1, 1]} : vector<8x384xf32> to vector<8x128xf32>
    %48 = vector.extract_strided_slice %45 {offsets = [0, 256], sizes = [8, 128], strides = [1, 1]} : vector<8x384xf32> to vector<8x128xf32>
    %c0_29 = arith.constant 0 : index
    %c0_30 = arith.constant 0 : index
    %c0_31 = arith.constant 0 : index
    %49 = vector.load %arg9[%c0_29, %c0_30, %c0_31] : memref<2x128x128xbf16, #tpu.memory_space<vmem>>, vector<1x128x128xbf16>
    %50 = vector.shape_cast %49 : vector<1x128x128xbf16> to vector<128x128xbf16>
    %c0_32 = arith.constant 0 : index
    %c0_33 = arith.constant 0 : index
    %c0_34 = arith.constant 0 : index
    %51 = vector.load %arg10[%c0_32, %c0_33, %c0_34] : memref<2x1x128xf32, #tpu.memory_space<vmem>>, vector<1x1x128xf32>
    %52 = vector.shape_cast %51 : vector<1x1x128xf32> to vector<1x128xf32>
    %53 = arith.truncf %46 : vector<8x128xf32> to vector<8x128xbf16>
    %54 = arith.truncf %47 : vector<8x128xf32> to vector<8x128xbf16>
    %55 = arith.truncf %48 : vector<8x128xf32> to vector<8x128xbf16>
    %56 = vector.extract_strided_slice %53 {offsets = [0, 0], sizes = [8, 32], strides = [1, 1]} : vector<8x128xbf16> to vector<8x32xbf16>
    %57 = vector.extract_strided_slice %54 {offsets = [0, 0], sizes = [8, 32], strides = [1, 1]} : vector<8x128xbf16> to vector<8x32xbf16>
    %cst_35 = arith.constant dense<0.000000e+00> : vector<8x8xf32>
    %58 = tpu.matmul %56, %57, %cst_35 {dimension_numbers = #tpu.dot_dimension_numbers<[1], [1], [0], [0], [0, 0, 1, 0], [], []>} : vector<8x32xbf16>, vector<8x32xbf16>, vector<8x8xf32> -> vector<8x8xf32>
    %cst_36 = arith.constant -1.000000e+09 : f32
    %59 = vector.broadcast %cst_36 : f32 to vector<8x8xf32>
    %60 = arith.select %8, %59, %58 : vector<8x8xi1>, vector<8x8xf32>
    %cst_37 = arith.constant dense<0xFF800000> : vector<8xf32>
    %61 = vector.multi_reduction <maximumf>, %60, %cst_37 [1] : vector<8x8xf32> to vector<8xf32>
    %62 = vector.shape_cast %61 : vector<8xf32> to vector<8x1xf32>
    %63 = vector.broadcast %62 : vector<8x1xf32> to vector<8x8xf32>
    %64 = arith.subf %60, %63 : vector<8x8xf32>
    %65 = math.exp %64 : vector<8x8xf32>
    %cst_38 = arith.constant dense<0.000000e+00> : vector<8xf32>
    %66 = vector.multi_reduction <add>, %65, %cst_38 [1] : vector<8x8xf32> to vector<8xf32>
    %67 = vector.shape_cast %66 : vector<8xf32> to vector<8x1xf32>
    %68 = tpu.reciprocal %67 {approx = true} : vector<8x1xf32> -> vector<8x1xf32>
    %69 = vector.broadcast %68 : vector<8x1xf32> to vector<8x8xf32>
    %70 = arith.mulf %65, %69 : vector<8x8xf32>
    %71 = arith.truncf %70 : vector<8x8xf32> to vector<8x8xbf16>
    %72 = vector.extract_strided_slice %55 {offsets = [0, 0], sizes = [8, 32], strides = [1, 1]} : vector<8x128xbf16> to vector<8x32xbf16>
    %cst_39 = arith.constant dense<0.000000e+00> : vector<8x32xf32>
    %73 = tpu.matmul %71, %72, %cst_39 {dimension_numbers = #tpu.dot_dimension_numbers<[1], [0], [0], [1], [0, 0, 1, 1], [], []>} : vector<8x8xbf16>, vector<8x32xbf16>, vector<8x32xf32> -> vector<8x32xf32>
    %74 = vector.extract_strided_slice %53 {offsets = [0, 32], sizes = [8, 32], strides = [1, 1]} : vector<8x128xbf16> to vector<8x32xbf16>
    %75 = vector.extract_strided_slice %54 {offsets = [0, 32], sizes = [8, 32], strides = [1, 1]} : vector<8x128xbf16> to vector<8x32xbf16>
    %cst_40 = arith.constant dense<0.000000e+00> : vector<8x8xf32>
    %76 = tpu.matmul %74, %75, %cst_40 {dimension_numbers = #tpu.dot_dimension_numbers<[1], [1], [0], [0], [0, 0, 1, 0], [], []>} : vector<8x32xbf16>, vector<8x32xbf16>, vector<8x8xf32> -> vector<8x8xf32>
    %cst_41 = arith.constant -1.000000e+09 : f32
    %77 = vector.broadcast %cst_41 : f32 to vector<8x8xf32>
    %78 = arith.select %8, %77, %76 : vector<8x8xi1>, vector<8x8xf32>
    %cst_42 = arith.constant dense<0xFF800000> : vector<8xf32>
    %79 = vector.multi_reduction <maximumf>, %78, %cst_42 [1] : vector<8x8xf32> to vector<8xf32>
    %80 = vector.shape_cast %79 : vector<8xf32> to vector<8x1xf32>
    %81 = vector.broadcast %80 : vector<8x1xf32> to vector<8x8xf32>
    %82 = arith.subf %78, %81 : vector<8x8xf32>
    %83 = math.exp %82 : vector<8x8xf32>
    %cst_43 = arith.constant dense<0.000000e+00> : vector<8xf32>
    %84 = vector.multi_reduction <add>, %83, %cst_43 [1] : vector<8x8xf32> to vector<8xf32>
    %85 = vector.shape_cast %84 : vector<8xf32> to vector<8x1xf32>
    %86 = tpu.reciprocal %85 {approx = true} : vector<8x1xf32> -> vector<8x1xf32>
    %87 = vector.broadcast %86 : vector<8x1xf32> to vector<8x8xf32>
    %88 = arith.mulf %83, %87 : vector<8x8xf32>
    %89 = arith.truncf %88 : vector<8x8xf32> to vector<8x8xbf16>
    %90 = vector.extract_strided_slice %55 {offsets = [0, 32], sizes = [8, 32], strides = [1, 1]} : vector<8x128xbf16> to vector<8x32xbf16>
    %cst_44 = arith.constant dense<0.000000e+00> : vector<8x32xf32>
    %91 = tpu.matmul %89, %90, %cst_44 {dimension_numbers = #tpu.dot_dimension_numbers<[1], [0], [0], [1], [0, 0, 1, 1], [], []>} : vector<8x8xbf16>, vector<8x32xbf16>, vector<8x32xf32> -> vector<8x32xf32>
    %92 = vector.extract_strided_slice %53 {offsets = [0, 64], sizes = [8, 32], strides = [1, 1]} : vector<8x128xbf16> to vector<8x32xbf16>
    %93 = vector.extract_strided_slice %54 {offsets = [0, 64], sizes = [8, 32], strides = [1, 1]} : vector<8x128xbf16> to vector<8x32xbf16>
    %cst_45 = arith.constant dense<0.000000e+00> : vector<8x8xf32>
    %94 = tpu.matmul %92, %93, %cst_45 {dimension_numbers = #tpu.dot_dimension_numbers<[1], [1], [0], [0], [0, 0, 1, 0], [], []>} : vector<8x32xbf16>, vector<8x32xbf16>, vector<8x8xf32> -> vector<8x8xf32>
    %cst_46 = arith.constant -1.000000e+09 : f32
    %95 = vector.broadcast %cst_46 : f32 to vector<8x8xf32>
    %96 = arith.select %8, %95, %94 : vector<8x8xi1>, vector<8x8xf32>
    %cst_47 = arith.constant dense<0xFF800000> : vector<8xf32>
    %97 = vector.multi_reduction <maximumf>, %96, %cst_47 [1] : vector<8x8xf32> to vector<8xf32>
    %98 = vector.shape_cast %97 : vector<8xf32> to vector<8x1xf32>
    %99 = vector.broadcast %98 : vector<8x1xf32> to vector<8x8xf32>
    %100 = arith.subf %96, %99 : vector<8x8xf32>
    %101 = math.exp %100 : vector<8x8xf32>
    %cst_48 = arith.constant dense<0.000000e+00> : vector<8xf32>
    %102 = vector.multi_reduction <add>, %101, %cst_48 [1] : vector<8x8xf32> to vector<8xf32>
    %103 = vector.shape_cast %102 : vector<8xf32> to vector<8x1xf32>
    %104 = tpu.reciprocal %103 {approx = true} : vector<8x1xf32> -> vector<8x1xf32>
    %105 = vector.broadcast %104 : vector<8x1xf32> to vector<8x8xf32>
    %106 = arith.mulf %101, %105 : vector<8x8xf32>
    %107 = arith.truncf %106 : vector<8x8xf32> to vector<8x8xbf16>
    %108 = vector.extract_strided_slice %55 {offsets = [0, 64], sizes = [8, 32], strides = [1, 1]} : vector<8x128xbf16> to vector<8x32xbf16>
    %cst_49 = arith.constant dense<0.000000e+00> : vector<8x32xf32>
    %109 = tpu.matmul %107, %108, %cst_49 {dimension_numbers = #tpu.dot_dimension_numbers<[1], [0], [0], [1], [0, 0, 1, 1], [], []>} : vector<8x8xbf16>, vector<8x32xbf16>, vector<8x32xf32> -> vector<8x32xf32>
    %110 = vector.extract_strided_slice %53 {offsets = [0, 96], sizes = [8, 32], strides = [1, 1]} : vector<8x128xbf16> to vector<8x32xbf16>
    %111 = vector.extract_strided_slice %54 {offsets = [0, 96], sizes = [8, 32], strides = [1, 1]} : vector<8x128xbf16> to vector<8x32xbf16>
    %cst_50 = arith.constant dense<0.000000e+00> : vector<8x8xf32>
    %112 = tpu.matmul %110, %111, %cst_50 {dimension_numbers = #tpu.dot_dimension_numbers<[1], [1], [0], [0], [0, 0, 1, 0], [], []>} : vector<8x32xbf16>, vector<8x32xbf16>, vector<8x8xf32> -> vector<8x8xf32>
    %cst_51 = arith.constant -1.000000e+09 : f32
    %113 = vector.broadcast %cst_51 : f32 to vector<8x8xf32>
    %114 = arith.select %8, %113, %112 : vector<8x8xi1>, vector<8x8xf32>
    %cst_52 = arith.constant dense<0xFF800000> : vector<8xf32>
    %115 = vector.multi_reduction <maximumf>, %114, %cst_52 [1] : vector<8x8xf32> to vector<8xf32>
    %116 = vector.shape_cast %115 : vector<8xf32> to vector<8x1xf32>
    %117 = vector.broadcast %116 : vector<8x1xf32> to vector<8x8xf32>
    %118 = arith.subf %114, %117 : vector<8x8xf32>
    %119 = math.exp %118 : vector<8x8xf32>
    %cst_53 = arith.constant dense<0.000000e+00> : vector<8xf32>
    %120 = vector.multi_reduction <add>, %119, %cst_53 [1] : vector<8x8xf32> to vector<8xf32>
    %121 = vector.shape_cast %120 : vector<8xf32> to vector<8x1xf32>
    %122 = tpu.reciprocal %121 {approx = true} : vector<8x1xf32> -> vector<8x1xf32>
    %123 = vector.broadcast %122 : vector<8x1xf32> to vector<8x8xf32>
    %124 = arith.mulf %119, %123 : vector<8x8xf32>
    %125 = arith.truncf %124 : vector<8x8xf32> to vector<8x8xbf16>
    %126 = vector.extract_strided_slice %55 {offsets = [0, 96], sizes = [8, 32], strides = [1, 1]} : vector<8x128xbf16> to vector<8x32xbf16>
    %cst_54 = arith.constant dense<0.000000e+00> : vector<8x32xf32>
    %127 = tpu.matmul %125, %126, %cst_54 {dimension_numbers = #tpu.dot_dimension_numbers<[1], [0], [0], [1], [0, 0, 1, 1], [], []>} : vector<8x8xbf16>, vector<8x32xbf16>, vector<8x32xf32> -> vector<8x32xf32>
    %128 = tpu.concatenate %73, %91, %109, %127 in 1 : vector<8x32xf32>, vector<8x32xf32>, vector<8x32xf32>, vector<8x32xf32> -> vector<8x128xf32>
    %129 = arith.truncf %128 : vector<8x128xf32> to vector<8x128xbf16>
    %cst_55 = arith.constant dense<0.000000e+00> : vector<8x128xf32>
    %130 = tpu.matmul %129, %50, %cst_55 {dimension_numbers = #tpu.dot_dimension_numbers<[1], [0], [0], [1], [0, 0, 1, 1], [], []>} : vector<8x128xbf16>, vector<128x128xbf16>, vector<8x128xf32> -> vector<8x128xf32>
    %131 = vector.broadcast %52 : vector<1x128xf32> to vector<8x128xf32>
    %132 = arith.addf %130, %131 : vector<8x128xf32>
    %133 = arith.addf %1, %132 : vector<8x128xf32>
    %c0_56 = arith.constant 0 : index
    %c0_57 = arith.constant 0 : index
    %c0_58 = arith.constant 0 : index
    %134 = vector.load %arg11[%c0_56, %c0_57, %c0_58] : memref<2x1x128xf32, #tpu.memory_space<vmem>>, vector<1x1x128xf32>
    %135 = vector.shape_cast %134 : vector<1x1x128xf32> to vector<1x128xf32>
    %c0_59 = arith.constant 0 : index
    %c0_60 = arith.constant 0 : index
    %c0_61 = arith.constant 0 : index
    %136 = vector.load %arg12[%c0_59, %c0_60, %c0_61] : memref<2x1x128xf32, #tpu.memory_space<vmem>>, vector<1x1x128xf32>
    %137 = vector.shape_cast %136 : vector<1x1x128xf32> to vector<1x128xf32>
    %cst_62 = arith.constant dense<0.000000e+00> : vector<8xf32>
    %138 = vector.multi_reduction <add>, %133, %cst_62 [1] : vector<8x128xf32> to vector<8xf32>
    %139 = vector.shape_cast %138 : vector<8xf32> to vector<8x1xf32>
    %cst_63 = arith.constant 1.280000e+02 : f32
    %140 = vector.broadcast %cst_63 : f32 to vector<8x1xf32>
    %141 = arith.divf %139, %140 : vector<8x1xf32>
    %142 = vector.broadcast %141 : vector<8x1xf32> to vector<8x128xf32>
    %143 = arith.subf %133, %142 : vector<8x128xf32>
    %144 = arith.mulf %143, %143 : vector<8x128xf32>
    %cst_64 = arith.constant dense<0.000000e+00> : vector<8xf32>
    %145 = vector.multi_reduction <add>, %144, %cst_64 [1] : vector<8x128xf32> to vector<8xf32>
    %146 = vector.shape_cast %145 : vector<8xf32> to vector<8x1xf32>
    %cst_65 = arith.constant 0.00787401571 : f32
    %147 = vector.broadcast %cst_65 : f32 to vector<8x1xf32>
    %148 = arith.mulf %146, %147 : vector<8x1xf32>
    %149 = math.sqrt %148 : vector<8x1xf32>
    %cst_66 = arith.constant 9.99999997E-7 : f32
    %150 = vector.broadcast %cst_66 : f32 to vector<8x1xf32>
    %151 = arith.addf %149, %150 : vector<8x1xf32>
    %152 = tpu.reciprocal %151 {approx = true} : vector<8x1xf32> -> vector<8x1xf32>
    %153 = vector.broadcast %135 : vector<1x128xf32> to vector<8x128xf32>
    %154 = arith.mulf %153, %143 : vector<8x128xf32>
    %155 = vector.broadcast %152 : vector<8x1xf32> to vector<8x128xf32>
    %156 = arith.mulf %154, %155 : vector<8x128xf32>
    %157 = vector.broadcast %137 : vector<1x128xf32> to vector<8x128xf32>
    %158 = arith.addf %156, %157 : vector<8x128xf32>
    %159 = arith.truncf %158 : vector<8x128xf32> to vector<8x128xbf16>
    %c0_67 = arith.constant 0 : index
    %c0_68 = arith.constant 0 : index
    %c0_69 = arith.constant 0 : index
    %160 = vector.load %arg13[%c0_67, %c0_68, %c0_69] : memref<2x128x128xbf16, #tpu.memory_space<vmem>>, vector<1x128x128xbf16>
    %161 = vector.shape_cast %160 : vector<1x128x128xbf16> to vector<128x128xbf16>
    %cst_70 = arith.constant dense<0.000000e+00> : vector<8x128xf32>
    %162 = tpu.matmul %159, %161, %cst_70 {dimension_numbers = #tpu.dot_dimension_numbers<[1], [0], [0], [1], [0, 0, 1, 1], [], []>} : vector<8x128xbf16>, vector<128x128xbf16>, vector<8x128xf32> -> vector<8x128xf32>
    %c0_71 = arith.constant 0 : index
    %c0_72 = arith.constant 0 : index
    %c0_73 = arith.constant 0 : index
    %163 = vector.load %arg14[%c0_71, %c0_72, %c0_73] : memref<2x1x128xf32, #tpu.memory_space<vmem>>, vector<1x1x128xf32>
    %164 = vector.shape_cast %163 : vector<1x1x128xf32> to vector<1x128xf32>
    %165 = vector.broadcast %164 : vector<1x128xf32> to vector<8x128xf32>
    %166 = arith.addf %162, %165 : vector<8x128xf32>
    %c0_74 = arith.constant 0 : index
    %c0_75 = arith.constant 0 : index
    %c0_76 = arith.constant 0 : index
    %167 = vector.load %arg15[%c0_74, %c0_75, %c0_76] : memref<2x128x256xbf16, #tpu.memory_space<vmem>>, vector<1x128x256xbf16>
    %168 = vector.shape_cast %167 : vector<1x128x256xbf16> to vector<128x256xbf16>
    %cst_77 = arith.constant dense<0.000000e+00> : vector<10x256xf32>
    %169 = tpu.matmul %4, %168, %cst_77 {dimension_numbers = #tpu.dot_dimension_numbers<[1], [0], [0], [1], [0, 0, 1, 1], [], []>} : vector<10x128xbf16>, vector<128x256xbf16>, vector<10x256xf32> -> vector<10x256xf32>
    %c0_78 = arith.constant 0 : index
    %c0_79 = arith.constant 0 : index
    %c0_80 = arith.constant 0 : index
    %170 = vector.load %arg16[%c0_78, %c0_79, %c0_80] : memref<2x1x256xf32, #tpu.memory_space<vmem>>, vector<1x1x256xf32>
    %171 = vector.shape_cast %170 : vector<1x1x256xf32> to vector<1x256xf32>
    %172 = vector.broadcast %171 : vector<1x256xf32> to vector<10x256xf32>
    %173 = arith.addf %169, %172 : vector<10x256xf32>
    %174 = vector.extract_strided_slice %173 {offsets = [0, 0], sizes = [10, 128], strides = [1, 1]} : vector<10x256xf32> to vector<10x128xf32>
    %175 = vector.extract_strided_slice %173 {offsets = [0, 128], sizes = [10, 128], strides = [1, 1]} : vector<10x256xf32> to vector<10x128xf32>
    %c0_81 = arith.constant 0 : index
    %c0_82 = arith.constant 0 : index
    %c0_83 = arith.constant 0 : index
    %176 = vector.load %arg17[%c0_81, %c0_82, %c0_83] : memref<2x128x128xbf16, #tpu.memory_space<vmem>>, vector<1x128x128xbf16>
    %177 = vector.shape_cast %176 : vector<1x128x128xbf16> to vector<128x128xbf16>
    %c0_84 = arith.constant 0 : index
    %c0_85 = arith.constant 0 : index
    %c0_86 = arith.constant 0 : index
    %178 = vector.load %arg18[%c0_84, %c0_85, %c0_86] : memref<2x1x128xf32, #tpu.memory_space<vmem>>, vector<1x1x128xf32>
    %179 = vector.shape_cast %178 : vector<1x1x128xf32> to vector<1x128xf32>
    %180 = arith.truncf %166 : vector<8x128xf32> to vector<8x128xbf16>
    %181 = arith.truncf %174 : vector<10x128xf32> to vector<10x128xbf16>
    %182 = arith.truncf %175 : vector<10x128xf32> to vector<10x128xbf16>
    %183 = vector.extract_strided_slice %180 {offsets = [0, 0], sizes = [8, 32], strides = [1, 1]} : vector<8x128xbf16> to vector<8x32xbf16>
    %184 = vector.extract_strided_slice %181 {offsets = [0, 0], sizes = [10, 32], strides = [1, 1]} : vector<10x128xbf16> to vector<10x32xbf16>
    %cst_87 = arith.constant dense<0.000000e+00> : vector<8x10xf32>
    %185 = tpu.matmul %183, %184, %cst_87 {dimension_numbers = #tpu.dot_dimension_numbers<[1], [1], [0], [0], [0, 0, 1, 0], [], []>} : vector<8x32xbf16>, vector<10x32xbf16>, vector<8x10xf32> -> vector<8x10xf32>
    %cst_88 = arith.constant -1.000000e+09 : f32
    %186 = vector.shape_cast %12 : vector<1x10xi1> to vector<1x10xi1>
    %187 = vector.broadcast %186 : vector<1x10xi1> to vector<8x10xi1>
    %188 = vector.broadcast %cst_88 : f32 to vector<8x10xf32>
    %189 = arith.select %187, %188, %185 : vector<8x10xi1>, vector<8x10xf32>
    %cst_89 = arith.constant dense<0xFF800000> : vector<8xf32>
    %190 = vector.multi_reduction <maximumf>, %189, %cst_89 [1] : vector<8x10xf32> to vector<8xf32>
    %191 = vector.shape_cast %190 : vector<8xf32> to vector<8x1xf32>
    %192 = vector.broadcast %191 : vector<8x1xf32> to vector<8x10xf32>
    %193 = arith.subf %189, %192 : vector<8x10xf32>
    %194 = math.exp %193 : vector<8x10xf32>
    %cst_90 = arith.constant dense<0.000000e+00> : vector<8xf32>
    %195 = vector.multi_reduction <add>, %194, %cst_90 [1] : vector<8x10xf32> to vector<8xf32>
    %196 = vector.shape_cast %195 : vector<8xf32> to vector<8x1xf32>
    %197 = tpu.reciprocal %196 {approx = true} : vector<8x1xf32> -> vector<8x1xf32>
    %198 = vector.broadcast %197 : vector<8x1xf32> to vector<8x10xf32>
    %199 = arith.mulf %194, %198 : vector<8x10xf32>
    %200 = arith.truncf %199 : vector<8x10xf32> to vector<8x10xbf16>
    %201 = vector.extract_strided_slice %182 {offsets = [0, 0], sizes = [10, 32], strides = [1, 1]} : vector<10x128xbf16> to vector<10x32xbf16>
    %cst_91 = arith.constant dense<0.000000e+00> : vector<8x32xf32>
    %202 = tpu.matmul %200, %201, %cst_91 {dimension_numbers = #tpu.dot_dimension_numbers<[1], [0], [0], [1], [0, 0, 1, 1], [], []>} : vector<8x10xbf16>, vector<10x32xbf16>, vector<8x32xf32> -> vector<8x32xf32>
    %203 = vector.extract_strided_slice %180 {offsets = [0, 32], sizes = [8, 32], strides = [1, 1]} : vector<8x128xbf16> to vector<8x32xbf16>
    %204 = vector.extract_strided_slice %181 {offsets = [0, 32], sizes = [10, 32], strides = [1, 1]} : vector<10x128xbf16> to vector<10x32xbf16>
    %cst_92 = arith.constant dense<0.000000e+00> : vector<8x10xf32>
    %205 = tpu.matmul %203, %204, %cst_92 {dimension_numbers = #tpu.dot_dimension_numbers<[1], [1], [0], [0], [0, 0, 1, 0], [], []>} : vector<8x32xbf16>, vector<10x32xbf16>, vector<8x10xf32> -> vector<8x10xf32>
    %cst_93 = arith.constant -1.000000e+09 : f32
    %206 = vector.shape_cast %12 : vector<1x10xi1> to vector<1x10xi1>
    %207 = vector.broadcast %206 : vector<1x10xi1> to vector<8x10xi1>
    %208 = vector.broadcast %cst_93 : f32 to vector<8x10xf32>
    %209 = arith.select %207, %208, %205 : vector<8x10xi1>, vector<8x10xf32>
    %cst_94 = arith.constant dense<0xFF800000> : vector<8xf32>
    %210 = vector.multi_reduction <maximumf>, %209, %cst_94 [1] : vector<8x10xf32> to vector<8xf32>
    %211 = vector.shape_cast %210 : vector<8xf32> to vector<8x1xf32>
    %212 = vector.broadcast %211 : vector<8x1xf32> to vector<8x10xf32>
    %213 = arith.subf %209, %212 : vector<8x10xf32>
    %214 = math.exp %213 : vector<8x10xf32>
    %cst_95 = arith.constant dense<0.000000e+00> : vector<8xf32>
    %215 = vector.multi_reduction <add>, %214, %cst_95 [1] : vector<8x10xf32> to vector<8xf32>
    %216 = vector.shape_cast %215 : vector<8xf32> to vector<8x1xf32>
    %217 = tpu.reciprocal %216 {approx = true} : vector<8x1xf32> -> vector<8x1xf32>
    %218 = vector.broadcast %217 : vector<8x1xf32> to vector<8x10xf32>
    %219 = arith.mulf %214, %218 : vector<8x10xf32>
    %220 = arith.truncf %219 : vector<8x10xf32> to vector<8x10xbf16>
    %221 = vector.extract_strided_slice %182 {offsets = [0, 32], sizes = [10, 32], strides = [1, 1]} : vector<10x128xbf16> to vector<10x32xbf16>
    %cst_96 = arith.constant dense<0.000000e+00> : vector<8x32xf32>
    %222 = tpu.matmul %220, %221, %cst_96 {dimension_numbers = #tpu.dot_dimension_numbers<[1], [0], [0], [1], [0, 0, 1, 1], [], []>} : vector<8x10xbf16>, vector<10x32xbf16>, vector<8x32xf32> -> vector<8x32xf32>
    %223 = vector.extract_strided_slice %180 {offsets = [0, 64], sizes = [8, 32], strides = [1, 1]} : vector<8x128xbf16> to vector<8x32xbf16>
    %224 = vector.extract_strided_slice %181 {offsets = [0, 64], sizes = [10, 32], strides = [1, 1]} : vector<10x128xbf16> to vector<10x32xbf16>
    %cst_97 = arith.constant dense<0.000000e+00> : vector<8x10xf32>
    %225 = tpu.matmul %223, %224, %cst_97 {dimension_numbers = #tpu.dot_dimension_numbers<[1], [1], [0], [0], [0, 0, 1, 0], [], []>} : vector<8x32xbf16>, vector<10x32xbf16>, vector<8x10xf32> -> vector<8x10xf32>
    %cst_98 = arith.constant -1.000000e+09 : f32
    %226 = vector.shape_cast %12 : vector<1x10xi1> to vector<1x10xi1>
    %227 = vector.broadcast %226 : vector<1x10xi1> to vector<8x10xi1>
    %228 = vector.broadcast %cst_98 : f32 to vector<8x10xf32>
    %229 = arith.select %227, %228, %225 : vector<8x10xi1>, vector<8x10xf32>
    %cst_99 = arith.constant dense<0xFF800000> : vector<8xf32>
    %230 = vector.multi_reduction <maximumf>, %229, %cst_99 [1] : vector<8x10xf32> to vector<8xf32>
    %231 = vector.shape_cast %230 : vector<8xf32> to vector<8x1xf32>
    %232 = vector.broadcast %231 : vector<8x1xf32> to vector<8x10xf32>
    %233 = arith.subf %229, %232 : vector<8x10xf32>
    %234 = math.exp %233 : vector<8x10xf32>
    %cst_100 = arith.constant dense<0.000000e+00> : vector<8xf32>
    %235 = vector.multi_reduction <add>, %234, %cst_100 [1] : vector<8x10xf32> to vector<8xf32>
    %236 = vector.shape_cast %235 : vector<8xf32> to vector<8x1xf32>
    %237 = tpu.reciprocal %236 {approx = true} : vector<8x1xf32> -> vector<8x1xf32>
    %238 = vector.broadcast %237 : vector<8x1xf32> to vector<8x10xf32>
    %239 = arith.mulf %234, %238 : vector<8x10xf32>
    %240 = arith.truncf %239 : vector<8x10xf32> to vector<8x10xbf16>
    %241 = vector.extract_strided_slice %182 {offsets = [0, 64], sizes = [10, 32], strides = [1, 1]} : vector<10x128xbf16> to vector<10x32xbf16>
    %cst_101 = arith.constant dense<0.000000e+00> : vector<8x32xf32>
    %242 = tpu.matmul %240, %241, %cst_101 {dimension_numbers = #tpu.dot_dimension_numbers<[1], [0], [0], [1], [0, 0, 1, 1], [], []>} : vector<8x10xbf16>, vector<10x32xbf16>, vector<8x32xf32> -> vector<8x32xf32>
    %243 = vector.extract_strided_slice %180 {offsets = [0, 96], sizes = [8, 32], strides = [1, 1]} : vector<8x128xbf16> to vector<8x32xbf16>
    %244 = vector.extract_strided_slice %181 {offsets = [0, 96], sizes = [10, 32], strides = [1, 1]} : vector<10x128xbf16> to vector<10x32xbf16>
    %cst_102 = arith.constant dense<0.000000e+00> : vector<8x10xf32>
    %245 = tpu.matmul %243, %244, %cst_102 {dimension_numbers = #tpu.dot_dimension_numbers<[1], [1], [0], [0], [0, 0, 1, 0], [], []>} : vector<8x32xbf16>, vector<10x32xbf16>, vector<8x10xf32> -> vector<8x10xf32>
    %cst_103 = arith.constant -1.000000e+09 : f32
    %246 = vector.shape_cast %12 : vector<1x10xi1> to vector<1x10xi1>
    %247 = vector.broadcast %246 : vector<1x10xi1> to vector<8x10xi1>
    %248 = vector.broadcast %cst_103 : f32 to vector<8x10xf32>
    %249 = arith.select %247, %248, %245 : vector<8x10xi1>, vector<8x10xf32>
    %cst_104 = arith.constant dense<0xFF800000> : vector<8xf32>
    %250 = vector.multi_reduction <maximumf>, %249, %cst_104 [1] : vector<8x10xf32> to vector<8xf32>
    %251 = vector.shape_cast %250 : vector<8xf32> to vector<8x1xf32>
    %252 = vector.broadcast %251 : vector<8x1xf32> to vector<8x10xf32>
    %253 = arith.subf %249, %252 : vector<8x10xf32>
    %254 = math.exp %253 : vector<8x10xf32>
    %cst_105 = arith.constant dense<0.000000e+00> : vector<8xf32>
    %255 = vector.multi_reduction <add>, %254, %cst_105 [1] : vector<8x10xf32> to vector<8xf32>
    %256 = vector.shape_cast %255 : vector<8xf32> to vector<8x1xf32>
    %257 = tpu.reciprocal %256 {approx = true} : vector<8x1xf32> -> vector<8x1xf32>
    %258 = vector.broadcast %257 : vector<8x1xf32> to vector<8x10xf32>
    %259 = arith.mulf %254, %258 : vector<8x10xf32>
    %260 = arith.truncf %259 : vector<8x10xf32> to vector<8x10xbf16>
    %261 = vector.extract_strided_slice %182 {offsets = [0, 96], sizes = [10, 32], strides = [1, 1]} : vector<10x128xbf16> to vector<10x32xbf16>
    %cst_106 = arith.constant dense<0.000000e+00> : vector<8x32xf32>
    %262 = tpu.matmul %260, %261, %cst_106 {dimension_numbers = #tpu.dot_dimension_numbers<[1], [0], [0], [1], [0, 0, 1, 1], [], []>} : vector<8x10xbf16>, vector<10x32xbf16>, vector<8x32xf32> -> vector<8x32xf32>
    %263 = tpu.concatenate %202, %222, %242, %262 in 1 : vector<8x32xf32>, vector<8x32xf32>, vector<8x32xf32>, vector<8x32xf32> -> vector<8x128xf32>
    %264 = arith.truncf %263 : vector<8x128xf32> to vector<8x128xbf16>
    %cst_107 = arith.constant dense<0.000000e+00> : vector<8x128xf32>
    %265 = tpu.matmul %264, %177, %cst_107 {dimension_numbers = #tpu.dot_dimension_numbers<[1], [0], [0], [1], [0, 0, 1, 1], [], []>} : vector<8x128xbf16>, vector<128x128xbf16>, vector<8x128xf32> -> vector<8x128xf32>
    %266 = vector.broadcast %179 : vector<1x128xf32> to vector<8x128xf32>
    %267 = arith.addf %265, %266 : vector<8x128xf32>
    %268 = arith.addf %133, %267 : vector<8x128xf32>
    %c0_108 = arith.constant 0 : index
    %c0_109 = arith.constant 0 : index
    %c0_110 = arith.constant 0 : index
    %269 = vector.load %arg19[%c0_108, %c0_109, %c0_110] : memref<2x1x128xf32, #tpu.memory_space<vmem>>, vector<1x1x128xf32>
    %270 = vector.shape_cast %269 : vector<1x1x128xf32> to vector<1x128xf32>
    %c0_111 = arith.constant 0 : index
    %c0_112 = arith.constant 0 : index
    %c0_113 = arith.constant 0 : index
    %271 = vector.load %arg20[%c0_111, %c0_112, %c0_113] : memref<2x1x128xf32, #tpu.memory_space<vmem>>, vector<1x1x128xf32>
    %272 = vector.shape_cast %271 : vector<1x1x128xf32> to vector<1x128xf32>
    %cst_114 = arith.constant dense<0.000000e+00> : vector<8xf32>
    %273 = vector.multi_reduction <add>, %268, %cst_114 [1] : vector<8x128xf32> to vector<8xf32>
    %274 = vector.shape_cast %273 : vector<8xf32> to vector<8x1xf32>
    %cst_115 = arith.constant 1.280000e+02 : f32
    %275 = vector.broadcast %cst_115 : f32 to vector<8x1xf32>
    %276 = arith.divf %274, %275 : vector<8x1xf32>
    %277 = vector.broadcast %276 : vector<8x1xf32> to vector<8x128xf32>
    %278 = arith.subf %268, %277 : vector<8x128xf32>
    %279 = arith.mulf %278, %278 : vector<8x128xf32>
    %cst_116 = arith.constant dense<0.000000e+00> : vector<8xf32>
    %280 = vector.multi_reduction <add>, %279, %cst_116 [1] : vector<8x128xf32> to vector<8xf32>
    %281 = vector.shape_cast %280 : vector<8xf32> to vector<8x1xf32>
    %cst_117 = arith.constant 0.00787401571 : f32
    %282 = vector.broadcast %cst_117 : f32 to vector<8x1xf32>
    %283 = arith.mulf %281, %282 : vector<8x1xf32>
    %284 = math.sqrt %283 : vector<8x1xf32>
    %cst_118 = arith.constant 9.99999997E-7 : f32
    %285 = vector.broadcast %cst_118 : f32 to vector<8x1xf32>
    %286 = arith.addf %284, %285 : vector<8x1xf32>
    %287 = tpu.reciprocal %286 {approx = true} : vector<8x1xf32> -> vector<8x1xf32>
    %288 = vector.broadcast %270 : vector<1x128xf32> to vector<8x128xf32>
    %289 = arith.mulf %288, %278 : vector<8x128xf32>
    %290 = vector.broadcast %287 : vector<8x1xf32> to vector<8x128xf32>
    %291 = arith.mulf %289, %290 : vector<8x128xf32>
    %292 = vector.broadcast %272 : vector<1x128xf32> to vector<8x128xf32>
    %293 = arith.addf %291, %292 : vector<8x128xf32>
    %294 = arith.truncf %293 : vector<8x128xf32> to vector<8x128xbf16>
    %c0_119 = arith.constant 0 : index
    %c0_120 = arith.constant 0 : index
    %c0_121 = arith.constant 0 : index
    %295 = vector.load %arg21[%c0_119, %c0_120, %c0_121] : memref<2x128x2048xbf16, #tpu.memory_space<vmem>>, vector<1x128x2048xbf16>
    %296 = vector.shape_cast %295 : vector<1x128x2048xbf16> to vector<128x2048xbf16>
    %cst_122 = arith.constant dense<0.000000e+00> : vector<8x2048xf32>
    %297 = tpu.matmul %294, %296, %cst_122 {dimension_numbers = #tpu.dot_dimension_numbers<[1], [0], [0], [1], [0, 0, 1, 1], [], []>} : vector<8x128xbf16>, vector<128x2048xbf16>, vector<8x2048xf32> -> vector<8x2048xf32>
    %c0_123 = arith.constant 0 : index
    %c0_124 = arith.constant 0 : index
    %c0_125 = arith.constant 0 : index
    %298 = vector.load %arg22[%c0_123, %c0_124, %c0_125] : memref<2x1x2048xf32, #tpu.memory_space<vmem>>, vector<1x1x2048xf32>
    %299 = vector.shape_cast %298 : vector<1x1x2048xf32> to vector<1x2048xf32>
    %300 = vector.broadcast %299 : vector<1x2048xf32> to vector<8x2048xf32>
    %301 = arith.addf %297, %300 : vector<8x2048xf32>
    %cst_126 = arith.constant 0.000000e+00 : f32
    %302 = vector.broadcast %cst_126 : f32 to vector<8x2048xf32>
    %303 = arith.maximumf %301, %302 : vector<8x2048xf32>
    %304 = arith.truncf %303 : vector<8x2048xf32> to vector<8x2048xbf16>
    %c0_127 = arith.constant 0 : index
    %c0_128 = arith.constant 0 : index
    %c0_129 = arith.constant 0 : index
    %305 = vector.load %arg23[%c0_127, %c0_128, %c0_129] : memref<2x2048x128xbf16, #tpu.memory_space<vmem>>, vector<1x2048x128xbf16>
    %306 = vector.shape_cast %305 : vector<1x2048x128xbf16> to vector<2048x128xbf16>
    %cst_130 = arith.constant dense<0.000000e+00> : vector<8x128xf32>
    %307 = tpu.matmul %304, %306, %cst_130 {dimension_numbers = #tpu.dot_dimension_numbers<[1], [0], [0], [1], [0, 0, 1, 1], [], []>} : vector<8x2048xbf16>, vector<2048x128xbf16>, vector<8x128xf32> -> vector<8x128xf32>
    %308 = arith.addf %268, %307 : vector<8x128xf32>
    %c0_131 = arith.constant 0 : index
    %c0_132 = arith.constant 0 : index
    %c0_133 = arith.constant 0 : index
    %309 = vector.load %arg24[%c0_131, %c0_132, %c0_133] : memref<2x1x128xf32, #tpu.memory_space<vmem>>, vector<1x1x128xf32>
    %310 = vector.shape_cast %309 : vector<1x1x128xf32> to vector<1x128xf32>
    %311 = vector.broadcast %310 : vector<1x128xf32> to vector<8x128xf32>
    %312 = arith.addf %308, %311 : vector<8x128xf32>
    %c1 = arith.constant 1 : index
    %c0_134 = arith.constant 0 : index
    %c0_135 = arith.constant 0 : index
    %313 = vector.load %arg5[%c1, %c0_134, %c0_135] : memref<2x1x128xf32, #tpu.memory_space<vmem>>, vector<1x1x128xf32>
    %314 = vector.shape_cast %313 : vector<1x1x128xf32> to vector<1x128xf32>
    %c1_136 = arith.constant 1 : index
    %c0_137 = arith.constant 0 : index
    %c0_138 = arith.constant 0 : index
    %315 = vector.load %arg6[%c1_136, %c0_137, %c0_138] : memref<2x1x128xf32, #tpu.memory_space<vmem>>, vector<1x1x128xf32>
    %316 = vector.shape_cast %315 : vector<1x1x128xf32> to vector<1x128xf32>
    %cst_139 = arith.constant dense<0.000000e+00> : vector<8xf32>
    %317 = vector.multi_reduction <add>, %312, %cst_139 [1] : vector<8x128xf32> to vector<8xf32>
    %318 = vector.shape_cast %317 : vector<8xf32> to vector<8x1xf32>
    %cst_140 = arith.constant 1.280000e+02 : f32
    %319 = vector.broadcast %cst_140 : f32 to vector<8x1xf32>
    %320 = arith.divf %318, %319 : vector<8x1xf32>
    %321 = vector.broadcast %320 : vector<8x1xf32> to vector<8x128xf32>
    %322 = arith.subf %312, %321 : vector<8x128xf32>
    %323 = arith.mulf %322, %322 : vector<8x128xf32>
    %cst_141 = arith.constant dense<0.000000e+00> : vector<8xf32>
    %324 = vector.multi_reduction <add>, %323, %cst_141 [1] : vector<8x128xf32> to vector<8xf32>
    %325 = vector.shape_cast %324 : vector<8xf32> to vector<8x1xf32>
    %cst_142 = arith.constant 0.00787401571 : f32
    %326 = vector.broadcast %cst_142 : f32 to vector<8x1xf32>
    %327 = arith.mulf %325, %326 : vector<8x1xf32>
    %328 = math.sqrt %327 : vector<8x1xf32>
    %cst_143 = arith.constant 9.99999997E-7 : f32
    %329 = vector.broadcast %cst_143 : f32 to vector<8x1xf32>
    %330 = arith.addf %328, %329 : vector<8x1xf32>
    %331 = tpu.reciprocal %330 {approx = true} : vector<8x1xf32> -> vector<8x1xf32>
    %332 = vector.broadcast %314 : vector<1x128xf32> to vector<8x128xf32>
    %333 = arith.mulf %332, %322 : vector<8x128xf32>
    %334 = vector.broadcast %331 : vector<8x1xf32> to vector<8x128xf32>
    %335 = arith.mulf %333, %334 : vector<8x128xf32>
    %336 = vector.broadcast %316 : vector<1x128xf32> to vector<8x128xf32>
    %337 = arith.addf %335, %336 : vector<8x128xf32>
    %338 = arith.truncf %337 : vector<8x128xf32> to vector<8x128xbf16>
    %c1_144 = arith.constant 1 : index
    %c0_145 = arith.constant 0 : index
    %c0_146 = arith.constant 0 : index
    %339 = vector.load %arg7[%c1_144, %c0_145, %c0_146] : memref<2x128x384xbf16, #tpu.memory_space<vmem>>, vector<1x128x384xbf16>
    %340 = vector.shape_cast %339 : vector<1x128x384xbf16> to vector<128x384xbf16>
    %cst_147 = arith.constant dense<0.000000e+00> : vector<8x384xf32>
    %341 = tpu.matmul %338, %340, %cst_147 {dimension_numbers = #tpu.dot_dimension_numbers<[1], [0], [0], [1], [0, 0, 1, 1], [], []>} : vector<8x128xbf16>, vector<128x384xbf16>, vector<8x384xf32> -> vector<8x384xf32>
    %c1_148 = arith.constant 1 : index
    %c0_149 = arith.constant 0 : index
    %c0_150 = arith.constant 0 : index
    %342 = vector.load %arg8[%c1_148, %c0_149, %c0_150] : memref<2x1x384xf32, #tpu.memory_space<vmem>>, vector<1x1x384xf32>
    %343 = vector.shape_cast %342 : vector<1x1x384xf32> to vector<1x384xf32>
    %344 = vector.broadcast %343 : vector<1x384xf32> to vector<8x384xf32>
    %345 = arith.addf %341, %344 : vector<8x384xf32>
    %346 = vector.extract_strided_slice %345 {offsets = [0, 0], sizes = [8, 128], strides = [1, 1]} : vector<8x384xf32> to vector<8x128xf32>
    %347 = vector.extract_strided_slice %345 {offsets = [0, 128], sizes = [8, 128], strides = [1, 1]} : vector<8x384xf32> to vector<8x128xf32>
    %348 = vector.extract_strided_slice %345 {offsets = [0, 256], sizes = [8, 128], strides = [1, 1]} : vector<8x384xf32> to vector<8x128xf32>
    %c1_151 = arith.constant 1 : index
    %c0_152 = arith.constant 0 : index
    %c0_153 = arith.constant 0 : index
    %349 = vector.load %arg9[%c1_151, %c0_152, %c0_153] : memref<2x128x128xbf16, #tpu.memory_space<vmem>>, vector<1x128x128xbf16>
    %350 = vector.shape_cast %349 : vector<1x128x128xbf16> to vector<128x128xbf16>
    %c1_154 = arith.constant 1 : index
    %c0_155 = arith.constant 0 : index
    %c0_156 = arith.constant 0 : index
    %351 = vector.load %arg10[%c1_154, %c0_155, %c0_156] : memref<2x1x128xf32, #tpu.memory_space<vmem>>, vector<1x1x128xf32>
    %352 = vector.shape_cast %351 : vector<1x1x128xf32> to vector<1x128xf32>
    %353 = arith.truncf %346 : vector<8x128xf32> to vector<8x128xbf16>
    %354 = arith.truncf %347 : vector<8x128xf32> to vector<8x128xbf16>
    %355 = arith.truncf %348 : vector<8x128xf32> to vector<8x128xbf16>
    %356 = vector.extract_strided_slice %353 {offsets = [0, 0], sizes = [8, 32], strides = [1, 1]} : vector<8x128xbf16> to vector<8x32xbf16>
    %357 = vector.extract_strided_slice %354 {offsets = [0, 0], sizes = [8, 32], strides = [1, 1]} : vector<8x128xbf16> to vector<8x32xbf16>
    %cst_157 = arith.constant dense<0.000000e+00> : vector<8x8xf32>
    %358 = tpu.matmul %356, %357, %cst_157 {dimension_numbers = #tpu.dot_dimension_numbers<[1], [1], [0], [0], [0, 0, 1, 0], [], []>} : vector<8x32xbf16>, vector<8x32xbf16>, vector<8x8xf32> -> vector<8x8xf32>
    %cst_158 = arith.constant -1.000000e+09 : f32
    %359 = vector.broadcast %cst_158 : f32 to vector<8x8xf32>
    %360 = arith.select %8, %359, %358 : vector<8x8xi1>, vector<8x8xf32>
    %cst_159 = arith.constant dense<0xFF800000> : vector<8xf32>
    %361 = vector.multi_reduction <maximumf>, %360, %cst_159 [1] : vector<8x8xf32> to vector<8xf32>
    %362 = vector.shape_cast %361 : vector<8xf32> to vector<8x1xf32>
    %363 = vector.broadcast %362 : vector<8x1xf32> to vector<8x8xf32>
    %364 = arith.subf %360, %363 : vector<8x8xf32>
    %365 = math.exp %364 : vector<8x8xf32>
    %cst_160 = arith.constant dense<0.000000e+00> : vector<8xf32>
    %366 = vector.multi_reduction <add>, %365, %cst_160 [1] : vector<8x8xf32> to vector<8xf32>
    %367 = vector.shape_cast %366 : vector<8xf32> to vector<8x1xf32>
    %368 = tpu.reciprocal %367 {approx = true} : vector<8x1xf32> -> vector<8x1xf32>
    %369 = vector.broadcast %368 : vector<8x1xf32> to vector<8x8xf32>
    %370 = arith.mulf %365, %369 : vector<8x8xf32>
    %371 = arith.truncf %370 : vector<8x8xf32> to vector<8x8xbf16>
    %372 = vector.extract_strided_slice %355 {offsets = [0, 0], sizes = [8, 32], strides = [1, 1]} : vector<8x128xbf16> to vector<8x32xbf16>
    %cst_161 = arith.constant dense<0.000000e+00> : vector<8x32xf32>
    %373 = tpu.matmul %371, %372, %cst_161 {dimension_numbers = #tpu.dot_dimension_numbers<[1], [0], [0], [1], [0, 0, 1, 1], [], []>} : vector<8x8xbf16>, vector<8x32xbf16>, vector<8x32xf32> -> vector<8x32xf32>
    %374 = vector.extract_strided_slice %353 {offsets = [0, 32], sizes = [8, 32], strides = [1, 1]} : vector<8x128xbf16> to vector<8x32xbf16>
    %375 = vector.extract_strided_slice %354 {offsets = [0, 32], sizes = [8, 32], strides = [1, 1]} : vector<8x128xbf16> to vector<8x32xbf16>
    %cst_162 = arith.constant dense<0.000000e+00> : vector<8x8xf32>
    %376 = tpu.matmul %374, %375, %cst_162 {dimension_numbers = #tpu.dot_dimension_numbers<[1], [1], [0], [0], [0, 0, 1, 0], [], []>} : vector<8x32xbf16>, vector<8x32xbf16>, vector<8x8xf32> -> vector<8x8xf32>
    %cst_163 = arith.constant -1.000000e+09 : f32
    %377 = vector.broadcast %cst_163 : f32 to vector<8x8xf32>
    %378 = arith.select %8, %377, %376 : vector<8x8xi1>, vector<8x8xf32>
    %cst_164 = arith.constant dense<0xFF800000> : vector<8xf32>
    %379 = vector.multi_reduction <maximumf>, %378, %cst_164 [1] : vector<8x8xf32> to vector<8xf32>
    %380 = vector.shape_cast %379 : vector<8xf32> to vector<8x1xf32>
    %381 = vector.broadcast %380 : vector<8x1xf32> to vector<8x8xf32>
    %382 = arith.subf %378, %381 : vector<8x8xf32>
    %383 = math.exp %382 : vector<8x8xf32>
    %cst_165 = arith.constant dense<0.000000e+00> : vector<8xf32>
    %384 = vector.multi_reduction <add>, %383, %cst_165 [1] : vector<8x8xf32> to vector<8xf32>
    %385 = vector.shape_cast %384 : vector<8xf32> to vector<8x1xf32>
    %386 = tpu.reciprocal %385 {approx = true} : vector<8x1xf32> -> vector<8x1xf32>
    %387 = vector.broadcast %386 : vector<8x1xf32> to vector<8x8xf32>
    %388 = arith.mulf %383, %387 : vector<8x8xf32>
    %389 = arith.truncf %388 : vector<8x8xf32> to vector<8x8xbf16>
    %390 = vector.extract_strided_slice %355 {offsets = [0, 32], sizes = [8, 32], strides = [1, 1]} : vector<8x128xbf16> to vector<8x32xbf16>
    %cst_166 = arith.constant dense<0.000000e+00> : vector<8x32xf32>
    %391 = tpu.matmul %389, %390, %cst_166 {dimension_numbers = #tpu.dot_dimension_numbers<[1], [0], [0], [1], [0, 0, 1, 1], [], []>} : vector<8x8xbf16>, vector<8x32xbf16>, vector<8x32xf32> -> vector<8x32xf32>
    %392 = vector.extract_strided_slice %353 {offsets = [0, 64], sizes = [8, 32], strides = [1, 1]} : vector<8x128xbf16> to vector<8x32xbf16>
    %393 = vector.extract_strided_slice %354 {offsets = [0, 64], sizes = [8, 32], strides = [1, 1]} : vector<8x128xbf16> to vector<8x32xbf16>
    %cst_167 = arith.constant dense<0.000000e+00> : vector<8x8xf32>
    %394 = tpu.matmul %392, %393, %cst_167 {dimension_numbers = #tpu.dot_dimension_numbers<[1], [1], [0], [0], [0, 0, 1, 0], [], []>} : vector<8x32xbf16>, vector<8x32xbf16>, vector<8x8xf32> -> vector<8x8xf32>
    %cst_168 = arith.constant -1.000000e+09 : f32
    %395 = vector.broadcast %cst_168 : f32 to vector<8x8xf32>
    %396 = arith.select %8, %395, %394 : vector<8x8xi1>, vector<8x8xf32>
    %cst_169 = arith.constant dense<0xFF800000> : vector<8xf32>
    %397 = vector.multi_reduction <maximumf>, %396, %cst_169 [1] : vector<8x8xf32> to vector<8xf32>
    %398 = vector.shape_cast %397 : vector<8xf32> to vector<8x1xf32>
    %399 = vector.broadcast %398 : vector<8x1xf32> to vector<8x8xf32>
    %400 = arith.subf %396, %399 : vector<8x8xf32>
    %401 = math.exp %400 : vector<8x8xf32>
    %cst_170 = arith.constant dense<0.000000e+00> : vector<8xf32>
    %402 = vector.multi_reduction <add>, %401, %cst_170 [1] : vector<8x8xf32> to vector<8xf32>
    %403 = vector.shape_cast %402 : vector<8xf32> to vector<8x1xf32>
    %404 = tpu.reciprocal %403 {approx = true} : vector<8x1xf32> -> vector<8x1xf32>
    %405 = vector.broadcast %404 : vector<8x1xf32> to vector<8x8xf32>
    %406 = arith.mulf %401, %405 : vector<8x8xf32>
    %407 = arith.truncf %406 : vector<8x8xf32> to vector<8x8xbf16>
    %408 = vector.extract_strided_slice %355 {offsets = [0, 64], sizes = [8, 32], strides = [1, 1]} : vector<8x128xbf16> to vector<8x32xbf16>
    %cst_171 = arith.constant dense<0.000000e+00> : vector<8x32xf32>
    %409 = tpu.matmul %407, %408, %cst_171 {dimension_numbers = #tpu.dot_dimension_numbers<[1], [0], [0], [1], [0, 0, 1, 1], [], []>} : vector<8x8xbf16>, vector<8x32xbf16>, vector<8x32xf32> -> vector<8x32xf32>
    %410 = vector.extract_strided_slice %353 {offsets = [0, 96], sizes = [8, 32], strides = [1, 1]} : vector<8x128xbf16> to vector<8x32xbf16>
    %411 = vector.extract_strided_slice %354 {offsets = [0, 96], sizes = [8, 32], strides = [1, 1]} : vector<8x128xbf16> to vector<8x32xbf16>
    %cst_172 = arith.constant dense<0.000000e+00> : vector<8x8xf32>
    %412 = tpu.matmul %410, %411, %cst_172 {dimension_numbers = #tpu.dot_dimension_numbers<[1], [1], [0], [0], [0, 0, 1, 0], [], []>} : vector<8x32xbf16>, vector<8x32xbf16>, vector<8x8xf32> -> vector<8x8xf32>
    %cst_173 = arith.constant -1.000000e+09 : f32
    %413 = vector.broadcast %cst_173 : f32 to vector<8x8xf32>
    %414 = arith.select %8, %413, %412 : vector<8x8xi1>, vector<8x8xf32>
    %cst_174 = arith.constant dense<0xFF800000> : vector<8xf32>
    %415 = vector.multi_reduction <maximumf>, %414, %cst_174 [1] : vector<8x8xf32> to vector<8xf32>
    %416 = vector.shape_cast %415 : vector<8xf32> to vector<8x1xf32>
    %417 = vector.broadcast %416 : vector<8x1xf32> to vector<8x8xf32>
    %418 = arith.subf %414, %417 : vector<8x8xf32>
    %419 = math.exp %418 : vector<8x8xf32>
    %cst_175 = arith.constant dense<0.000000e+00> : vector<8xf32>
    %420 = vector.multi_reduction <add>, %419, %cst_175 [1] : vector<8x8xf32> to vector<8xf32>
    %421 = vector.shape_cast %420 : vector<8xf32> to vector<8x1xf32>
    %422 = tpu.reciprocal %421 {approx = true} : vector<8x1xf32> -> vector<8x1xf32>
    %423 = vector.broadcast %422 : vector<8x1xf32> to vector<8x8xf32>
    %424 = arith.mulf %419, %423 : vector<8x8xf32>
    %425 = arith.truncf %424 : vector<8x8xf32> to vector<8x8xbf16>
    %426 = vector.extract_strided_slice %355 {offsets = [0, 96], sizes = [8, 32], strides = [1, 1]} : vector<8x128xbf16> to vector<8x32xbf16>
    %cst_176 = arith.constant dense<0.000000e+00> : vector<8x32xf32>
    %427 = tpu.matmul %425, %426, %cst_176 {dimension_numbers = #tpu.dot_dimension_numbers<[1], [0], [0], [1], [0, 0, 1, 1], [], []>} : vector<8x8xbf16>, vector<8x32xbf16>, vector<8x32xf32> -> vector<8x32xf32>
    %428 = tpu.concatenate %373, %391, %409, %427 in 1 : vector<8x32xf32>, vector<8x32xf32>, vector<8x32xf32>, vector<8x32xf32> -> vector<8x128xf32>
    %429 = arith.truncf %428 : vector<8x128xf32> to vector<8x128xbf16>
    %cst_177 = arith.constant dense<0.000000e+00> : vector<8x128xf32>
    %430 = tpu.matmul %429, %350, %cst_177 {dimension_numbers = #tpu.dot_dimension_numbers<[1], [0], [0], [1], [0, 0, 1, 1], [], []>} : vector<8x128xbf16>, vector<128x128xbf16>, vector<8x128xf32> -> vector<8x128xf32>
    %431 = vector.broadcast %352 : vector<1x128xf32> to vector<8x128xf32>
    %432 = arith.addf %430, %431 : vector<8x128xf32>
    %433 = arith.addf %312, %432 : vector<8x128xf32>
    %c1_178 = arith.constant 1 : index
    %c0_179 = arith.constant 0 : index
    %c0_180 = arith.constant 0 : index
    %434 = vector.load %arg11[%c1_178, %c0_179, %c0_180] : memref<2x1x128xf32, #tpu.memory_space<vmem>>, vector<1x1x128xf32>
    %435 = vector.shape_cast %434 : vector<1x1x128xf32> to vector<1x128xf32>
    %c1_181 = arith.constant 1 : index
    %c0_182 = arith.constant 0 : index
    %c0_183 = arith.constant 0 : index
    %436 = vector.load %arg12[%c1_181, %c0_182, %c0_183] : memref<2x1x128xf32, #tpu.memory_space<vmem>>, vector<1x1x128xf32>
    %437 = vector.shape_cast %436 : vector<1x1x128xf32> to vector<1x128xf32>
    %cst_184 = arith.constant dense<0.000000e+00> : vector<8xf32>
    %438 = vector.multi_reduction <add>, %433, %cst_184 [1] : vector<8x128xf32> to vector<8xf32>
    %439 = vector.shape_cast %438 : vector<8xf32> to vector<8x1xf32>
    %cst_185 = arith.constant 1.280000e+02 : f32
    %440 = vector.broadcast %cst_185 : f32 to vector<8x1xf32>
    %441 = arith.divf %439, %440 : vector<8x1xf32>
    %442 = vector.broadcast %441 : vector<8x1xf32> to vector<8x128xf32>
    %443 = arith.subf %433, %442 : vector<8x128xf32>
    %444 = arith.mulf %443, %443 : vector<8x128xf32>
    %cst_186 = arith.constant dense<0.000000e+00> : vector<8xf32>
    %445 = vector.multi_reduction <add>, %444, %cst_186 [1] : vector<8x128xf32> to vector<8xf32>
    %446 = vector.shape_cast %445 : vector<8xf32> to vector<8x1xf32>
    %cst_187 = arith.constant 0.00787401571 : f32
    %447 = vector.broadcast %cst_187 : f32 to vector<8x1xf32>
    %448 = arith.mulf %446, %447 : vector<8x1xf32>
    %449 = math.sqrt %448 : vector<8x1xf32>
    %cst_188 = arith.constant 9.99999997E-7 : f32
    %450 = vector.broadcast %cst_188 : f32 to vector<8x1xf32>
    %451 = arith.addf %449, %450 : vector<8x1xf32>
    %452 = tpu.reciprocal %451 {approx = true} : vector<8x1xf32> -> vector<8x1xf32>
    %453 = vector.broadcast %435 : vector<1x128xf32> to vector<8x128xf32>
    %454 = arith.mulf %453, %443 : vector<8x128xf32>
    %455 = vector.broadcast %452 : vector<8x1xf32> to vector<8x128xf32>
    %456 = arith.mulf %454, %455 : vector<8x128xf32>
    %457 = vector.broadcast %437 : vector<1x128xf32> to vector<8x128xf32>
    %458 = arith.addf %456, %457 : vector<8x128xf32>
    %459 = arith.truncf %458 : vector<8x128xf32> to vector<8x128xbf16>
    %c1_189 = arith.constant 1 : index
    %c0_190 = arith.constant 0 : index
    %c0_191 = arith.constant 0 : index
    %460 = vector.load %arg13[%c1_189, %c0_190, %c0_191] : memref<2x128x128xbf16, #tpu.memory_space<vmem>>, vector<1x128x128xbf16>
    %461 = vector.shape_cast %460 : vector<1x128x128xbf16> to vector<128x128xbf16>
    %cst_192 = arith.constant dense<0.000000e+00> : vector<8x128xf32>
    %462 = tpu.matmul %459, %461, %cst_192 {dimension_numbers = #tpu.dot_dimension_numbers<[1], [0], [0], [1], [0, 0, 1, 1], [], []>} : vector<8x128xbf16>, vector<128x128xbf16>, vector<8x128xf32> -> vector<8x128xf32>
    %c1_193 = arith.constant 1 : index
    %c0_194 = arith.constant 0 : index
    %c0_195 = arith.constant 0 : index
    %463 = vector.load %arg14[%c1_193, %c0_194, %c0_195] : memref<2x1x128xf32, #tpu.memory_space<vmem>>, vector<1x1x128xf32>
    %464 = vector.shape_cast %463 : vector<1x1x128xf32> to vector<1x128xf32>
    %465 = vector.broadcast %464 : vector<1x128xf32> to vector<8x128xf32>
    %466 = arith.addf %462, %465 : vector<8x128xf32>
    %c1_196 = arith.constant 1 : index
    %c0_197 = arith.constant 0 : index
    %c0_198 = arith.constant 0 : index
    %467 = vector.load %arg15[%c1_196, %c0_197, %c0_198] : memref<2x128x256xbf16, #tpu.memory_space<vmem>>, vector<1x128x256xbf16>
    %468 = vector.shape_cast %467 : vector<1x128x256xbf16> to vector<128x256xbf16>
    %cst_199 = arith.constant dense<0.000000e+00> : vector<10x256xf32>
    %469 = tpu.matmul %4, %468, %cst_199 {dimension_numbers = #tpu.dot_dimension_numbers<[1], [0], [0], [1], [0, 0, 1, 1], [], []>} : vector<10x128xbf16>, vector<128x256xbf16>, vector<10x256xf32> -> vector<10x256xf32>
    %c1_200 = arith.constant 1 : index
    %c0_201 = arith.constant 0 : index
    %c0_202 = arith.constant 0 : index
    %470 = vector.load %arg16[%c1_200, %c0_201, %c0_202] : memref<2x1x256xf32, #tpu.memory_space<vmem>>, vector<1x1x256xf32>
    %471 = vector.shape_cast %470 : vector<1x1x256xf32> to vector<1x256xf32>
    %472 = vector.broadcast %471 : vector<1x256xf32> to vector<10x256xf32>
    %473 = arith.addf %469, %472 : vector<10x256xf32>
    %474 = vector.extract_strided_slice %473 {offsets = [0, 0], sizes = [10, 128], strides = [1, 1]} : vector<10x256xf32> to vector<10x128xf32>
    %475 = vector.extract_strided_slice %473 {offsets = [0, 128], sizes = [10, 128], strides = [1, 1]} : vector<10x256xf32> to vector<10x128xf32>
    %c1_203 = arith.constant 1 : index
    %c0_204 = arith.constant 0 : index
    %c0_205 = arith.constant 0 : index
    %476 = vector.load %arg17[%c1_203, %c0_204, %c0_205] : memref<2x128x128xbf16, #tpu.memory_space<vmem>>, vector<1x128x128xbf16>
    %477 = vector.shape_cast %476 : vector<1x128x128xbf16> to vector<128x128xbf16>
    %c1_206 = arith.constant 1 : index
    %c0_207 = arith.constant 0 : index
    %c0_208 = arith.constant 0 : index
    %478 = vector.load %arg18[%c1_206, %c0_207, %c0_208] : memref<2x1x128xf32, #tpu.memory_space<vmem>>, vector<1x1x128xf32>
    %479 = vector.shape_cast %478 : vector<1x1x128xf32> to vector<1x128xf32>
    %480 = arith.truncf %466 : vector<8x128xf32> to vector<8x128xbf16>
    %481 = arith.truncf %474 : vector<10x128xf32> to vector<10x128xbf16>
    %482 = arith.truncf %475 : vector<10x128xf32> to vector<10x128xbf16>
    %483 = vector.extract_strided_slice %480 {offsets = [0, 0], sizes = [8, 32], strides = [1, 1]} : vector<8x128xbf16> to vector<8x32xbf16>
    %484 = vector.extract_strided_slice %481 {offsets = [0, 0], sizes = [10, 32], strides = [1, 1]} : vector<10x128xbf16> to vector<10x32xbf16>
    %cst_209 = arith.constant dense<0.000000e+00> : vector<8x10xf32>
    %485 = tpu.matmul %483, %484, %cst_209 {dimension_numbers = #tpu.dot_dimension_numbers<[1], [1], [0], [0], [0, 0, 1, 0], [], []>} : vector<8x32xbf16>, vector<10x32xbf16>, vector<8x10xf32> -> vector<8x10xf32>
    %cst_210 = arith.constant -1.000000e+09 : f32
    %486 = vector.shape_cast %12 : vector<1x10xi1> to vector<1x10xi1>
    %487 = vector.broadcast %486 : vector<1x10xi1> to vector<8x10xi1>
    %488 = vector.broadcast %cst_210 : f32 to vector<8x10xf32>
    %489 = arith.select %487, %488, %485 : vector<8x10xi1>, vector<8x10xf32>
    %cst_211 = arith.constant dense<0xFF800000> : vector<8xf32>
    %490 = vector.multi_reduction <maximumf>, %489, %cst_211 [1] : vector<8x10xf32> to vector<8xf32>
    %491 = vector.shape_cast %490 : vector<8xf32> to vector<8x1xf32>
    %492 = vector.broadcast %491 : vector<8x1xf32> to vector<8x10xf32>
    %493 = arith.subf %489, %492 : vector<8x10xf32>
    %494 = math.exp %493 : vector<8x10xf32>
    %cst_212 = arith.constant dense<0.000000e+00> : vector<8xf32>
    %495 = vector.multi_reduction <add>, %494, %cst_212 [1] : vector<8x10xf32> to vector<8xf32>
    %496 = vector.shape_cast %495 : vector<8xf32> to vector<8x1xf32>
    %497 = tpu.reciprocal %496 {approx = true} : vector<8x1xf32> -> vector<8x1xf32>
    %498 = vector.broadcast %497 : vector<8x1xf32> to vector<8x10xf32>
    %499 = arith.mulf %494, %498 : vector<8x10xf32>
    %500 = arith.truncf %499 : vector<8x10xf32> to vector<8x10xbf16>
    %501 = vector.extract_strided_slice %482 {offsets = [0, 0], sizes = [10, 32], strides = [1, 1]} : vector<10x128xbf16> to vector<10x32xbf16>
    %cst_213 = arith.constant dense<0.000000e+00> : vector<8x32xf32>
    %502 = tpu.matmul %500, %501, %cst_213 {dimension_numbers = #tpu.dot_dimension_numbers<[1], [0], [0], [1], [0, 0, 1, 1], [], []>} : vector<8x10xbf16>, vector<10x32xbf16>, vector<8x32xf32> -> vector<8x32xf32>
    %503 = vector.extract_strided_slice %480 {offsets = [0, 32], sizes = [8, 32], strides = [1, 1]} : vector<8x128xbf16> to vector<8x32xbf16>
    %504 = vector.extract_strided_slice %481 {offsets = [0, 32], sizes = [10, 32], strides = [1, 1]} : vector<10x128xbf16> to vector<10x32xbf16>
    %cst_214 = arith.constant dense<0.000000e+00> : vector<8x10xf32>
    %505 = tpu.matmul %503, %504, %cst_214 {dimension_numbers = #tpu.dot_dimension_numbers<[1], [1], [0], [0], [0, 0, 1, 0], [], []>} : vector<8x32xbf16>, vector<10x32xbf16>, vector<8x10xf32> -> vector<8x10xf32>
    %cst_215 = arith.constant -1.000000e+09 : f32
    %506 = vector.shape_cast %12 : vector<1x10xi1> to vector<1x10xi1>
    %507 = vector.broadcast %506 : vector<1x10xi1> to vector<8x10xi1>
    %508 = vector.broadcast %cst_215 : f32 to vector<8x10xf32>
    %509 = arith.select %507, %508, %505 : vector<8x10xi1>, vector<8x10xf32>
    %cst_216 = arith.constant dense<0xFF800000> : vector<8xf32>
    %510 = vector.multi_reduction <maximumf>, %509, %cst_216 [1] : vector<8x10xf32> to vector<8xf32>
    %511 = vector.shape_cast %510 : vector<8xf32> to vector<8x1xf32>
    %512 = vector.broadcast %511 : vector<8x1xf32> to vector<8x10xf32>
    %513 = arith.subf %509, %512 : vector<8x10xf32>
    %514 = math.exp %513 : vector<8x10xf32>
    %cst_217 = arith.constant dense<0.000000e+00> : vector<8xf32>
    %515 = vector.multi_reduction <add>, %514, %cst_217 [1] : vector<8x10xf32> to vector<8xf32>
    %516 = vector.shape_cast %515 : vector<8xf32> to vector<8x1xf32>
    %517 = tpu.reciprocal %516 {approx = true} : vector<8x1xf32> -> vector<8x1xf32>
    %518 = vector.broadcast %517 : vector<8x1xf32> to vector<8x10xf32>
    %519 = arith.mulf %514, %518 : vector<8x10xf32>
    %520 = arith.truncf %519 : vector<8x10xf32> to vector<8x10xbf16>
    %521 = vector.extract_strided_slice %482 {offsets = [0, 32], sizes = [10, 32], strides = [1, 1]} : vector<10x128xbf16> to vector<10x32xbf16>
    %cst_218 = arith.constant dense<0.000000e+00> : vector<8x32xf32>
    %522 = tpu.matmul %520, %521, %cst_218 {dimension_numbers = #tpu.dot_dimension_numbers<[1], [0], [0], [1], [0, 0, 1, 1], [], []>} : vector<8x10xbf16>, vector<10x32xbf16>, vector<8x32xf32> -> vector<8x32xf32>
    %523 = vector.extract_strided_slice %480 {offsets = [0, 64], sizes = [8, 32], strides = [1, 1]} : vector<8x128xbf16> to vector<8x32xbf16>
    %524 = vector.extract_strided_slice %481 {offsets = [0, 64], sizes = [10, 32], strides = [1, 1]} : vector<10x128xbf16> to vector<10x32xbf16>
    %cst_219 = arith.constant dense<0.000000e+00> : vector<8x10xf32>
    %525 = tpu.matmul %523, %524, %cst_219 {dimension_numbers = #tpu.dot_dimension_numbers<[1], [1], [0], [0], [0, 0, 1, 0], [], []>} : vector<8x32xbf16>, vector<10x32xbf16>, vector<8x10xf32> -> vector<8x10xf32>
    %cst_220 = arith.constant -1.000000e+09 : f32
    %526 = vector.shape_cast %12 : vector<1x10xi1> to vector<1x10xi1>
    %527 = vector.broadcast %526 : vector<1x10xi1> to vector<8x10xi1>
    %528 = vector.broadcast %cst_220 : f32 to vector<8x10xf32>
    %529 = arith.select %527, %528, %525 : vector<8x10xi1>, vector<8x10xf32>
    %cst_221 = arith.constant dense<0xFF800000> : vector<8xf32>
    %530 = vector.multi_reduction <maximumf>, %529, %cst_221 [1] : vector<8x10xf32> to vector<8xf32>
    %531 = vector.shape_cast %530 : vector<8xf32> to vector<8x1xf32>
    %532 = vector.broadcast %531 : vector<8x1xf32> to vector<8x10xf32>
    %533 = arith.subf %529, %532 : vector<8x10xf32>
    %534 = math.exp %533 : vector<8x10xf32>
    %cst_222 = arith.constant dense<0.000000e+00> : vector<8xf32>
    %535 = vector.multi_reduction <add>, %534, %cst_222 [1] : vector<8x10xf32> to vector<8xf32>
    %536 = vector.shape_cast %535 : vector<8xf32> to vector<8x1xf32>
    %537 = tpu.reciprocal %536 {approx = true} : vector<8x1xf32> -> vector<8x1xf32>
    %538 = vector.broadcast %537 : vector<8x1xf32> to vector<8x10xf32>
    %539 = arith.mulf %534, %538 : vector<8x10xf32>
    %540 = arith.truncf %539 : vector<8x10xf32> to vector<8x10xbf16>
    %541 = vector.extract_strided_slice %482 {offsets = [0, 64], sizes = [10, 32], strides = [1, 1]} : vector<10x128xbf16> to vector<10x32xbf16>
    %cst_223 = arith.constant dense<0.000000e+00> : vector<8x32xf32>
    %542 = tpu.matmul %540, %541, %cst_223 {dimension_numbers = #tpu.dot_dimension_numbers<[1], [0], [0], [1], [0, 0, 1, 1], [], []>} : vector<8x10xbf16>, vector<10x32xbf16>, vector<8x32xf32> -> vector<8x32xf32>
    %543 = vector.extract_strided_slice %480 {offsets = [0, 96], sizes = [8, 32], strides = [1, 1]} : vector<8x128xbf16> to vector<8x32xbf16>
    %544 = vector.extract_strided_slice %481 {offsets = [0, 96], sizes = [10, 32], strides = [1, 1]} : vector<10x128xbf16> to vector<10x32xbf16>
    %cst_224 = arith.constant dense<0.000000e+00> : vector<8x10xf32>
    %545 = tpu.matmul %543, %544, %cst_224 {dimension_numbers = #tpu.dot_dimension_numbers<[1], [1], [0], [0], [0, 0, 1, 0], [], []>} : vector<8x32xbf16>, vector<10x32xbf16>, vector<8x10xf32> -> vector<8x10xf32>
    %cst_225 = arith.constant -1.000000e+09 : f32
    %546 = vector.shape_cast %12 : vector<1x10xi1> to vector<1x10xi1>
    %547 = vector.broadcast %546 : vector<1x10xi1> to vector<8x10xi1>
    %548 = vector.broadcast %cst_225 : f32 to vector<8x10xf32>
    %549 = arith.select %547, %548, %545 : vector<8x10xi1>, vector<8x10xf32>
    %cst_226 = arith.constant dense<0xFF800000> : vector<8xf32>
    %550 = vector.multi_reduction <maximumf>, %549, %cst_226 [1] : vector<8x10xf32> to vector<8xf32>
    %551 = vector.shape_cast %550 : vector<8xf32> to vector<8x1xf32>
    %552 = vector.broadcast %551 : vector<8x1xf32> to vector<8x10xf32>
    %553 = arith.subf %549, %552 : vector<8x10xf32>
    %554 = math.exp %553 : vector<8x10xf32>
    %cst_227 = arith.constant dense<0.000000e+00> : vector<8xf32>
    %555 = vector.multi_reduction <add>, %554, %cst_227 [1] : vector<8x10xf32> to vector<8xf32>
    %556 = vector.shape_cast %555 : vector<8xf32> to vector<8x1xf32>
    %557 = tpu.reciprocal %556 {approx = true} : vector<8x1xf32> -> vector<8x1xf32>
    %558 = vector.broadcast %557 : vector<8x1xf32> to vector<8x10xf32>
    %559 = arith.mulf %554, %558 : vector<8x10xf32>
    %560 = arith.truncf %559 : vector<8x10xf32> to vector<8x10xbf16>
    %561 = vector.extract_strided_slice %482 {offsets = [0, 96], sizes = [10, 32], strides = [1, 1]} : vector<10x128xbf16> to vector<10x32xbf16>
    %cst_228 = arith.constant dense<0.000000e+00> : vector<8x32xf32>
    %562 = tpu.matmul %560, %561, %cst_228 {dimension_numbers = #tpu.dot_dimension_numbers<[1], [0], [0], [1], [0, 0, 1, 1], [], []>} : vector<8x10xbf16>, vector<10x32xbf16>, vector<8x32xf32> -> vector<8x32xf32>
    %563 = tpu.concatenate %502, %522, %542, %562 in 1 : vector<8x32xf32>, vector<8x32xf32>, vector<8x32xf32>, vector<8x32xf32> -> vector<8x128xf32>
    %564 = arith.truncf %563 : vector<8x128xf32> to vector<8x128xbf16>
    %cst_229 = arith.constant dense<0.000000e+00> : vector<8x128xf32>
    %565 = tpu.matmul %564, %477, %cst_229 {dimension_numbers = #tpu.dot_dimension_numbers<[1], [0], [0], [1], [0, 0, 1, 1], [], []>} : vector<8x128xbf16>, vector<128x128xbf16>, vector<8x128xf32> -> vector<8x128xf32>
    %566 = vector.broadcast %479 : vector<1x128xf32> to vector<8x128xf32>
    %567 = arith.addf %565, %566 : vector<8x128xf32>
    %568 = arith.addf %433, %567 : vector<8x128xf32>
    %c1_230 = arith.constant 1 : index
    %c0_231 = arith.constant 0 : index
    %c0_232 = arith.constant 0 : index
    %569 = vector.load %arg19[%c1_230, %c0_231, %c0_232] : memref<2x1x128xf32, #tpu.memory_space<vmem>>, vector<1x1x128xf32>
    %570 = vector.shape_cast %569 : vector<1x1x128xf32> to vector<1x128xf32>
    %c1_233 = arith.constant 1 : index
    %c0_234 = arith.constant 0 : index
    %c0_235 = arith.constant 0 : index
    %571 = vector.load %arg20[%c1_233, %c0_234, %c0_235] : memref<2x1x128xf32, #tpu.memory_space<vmem>>, vector<1x1x128xf32>
    %572 = vector.shape_cast %571 : vector<1x1x128xf32> to vector<1x128xf32>
    %cst_236 = arith.constant dense<0.000000e+00> : vector<8xf32>
    %573 = vector.multi_reduction <add>, %568, %cst_236 [1] : vector<8x128xf32> to vector<8xf32>
    %574 = vector.shape_cast %573 : vector<8xf32> to vector<8x1xf32>
    %cst_237 = arith.constant 1.280000e+02 : f32
    %575 = vector.broadcast %cst_237 : f32 to vector<8x1xf32>
    %576 = arith.divf %574, %575 : vector<8x1xf32>
    %577 = vector.broadcast %576 : vector<8x1xf32> to vector<8x128xf32>
    %578 = arith.subf %568, %577 : vector<8x128xf32>
    %579 = arith.mulf %578, %578 : vector<8x128xf32>
    %cst_238 = arith.constant dense<0.000000e+00> : vector<8xf32>
    %580 = vector.multi_reduction <add>, %579, %cst_238 [1] : vector<8x128xf32> to vector<8xf32>
    %581 = vector.shape_cast %580 : vector<8xf32> to vector<8x1xf32>
    %cst_239 = arith.constant 0.00787401571 : f32
    %582 = vector.broadcast %cst_239 : f32 to vector<8x1xf32>
    %583 = arith.mulf %581, %582 : vector<8x1xf32>
    %584 = math.sqrt %583 : vector<8x1xf32>
    %cst_240 = arith.constant 9.99999997E-7 : f32
    %585 = vector.broadcast %cst_240 : f32 to vector<8x1xf32>
    %586 = arith.addf %584, %585 : vector<8x1xf32>
    %587 = tpu.reciprocal %586 {approx = true} : vector<8x1xf32> -> vector<8x1xf32>
    %588 = vector.broadcast %570 : vector<1x128xf32> to vector<8x128xf32>
    %589 = arith.mulf %588, %578 : vector<8x128xf32>
    %590 = vector.broadcast %587 : vector<8x1xf32> to vector<8x128xf32>
    %591 = arith.mulf %589, %590 : vector<8x128xf32>
    %592 = vector.broadcast %572 : vector<1x128xf32> to vector<8x128xf32>
    %593 = arith.addf %591, %592 : vector<8x128xf32>
    %594 = arith.truncf %593 : vector<8x128xf32> to vector<8x128xbf16>
    %c1_241 = arith.constant 1 : index
    %c0_242 = arith.constant 0 : index
    %c0_243 = arith.constant 0 : index
    %595 = vector.load %arg21[%c1_241, %c0_242, %c0_243] : memref<2x128x2048xbf16, #tpu.memory_space<vmem>>, vector<1x128x2048xbf16>
    %596 = vector.shape_cast %595 : vector<1x128x2048xbf16> to vector<128x2048xbf16>
    %cst_244 = arith.constant dense<0.000000e+00> : vector<8x2048xf32>
    %597 = tpu.matmul %594, %596, %cst_244 {dimension_numbers = #tpu.dot_dimension_numbers<[1], [0], [0], [1], [0, 0, 1, 1], [], []>} : vector<8x128xbf16>, vector<128x2048xbf16>, vector<8x2048xf32> -> vector<8x2048xf32>
    %c1_245 = arith.constant 1 : index
    %c0_246 = arith.constant 0 : index
    %c0_247 = arith.constant 0 : index
    %598 = vector.load %arg22[%c1_245, %c0_246, %c0_247] : memref<2x1x2048xf32, #tpu.memory_space<vmem>>, vector<1x1x2048xf32>
    %599 = vector.shape_cast %598 : vector<1x1x2048xf32> to vector<1x2048xf32>
    %600 = vector.broadcast %599 : vector<1x2048xf32> to vector<8x2048xf32>
    %601 = arith.addf %597, %600 : vector<8x2048xf32>
    %cst_248 = arith.constant 0.000000e+00 : f32
    %602 = vector.broadcast %cst_248 : f32 to vector<8x2048xf32>
    %603 = arith.maximumf %601, %602 : vector<8x2048xf32>
    %604 = arith.truncf %603 : vector<8x2048xf32> to vector<8x2048xbf16>
    %c1_249 = arith.constant 1 : index
    %c0_250 = arith.constant 0 : index
    %c0_251 = arith.constant 0 : index
    %605 = vector.load %arg23[%c1_249, %c0_250, %c0_251] : memref<2x2048x128xbf16, #tpu.memory_space<vmem>>, vector<1x2048x128xbf16>
    %606 = vector.shape_cast %605 : vector<1x2048x128xbf16> to vector<2048x128xbf16>
    %cst_252 = arith.constant dense<0.000000e+00> : vector<8x128xf32>
    %607 = tpu.matmul %604, %606, %cst_252 {dimension_numbers = #tpu.dot_dimension_numbers<[1], [0], [0], [1], [0, 0, 1, 1], [], []>} : vector<8x2048xbf16>, vector<2048x128xbf16>, vector<8x128xf32> -> vector<8x128xf32>
    %608 = arith.addf %568, %607 : vector<8x128xf32>
    %c1_253 = arith.constant 1 : index
    %c0_254 = arith.constant 0 : index
    %c0_255 = arith.constant 0 : index
    %609 = vector.load %arg24[%c1_253, %c0_254, %c0_255] : memref<2x1x128xf32, #tpu.memory_space<vmem>>, vector<1x1x128xf32>
    %610 = vector.shape_cast %609 : vector<1x1x128xf32> to vector<1x128xf32>
    %611 = vector.broadcast %610 : vector<1x128xf32> to vector<8x128xf32>
    %612 = arith.addf %608, %611 : vector<8x128xf32>
    %c0_256 = arith.constant 0 : index
    %c0_257 = arith.constant 0 : index
    %613 = vector.load %arg25[%c0_256, %c0_257] : memref<1x128xf32, #tpu.memory_space<vmem>>, vector<1x128xf32>
    %c0_258 = arith.constant 0 : index
    %c0_259 = arith.constant 0 : index
    %614 = vector.load %arg26[%c0_258, %c0_259] : memref<1x128xf32, #tpu.memory_space<vmem>>, vector<1x128xf32>
    %cst_260 = arith.constant dense<0.000000e+00> : vector<8xf32>
    %615 = vector.multi_reduction <add>, %612, %cst_260 [1] : vector<8x128xf32> to vector<8xf32>
    %616 = vector.shape_cast %615 : vector<8xf32> to vector<8x1xf32>
    %cst_261 = arith.constant 1.280000e+02 : f32
    %617 = vector.broadcast %cst_261 : f32 to vector<8x1xf32>
    %618 = arith.divf %616, %617 : vector<8x1xf32>
    %619 = vector.broadcast %618 : vector<8x1xf32> to vector<8x128xf32>
    %620 = arith.subf %612, %619 : vector<8x128xf32>
    %621 = arith.mulf %620, %620 : vector<8x128xf32>
    %cst_262 = arith.constant dense<0.000000e+00> : vector<8xf32>
    %622 = vector.multi_reduction <add>, %621, %cst_262 [1] : vector<8x128xf32> to vector<8xf32>
    %623 = vector.shape_cast %622 : vector<8xf32> to vector<8x1xf32>
    %cst_263 = arith.constant 0.00787401571 : f32
    %624 = vector.broadcast %cst_263 : f32 to vector<8x1xf32>
    %625 = arith.mulf %623, %624 : vector<8x1xf32>
    %626 = math.sqrt %625 : vector<8x1xf32>
    %cst_264 = arith.constant 9.99999997E-7 : f32
    %627 = vector.broadcast %cst_264 : f32 to vector<8x1xf32>
    %628 = arith.addf %626, %627 : vector<8x1xf32>
    %629 = tpu.reciprocal %628 {approx = true} : vector<8x1xf32> -> vector<8x1xf32>
    %630 = vector.broadcast %613 : vector<1x128xf32> to vector<8x128xf32>
    %631 = arith.mulf %630, %620 : vector<8x128xf32>
    %632 = vector.broadcast %629 : vector<8x1xf32> to vector<8x128xf32>
    %633 = arith.mulf %631, %632 : vector<8x128xf32>
    %634 = vector.broadcast %614 : vector<1x128xf32> to vector<8x128xf32>
    %635 = arith.addf %633, %634 : vector<8x128xf32>
    %c0_265 = arith.constant 0 : index
    %c0_266 = arith.constant 0 : index
    %c0_267 = arith.constant 0 : index
    %636 = vector.load %arg27[%c0_265, %c0_266, %c0_267] : memref<1x8x128xf32, #tpu.memory_space<vmem>>, vector<1x8x128xf32>
    %637 = vector.shape_cast %636 : vector<1x8x128xf32> to vector<8x128xf32>
    %638 = vector.shape_cast %635 : vector<8x128xf32> to vector<1x8x128xf32>
    tpu.vector_store %arg27[%c0_265, %c0_266, %c0_267], %638 {strides = array<i32>} : memref<1x8x128xf32, #tpu.memory_space<vmem>>, vector<1x8x128xf32>,
    return
  }
  func.func @transform_0(%arg0: i32) -> (i32, i32, i32) {
    %c0_i32 = arith.constant 0 : i32
    %c0_i32_0 = arith.constant 0 : i32
    %c0_i32_1 = arith.constant 0 : i32
    return %arg0, %c0_i32, %c0_i32_0 : i32, i32, i32
  }
  func.func @transform_1(%arg0: i32) -> (i32, i32, i32) {
    %c0_i32 = arith.constant 0 : i32
    %c0_i32_0 = arith.constant 0 : i32
    %c0_i32_1 = arith.constant 0 : i32
    return %arg0, %c0_i32, %c0_i32_0 : i32, i32, i32
  }
  func.func @transform_2(%arg0: i32) -> (i32, i32, i32) {
    %c0_i32 = arith.constant 0 : i32
    %c0_i32_0 = arith.constant 0 : i32
    %c0_i32_1 = arith.constant 0 : i32
    return %arg0, %c0_i32, %c0_i32_0 : i32, i32, i32
  }
  func.func @transform_3(%arg0: i32) -> (i32, i32, i32) {
    %c0_i32 = arith.constant 0 : i32
    %c0_i32_0 = arith.constant 0 : i32
    %c0_i32_1 = arith.constant 0 : i32
    return %arg0, %c0_i32, %c0_i32_0 : i32, i32, i32
  }
  func.func @transform_4(%arg0: i32) -> (i32, i32, i32) {
    %c0_i32 = arith.constant 0 : i32
    %c0_i32_0 = arith.constant 0 : i32
    %c0_i32_1 = arith.constant 0 : i32
    %c0_i32_2 = arith.constant 0 : i32
    return %c0_i32, %c0_i32_0, %c0_i32_1 : i32, i32, i32
  }
  func.func @transform_5(%arg0: i32) -> (i32, i32, i32) {
    %c0_i32 = arith.constant 0 : i32
    %c0_i32_0 = arith.constant 0 : i32
    %c0_i32_1 = arith.constant 0 : i32
    %c0_i32_2 = arith.constant 0 : i32
    return %c0_i32, %c0_i32_0, %c0_i32_1 : i32, i32, i32
  }
  func.func @transform_6(%arg0: i32) -> (i32, i32, i32) {
    %c0_i32 = arith.constant 0 : i32
    %c0_i32_0 = arith.constant 0 : i32
    %c0_i32_1 = arith.constant 0 : i32
    %c0_i32_2 = arith.constant 0 : i32
    return %c0_i32, %c0_i32_0, %c0_i32_1 : i32, i32, i32
  }
  func.func @transform_7(%arg0: i32) -> (i32, i32, i32) {
    %c0_i32 = arith.constant 0 : i32
    %c0_i32_0 = arith.constant 0 : i32
    %c0_i32_1 = arith.constant 0 : i32
    %c0_i32_2 = arith.constant 0 : i32
    return %c0_i32, %c0_i32_0, %c0_i32_1 : i32, i32, i32
  }
  func.func @transform_8(%arg0: i32) -> (i32, i32, i32) {
    %c0_i32 = arith.constant 0 : i32
    %c0_i32_0 = arith.constant 0 : i32
    %c0_i32_1 = arith.constant 0 : i32
    %c0_i32_2 = arith.constant 0 : i32
    return %c0_i32, %c0_i32_0, %c0_i32_1 : i32, i32, i32
  }
  func.func @transform_9(%arg0: i32) -> (i32, i32, i32) {
    %c0_i32 = arith.constant 0 : i32
    %c0_i32_0 = arith.constant 0 : i32
    %c0_i32_1 = arith.constant 0 : i32
    %c0_i32_2 = arith.constant 0 : i32
    return %c0_i32, %c0_i32_0, %c0_i32_1 : i32, i32, i32
  }
  func.func @transform_10(%arg0: i32) -> (i32, i32, i32) {
    %c0_i32 = arith.constant 0 : i32
    %c0_i32_0 = arith.constant 0 : i32
    %c0_i32_1 = arith.constant 0 : i32
    %c0_i32_2 = arith.constant 0 : i32
    return %c0_i32, %c0_i32_0, %c0_i32_1 : i32, i32, i32
  }
  func.func @transform_11(%arg0: i32) -> (i32, i32, i32) {
    %c0_i32 = arith.constant 0 : i32
    %c0_i32_0 = arith.constant 0 : i32
    %c0_i32_1 = arith.constant 0 : i32
    %c0_i32_2 = arith.constant 0 : i32
    return %c0_i32, %c0_i32_0, %c0_i32_1 : i32, i32, i32
  }
  func.func @transform_12(%arg0: i32) -> (i32, i32, i32) {
    %c0_i32 = arith.constant 0 : i32
    %c0_i32_0 = arith.constant 0 : i32
    %c0_i32_1 = arith.constant 0 : i32
    %c0_i32_2 = arith.constant 0 : i32
    return %c0_i32, %c0_i32_0, %c0_i32_1 : i32, i32, i32
  }
  func.func @transform_13(%arg0: i32) -> (i32, i32, i32) {
    %c0_i32 = arith.constant 0 : i32
    %c0_i32_0 = arith.constant 0 : i32
    %c0_i32_1 = arith.constant 0 : i32
    %c0_i32_2 = arith.constant 0 : i32
    return %c0_i32, %c0_i32_0, %c0_i32_1 : i32, i32, i32
  }
  func.func @transform_14(%arg0: i32) -> (i32, i32, i32) {
    %c0_i32 = arith.constant 0 : i32
    %c0_i32_0 = arith.constant 0 : i32
    %c0_i32_1 = arith.constant 0 : i32
    %c0_i32_2 = arith.constant 0 : i32
    return %c0_i32, %c0_i32_0, %c0_i32_1 : i32, i32, i32
  }
  func.func @transform_15(%arg0: i32) -> (i32, i32, i32) {
    %c0_i32 = arith.constant 0 : i32
    %c0_i32_0 = arith.constant 0 : i32
    %c0_i32_1 = arith.constant 0 : i32
    %c0_i32_2 = arith.constant 0 : i32
    return %c0_i32, %c0_i32_0, %c0_i32_1 : i32, i32, i32
  }
  func.func @transform_16(%arg0: i32) -> (i32, i32, i32) {
    %c0_i32 = arith.constant 0 : i32
    %c0_i32_0 = arith.constant 0 : i32
    %c0_i32_1 = arith.constant 0 : i32
    %c0_i32_2 = arith.constant 0 : i32
    return %c0_i32, %c0_i32_0, %c0_i32_1 : i32, i32, i32
  }
  func.func @transform_17(%arg0: i32) -> (i32, i32, i32) {
    %c0_i32 = arith.constant 0 : i32
    %c0_i32_0 = arith.constant 0 : i32
    %c0_i32_1 = arith.constant 0 : i32
    %c0_i32_2 = arith.constant 0 : i32
    return %c0_i32, %c0_i32_0, %c0_i32_1 : i32, i32, i32
  }
  func.func @transform_18(%arg0: i32) -> (i32, i32, i32) {
    %c0_i32 = arith.constant 0 : i32
    %c0_i32_0 = arith.constant 0 : i32
    %c0_i32_1 = arith.constant 0 : i32
    %c0_i32_2 = arith.constant 0 : i32
    return %c0_i32, %c0_i32_0, %c0_i32_1 : i32, i32, i32
  }
  func.func @transform_19(%arg0: i32) -> (i32, i32, i32) {
    %c0_i32 = arith.constant 0 : i32
    %c0_i32_0 = arith.constant 0 : i32
    %c0_i32_1 = arith.constant 0 : i32
    %c0_i32_2 = arith.constant 0 : i32
    return %c0_i32, %c0_i32_0, %c0_i32_1 : i32, i32, i32
  }
  func.func @transform_20(%arg0: i32) -> (i32, i32, i32) {
    %c0_i32 = arith.constant 0 : i32
    %c0_i32_0 = arith.constant 0 : i32
    %c0_i32_1 = arith.constant 0 : i32
    %c0_i32_2 = arith.constant 0 : i32
    return %c0_i32, %c0_i32_0, %c0_i32_1 : i32, i32, i32
  }
  func.func @transform_21(%arg0: i32) -> (i32, i32, i32) {
    %c0_i32 = arith.constant 0 : i32
    %c0_i32_0 = arith.constant 0 : i32
    %c0_i32_1 = arith.constant 0 : i32
    %c0_i32_2 = arith.constant 0 : i32
    return %c0_i32, %c0_i32_0, %c0_i32_1 : i32, i32, i32
  }
  func.func @transform_22(%arg0: i32) -> (i32, i32, i32) {
    %c0_i32 = arith.constant 0 : i32
    %c0_i32_0 = arith.constant 0 : i32
    %c0_i32_1 = arith.constant 0 : i32
    %c0_i32_2 = arith.constant 0 : i32
    return %c0_i32, %c0_i32_0, %c0_i32_1 : i32, i32, i32
  }
  func.func @transform_23(%arg0: i32) -> (i32, i32, i32) {
    %c0_i32 = arith.constant 0 : i32
    %c0_i32_0 = arith.constant 0 : i32
    %c0_i32_1 = arith.constant 0 : i32
    %c0_i32_2 = arith.constant 0 : i32
    return %c0_i32, %c0_i32_0, %c0_i32_1 : i32, i32, i32
  }
  func.func @transform_24(%arg0: i32) -> (i32, i32) {
    %c0_i32 = arith.constant 0 : i32
    %c0_i32_0 = arith.constant 0 : i32
    %c0_i32_1 = arith.constant 0 : i32
    return %c0_i32, %c0_i32_0 : i32, i32
  }
  func.func @transform_25(%arg0: i32) -> (i32, i32) {
    %c0_i32 = arith.constant 0 : i32
    %c0_i32_0 = arith.constant 0 : i32
    %c0_i32_1 = arith.constant 0 : i32
    return %c0_i32, %c0_i32_0 : i32, i32
  }
  func.func @transform_26(%arg0: i32) -> (i32, i32, i32) {
    %c0_i32 = arith.constant 0 : i32
    %c0_i32_0 = arith.constant 0 : i32
    %c0_i32_1 = arith.constant 0 : i32
    return %arg0, %c0_i32, %c0_i32_0 : i32, i32, i32
  }
}

</mosaic_0001>

<llo_original>
// kernel: decoder_forward.1
$region0: #{decoder_forward.1}
  #allocation0 [shape = 'u32[]', space=smem, size = 0x4, offset = 0x4, fixed_abs, tag = 'smem constant byte address 0x4 - core index']
  #allocation1 [shape = 'u32[144,128]{1,0:T(1,128)}', space=vmem, size = 0x12000, scoped, tag = 'internal scratch']
  %s0 = inlined_call_operand.vmem [shape: f32[2,8,128], index: 0, kind: input, shape index: {}]
  %s1 = inlined_call_operand.vmem [shape: f32[2,10,128], index: 1, kind: input, shape index: {}]
  %s2 = inlined_call_operand.vmem [shape: s32[2,8,8], index: 2, kind: input, shape index: {}]
  %s3 = inlined_call_operand.vmem [shape: s32[2,1,10], index: 3, kind: input, shape index: {}]
  %s4 = inlined_call_operand.hbm [shape: f32[2,1,128], index: 4, kind: input, shape index: {}]
  %s5 = inlined_call_operand.hbm [shape: f32[2,1,128], index: 5, kind: input, shape index: {}]
  %s6 = inlined_call_operand.hbm [shape: bf16[2,128,384], index: 6, kind: input, shape index: {}]
  %s7 = inlined_call_operand.hbm [shape: f32[2,1,384], index: 7, kind: input, shape index: {}]
  %s8 = inlined_call_operand.hbm [shape: bf16[2,128,128], index: 8, kind: input, shape index: {}]
  %s9 = inlined_call_operand.hbm [shape: f32[2,1,128], index: 9, kind: input, shape index: {}]
  %s10 = inlined_call_operand.hbm [shape: f32[2,1,128], index: 10, kind: input, shape index: {}]
  %s11 = inlined_call_operand.hbm [shape: f32[2,1,128], index: 11, kind: input, shape index: {}]
  %s12 = inlined_call_operand.hbm [shape: bf16[2,128,128], index: 12, kind: input, shape index: {}]
  %s13 = inlined_call_operand.hbm [shape: f32[2,1,128], index: 13, kind: input, shape index: {}]
  %s14 = inlined_call_operand.vmem [shape: bf16[2,128,256], index: 14, kind: input, shape index: {}]
  %s15 = inlined_call_operand.hbm [shape: f32[2,1,256], index: 15, kind: input, shape index: {}]
  %s16 = inlined_call_operand.hbm [shape: bf16[2,128,128], index: 16, kind: input, shape index: {}]
  %s17 = inlined_call_operand.hbm [shape: f32[2,1,128], index: 17, kind: input, shape index: {}]
  %s18 = inlined_call_operand.hbm [shape: f32[2,1,128], index: 18, kind: input, shape index: {}]
  %s19 = inlined_call_operand.hbm [shape: f32[2,1,128], index: 19, kind: input, shape index: {}]
  %s20 = inlined_call_operand.hbm [shape: bf16[2,128,2048], index: 20, kind: input, shape index: {}]
  %s21 = inlined_call_operand.vmem [shape: f32[2,1,2048], index: 21, kind: input, shape index: {}]
  %s22 = inlined_call_operand.hbm [shape: bf16[2,2048,128], index: 22, kind: input, shape index: {}]
  %s23 = inlined_call_operand.hbm [shape: f32[2,1,128], index: 23, kind: input, shape index: {}]
  %s24 = inlined_call_operand.vmem [shape: f32[1,128], index: 24, kind: input, shape index: {}]
  %s25 = inlined_call_operand.hbm [shape: f32[1,128], index: 25, kind: input, shape index: {}]
  %s26 = inlined_call_operand.hbm [shape: f32[2,8,128], index: 26, kind: output, shape index: {}]
  %s27 = sld [smem:[#allocation0]]
  $region213: #{decoder_forward.1} parent=0
    _
  %s29 = ssub.s32 1, %s27
  %s30 = scalar_select 0, %s29, %s27
  $region1: #{decoder_forward.1} parent=0
    #allocation2 [shape = 'u8[1024]{0}', space=vmem, size = 0x400, scoped, tag = 'input window, operand 4, single buffered']
    #allocation3 [shape = 's32[2]{0}', space=sflag, size = 0x8, scoped, tag = 'scoped memory for decoder_forward.1']
    #allocation4 [shape = 's32[2]{0}', space=sflag, size = 0x8, scoped, tag = 'scoped memory for decoder_forward.1']
    #allocation5 [shape = 'u8[1024]{0}', space=vmem, size = 0x400, scoped, tag = 'input window, operand 5, single buffered']
    #allocation6 [shape = 's32[1]{0}', space=sflag, size = 0x4, scoped, tag = 'scoped memory for decoder_forward.1']
    #allocation7 [shape = 'u8[196608]{0}', space=vmem, size = 0x30000, scoped, tag = 'input window, operand 6, single buffered']
    #allocation8 [shape = 'u8[3072]{0}', space=vmem, size = 0xc00, scoped, tag = 'input window, operand 7, single buffered']
    #allocation9 [shape = 's32[1]{0}', space=sflag, size = 0x4, scoped, tag = 'scoped memory for decoder_forward.1']
    #allocation10 [shape = 'u8[65536]{0}', space=vmem, size = 0x10000, scoped, tag = 'input window, operand 8, single buffered']
    #allocation11 [shape = 'u8[1024]{0}', space=vmem, size = 0x400, scoped, tag = 'input window, operand 9, single buffered']
    #allocation12 [shape = 's32[1]{0}', space=sflag, size = 0x4, scoped, tag = 'scoped memory for decoder_forward.1']
    #allocation13 [shape = 'u8[1024]{0}', space=vmem, size = 0x400, scoped, tag = 'input window, operand 10, single buffered']
    #allocation14 [shape = 'u8[1024]{0}', space=vmem, size = 0x400, scoped, tag = 'input window, operand 11, single buffered']
    #allocation15 [shape = 's32[1]{0}', space=sflag, size = 0x4, scoped, tag = 'scoped memory for decoder_forward.1']
    #allocation16 [shape = 'u8[65536]{0}', space=vmem, size = 0x10000, scoped, tag = 'input window, operand 12, single buffered']
    #allocation17 [shape = 'u8[1024]{0}', space=vmem, size = 0x400, scoped, tag = 'input window, operand 13, single buffered']
    #allocation18 [shape = 's32[1]{0}', space=sflag, size = 0x4, scoped, tag = 'scoped memory for decoder_forward.1']
    #allocation19 [shape = 'u8[2048]{0}', space=vmem, size = 0x800, scoped, tag = 'input window, operand 15, single buffered']
    #allocation20 [shape = 'u8[65536]{0}', space=vmem, size = 0x10000, scoped, tag = 'input window, operand 16, single buffered']
    #allocation21 [shape = 's32[1]{0}', space=sflag, size = 0x4, scoped, tag = 'scoped memory for decoder_forward.1']
    #allocation22 [shape = 'u8[1024]{0}', space=vmem, size = 0x400, scoped, tag = 'input window, operand 17, single buffered']
    #allocation23 [shape = 'u8[1024]{0}', space=vmem, size = 0x400, scoped, tag = 'input window, operand 18, single buffered']
    #allocation24 [shape = 's32[1]{0}', space=sflag, size = 0x4, scoped, tag = 'scoped memory for decoder_forward.1']
    #allocation25 [shape = 'u8[1024]{0}', space=vmem, size = 0x400, scoped, tag = 'input window, operand 19, single buffered']
    #allocation26 [shape = 'u8[1048576]{0}', space=vmem, size = 0x100000, scoped, tag = 'input window, operand 20, single buffered']
    #allocation27 [shape = 's32[1]{0}', space=sflag, size = 0x4, scoped, tag = 'scoped memory for decoder_forward.1']
    #allocation28 [shape = 'u8[1048576]{0}', space=vmem, size = 0x100000, scoped, tag = 'input window, operand 22, single buffered']
    #allocation29 [shape = 'u8[1024]{0}', space=vmem, size = 0x400, scoped, tag = 'input window, operand 23, single buffered']
    #allocation30 [shape = 's32[1]{0}', space=sflag, size = 0x4, scoped, tag = 'scoped memory for decoder_forward.1']
    #allocation31 [shape = 'u8[512]{0}', space=vmem, size = 0x400, scoped, tag = 'input window, operand 25, single buffered']
    #allocation32 [shape = 'u8[8192]{0}', space=vmem, size = 0x2000, scoped, tag = 'output window, operand 0']
    %31 = vsyncpa [#allocation3], 0
    %32 = vsyncpa [#allocation6], 0
    %33 = vsyncpa [#allocation9], 0
    %34 = vsyncpa [#allocation12], 0
    %35 = vsyncpa [#allocation15], 0
    %36 = vsyncpa [#allocation18], 0
    %37 = vsyncpa [#allocation21], 0
    %38 = vsyncpa [#allocation24], 0
    %39 = vsyncpa [#allocation27], 0
    %40 = vsyncpa [#allocation30], 0
    %41 = vsyncpa [#allocation4], 0
    %s42 = scalar_lea.sflag [#allocation4], 1
    %43 = vsyncpa %s42, 0
    loop: start=0, step=1, limit=4
    $region2: #{decoder_forward.1} parent=1 // loop_pre_header
      _
    $region3: #{decoder_forward.1} parent=1 // loop_header
      %s45 = sphi 0, %s49
      %p46 = scmp.ge.s32.totalorder %s45, 4
      %s55 = sphi 0, %s57
      %s58 = sphi 0, %s55
      %s59 = sphi 0, %s58
      %s75 = sphi 0, %s59
      %s81 = sphi 0, %s83
      %s84 = sphi 0, %s81
      %s85 = sphi 0, %s84
      %s101 = sphi 0, %s85
      %s107 = sphi 0, %s109
      %s110 = sphi 0, %s107
      %s111 = sphi 0, %s110
      %s127 = sphi 0, %s111
      %s133 = sphi 0, %s135
      %s136 = sphi 0, %s133
      %s137 = sphi 0, %s136
      %s153 = sphi 0, %s137
      %s157 = sphi 0, %s157
      %s159 = sphi 0, %s157
      %s160 = sphi 0, %s159
      %s174 = sphi 0, %s160
      %s178 = sphi 0, %s178
      %s180 = sphi 0, %s178
      %s181 = sphi 0, %s180
      %s195 = sphi 0, %s181
      %s199 = sphi 0, %s199
      %s201 = sphi 0, %s199
      %s202 = sphi 0, %s201
      %s216 = sphi 0, %s202
      %s220 = sphi 0, %s220
      %s222 = sphi 0, %s220
      %s223 = sphi 0, %s222
      %s237 = sphi 0, %s223
      %s241 = sphi 0, %s241
      %s243 = sphi 0, %s241
      %s244 = sphi 0, %s243
      %s258 = sphi 0, %s244
      %s262 = sphi 0, %s262
      %s264 = sphi 0, %s262
      %s265 = sphi 0, %s264
      %s279 = sphi 0, %s265
      %s283 = sphi 0, %s283
      %s285 = sphi 0, %s283
      %s286 = sphi 0, %s285
      %s300 = sphi 0, %s286
      %s304 = sphi 0, %s304
      %s306 = sphi 0, %s304
      %s307 = sphi 0, %s306
      %s321 = sphi 0, %s307
      %s325 = sphi 0, %s325
      %s327 = sphi 0, %s325
      %s328 = sphi 0, %s327
      %s342 = sphi 0, %s328
      %s346 = sphi 0, %s346
      %s348 = sphi 0, %s346
      %s349 = sphi 0, %s348
      %s363 = sphi 0, %s349
      %s367 = sphi 0, %s367
      %s369 = sphi 0, %s367
      %s370 = sphi 0, %s369
      %s384 = sphi 0, %s370
      %s388 = sphi 0, %s388
      %s390 = sphi 0, %s388
      %s391 = sphi 0, %s390
      %s405 = sphi 0, %s391
      %s409 = sphi 0, %s409
      %s411 = sphi 0, %s409
      %s412 = sphi 0, %s411
      %s426 = sphi 0, %s412
      %s430 = sphi 0, %s430
      %s432 = sphi 0, %s430
      %s433 = sphi 0, %s432
      %s447 = sphi 0, %s433
      %s451 = sphi 0, %s451
      %s453 = sphi 0, %s451
      %s454 = sphi 0, %s453
      %s468 = sphi 0, %s454
      %s472 = sphi 0, %s472
      %s474 = sphi 0, %s472
      %s475 = sphi 0, %s474
      %s489 = sphi 0, %s475
      %s493 = sphi 0, %s493
      %s495 = sphi 0, %s493
      %s496 = sphi 0, %s495
      %s510 = sphi 0, %s496
      %s514 = sphi 0, %s514
      %s516 = sphi 0, %s514
      %s517 = sphi 0, %s516
      %s531 = sphi 0, %s517
      %s535 = sphi 0, %s535
      %s537 = sphi 0, %s535
      %s538 = sphi 0, %s537
      %s552 = sphi 0, %s538
      %s556 = sphi 0, %s556
      %s558 = sphi 0, %s556
      %s559 = sphi 0, %s558
      %s573 = sphi 0, %s559
      %s577 = sphi 0, %s577
      %s579 = sphi 0, %s577
      %s580 = sphi 0, %s579
      %s594 = sphi 0, %s580
      %s598 = sphi 0, %s598
      %s600 = sphi 0, %s598
      %s601 = sphi 0, %s600
      %s615 = sphi 0, %s601
      %s621 = sphi 0, %s623
      %s624 = sphi 0, %s621
      %s625 = sphi 0, %s624
      %s641 = sphi 0, %s625
    $region4: #{decoder_forward.1} parent=1 // loop_header_branch
      %48 = sbr.rel (%p46) target = $region8
    $region5: #{decoder_forward.1} parent=1 // loop_body
      %s50 = ssub.s32 %s45, 1
      %s51 = ssub.s32 %s45, 2
      %s52 = sadd.s32 %s45, 1
      %s53 = ssub.s32 %s45, %s52
      %p54 = scmp.eq.s32.totalorder %s53, 0
      %s56 = sadd.s32 %s55, 1
      %s57 = scalar_select %p54, %s55, %s56
      %p60 = pneg %p54
      %p61 = scmp.eq.s32.totalorder %s45, 1
      %p62 = por %p60, %p61
      %p63 = scmp.ne.s32.totalorder %s55, %s58
      %p64 = scmp.eq.s32.totalorder %s45, 0
      %p65 = por %p63, %p64
      %p66 = scmp.ne.s32.totalorder %s55, %s58
      %p67 = scmp.eq.s32.totalorder %s50, 1
      %p68 = por %p66, %p67
      %p69 = scmp.ne.s32.totalorder %s58, %s59
      %p70 = scmp.eq.s32.totalorder %s50, 0
      %p71 = por %p69, %p70
      %p72 = scmp.ne.s32.totalorder %s58, %s59
      %p73 = scmp.eq.s32.totalorder %s51, 1
      %p74 = por %p72, %p73
      %p76 = scmp.ne.s32.totalorder %s59, %s75
      %p77 = scmp.eq.s32.totalorder %s51, 0
      %p78 = por %p76, %p77
      %s79 = ssub.s32 %s45, %s52
      %p80 = scmp.eq.s32.totalorder %s79, 0
      %s82 = sadd.s32 %s81, 1
      %s83 = scalar_select %p80, %s81, %s82
      %p86 = pneg %p80
      %p87 = scmp.eq.s32.totalorder %s45, 1
      %p88 = por %p86, %p87
      %p89 = scmp.ne.s32.totalorder %s81, %s84
      %p90 = scmp.eq.s32.totalorder %s45, 0
      %p91 = por %p89, %p90
      %p92 = scmp.ne.s32.totalorder %s81, %s84
      %p93 = scmp.eq.s32.totalorder %s50, 1
      %p94 = por %p92, %p93
      %p95 = scmp.ne.s32.totalorder %s84, %s85
      %p96 = scmp.eq.s32.totalorder %s50, 0
      %p97 = por %p95, %p96
      %p98 = scmp.ne.s32.totalorder %s84, %s85
      %p99 = scmp.eq.s32.totalorder %s51, 1
      %p100 = por %p98, %p99
      %p102 = scmp.ne.s32.totalorder %s85, %s101
      %p103 = scmp.eq.s32.totalorder %s51, 0
      %p104 = por %p102, %p103
      %s105 = ssub.s32 %s45, %s52
      %p106 = scmp.eq.s32.totalorder %s105, 0
      %s108 = sadd.s32 %s107, 1
      %s109 = scalar_select %p106, %s107, %s108
      %p112 = pneg %p106
      %p113 = scmp.eq.s32.totalorder %s45, 1
      %p114 = por %p112, %p113
      %p115 = scmp.ne.s32.totalorder %s107, %s110
      %p116 = scmp.eq.s32.totalorder %s45, 0
      %p117 = por %p115, %p116
      %p118 = scmp.ne.s32.totalorder %s107, %s110
      %p119 = scmp.eq.s32.totalorder %s50, 1
      %p120 = por %p118, %p119
      %p121 = scmp.ne.s32.totalorder %s110, %s111
      %p122 = scmp.eq.s32.totalorder %s50, 0
      %p123 = por %p121, %p122
      %p124 = scmp.ne.s32.totalorder %s110, %s111
      %p125 = scmp.eq.s32.totalorder %s51, 1
      %p126 = por %p124, %p125
      %p128 = scmp.ne.s32.totalorder %s111, %s127
      %p129 = scmp.eq.s32.totalorder %s51, 0
      %p130 = por %p128, %p129
      %s131 = ssub.s32 %s45, %s52
      %p132 = scmp.eq.s32.totalorder %s131, 0
      %s134 = sadd.s32 %s133, 1
      %s135 = scalar_select %p132, %s133, %s134
      %p138 = pneg %p132
      %p139 = scmp.eq.s32.totalorder %s45, 1
      %p140 = por %p138, %p139
      %p141 = scmp.ne.s32.totalorder %s133, %s136
      %p142 = scmp.eq.s32.totalorder %s45, 0
      %p143 = por %p141, %p142
      %p144 = scmp.ne.s32.totalorder %s133, %s136
      %p145 = scmp.eq.s32.totalorder %s50, 1
      %p146 = por %p144, %p145
      %p147 = scmp.ne.s32.totalorder %s136, %s137
      %p148 = scmp.eq.s32.totalorder %s50, 0
      %p149 = por %p147, %p148
      %p150 = scmp.ne.s32.totalorder %s136, %s137
      %p151 = scmp.eq.s32.totalorder %s51, 1
      %p152 = por %p150, %p151
      %p154 = scmp.ne.s32.totalorder %s137, %s153
      %p155 = scmp.eq.s32.totalorder %s51, 0
      %p156 = por %p154, %p155
      %s158 = sadd.s32 %s157, 1
      %p161 = scmp.eq.s32.totalorder %s45, 1
      %p162 = scmp.ne.s32.totalorder %s157, %s159
      %p163 = scmp.eq.s32.totalorder %s45, 0
      %p164 = por %p162, %p163
      %p165 = scmp.ne.s32.totalorder %s157, %s159
      %p166 = scmp.eq.s32.totalorder %s50, 1
      %p167 = por %p165, %p166
      %p168 = scmp.ne.s32.totalorder %s159, %s160
      %p169 = scmp.eq.s32.totalorder %s50, 0
      %p170 = por %p168, %p169
      %p171 = scmp.ne.s32.totalorder %s159, %s160
      %p172 = scmp.eq.s32.totalorder %s51, 1
      %p173 = por %p171, %p172
      %p175 = scmp.ne.s32.totalorder %s160, %s174
      %p176 = scmp.eq.s32.totalorder %s51, 0
      %p177 = por %p175, %p176
      %s179 = sadd.s32 %s178, 1
      %p182 = scmp.eq.s32.totalorder %s45, 1
      %p183 = scmp.ne.s32.totalorder %s178, %s180
      %p184 = scmp.eq.s32.totalorder %s45, 0
      %p185 = por %p183, %p184
      %p186 = scmp.ne.s32.totalorder %s178, %s180
      %p187 = scmp.eq.s32.totalorder %s50, 1
      %p188 = por %p186, %p187
      %p189 = scmp.ne.s32.totalorder %s180, %s181
      %p190 = scmp.eq.s32.totalorder %s50, 0
      %p191 = por %p189, %p190
      %p192 = scmp.ne.s32.totalorder %s180, %s181
      %p193 = scmp.eq.s32.totalorder %s51, 1
      %p194 = por %p192, %p193
      %p196 = scmp.ne.s32.totalorder %s181, %s195
      %p197 = scmp.eq.s32.totalorder %s51, 0
      %p198 = por %p196, %p197
      %s200 = sadd.s32 %s199, 1
      %p203 = scmp.eq.s32.totalorder %s45, 1
      %p204 = scmp.ne.s32.totalorder %s199, %s201
      %p205 = scmp.eq.s32.totalorder %s45, 0
      %p206 = por %p204, %p205
      %p207 = scmp.ne.s32.totalorder %s199, %s201
      %p208 = scmp.eq.s32.totalorder %s50, 1
      %p209 = por %p207, %p208
      %p210 = scmp.ne.s32.totalorder %s201, %s202
      %p211 = scmp.eq.s32.totalorder %s50, 0
      %p212 = por %p210, %p211
      %p213 = scmp.ne.s32.totalorder %s201, %s202
      %p214 = scmp.eq.s32.totalorder %s51, 1
      %p215 = por %p213, %p214
      %p217 = scmp.ne.s32.totalorder %s202, %s216
      %p218 = scmp.eq.s32.totalorder %s51, 0
      %p219 = por %p217, %p218
      %s221 = sadd.s32 %s220, 1
      %p224 = scmp.eq.s32.totalorder %s45, 1
      %p225 = scmp.ne.s32.totalorder %s220, %s222
      %p226 = scmp.eq.s32.totalorder %s45, 0
      %p227 = por %p225, %p226
      %p228 = scmp.ne.s32.totalorder %s220, %s222
      %p229 = scmp.eq.s32.totalorder %s50, 1
      %p230 = por %p228, %p229
      %p231 = scmp.ne.s32.totalorder %s222, %s223
      %p232 = scmp.eq.s32.totalorder %s50, 0
      %p233 = por %p231, %p232
      %p234 = scmp.ne.s32.totalorder %s222, %s223
      %p235 = scmp.eq.s32.totalorder %s51, 1
      %p236 = por %p234, %p235
      %p238 = scmp.ne.s32.totalorder %s223, %s237
      %p239 = scmp.eq.s32.totalorder %s51, 0
      %p240 = por %p238, %p239
      %s242 = sadd.s32 %s241, 1
      %p245 = scmp.eq.s32.totalorder %s45, 1
      %p246 = scmp.ne.s32.totalorder %s241, %s243
      %p247 = scmp.eq.s32.totalorder %s45, 0
      %p248 = por %p246, %p247
      %p249 = scmp.ne.s32.totalorder %s241, %s243
      %p250 = scmp.eq.s32.totalorder %s50, 1
      %p251 = por %p249, %p250
      %p252 = scmp.ne.s32.totalorder %s243, %s244
      %p253 = scmp.eq.s32.totalorder %s50, 0
      %p254 = por %p252, %p253
      %p255 = scmp.ne.s32.totalorder %s243, %s244
      %p256 = scmp.eq.s32.totalorder %s51, 1
      %p257 = por %p255, %p256
      %p259 = scmp.ne.s32.totalorder %s244, %s258
      %p260 = scmp.eq.s32.totalorder %s51, 0
      %p261 = por %p259, %p260
      %s263 = sadd.s32 %s262, 1
      %p266 = scmp.eq.s32.totalorder %s45, 1
      %p267 = scmp.ne.s32.totalorder %s262, %s264
      %p268 = scmp.eq.s32.totalorder %s45, 0
      %p269 = por %p267, %p268
      %p270 = scmp.ne.s32.totalorder %s262, %s264
      %p271 = scmp.eq.s32.totalorder %s50, 1
      %p272 = por %p270, %p271
      %p273 = scmp.ne.s32.totalorder %s264, %s265
      %p274 = scmp.eq.s32.totalorder %s50, 0
      %p275 = por %p273, %p274
      %p276 = scmp.ne.s32.totalorder %s264, %s265
      %p277 = scmp.eq.s32.totalorder %s51, 1
      %p278 = por %p276, %p277
      %p280 = scmp.ne.s32.totalorder %s265, %s279
      %p281 = scmp.eq.s32.totalorder %s51, 0
      %p282 = por %p280, %p281
      %s284 = sadd.s32 %s283, 1
      %p287 = scmp.eq.s32.totalorder %s45, 1
      %p288 = scmp.ne.s32.totalorder %s283, %s285
      %p289 = scmp.eq.s32.totalorder %s45, 0
      %p290 = por %p288, %p289
      %p291 = scmp.ne.s32.totalorder %s283, %s285
      %p292 = scmp.eq.s32.totalorder %s50, 1
      %p293 = por %p291, %p292
      %p294 = scmp.ne.s32.totalorder %s285, %s286
      %p295 = scmp.eq.s32.totalorder %s50, 0
      %p296 = por %p294, %p295
      %p297 = scmp.ne.s32.totalorder %s285, %s286
      %p298 = scmp.eq.s32.totalorder %s51, 1
      %p299 = por %p297, %p298
      %p301 = scmp.ne.s32.totalorder %s286, %s300
      %p302 = scmp.eq.s32.totalorder %s51, 0
      %p303 = por %p301, %p302
      %s305 = sadd.s32 %s304, 1
      %p308 = scmp.eq.s32.totalorder %s45, 1
      %p309 = scmp.ne.s32.totalorder %s304, %s306
      %p310 = scmp.eq.s32.totalorder %s45, 0
      %p311 = por %p309, %p310
      %p312 = scmp.ne.s32.totalorder %s304, %s306
      %p313 = scmp.eq.s32.totalorder %s50, 1
      %p314 = por %p312, %p313
      %p315 = scmp.ne.s32.totalorder %s306, %s307
      %p316 = scmp.eq.s32.totalorder %s50, 0
      %p317 = por %p315, %p316
      %p318 = scmp.ne.s32.totalorder %s306, %s307
      %p319 = scmp.eq.s32.totalorder %s51, 1
      %p320 = por %p318, %p319
      %p322 = scmp.ne.s32.totalorder %s307, %s321
      %p323 = scmp.eq.s32.totalorder %s51, 0
      %p324 = por %p322, %p323
      %s326 = sadd.s32 %s325, 1
      %p329 = scmp.eq.s32.totalorder %s45, 1
      %p330 = scmp.ne.s32.totalorder %s325, %s327
      %p331 = scmp.eq.s32.totalorder %s45, 0
      %p332 = por %p330, %p331
      %p333 = scmp.ne.s32.totalorder %s325, %s327
      %p334 = scmp.eq.s32.totalorder %s50, 1
      %p335 = por %p333, %p334
      %p336 = scmp.ne.s32.totalorder %s327, %s328
      %p337 = scmp.eq.s32.totalorder %s50, 0
      %p338 = por %p336, %p337
      %p339 = scmp.ne.s32.totalorder %s327, %s328
      %p340 = scmp.eq.s32.totalorder %s51, 1
      %p341 = por %p339, %p340
      %p343 = scmp.ne.s32.totalorder %s328, %s342
      %p344 = scmp.eq.s32.totalorder %s51, 0
      %p345 = por %p343, %p344
      %s347 = sadd.s32 %s346, 1
      %p350 = scmp.eq.s32.totalorder %s45, 1
      %p351 = scmp.ne.s32.totalorder %s346, %s348
      %p352 = scmp.eq.s32.totalorder %s45, 0
      %p353 = por %p351, %p352
      %p354 = scmp.ne.s32.totalorder %s346, %s348
      %p355 = scmp.eq.s32.totalorder %s50, 1
      %p356 = por %p354, %p355
      %p357 = scmp.ne.s32.totalorder %s348, %s349
      %p358 = scmp.eq.s32.totalorder %s50, 0
      %p359 = por %p357, %p358
      %p360 = scmp.ne.s32.totalorder %s348, %s349
      %p361 = scmp.eq.s32.totalorder %s51, 1
      %p362 = por %p360, %p361
      %p364 = scmp.ne.s32.totalorder %s349, %s363
      %p365 = scmp.eq.s32.totalorder %s51, 0
      %p366 = por %p364, %p365
      %s368 = sadd.s32 %s367, 1
      %p371 = scmp.eq.s32.totalorder %s45, 1
      %p372 = scmp.ne.s32.totalorder %s367, %s369
      %p373 = scmp.eq.s32.totalorder %s45, 0
      %p374 = por %p372, %p373
      %p375 = scmp.ne.s32.totalorder %s367, %s369
      %p376 = scmp.eq.s32.totalorder %s50, 1
      %p377 = por %p375, %p376
      %p378 = scmp.ne.s32.totalorder %s369, %s370
      %p379 = scmp.eq.s32.totalorder %s50, 0
      %p380 = por %p378, %p379
      %p381 = scmp.ne.s32.totalorder %s369, %s370
      %p382 = scmp.eq.s32.totalorder %s51, 1
      %p383 = por %p381, %p382
      %p385 = scmp.ne.s32.totalorder %s370, %s384
      %p386 = scmp.eq.s32.totalorder %s51, 0
      %p387 = por %p385, %p386
      %s389 = sadd.s32 %s388, 1
      %p392 = scmp.eq.s32.totalorder %s45, 1
      %p393 = scmp.ne.s32.totalorder %s388, %s390
      %p394 = scmp.eq.s32.totalorder %s45, 0
      %p395 = por %p393, %p394
      %p396 = scmp.ne.s32.totalorder %s388, %s390
      %p397 = scmp.eq.s32.totalorder %s50, 1
      %p398 = por %p396, %p397
      %p399 = scmp.ne.s32.totalorder %s390, %s391
      %p400 = scmp.eq.s32.totalorder %s50, 0
      %p401 = por %p399, %p400
      %p402 = scmp.ne.s32.totalorder %s390, %s391
      %p403 = scmp.eq.s32.totalorder %s51, 1
      %p404 = por %p402, %p403
      %p406 = scmp.ne.s32.totalorder %s391, %s405
      %p407 = scmp.eq.s32.totalorder %s51, 0
      %p408 = por %p406, %p407
      %s410 = sadd.s32 %s409, 1
      %p413 = scmp.eq.s32.totalorder %s45, 1
      %p414 = scmp.ne.s32.totalorder %s409, %s411
      %p415 = scmp.eq.s32.totalorder %s45, 0
      %p416 = por %p414, %p415
      %p417 = scmp.ne.s32.totalorder %s409, %s411
      %p418 = scmp.eq.s32.totalorder %s50, 1
      %p419 = por %p417, %p418
      %p420 = scmp.ne.s32.totalorder %s411, %s412
      %p421 = scmp.eq.s32.totalorder %s50, 0
      %p422 = por %p420, %p421
      %p423 = scmp.ne.s32.totalorder %s411, %s412
      %p424 = scmp.eq.s32.totalorder %s51, 1
      %p425 = por %p423, %p424
      %p427 = scmp.ne.s32.totalorder %s412, %s426
      %p428 = scmp.eq.s32.totalorder %s51, 0
      %p429 = por %p427, %p428
      %s431 = sadd.s32 %s430, 1
      %p434 = scmp.eq.s32.totalorder %s45, 1
      %p435 = scmp.ne.s32.totalorder %s430, %s432
      %p436 = scmp.eq.s32.totalorder %s45, 0
      %p437 = por %p435, %p436
      %p438 = scmp.ne.s32.totalorder %s430, %s432
      %p439 = scmp.eq.s32.totalorder %s50, 1
      %p440 = por %p438, %p439
      %p441 = scmp.ne.s32.totalorder %s432, %s433
      %p442 = scmp.eq.s32.totalorder %s50, 0
      %p443 = por %p441, %p442
      %p444 = scmp.ne.s32.totalorder %s432, %s433
      %p445 = scmp.eq.s32.totalorder %s51, 1
      %p446 = por %p444, %p445
      %p448 = scmp.ne.s32.totalorder %s433, %s447
      %p449 = scmp.eq.s32.totalorder %s51, 0
      %p450 = por %p448, %p449
      %s452 = sadd.s32 %s451, 1
      %p455 = scmp.eq.s32.totalorder %s45, 1
      %p456 = scmp.ne.s32.totalorder %s451, %s453
      %p457 = scmp.eq.s32.totalorder %s45, 0
      %p458 = por %p456, %p457
      %p459 = scmp.ne.s32.totalorder %s451, %s453
      %p460 = scmp.eq.s32.totalorder %s50, 1
      %p461 = por %p459, %p460
      %p462 = scmp.ne.s32.totalorder %s453, %s454
      %p463 = scmp.eq.s32.totalorder %s50, 0
      %p464 = por %p462, %p463
      %p465 = scmp.ne.s32.totalorder %s453, %s454
      %p466 = scmp.eq.s32.totalorder %s51, 1
      %p467 = por %p465, %p466
      %p469 = scmp.ne.s32.totalorder %s454, %s468
      %p470 = scmp.eq.s32.totalorder %s51, 0
      %p471 = por %p469, %p470
      %s473 = sadd.s32 %s472, 1
      %p476 = scmp.eq.s32.totalorder %s45, 1
      %p477 = scmp.ne.s32.totalorder %s472, %s474
      %p478 = scmp.eq.s32.totalorder %s45, 0
      %p479 = por %p477, %p478
      %p480 = scmp.ne.s32.totalorder %s472, %s474
      %p481 = scmp.eq.s32.totalorder %s50, 1
      %p482 = por %p480, %p481
      %p483 = scmp.ne.s32.totalorder %s474, %s475
      %p484 = scmp.eq.s32.totalorder %s50, 0
      %p485 = por %p483, %p484
      %p486 = scmp.ne.s32.totalorder %s474, %s475
      %p487 = scmp.eq.s32.totalorder %s51, 1
      %p488 = por %p486, %p487
      %p490 = scmp.ne.s32.totalorder %s475, %s489
      %p491 = scmp.eq.s32.totalorder %s51, 0
      %p492 = por %p490, %p491
      %s494 = sadd.s32 %s493, 1
      %p497 = scmp.eq.s32.totalorder %s45, 1
      %p498 = scmp.ne.s32.totalorder %s493, %s495
      %p499 = scmp.eq.s32.totalorder %s45, 0
      %p500 = por %p498, %p499
      %p501 = scmp.ne.s32.totalorder %s493, %s495
      %p502 = scmp.eq.s32.totalorder %s50, 1
      %p503 = por %p501, %p502
      %p504 = scmp.ne.s32.totalorder %s495, %s496
      %p505 = scmp.eq.s32.totalorder %s50, 0
      %p506 = por %p504, %p505
      %p507 = scmp.ne.s32.totalorder %s495, %s496
      %p508 = scmp.eq.s32.totalorder %s51, 1
      %p509 = por %p507, %p508
      %p511 = scmp.ne.s32.totalorder %s496, %s510
      %p512 = scmp.eq.s32.totalorder %s51, 0
      %p513 = por %p511, %p512
      %s515 = sadd.s32 %s514, 1
      %p518 = scmp.eq.s32.totalorder %s45, 1
      %p519 = scmp.ne.s32.totalorder %s514, %s516
      %p520 = scmp.eq.s32.totalorder %s45, 0
      %p521 = por %p519, %p520
      %p522 = scmp.ne.s32.totalorder %s514, %s516
      %p523 = scmp.eq.s32.totalorder %s50, 1
      %p524 = por %p522, %p523
      %p525 = scmp.ne.s32.totalorder %s516, %s517
      %p526 = scmp.eq.s32.totalorder %s50, 0
      %p527 = por %p525, %p526
      %p528 = scmp.ne.s32.totalorder %s516, %s517
      %p529 = scmp.eq.s32.totalorder %s51, 1
      %p530 = por %p528, %p529
      %p532 = scmp.ne.s32.totalorder %s517, %s531
      %p533 = scmp.eq.s32.totalorder %s51, 0
      %p534 = por %p532, %p533
      %s536 = sadd.s32 %s535, 1
      %p539 = scmp.eq.s32.totalorder %s45, 1
      %p540 = scmp.ne.s32.totalorder %s535, %s537
      %p541 = scmp.eq.s32.totalorder %s45, 0
      %p542 = por %p540, %p541
      %p543 = scmp.ne.s32.totalorder %s535, %s537
      %p544 = scmp.eq.s32.totalorder %s50, 1
      %p545 = por %p543, %p544
      %p546 = scmp.ne.s32.totalorder %s537, %s538
      %p547 = scmp.eq.s32.totalorder %s50, 0
      %p548 = por %p546, %p547
      %p549 = scmp.ne.s32.totalorder %s537, %s538
      %p550 = scmp.eq.s32.totalorder %s51, 1
      %p551 = por %p549, %p550
      %p553 = scmp.ne.s32.totalorder %s538, %s552
      %p554 = scmp.eq.s32.totalorder %s51, 0
      %p555 = por %p553, %p554
      %s557 = sadd.s32 %s556, 1
      %p560 = scmp.eq.s32.totalorder %s45, 1
      %p561 = scmp.ne.s32.totalorder %s556, %s558
      %p562 = scmp.eq.s32.totalorder %s45, 0
      %p563 = por %p561, %p562
      %p564 = scmp.ne.s32.totalorder %s556, %s558
      %p565 = scmp.eq.s32.totalorder %s50, 1
      %p566 = por %p564, %p565
      %p567 = scmp.ne.s32.totalorder %s558, %s559
      %p568 = scmp.eq.s32.totalorder %s50, 0
      %p569 = por %p567, %p568
      %p570 = scmp.ne.s32.totalorder %s558, %s559
      %p571 = scmp.eq.s32.totalorder %s51, 1
      %p572 = por %p570, %p571
      %p574 = scmp.ne.s32.totalorder %s559, %s573
      %p575 = scmp.eq.s32.totalorder %s51, 0
      %p576 = por %p574, %p575
      %s578 = sadd.s32 %s577, 1
      %p581 = scmp.eq.s32.totalorder %s45, 1
      %p582 = scmp.ne.s32.totalorder %s577, %s579
      %p583 = scmp.eq.s32.totalorder %s45, 0
      %p584 = por %p582, %p583
      %p585 = scmp.ne.s32.totalorder %s577, %s579
      %p586 = scmp.eq.s32.totalorder %s50, 1
      %p587 = por %p585, %p586
      %p588 = scmp.ne.s32.totalorder %s579, %s580
      %p589 = scmp.eq.s32.totalorder %s50, 0
      %p590 = por %p588, %p589
      %p591 = scmp.ne.s32.totalorder %s579, %s580
      %p592 = scmp.eq.s32.totalorder %s51, 1
      %p593 = por %p591, %p592
      %p595 = scmp.ne.s32.totalorder %s580, %s594
      %p596 = scmp.eq.s32.totalorder %s51, 0
      %p597 = por %p595, %p596
      %s599 = sadd.s32 %s598, 1
      %p602 = scmp.eq.s32.totalorder %s45, 1
      %p603 = scmp.ne.s32.totalorder %s598, %s600
      %p604 = scmp.eq.s32.totalorder %s45, 0
      %p605 = por %p603, %p604
      %p606 = scmp.ne.s32.totalorder %s598, %s600
      %p607 = scmp.eq.s32.totalorder %s50, 1
      %p608 = por %p606, %p607
      %p609 = scmp.ne.s32.totalorder %s600, %s601
      %p610 = scmp.eq.s32.totalorder %s50, 0
      %p611 = por %p609, %p610
      %p612 = scmp.ne.s32.totalorder %s600, %s601
      %p613 = scmp.eq.s32.totalorder %s51, 1
      %p614 = por %p612, %p613
      %p616 = scmp.ne.s32.totalorder %s601, %s615
      %p617 = scmp.eq.s32.totalorder %s51, 0
      %p618 = por %p616, %p617
      %s619 = ssub.s32 %s45, %s52
      %p620 = scmp.eq.s32.totalorder %s619, 0
      %s622 = sadd.s32 %s621, 1
      %s623 = scalar_select %p620, %s621, %s622
      %p626 = pneg %p620
      %p627 = scmp.eq.s32.totalorder %s45, 1
      %p628 = por %p626, %p627
      %p629 = scmp.ne.s32.totalorder %s621, %s624
      %p630 = scmp.eq.s32.totalorder %s45, 0
      %p631 = por %p629, %p630
      %p632 = scmp.ne.s32.totalorder %s621, %s624
      %p633 = scmp.eq.s32.totalorder %s50, 1
      %p634 = por %p632, %p633
      %p635 = scmp.ne.s32.totalorder %s624, %s625
      %p636 = scmp.eq.s32.totalorder %s50, 0
      %p637 = por %p635, %p636
      %p638 = scmp.ne.s32.totalorder %s624, %s625
      %p639 = scmp.eq.s32.totalorder %s51, 1
      %p640 = por %p638, %p639
      %p642 = scmp.ne.s32.totalorder %s625, %s641
      %p643 = scmp.eq.s32.totalorder %s51, 0
      %p644 = por %p642, %p643
      %p645 = scmp.le.s32.totalorder 1, %s45
      %p646 = scmp.lt.s32.totalorder %s45, 3
      %p647 = pnand %p645, %p646
      %p648 = pneg %p647
      // Predicated region
      $region9: #{decoder_forward.1} parent=5 // pred_check
        _
      $region10: #{decoder_forward.1} parent=5 // pred_check_branch
        %650 = sbr.rel (%p647) target = $region12
      $region11: #{decoder_forward.1} parent=5 // pred_region
        %s651 = ssub.s32 %s45, 1
        // Predicated region
        $region13: #{decoder_forward.1} parent=11 // pred_check
          %p652 = pneg %p170
        $region14: #{decoder_forward.1} parent=11 // pred_check_branch
          %654 = sbr.rel (%p652) target = $region16
        $region15: #{decoder_forward.1} parent=11 // pred_region
          %s656 = ssub.s32 32, 32
          %657 = vsyncadd [#allocation3], %s656
          %s658 = sshll.u32 [#allocation2], 4
          %s659 = int_to_ptr.vmem [resolvable:$true] %s658
          %664 = dma.hbm_to_vmem [thread:$0]  %s4, 32, %s659, [#allocation3], 16, 16, 1
        $region16: #{decoder_forward.1} parent=11 // pred_fallthru
          _
        // Predicated region
        $region17: #{decoder_forward.1} parent=11 // pred_check
          %p665 = pneg %p191
        $region18: #{decoder_forward.1} parent=11 // pred_check_branch
          %667 = sbr.rel (%p665) target = $region20
        $region19: #{decoder_forward.1} parent=11 // pred_region
          %s669 = ssub.s32 32, 32
          %670 = vsyncadd [#allocation6], %s669
          %s671 = sshll.u32 [#allocation5], 4
          %s672 = int_to_ptr.vmem [resolvable:$true] %s671
          %677 = dma.hbm_to_vmem [thread:$0]  %s5, 32, %s672, [#allocation6], 16, 16, 1
        $region20: #{decoder_forward.1} parent=11 // pred_fallthru
          _
        // Predicated region
        $region21: #{decoder_forward.1} parent=11 // pred_check
          %p678 = pneg %p212
        $region22: #{decoder_forward.1} parent=11 // pred_check_branch
          %680 = sbr.rel (%p678) target = $region24
        $region23: #{decoder_forward.1} parent=11 // pred_region
          %s682 = ssub.s32 6144, 6144
          %683 = vsyncadd [#allocation6], %s682
          %s684 = sshll.u32 [#allocation7], 4
          %s685 = int_to_ptr.vmem [resolvable:$true] %s684
          %690 = dma.hbm_to_vmem [thread:$0]  %s6, 6144, %s685, [#allocation6], 192, 192, 12
        $region24: #{decoder_forward.1} parent=11 // pred_fallthru
          _
        // Predicated region
        $region25: #{decoder_forward.1} parent=11 // pred_check
          %p691 = pneg %p233
        $region26: #{decoder_forward.1} parent=11 // pred_check_branch
          %693 = sbr.rel (%p691) target = $region28
        $region27: #{decoder_forward.1} parent=11 // pred_region
          %s695 = ssub.s32 96, 96
          %696 = vsyncadd [#allocation9], %s695
          %s697 = sshll.u32 [#allocation8], 4
          %s698 = int_to_ptr.vmem [resolvable:$true] %s697
          %703 = dma.hbm_to_vmem [thread:$0]  %s7, 96, %s698, [#allocation9], 48, 48, 3
        $region28: #{decoder_forward.1} parent=11 // pred_fallthru
          _
        // Predicated region
        $region29: #{decoder_forward.1} parent=11 // pred_check
          %p704 = pneg %p254
        $region30: #{decoder_forward.1} parent=11 // pred_check_branch
          %706 = sbr.rel (%p704) target = $region32
        $region31: #{decoder_forward.1} parent=11 // pred_region
          %s708 = ssub.s32 2048, 2048
          %709 = vsyncadd [#allocation9], %s708
          %s710 = sshll.u32 [#allocation10], 4
          %s711 = int_to_ptr.vmem [resolvable:$true] %s710
          %716 = dma.hbm_to_vmem [thread:$0]  %s8, 2048, %s711, [#allocation9], 64, 64, 4
        $region32: #{decoder_forward.1} parent=11 // pred_fallthru
          _
        // Predicated region
        $region33: #{decoder_forward.1} parent=11 // pred_check
          %p717 = pneg %p275
        $region34: #{decoder_forward.1} parent=11 // pred_check_branch
          %719 = sbr.rel (%p717) target = $region36
        $region35: #{decoder_forward.1} parent=11 // pred_region
          %s721 = ssub.s32 32, 32
          %722 = vsyncadd [#allocation12], %s721
          %s723 = sshll.u32 [#allocation11], 4
          %s724 = int_to_ptr.vmem [resolvable:$true] %s723
          %729 = dma.hbm_to_vmem [thread:$0]  %s9, 32, %s724, [#allocation12], 16, 16, 1
        $region36: #{decoder_forward.1} parent=11 // pred_fallthru
          _
        // Predicated region
        $region37: #{decoder_forward.1} parent=11 // pred_check
          %p730 = pneg %p296
        $region38: #{decoder_forward.1} parent=11 // pred_check_branch
          %732 = sbr.rel (%p730) target = $region40
        $region39: #{decoder_forward.1} parent=11 // pred_region
          %s734 = ssub.s32 32, 32
          %735 = vsyncadd [#allocation12], %s734
          %s736 = sshll.u32 [#allocation13], 4
          %s737 = int_to_ptr.vmem [resolvable:$true] %s736
          %742 = dma.hbm_to_vmem [thread:$0]  %s10, 32, %s737, [#allocation12], 16, 16, 1
        $region40: #{decoder_forward.1} parent=11 // pred_fallthru
          _
        // Predicated region
        $region41: #{decoder_forward.1} parent=11 // pred_check
          %p743 = pneg %p317
        $region42: #{decoder_forward.1} parent=11 // pred_check_branch
          %745 = sbr.rel (%p743) target = $region44
        $region43: #{decoder_forward.1} parent=11 // pred_region
          %s747 = ssub.s32 32, 32
          %748 = vsyncadd [#allocation15], %s747
          %s749 = sshll.u32 [#allocation14], 4
          %s750 = int_to_ptr.vmem [resolvable:$true] %s749
          %755 = dma.hbm_to_vmem [thread:$0]  %s11, 32, %s750, [#allocation15], 16, 16, 1
        $region44: #{decoder_forward.1} parent=11 // pred_fallthru
          _
        // Predicated region
        $region45: #{decoder_forward.1} parent=11 // pred_check
          %p756 = pneg %p338
        $region46: #{decoder_forward.1} parent=11 // pred_check_branch
          %758 = sbr.rel (%p756) target = $region48
        $region47: #{decoder_forward.1} parent=11 // pred_region
          %s760 = ssub.s32 2048, 2048
          %761 = vsyncadd [#allocation15], %s760
          %s762 = sshll.u32 [#allocation16], 4
          %s763 = int_to_ptr.vmem [resolvable:$true] %s762
          %768 = dma.hbm_to_vmem [thread:$0]  %s12, 2048, %s763, [#allocation15], 64, 64, 4
        $region48: #{decoder_forward.1} parent=11 // pred_fallthru
          _
        // Predicated region
        $region49: #{decoder_forward.1} parent=11 // pred_check
          %p769 = pneg %p359
        $region50: #{decoder_forward.1} parent=11 // pred_check_branch
          %771 = sbr.rel (%p769) target = $region52
        $region51: #{decoder_forward.1} parent=11 // pred_region
          %s773 = ssub.s32 32, 32
          %774 = vsyncadd [#allocation18], %s773
          %s775 = sshll.u32 [#allocation17], 4
          %s776 = int_to_ptr.vmem [resolvable:$true] %s775
          %781 = dma.hbm_to_vmem [thread:$0]  %s13, 32, %s776, [#allocation18], 16, 16, 1
        $region52: #{decoder_forward.1} parent=11 // pred_fallthru
          _
        // Predicated region
        $region53: #{decoder_forward.1} parent=11 // pred_check
          %p782 = pneg %p380
        $region54: #{decoder_forward.1} parent=11 // pred_check_branch
          %784 = sbr.rel (%p782) target = $region56
        $region55: #{decoder_forward.1} parent=11 // pred_region
          _
        $region56: #{decoder_forward.1} parent=11 // pred_fallthru
          _
        // Predicated region
        $region57: #{decoder_forward.1} parent=11 // pred_check
          %p785 = pneg %p401
        $region58: #{decoder_forward.1} parent=11 // pred_check_branch
          %787 = sbr.rel (%p785) target = $region60
        $region59: #{decoder_forward.1} parent=11 // pred_region
          %s789 = ssub.s32 64, 64
          %790 = vsyncadd [#allocation18], %s789
          %s791 = sshll.u32 [#allocation19], 4
          %s792 = int_to_ptr.vmem [resolvable:$true] %s791
          %797 = dma.hbm_to_vmem [thread:$0]  %s15, 64, %s792, [#allocation18], 32, 32, 2
        $region60: #{decoder_forward.1} parent=11 // pred_fallthru
          _
        // Predicated region
        $region61: #{decoder_forward.1} parent=11 // pred_check
          %p798 = pneg %p422
        $region62: #{decoder_forward.1} parent=11 // pred_check_branch
          %800 = sbr.rel (%p798) target = $region64
        $region63: #{decoder_forward.1} parent=11 // pred_region
          %s802 = ssub.s32 2048, 2048
          %803 = vsyncadd [#allocation21], %s802
          %s804 = sshll.u32 [#allocation20], 4
          %s805 = int_to_ptr.vmem [resolvable:$true] %s804
          %810 = dma.hbm_to_vmem [thread:$0]  %s16, 2048, %s805, [#allocation21], 64, 64, 4
        $region64: #{decoder_forward.1} parent=11 // pred_fallthru
          _
        // Predicated region
        $region65: #{decoder_forward.1} parent=11 // pred_check
          %p811 = pneg %p443
        $region66: #{decoder_forward.1} parent=11 // pred_check_branch
          %813 = sbr.rel (%p811) target = $region68
        $region67: #{decoder_forward.1} parent=11 // pred_region
          %s815 = ssub.s32 32, 32
          %816 = vsyncadd [#allocation21], %s815
          %s817 = sshll.u32 [#allocation22], 4
          %s818 = int_to_ptr.vmem [resolvable:$true] %s817
          %823 = dma.hbm_to_vmem [thread:$0]  %s17, 32, %s818, [#allocation21], 16, 16, 1
        $region68: #{decoder_forward.1} parent=11 // pred_fallthru
          _
        // Predicated region
        $region69: #{decoder_forward.1} parent=11 // pred_check
          %p824 = pneg %p464
        $region70: #{decoder_forward.1} parent=11 // pred_check_branch
          %826 = sbr.rel (%p824) target = $region72
        $region71: #{decoder_forward.1} parent=11 // pred_region
          %s828 = ssub.s32 32, 32
          %829 = vsyncadd [#allocation24], %s828
          %s830 = sshll.u32 [#allocation23], 4
          %s831 = int_to_ptr.vmem [resolvable:$true] %s830
          %836 = dma.hbm_to_vmem [thread:$0]  %s18, 32, %s831, [#allocation24], 16, 16, 1
        $region72: #{decoder_forward.1} parent=11 // pred_fallthru
          _
        // Predicated region
        $region73: #{decoder_forward.1} parent=11 // pred_check
          %p837 = pneg %p485
        $region74: #{decoder_forward.1} parent=11 // pred_check_branch
          %839 = sbr.rel (%p837) target = $region76
        $region75: #{decoder_forward.1} parent=11 // pred_region
          %s841 = ssub.s32 32, 32
          %842 = vsyncadd [#allocation24], %s841
          %s843 = sshll.u32 [#allocation25], 4
          %s844 = int_to_ptr.vmem [resolvable:$true] %s843
          %849 = dma.hbm_to_vmem [thread:$0]  %s19, 32, %s844, [#allocation24], 16, 16, 1
        $region76: #{decoder_forward.1} parent=11 // pred_fallthru
          _
        // Predicated region
        $region77: #{decoder_forward.1} parent=11 // pred_check
          %p850 = pneg %p506
        $region78: #{decoder_forward.1} parent=11 // pred_check_branch
          %852 = sbr.rel (%p850) target = $region80
        $region79: #{decoder_forward.1} parent=11 // pred_region
          %s854 = ssub.s32 32768, 32768
          %855 = vsyncadd [#allocation27], %s854
          %s856 = sshll.u32 [#allocation26], 4
          %s857 = int_to_ptr.vmem [resolvable:$true] %s856
          %862 = dma.hbm_to_vmem [thread:$0]  %s20, 32768, %s857, [#allocation27], 1024, 1024, 64
        $region80: #{decoder_forward.1} parent=11 // pred_fallthru
          _
        // Predicated region
        $region81: #{decoder_forward.1} parent=11 // pred_check
          %p863 = pneg %p527
        $region82: #{decoder_forward.1} parent=11 // pred_check_branch
          %865 = sbr.rel (%p863) target = $region84
        $region83: #{decoder_forward.1} parent=11 // pred_region
          _
        $region84: #{decoder_forward.1} parent=11 // pred_fallthru
          _
        // Predicated region
        $region85: #{decoder_forward.1} parent=11 // pred_check
          %p866 = pneg %p548
        $region86: #{decoder_forward.1} parent=11 // pred_check_branch
          %868 = sbr.rel (%p866) target = $region88
        $region87: #{decoder_forward.1} parent=11 // pred_region
          %s870 = ssub.s32 32768, 32768
          %871 = vsyncadd [#allocation27], %s870
          %s872 = sshll.u32 [#allocation28], 4
          %s873 = int_to_ptr.vmem [resolvable:$true] %s872
          %878 = dma.hbm_to_vmem [thread:$0]  %s22, 32768, %s873, [#allocation27], 64, 64, 4
        $region88: #{decoder_forward.1} parent=11 // pred_fallthru
          _
        // Predicated region
        $region89: #{decoder_forward.1} parent=11 // pred_check
          %p879 = pneg %p569
        $region90: #{decoder_forward.1} parent=11 // pred_check_branch
          %881 = sbr.rel (%p879) target = $region92
        $region91: #{decoder_forward.1} parent=11 // pred_region
          %s883 = ssub.s32 32, 32
          %884 = vsyncadd [#allocation30], %s883
          %s885 = sshll.u32 [#allocation29], 4
          %s886 = int_to_ptr.vmem [resolvable:$true] %s885
          %891 = dma.hbm_to_vmem [thread:$0]  %s23, 32, %s886, [#allocation30], 16, 16, 1
        $region92: #{decoder_forward.1} parent=11 // pred_fallthru
          _
        // Predicated region
        $region93: #{decoder_forward.1} parent=11 // pred_check
          %p892 = pneg %p590
        $region94: #{decoder_forward.1} parent=11 // pred_check_branch
          %894 = sbr.rel (%p892) target = $region96
        $region95: #{decoder_forward.1} parent=11 // pred_region
          _
        $region96: #{decoder_forward.1} parent=11 // pred_fallthru
          _
        // Predicated region
        $region97: #{decoder_forward.1} parent=11 // pred_check
          %p895 = pneg %p611
        $region98: #{decoder_forward.1} parent=11 // pred_check_branch
          %897 = sbr.rel (%p895) target = $region100
        $region99: #{decoder_forward.1} parent=11 // pred_region
          %s899 = ssub.s32 16, 16
          %900 = vsyncadd [#allocation30], %s899
          %s902 = sshll.u32 [#allocation31], 4
          %s903 = int_to_ptr.vmem [resolvable:$true] %s902
          %905 = dma.hbm_to_vmem [thread:$0]  %s25, 16, %s903, [#allocation30]
        $region100: #{decoder_forward.1} parent=11 // pred_fallthru
          _
      $region12: #{decoder_forward.1} parent=5 // pred_fallthru
        _
      %p906 = scmp.lt.s32.totalorder %s45, 2
      // Predicated region
      $region101: #{decoder_forward.1} parent=5 // pred_check
        %p907 = pneg %p906
      $region102: #{decoder_forward.1} parent=5 // pred_check_branch
        %909 = sbr.rel (%p907) target = $region104
      $region103: #{decoder_forward.1} parent=5 // pred_region
        // Predicated region
        $region105: #{decoder_forward.1} parent=103 // pred_check
          %p910 = pneg %p65
        $region106: #{decoder_forward.1} parent=103 // pred_check_branch
          %912 = sbr.rel (%p910) target = $region108
        $region107: #{decoder_forward.1} parent=103 // pred_region
          %p913 = scmp.lt.s32.totalorder %s45, 1
          %s914 = scalar_select %p913, %s45, 1
          %s915 = smul.addr %s914, 8
          %s916 = scalar_lea.vmem %s0, %s915
        $region108: #{decoder_forward.1} parent=103 // pred_fallthru
          _
        // Predicated region
        $region109: #{decoder_forward.1} parent=103 // pred_check
          %p917 = pneg %p91
        $region110: #{decoder_forward.1} parent=103 // pred_check_branch
          %919 = sbr.rel (%p917) target = $region112
        $region111: #{decoder_forward.1} parent=103 // pred_region
          %p920 = scmp.lt.s32.totalorder %s45, 1
          %s921 = scalar_select %p920, %s45, 1
          %s922 = smul.addr %s921, 2
          %s923 = smul.addr %s922, 8
          %s924 = scalar_lea.vmem %s1, %s923
        $region112: #{decoder_forward.1} parent=103 // pred_fallthru
          _
        // Predicated region
        $region113: #{decoder_forward.1} parent=103 // pred_check
          %p925 = pneg %p117
        $region114: #{decoder_forward.1} parent=103 // pred_check_branch
          %927 = sbr.rel (%p925) target = $region116
        $region115: #{decoder_forward.1} parent=103 // pred_region
          %p928 = scmp.lt.s32.totalorder %s45, 1
          %s929 = scalar_select %p928, %s45, 1
          %s930 = smul.addr %s929, 8
          %s931 = scalar_lea.vmem %s2, %s930
        $region116: #{decoder_forward.1} parent=103 // pred_fallthru
          _
        // Predicated region
        $region117: #{decoder_forward.1} parent=103 // pred_check
          %p932 = pneg %p143
        $region118: #{decoder_forward.1} parent=103 // pred_check_branch
          %934 = sbr.rel (%p932) target = $region120
        $region119: #{decoder_forward.1} parent=103 // pred_region
          %p935 = scmp.lt.s32.totalorder %s45, 1
          %s936 = scalar_select %p935, %s45, 1
          %s937 = scalar_lea.vmem %s3, %s936
        $region120: #{decoder_forward.1} parent=103 // pred_fallthru
          _
      $region104: #{decoder_forward.1} parent=5 // pred_fallthru
        _
      %p938 = scmp.le.s32.totalorder 1, %s45
      %p939 = scmp.lt.s32.totalorder %s45, 3
      %p940 = pnand %p938, %p939
      %p941 = pneg %p940
      // Predicated region
      $region121: #{decoder_forward.1} parent=5 // pred_check
        _
      $region122: #{decoder_forward.1} parent=5 // pred_check_branch
        %943 = sbr.rel (%p940) target = $region124
      $region123: #{decoder_forward.1} parent=5 // pred_region
        %s944 = ssub.s32 %s45, 1
        // Predicated region
        $region125: #{decoder_forward.1} parent=123 // pred_check
          %p945 = pneg %p170
        $region126: #{decoder_forward.1} parent=123 // pred_check_branch
          %947 = sbr.rel (%p945) target = $region128
        $region127: #{decoder_forward.1} parent=123 // pred_region
          %948 = dma.done [#allocation3], 32
        $region128: #{decoder_forward.1} parent=123 // pred_fallthru
          _
        // Predicated region
        $region129: #{decoder_forward.1} parent=123 // pred_check
          %p949 = pneg %p191
        $region130: #{decoder_forward.1} parent=123 // pred_check_branch
          %951 = sbr.rel (%p949) target = $region132
        $region131: #{decoder_forward.1} parent=123 // pred_region
          %952 = dma.done [#allocation6], 32
        $region132: #{decoder_forward.1} parent=123 // pred_fallthru
          _
        // Predicated region
        $region133: #{decoder_forward.1} parent=123 // pred_check
          %p953 = pneg %p212
        $region134: #{decoder_forward.1} parent=123 // pred_check_branch
          %955 = sbr.rel (%p953) target = $region136
        $region135: #{decoder_forward.1} parent=123 // pred_region
          %956 = dma.done [#allocation6], 6144
        $region136: #{decoder_forward.1} parent=123 // pred_fallthru
          _
        // Predicated region
        $region137: #{decoder_forward.1} parent=123 // pred_check
          %p957 = pneg %p233
        $region138: #{decoder_forward.1} parent=123 // pred_check_branch
          %959 = sbr.rel (%p957) target = $region140
        $region139: #{decoder_forward.1} parent=123 // pred_region
          %960 = dma.done [#allocation9], 96
        $region140: #{decoder_forward.1} parent=123 // pred_fallthru
          _
        // Predicated region
        $region141: #{decoder_forward.1} parent=123 // pred_check
          %p961 = pneg %p254
        $region142: #{decoder_forward.1} parent=123 // pred_check_branch
          %963 = sbr.rel (%p961) target = $region144
        $region143: #{decoder_forward.1} parent=123 // pred_region
          %964 = dma.done [#allocation9], 2048
        $region144: #{decoder_forward.1} parent=123 // pred_fallthru
          _
        // Predicated region
        $region145: #{decoder_forward.1} parent=123 // pred_check
          %p965 = pneg %p275
        $region146: #{decoder_forward.1} parent=123 // pred_check_branch
          %967 = sbr.rel (%p965) target = $region148
        $region147: #{decoder_forward.1} parent=123 // pred_region
          %968 = dma.done [#allocation12], 32
        $region148: #{decoder_forward.1} parent=123 // pred_fallthru
          _
        // Predicated region
        $region149: #{decoder_forward.1} parent=123 // pred_check
          %p969 = pneg %p296
        $region150: #{decoder_forward.1} parent=123 // pred_check_branch
          %971 = sbr.rel (%p969) target = $region152
        $region151: #{decoder_forward.1} parent=123 // pred_region
          %972 = dma.done [#allocation12], 32
        $region152: #{decoder_forward.1} parent=123 // pred_fallthru
          _
        // Predicated region
        $region153: #{decoder_forward.1} parent=123 // pred_check
          %p973 = pneg %p317
        $region154: #{decoder_forward.1} parent=123 // pred_check_branch
          %975 = sbr.rel (%p973) target = $region156
        $region155: #{decoder_forward.1} parent=123 // pred_region
          %976 = dma.done [#allocation15], 32
        $region156: #{decoder_forward.1} parent=123 // pred_fallthru
          _
        // Predicated region
        $region157: #{decoder_forward.1} parent=123 // pred_check
          %p977 = pneg %p338
        $region158: #{decoder_forward.1} parent=123 // pred_check_branch
          %979 = sbr.rel (%p977) target = $region160
        $region159: #{decoder_forward.1} parent=123 // pred_region
          %980 = dma.done [#allocation15], 2048
        $region160: #{decoder_forward.1} parent=123 // pred_fallthru
          _
        // Predicated region
        $region161: #{decoder_forward.1} parent=123 // pred_check
          %p981 = pneg %p359
        $region162: #{decoder_forward.1} parent=123 // pred_check_branch
          %983 = sbr.rel (%p981) target = $region164
        $region163: #{decoder_forward.1} parent=123 // pred_region
          %984 = dma.done [#allocation18], 32
        $region164: #{decoder_forward.1} parent=123 // pred_fallthru
          _
        // Predicated region
        $region165: #{decoder_forward.1} parent=123 // pred_check
          %p985 = pneg %p401
        $region166: #{decoder_forward.1} parent=123 // pred_check_branch
          %987 = sbr.rel (%p985) target = $region168
        $region167: #{decoder_forward.1} parent=123 // pred_region
          %988 = dma.done [#allocation18], 64
        $region168: #{decoder_forward.1} parent=123 // pred_fallthru
          _
        // Predicated region
        $region169: #{decoder_forward.1} parent=123 // pred_check
          %p989 = pneg %p422
        $region170: #{decoder_forward.1} parent=123 // pred_check_branch
          %991 = sbr.rel (%p989) target = $region172
        $region171: #{decoder_forward.1} parent=123 // pred_region
          %992 = dma.done [#allocation21], 2048
        $region172: #{decoder_forward.1} parent=123 // pred_fallthru
          _
        // Predicated region
        $region173: #{decoder_forward.1} parent=123 // pred_check
          %p993 = pneg %p443
        $region174: #{decoder_forward.1} parent=123 // pred_check_branch
          %995 = sbr.rel (%p993) target = $region176
        $region175: #{decoder_forward.1} parent=123 // pred_region
          %996 = dma.done [#allocation21], 32
        $region176: #{decoder_forward.1} parent=123 // pred_fallthru
          _
        // Predicated region
        $region177: #{decoder_forward.1} parent=123 // pred_check
          %p997 = pneg %p464
        $region178: #{decoder_forward.1} parent=123 // pred_check_branch
          %999 = sbr.rel (%p997) target = $region180
        $region179: #{decoder_forward.1} parent=123 // pred_region
          %1000 = dma.done [#allocation24], 32
        $region180: #{decoder_forward.1} parent=123 // pred_fallthru
          _
        // Predicated region
        $region181: #{decoder_forward.1} parent=123 // pred_check
          %p1001 = pneg %p485
        $region182: #{decoder_forward.1} parent=123 // pred_check_branch
          %1003 = sbr.rel (%p1001) target = $region184
        $region183: #{decoder_forward.1} parent=123 // pred_region
          %1004 = dma.done [#allocation24], 32
        $region184: #{decoder_forward.1} parent=123 // pred_fallthru
          _
        // Predicated region
        $region185: #{decoder_forward.1} parent=123 // pred_check
          %p1005 = pneg %p506
        $region186: #{decoder_forward.1} parent=123 // pred_check_branch
          %1007 = sbr.rel (%p1005) target = $region188
        $region187: #{decoder_forward.1} parent=123 // pred_region
          %1008 = dma.done [#allocation27], 32768
        $region188: #{decoder_forward.1} parent=123 // pred_fallthru
          _
        // Predicated region
        $region189: #{decoder_forward.1} parent=123 // pred_check
          %p1009 = pneg %p548
        $region190: #{decoder_forward.1} parent=123 // pred_check_branch
          %1011 = sbr.rel (%p1009) target = $region192
        $region191: #{decoder_forward.1} parent=123 // pred_region
          %1012 = dma.done [#allocation27], 32768
        $region192: #{decoder_forward.1} parent=123 // pred_fallthru
          _
        // Predicated region
        $region193: #{decoder_forward.1} parent=123 // pred_check
          %p1013 = pneg %p569
        $region194: #{decoder_forward.1} parent=123 // pred_check_branch
          %1015 = sbr.rel (%p1013) target = $region196
        $region195: #{decoder_forward.1} parent=123 // pred_region
          %1016 = dma.done [#allocation30], 32
        $region196: #{decoder_forward.1} parent=123 // pred_fallthru
          _
        // Predicated region
        $region197: #{decoder_forward.1} parent=123 // pred_check
          %p1017 = pneg %p611
        $region198: #{decoder_forward.1} parent=123 // pred_check_branch
          %1019 = sbr.rel (%p1017) target = $region200
        $region199: #{decoder_forward.1} parent=123 // pred_region
          %1020 = dma.done [#allocation30], 16
        $region200: #{decoder_forward.1} parent=123 // pred_fallthru
          _
        %p1021 = scmp.lt.s32.totalorder %s50, 1
        %s1022 = scalar_select %p1021, %s50, 1
        %s1023 = smul.addr %s1022, 8
        %s1024 = scalar_lea.vmem %s0, %s1023
        %p1025 = pneg %p71
        %p1026 = pneg %p68
        %p1027 = scmp.lt.s32.totalorder %s50, 1
        %s1028 = scalar_select %p1027, %s50, 1
        %s1029 = smul.addr %s1028, 2
        %s1030 = smul.addr %s1029, 8
        %s1031 = scalar_lea.vmem %s1, %s1030
        %p1032 = pneg %p97
        %p1033 = pneg %p94
        %p1034 = scmp.lt.s32.totalorder %s50, 1
        %s1035 = scalar_select %p1034, %s50, 1
        %s1036 = smul.addr %s1035, 8
        %s1037 = scalar_lea.vmem %s2, %s1036
        %p1038 = pneg %p123
        %p1039 = pneg %p120
        %p1040 = scmp.lt.s32.totalorder %s50, 1
        %s1041 = scalar_select %p1040, %s50, 1
        %s1042 = scalar_lea.vmem %s3, %s1041
        %p1043 = pneg %p149
        %p1044 = pneg %p146
        %p1045 = pneg %p170
        %p1046 = pneg %p167
        %p1047 = pneg %p191
        %p1048 = pneg %p188
        %p1049 = pneg %p212
        %p1050 = pneg %p209
        %p1051 = pneg %p233
        %p1052 = pneg %p230
        %p1053 = pneg %p254
        %p1054 = pneg %p251
        %p1055 = pneg %p275
        %p1056 = pneg %p272
        %p1057 = pneg %p296
        %p1058 = pneg %p293
        %p1059 = pneg %p317
        %p1060 = pneg %p314
        %p1061 = pneg %p338
        %p1062 = pneg %p335
        %p1063 = pneg %p359
        %p1064 = pneg %p356
        %p1065 = pneg %p380
        %p1066 = pneg %p377
        %p1067 = pneg %p401
        %p1068 = pneg %p398
        %p1069 = pneg %p422
        %p1070 = pneg %p419
        %p1071 = pneg %p443
        %p1072 = pneg %p440
        %p1073 = pneg %p464
        %p1074 = pneg %p461
        %p1075 = pneg %p485
        %p1076 = pneg %p482
        %p1077 = pneg %p506
        %p1078 = pneg %p503
        %p1079 = pneg %p527
        %p1080 = pneg %p524
        %p1081 = pneg %p548
        %p1082 = pneg %p545
        %p1083 = pneg %p569
        %p1084 = pneg %p566
        %p1085 = pneg %p590
        %p1086 = pneg %p587
        %p1087 = pneg %p611
        %p1088 = pneg %p608
        %p1089 = pneg %p637
        %p1090 = pneg %p634
        %s1091 = sand.u32 %s624, 1
        %s1092 = scalar_lea.sflag [#allocation4], %s1091
        %s1093 = sand.u32 %s624, 1
        %s1094 = smul.addr %s1093, 8
        %s1095 = scalar_lea.vmem [#allocation32], %s1094
        %p1096 = scmp.lt.s32.totalorder %s50, 1
        %s1097 = scalar_select %p1096, %s50, 1
        %s1098 = smul.addr %s1097, 8
        %s1099 = scalar_lea.vmem %s0, %s1098
        %p1100 = scmp.lt.s32.totalorder %s50, 1
        %s1101 = scalar_select %p1100, %s50, 1
        %s1102 = smul.addr %s1101, 2
        %s1103 = smul.addr %s1102, 8
        %s1104 = scalar_lea.vmem %s1, %s1103
        %p1105 = scmp.lt.s32.totalorder %s50, 1
        %s1106 = scalar_select %p1105, %s50, 1
        %s1107 = smul.addr %s1106, 8
        %s1108 = scalar_lea.vmem %s2, %s1107
        %p1109 = scmp.lt.s32.totalorder %s50, 1
        %s1110 = scalar_select %p1109, %s50, 1
        %s1111 = scalar_lea.vmem %s3, %s1110
        %v1113 = vld [vmem:[%s1099] sm:$0xff]
        %v1114 = vld [vmem:[%s1104] sm:$0xff]
        %v1115 = vld [vmem:[%s1104 + $0x8] sm:$0x3]
        %v1116 = vpack.c.bf16 %v1115, %v1114
        %v1117 = vld [vmem:[%s1108] sm:$0xff]
        %vm1118 = vcmp.eq.s32.totalorder %v1117, 0
        %v1119 = vld [vmem:[%s1111] sm:$0x1]
        %vm1120 = vcmp.eq.s32.totalorder %v1119, 0
        %v1121 = vld [vmem:[#allocation2] sm:$0x1]
        %v1122 = vld [vmem:[#allocation5] sm:$0x1]
        %1123 = vadd.xlane.f32.xlu0 %v1113
        %v1124 = vpop.xlane.xlu0 %1123
        %v1125 = vrcp.pop 128.0
        %v1126 = vmul.f32 %v1124, %v1125
        %v1127 = vsub.f32 %v1113, %v1126
        %v1128 = vmul.f32 %v1127, %v1127
        %1129 = vadd.xlane.f32.xlu0 %v1128
        %v1130 = vpop.xlane.xlu0 %1129
        %v1131 = vmul.f32 %v1130, 0.007874016
        %v1132 = vrsqrt.pop %v1131
        %v1133 = vmul.f32 %v1131, %v1132
        %vm1134 = vcmp.eq.f32.partialorder %v1131, inf
        %v1135 = vsel %vm1134, %v1131, %v1133
        %vm1136 = vcmp.eq.f32.partialorder %v1131, 0.0
        %v1137 = vand.u32 %v1131, 2147483648
        %v1138 = vsel %vm1136, %v1137, %v1135
        %v1139 = vadd.f32 %v1138, 1e-06
        %v1140 = vrcp.pop %v1139
        %v1142 = vlaneseq
        %v1143 = vshrl.u32 %v1142, 7
        %v1144 = vsub.s32 0, %v1143
        %v1145 = vrot.slane %v1121, %v1144
        %v1147 = vmul.f32 %v1145, %v1127
        %v1148 = vmul.f32 %v1147, %v1140
        %v1150 = vlaneseq
        %v1151 = vshrl.u32 %v1150, 7
        %v1152 = vsub.s32 0, %v1151
        %v1153 = vrot.slane %v1122, %v1152
        %v1155 = vadd.f32 %v1148, %v1153
        %v1156 = vpack.c.bf16 %v1155, %v1155
        %v1157 = vld [vmem:[#allocation7] sm:$0xff]
        %v1158 = vld [vmem:[#allocation7 + $0x8] sm:$0xf]
        %v1159 = vld [vmem:[#allocation7 + $0xc] sm:$0xff]
        %v1160 = vld [vmem:[#allocation7 + $0x14] sm:$0xf]
        %v1161 = vld [vmem:[#allocation7 + $0x18] sm:$0xff]
        %v1162 = vld [vmem:[#allocation7 + $0x20] sm:$0xf]
        %v1163 = vld [vmem:[#allocation7 + $0x24] sm:$0xff]
        %v1164 = vld [vmem:[#allocation7 + $0x2c] sm:$0xf]
        %v1165 = vld [vmem:[#allocation7 + $0x30] sm:$0xff]
        %v1166 = vld [vmem:[#allocation7 + $0x38] sm:$0xf]
        %v1167 = vld [vmem:[#allocation7 + $0x3c] sm:$0xff]
        %v1168 = vld [vmem:[#allocation7 + $0x44] sm:$0xf]
        %v1169 = vld [vmem:[#allocation7 + $0x48] sm:$0xff]
        %v1170 = vld [vmem:[#allocation7 + $0x50] sm:$0xf]
        %v1171 = vld [vmem:[#allocation7 + $0x54] sm:$0xff]
        %v1172 = vld [vmem:[#allocation7 + $0x5c] sm:$0xf]
        %v1173 = vld [vmem:[#allocation7 + $0x60] sm:$0xff]
        %v1174 = vld [vmem:[#allocation7 + $0x68] sm:$0xf]
        %v1175 = vld [vmem:[#allocation7 + $0x6c] sm:$0xff]
        %v1176 = vld [vmem:[#allocation7 + $0x74] sm:$0xf]
        %v1177 = vld [vmem:[#allocation7 + $0x78] sm:$0xff]
        %v1178 = vld [vmem:[#allocation7 + $0x80] sm:$0xf]
        %v1179 = vld [vmem:[#allocation7 + $0x84] sm:$0xff]
        %v1180 = vld [vmem:[#allocation7 + $0x8c] sm:$0xf]
        %v1181 = vld [vmem:[#allocation7 + $0x90] sm:$0xff]
        %v1182 = vld [vmem:[#allocation7 + $0x98] sm:$0xf]
        %v1183 = vld [vmem:[#allocation7 + $0x9c] sm:$0xff]
        %v1184 = vld [vmem:[#allocation7 + $0xa4] sm:$0xf]
        %v1185 = vld [vmem:[#allocation7 + $0xa8] sm:$0xff]
        %v1186 = vld [vmem:[#allocation7 + $0xb0] sm:$0xf]
        %v1187 = vld [vmem:[#allocation7 + $0xb4] sm:$0xff]
        %v1188 = vld [vmem:[#allocation7 + $0xbc] sm:$0xf]
        %v1189 = vld [vmem:[#allocation8] sm:$0x7]
        %v1191 = vlaneseq
        %v1192 = vshrl.u32 %v1191, 7
        %v1193 = vsub.s32 0, %v1192
        %v1194 = vrot.slane %v1189, %v1193
        %v1195 = vlaneseq
        %v1196 = vshrl.u32 %v1195, 7
        %v1197 = vsub.s32 1, %v1196
        %v1198 = vrot.slane %v1189, %v1197
        %v1199 = vlaneseq
        %v1200 = vshrl.u32 %v1199, 7
        %v1201 = vsub.s32 2, %v1200
        %v1202 = vrot.slane %v1189, %v1201
        %v1238 = vunpack.c.l.b16 %v1157
        %v1239 = vunpack.c.h.b16 %v1157
        %v1240 = vunpack.c.l.b16 %v1158
        %v1241 = vunpack.c.l.b16 %v1159
        %v1242 = vunpack.c.h.b16 %v1159
        %v1243 = vunpack.c.l.b16 %v1160
        %v1244 = vunpack.c.l.b16 %v1161
        %v1245 = vunpack.c.h.b16 %v1161
        %v1246 = vunpack.c.l.b16 %v1162
        %v1247 = vunpack.c.l.b16 %v1163
        %v1248 = vunpack.c.h.b16 %v1163
        %v1249 = vunpack.c.l.b16 %v1164
        %v1250 = vunpack.c.l.b16 %v1165
        %v1251 = vunpack.c.h.b16 %v1165
        %v1252 = vunpack.c.l.b16 %v1166
        %v1253 = vunpack.c.l.b16 %v1167
        %v1254 = vunpack.c.h.b16 %v1167
        %v1255 = vunpack.c.l.b16 %v1168
        %v1256 = vunpack.c.l.b16 %v1169
        %v1257 = vunpack.c.h.b16 %v1169
        %v1258 = vunpack.c.l.b16 %v1170
        %v1259 = vunpack.c.l.b16 %v1171
        %v1260 = vunpack.c.h.b16 %v1171
        %v1261 = vunpack.c.l.b16 %v1172
        %v1262 = vunpack.c.l.b16 %v1173
        %v1263 = vunpack.c.h.b16 %v1173
        %v1264 = vunpack.c.l.b16 %v1174
        %v1265 = vunpack.c.l.b16 %v1175
        %v1266 = vunpack.c.h.b16 %v1175
        %v1267 = vunpack.c.l.b16 %v1176
        %v1268 = vunpack.c.l.b16 %v1177
        %v1269 = vunpack.c.h.b16 %v1177
        %v1270 = vunpack.c.l.b16 %v1178
        %v1271 = vunpack.c.l.b16 %v1179
        %v1272 = vunpack.c.h.b16 %v1179
        %v1273 = vunpack.c.l.b16 %v1180
        %v1274 = vunpack.c.l.b16 %v1181
        %v1275 = vunpack.c.h.b16 %v1181
        %v1276 = vunpack.c.l.b16 %v1182
        %v1277 = vunpack.c.l.b16 %v1183
        %v1278 = vunpack.c.h.b16 %v1183
        %v1279 = vunpack.c.l.b16 %v1184
        %v1280 = vunpack.c.l.b16 %v1185
        %v1281 = vunpack.c.h.b16 %v1185
        %v1282 = vunpack.c.l.b16 %v1186
        %v1283 = vunpack.c.l.b16 %v1187
        %v1284 = vunpack.c.h.b16 %v1187
        %v1285 = vunpack.c.l.b16 %v1188
        %v1286 = vpack.c.b16 %v1241, %v1238
        %v1287 = vpack.c.b16 %v1242, %v1239
        %v1288 = vpack.c.b16 %v1243, %v1240
        %v1289 = vpack.c.b16 %v1247, %v1244
        %v1290 = vpack.c.b16 %v1248, %v1245
        %v1291 = vpack.c.b16 %v1249, %v1246
        %v1292 = vpack.c.b16 %v1253, %v1250
        %v1293 = vpack.c.b16 %v1254, %v1251
        %v1294 = vpack.c.b16 %v1255, %v1252
        %v1295 = vpack.c.b16 %v1259, %v1256
        %v1296 = vpack.c.b16 %v1260, %v1257
        %v1297 = vpack.c.b16 %v1261, %v1258
        %v1298 = vpack.c.b16 %v1265, %v1262
        %v1299 = vpack.c.b16 %v1266, %v1263
        %v1300 = vpack.c.b16 %v1267, %v1264
        %v1301 = vpack.c.b16 %v1271, %v1268
        %v1302 = vpack.c.b16 %v1272, %v1269
        %v1303 = vpack.c.b16 %v1273, %v1270
        %v1304 = vpack.c.b16 %v1277, %v1274
        %v1305 = vpack.c.b16 %v1278, %v1275
        %v1306 = vpack.c.b16 %v1279, %v1276
        %v1307 = vpack.c.b16 %v1283, %v1280
        %v1308 = vpack.c.b16 %v1284, %v1281
        %v1309 = vpack.c.b16 %v1285, %v1282
        %1334 = vmatprep.subr.bf16.mxu0 %v1287
        %1335 = vmatpush1.bf16.msra.mxu0 %v1286
        %1336 = vmatprep.subr.bf16.mxu0 %v1290
        %1337 = vmatpush1.bf16.msra.mxu0 %v1289
        %1338 = vmatprep.subr.bf16.mxu0 %v1293
        %1339 = vmatpush1.bf16.msra.mxu0 %v1292
        %1340 = vmatprep.subr.bf16.mxu0 %v1296
        %1341 = vmatpush1.bf16.msra.mxu0 %v1295
        %1342 = vmatprep.subr.bf16.mxu0 %v1299
        %1343 = vmatpush1.bf16.msra.mxu0 %v1298
        %1344 = vmatprep.subr.bf16.mxu0 %v1302
        %1345 = vmatpush1.bf16.msra.mxu0 %v1301
        %1346 = vmatprep.subr.bf16.mxu0 %v1305
        %1347 = vmatpush1.bf16.msra.mxu0 %v1304
        %1348 = vmatprep.subr.bf16.mxu0 %v1308
        %1349 = vmatpush1.bf16.msra.mxu0 %v1307
        %1350 = vmatprep.subr.bf16.mxu0 0
        %1351 = vmatpush1.bf16.msra.mxu0 0
        %1352 = vmatprep.subr.bf16.mxu0 0
        %1353 = vmatpush1.bf16.msra.mxu0 0
        %1354 = vmatprep.subr.bf16.mxu0 0
        %1355 = vmatpush1.bf16.msra.mxu0 0
        %1356 = vmatprep.subr.bf16.mxu0 0
        %1357 = vmatpush1.bf16.msra.mxu0 0
        %1358 = vmatprep.subr.bf16.mxu0 0
        %1359 = vmatpush1.bf16.msra.mxu0 0
        %1360 = vmatprep.subr.bf16.mxu0 0
        %1361 = vmatpush1.bf16.msra.mxu0 0
        %1362 = vmatprep.subr.bf16.mxu0 0
        %1363 = vmatpush1.bf16.msra.mxu0 0
        %1364 = vmatprep.subr.bf16.mxu0 0
        %1365 = vmatpush1.bf16.msra.mxu0 0
        %1366 = vmatprep.mubr.bf16.mxu0 0
        %1367 = vmatmul.mubr.bf16.gmra.mrb[0].mxu0 %v1156
        %v1368 = vpop.f32.mrb[0].mxu0
        %v1369 = vadd.f32 %v1194, %v1368
        %v1370 = vpop.f32.mrb[0].mxu0
        %v1371 = vadd.f32 %v1198, %v1370
        %v1372 = vpop.f32.mrb[0].mxu0
        %v1373 = vpop.f32.mrb[0].mxu0
        %1374 = vdwg.mxu0
        %1375 = vmatprep.subr.bf16.mxu0 0
        %1376 = vmatpush1.bf16.msra.mxu0 %v1288
        %1377 = vmatprep.subr.bf16.mxu0 0
        %1378 = vmatpush1.bf16.msra.mxu0 %v1291
        %1379 = vmatprep.subr.bf16.mxu0 0
        %1380 = vmatpush1.bf16.msra.mxu0 %v1294
        %1381 = vmatprep.subr.bf16.mxu0 0
        %1382 = vmatpush1.bf16.msra.mxu0 %v1297
        %1383 = vmatprep.subr.bf16.mxu0 0
        %1384 = vmatpush1.bf16.msra.mxu0 %v1300
        %1385 = vmatprep.subr.bf16.mxu0 0
        %1386 = vmatpush1.bf16.msra.mxu0 %v1303
        %1387 = vmatprep.subr.bf16.mxu0 0
        %1388 = vmatpush1.bf16.msra.mxu0 %v1306
        %1389 = vmatprep.subr.bf16.mxu0 0
        %1390 = vmatpush1.bf16.msra.mxu0 %v1309
        %1391 = vmatprep.subr.bf16.mxu0 0
        %1392 = vmatpush1.bf16.msra.mxu0 0
        %1393 = vmatprep.subr.bf16.mxu0 0
        %1394 = vmatpush1.bf16.msra.mxu0 0
        %1395 = vmatprep.subr.bf16.mxu0 0
        %1396 = vmatpush1.bf16.msra.mxu0 0
        %1397 = vmatprep.subr.bf16.mxu0 0
        %1398 = vmatpush1.bf16.msra.mxu0 0
        %1399 = vmatprep.subr.bf16.mxu0 0
        %1400 = vmatpush1.bf16.msra.mxu0 0
        %1401 = vmatprep.subr.bf16.mxu0 0
        %1402 = vmatpush1.bf16.msra.mxu0 0
        %1403 = vmatprep.subr.bf16.mxu0 0
        %1404 = vmatpush1.bf16.msra.mxu0 0
        %1405 = vmatprep.subr.bf16.mxu0 0
        %1406 = vmatpush1.bf16.msra.mxu0 0
        %1407 = vmatprep.mubr.bf16.mxu0 0
        %1408 = vmatmul.mubr.bf16.gmra.mrb[0].mxu0 %v1156
        %v1409 = vpop.f32.mrb[0].mxu0
        %v1410 = vadd.f32 %v1202, %v1409
        %v1411 = vpop.f32.mrb[0].mxu0
        %v1412 = vpop.f32.mrb[0].mxu0
        %v1413 = vpop.f32.mrb[0].mxu0
        %1414 = vdwg.mxu0
        %v1415 = vld [vmem:[#allocation10] sm:$0xf]
        %v1416 = vld [vmem:[#allocation10 + $0x4] sm:$0xf]
        %v1417 = vld [vmem:[#allocation10 + $0x8] sm:$0xf]
        %v1418 = vld [vmem:[#allocation10 + $0xc] sm:$0xf]
        %v1419 = vld [vmem:[#allocation10 + $0x10] sm:$0xf]
        %v1420 = vld [vmem:[#allocation10 + $0x14] sm:$0xf]
        %v1421 = vld [vmem:[#allocation10 + $0x18] sm:$0xf]
        %v1422 = vld [vmem:[#allocation10 + $0x1c] sm:$0xf]
        %v1423 = vld [vmem:[#allocation10 + $0x20] sm:$0xf]
        %v1424 = vld [vmem:[#allocation10 + $0x24] sm:$0xf]
        %v1425 = vld [vmem:[#allocation10 + $0x28] sm:$0xf]
        %v1426 = vld [vmem:[#allocation10 + $0x2c] sm:$0xf]
        %v1427 = vld [vmem:[#allocation10 + $0x30] sm:$0xf]
        %v1428 = vld [vmem:[#allocation10 + $0x34] sm:$0xf]
        %v1429 = vld [vmem:[#allocation10 + $0x38] sm:$0xf]
        %v1430 = vld [vmem:[#allocation10 + $0x3c] sm:$0xf]
        %v1431 = vld [vmem:[#allocation11] sm:$0x1]
        %v1432 = vpack.c.bf16 %v1369, %v1369
        %v1433 = vpack.c.bf16 %v1371, %v1371
        %v1434 = vpack.c.bf16 %v1410, %v1410
        %vm1435 = vcmask 261120
        %v1437 = vsel %vm1435, %v1432, 0
        %v1440 = vsel %vm1435, %v1433, 0
        %1442 = vmatprep.subr.bf16.mxu0 0
        %1443 = vmatpush1.bf16.xpose.msra.mxu0 %v1440
        %1444 = vmatprep.subr.bf16.mxu0 0
        %1445 = vmatpush1.bf16.xpose.msra.mxu0 0
        %1446 = vmatprep.subr.bf16.mxu0 0
        %1447 = vmatpush1.bf16.xpose.msra.mxu0 0
        %1448 = vmatprep.subr.bf16.mxu0 0
        %1449 = vmatpush1.bf16.xpose.msra.mxu0 0
        %1450 = vmatprep.subr.bf16.mxu0 0
        %1451 = vmatpush1.bf16.xpose.msra.mxu0 0
        %1452 = vmatprep.subr.bf16.mxu0 0
        %1453 = vmatpush1.bf16.xpose.msra.mxu0 0
        %1454 = vmatprep.subr.bf16.mxu0 0
        %1455 = vmatpush1.bf16.xpose.msra.mxu0 0
        %1456 = vmatprep.subr.bf16.mxu0 0
        %1457 = vmatpush1.bf16.xpose.msra.mxu0 0
        %1458 = vmatprep.subr.bf16.mxu0 0
        %1459 = vmatpush1.bf16.xpose.msra.mxu0 0
        %1460 = vmatprep.subr.bf16.mxu0 0
        %1461 = vmatpush1.bf16.xpose.msra.mxu0 0
        %1462 = vmatprep.subr.bf16.mxu0 0
        %1463 = vmatpush1.bf16.xpose.msra.mxu0 0
        %1464 = vmatprep.subr.bf16.mxu0 0
        %1465 = vmatpush1.bf16.xpose.msra.mxu0 0
        %1466 = vmatprep.subr.bf16.mxu0 0
        %1467 = vmatpush1.bf16.xpose.msra.mxu0 0
        %1468 = vmatprep.subr.bf16.mxu0 0
        %1469 = vmatpush1.bf16.xpose.msra.mxu0 0
        %1470 = vmatprep.subr.bf16.mxu0 0
        %1471 = vmatpush1.bf16.xpose.msra.mxu0 0
        %1472 = vmatprep.subr.bf16.mxu0 0
        %1473 = vmatpush1.bf16.xpose.msra.mxu0 0
        %1474 = vmatprep.mubr.bf16.mxu0 0
        %1475 = vmatmul.mubr.bf16.gmra.mrb[0].mxu0 %v1437
        %v1476 = vpop.f32.mrb[0].mxu0
        %v1477 = vadd.f32 0.0, %v1476
        %v1478 = vpop.f32.mrb[0].mxu0
        %v1479 = vpop.f32.mrb[0].mxu0
        %v1480 = vpop.f32.mrb[0].mxu0
        %1481 = vdwg.mxu0
        %v1482 = vsel %vm1118, -1e+09, %v1477
        %vm1483 = vcmask 64512
        %v1484 = vsel %vm1483, %v1482, -inf
        %1485 = vmax.xlane.f32.xlu0 %v1484
        %v1486 = vpop.xlane.xlu0 %1485
        %v1487 = vsub.f32 %v1482, %v1486
        %v1488 = vmul.f32 %v1487, 1.442695
        %v1489 = vpow.pop %v1488
        %v1490 = vsel %vm1483, %v1489, 0.0
        %1491 = vadd.xlane.f32.xlu0 %v1490
        %v1492 = vpop.xlane.xlu0 %1491
        %v1493 = vrcp.pop %v1492
        %v1494 = vmul.f32 %v1489, %v1493
        %v1495 = vpack.c.bf16 %v1494, %v1494
        %v1497 = vsel %vm1483, %v1495, 0
        %vm1499 = vcmask 1043456
        %v1501 = vsel %vm1499, %v1434, 0
        %1503 = vmatprep.subr.bf16.mxu0 0
        %1504 = vmatpush1.bf16.msra.mxu0 %v1501
        %1505 = vmatprep.subr.bf16.mxu0 0
        %1506 = vmatpush1.bf16.msra.mxu0 0
        %1507 = vmatprep.subr.bf16.mxu0 0
        %1508 = vmatpush1.bf16.msra.mxu0 0
        %1509 = vmatprep.subr.bf16.mxu0 0
        %1510 = vmatpush1.bf16.msra.mxu0 0
        %1511 = vmatprep.subr.bf16.mxu0 0
        %1512 = vmatpush1.bf16.msra.mxu0 0
        %1513 = vmatprep.subr.bf16.mxu0 0
        %1514 = vmatpush1.bf16.msra.mxu0 0
        %1515 = vmatprep.subr.bf16.mxu0 0
        %1516 = vmatpush1.bf16.msra.mxu0 0
        %1517 = vmatprep.subr.bf16.mxu0 0
        %1518 = vmatpush1.bf16.msra.mxu0 0
        %1519 = vmatprep.subr.bf16.mxu0 0
        %1520 = vmatpush1.bf16.msra.mxu0 0
        %1521 = vmatprep.subr.bf16.mxu0 0
        %1522 = vmatpush1.bf16.msra.mxu0 0
        %1523 = vmatprep.subr.bf16.mxu0 0
        %1524 = vmatpush1.bf16.msra.mxu0 0
        %1525 = vmatprep.subr.bf16.mxu0 0
        %1526 = vmatpush1.bf16.msra.mxu0 0
        %1527 = vmatprep.subr.bf16.mxu0 0
        %1528 = vmatpush1.bf16.msra.mxu0 0
        %1529 = vmatprep.subr.bf16.mxu0 0
        %1530 = vmatpush1.bf16.msra.mxu0 0
        %1531 = vmatprep.subr.bf16.mxu0 0
        %1532 = vmatpush1.bf16.msra.mxu0 0
        %1533 = vmatprep.subr.bf16.mxu0 0
        %1534 = vmatpush1.bf16.msra.mxu0 0
        %1535 = vmatprep.mubr.bf16.mxu0 0
        %1536 = vmatmul.mubr.bf16.gmra.mrb[0].mxu0 %v1497
        %v1537 = vpop.f32.mrb[0].mxu0
        %v1538 = vadd.f32 0.0, %v1537
        %v1539 = vpop.f32.mrb[0].mxu0
        %v1540 = vpop.f32.mrb[0].mxu0
        %v1541 = vpop.f32.mrb[0].mxu0
        %1542 = vdwg.mxu0
        %1544 = vrot.lane.b32.xlu0 %v1432, 96
        %v1545 = vpop.permute.xlu0 %1544
        %1547 = vrot.lane.b32.xlu0 %v1433, 96
        %v1548 = vpop.permute.xlu0 %1547
        %v1550 = vsel %vm1435, %v1545, 0
        %v1553 = vsel %vm1435, %v1548, 0
        %1555 = vmatprep.subr.bf16.mxu0 0
        %1556 = vmatpush1.bf16.xpose.msra.mxu0 %v1553
        %1557 = vmatprep.subr.bf16.mxu0 0
        %1558 = vmatpush1.bf16.xpose.msra.mxu0 0
        %1559 = vmatprep.subr.bf16.mxu0 0
        %1560 = vmatpush1.bf16.xpose.msra.mxu0 0
        %1561 = vmatprep.subr.bf16.mxu0 0
        %1562 = vmatpush1.bf16.xpose.msra.mxu0 0
        %1563 = vmatprep.subr.bf16.mxu0 0
        %1564 = vmatpush1.bf16.xpose.msra.mxu0 0
        %1565 = vmatprep.subr.bf16.mxu0 0
        %1566 = vmatpush1.bf16.xpose.msra.mxu0 0
        %1567 = vmatprep.subr.bf16.mxu0 0
        %1568 = vmatpush1.bf16.xpose.msra.mxu0 0
        %1569 = vmatprep.subr.bf16.mxu0 0
        %1570 = vmatpush1.bf16.xpose.msra.mxu0 0
        %1571 = vmatprep.subr.bf16.mxu0 0
        %1572 = vmatpush1.bf16.xpose.msra.mxu0 0
        %1573 = vmatprep.subr.bf16.mxu0 0
        %1574 = vmatpush1.bf16.xpose.msra.mxu0 0
        %1575 = vmatprep.subr.bf16.mxu0 0
        %1576 = vmatpush1.bf16.xpose.msra.mxu0 0
        %1577 = vmatprep.subr.bf16.mxu0 0
        %1578 = vmatpush1.bf16.xpose.msra.mxu0 0
        %1579 = vmatprep.subr.bf16.mxu0 0
        %1580 = vmatpush1.bf16.xpose.msra.mxu0 0
        %1581 = vmatprep.subr.bf16.mxu0 0
        %1582 = vmatpush1.bf16.xpose.msra.mxu0 0
        %1583 = vmatprep.subr.bf16.mxu0 0
        %1584 = vmatpush1.bf16.xpose.msra.mxu0 0
        %1585 = vmatprep.subr.bf16.mxu0 0
        %1586 = vmatpush1.bf16.xpose.msra.mxu0 0
        %1587 = vmatprep.mubr.bf16.mxu0 0
        %1588 = vmatmul.mubr.bf16.gmra.mrb[0].mxu0 %v1550
        %v1589 = vpop.f32.mrb[0].mxu0
        %v1590 = vadd.f32 0.0, %v1589
        %v1591 = vpop.f32.mrb[0].mxu0
        %v1592 = vpop.f32.mrb[0].mxu0
        %v1593 = vpop.f32.mrb[0].mxu0
        %1594 = vdwg.mxu0
        %v1595 = vsel %vm1118, -1e+09, %v1590
        %v1596 = vsel %vm1483, %v1595, -inf
        %1597 = vmax.xlane.f32.xlu0 %v1596
        %v1598 = vpop.xlane.xlu0 %1597
        %v1599 = vsub.f32 %v1595, %v1598
        %v1600 = vmul.f32 %v1599, 1.442695
        %v1601 = vpow.pop %v1600
        %v1602 = vsel %vm1483, %v1601, 0.0
        %1603 = vadd.xlane.f32.xlu0 %v1602
        %v1604 = vpop.xlane.xlu0 %1603
        %v1605 = vrcp.pop %v1604
        %v1606 = vmul.f32 %v1601, %v1605
        %v1607 = vpack.c.bf16 %v1606, %v1606
        %1609 = vrot.lane.b32.xlu0 %v1434, 96
        %v1610 = vpop.permute.xlu0 %1609
        %v1612 = vsel %vm1483, %v1607, 0
        %v1615 = vsel %vm1499, %v1610, 0
        %1617 = vmatprep.subr.bf16.mxu0 0
        %1618 = vmatpush1.bf16.msra.mxu0 %v1615
        %1619 = vmatprep.subr.bf16.mxu0 0
        %1620 = vmatpush1.bf16.msra.mxu0 0
        %1621 = vmatprep.subr.bf16.mxu0 0
        %1622 = vmatpush1.bf16.msra.mxu0 0
        %1623 = vmatprep.subr.bf16.mxu0 0
        %1624 = vmatpush1.bf16.msra.mxu0 0
        %1625 = vmatprep.subr.bf16.mxu0 0
        %1626 = vmatpush1.bf16.msra.mxu0 0
        %1627 = vmatprep.subr.bf16.mxu0 0
        %1628 = vmatpush1.bf16.msra.mxu0 0
        %1629 = vmatprep.subr.bf16.mxu0 0
        %1630 = vmatpush1.bf16.msra.mxu0 0
        %1631 = vmatprep.subr.bf16.mxu0 0
        %1632 = vmatpush1.bf16.msra.mxu0 0
        %1633 = vmatprep.subr.bf16.mxu0 0
        %1634 = vmatpush1.bf16.msra.mxu0 0
        %1635 = vmatprep.subr.bf16.mxu0 0
        %1636 = vmatpush1.bf16.msra.mxu0 0
        %1637 = vmatprep.subr.bf16.mxu0 0
        %1638 = vmatpush1.bf16.msra.mxu0 0
        %1639 = vmatprep.subr.bf16.mxu0 0
        %1640 = vmatpush1.bf16.msra.mxu0 0
        %1641 = vmatprep.subr.bf16.mxu0 0
        %1642 = vmatpush1.bf16.msra.mxu0 0
        %1643 = vmatprep.subr.bf16.mxu0 0
        %1644 = vmatpush1.bf16.msra.mxu0 0
        %1645 = vmatprep.subr.bf16.mxu0 0
        %1646 = vmatpush1.bf16.msra.mxu0 0
        %1647 = vmatprep.subr.bf16.mxu0 0
        %1648 = vmatpush1.bf16.msra.mxu0 0
        %1649 = vmatprep.mubr.bf16.mxu0 0
        %1650 = vmatmul.mubr.bf16.gmra.mrb[0].mxu0 %v1612
        %v1651 = vpop.f32.mrb[0].mxu0
        %v1652 = vadd.f32 0.0, %v1651
        %v1653 = vpop.f32.mrb[0].mxu0
        %v1654 = vpop.f32.mrb[0].mxu0
        %v1655 = vpop.f32.mrb[0].mxu0
        %1656 = vdwg.mxu0
        %1657 = vrot.lane.b32.xlu0 %v1432, 64
        %v1658 = vpop.permute.xlu0 %1657
        %1659 = vrot.lane.b32.xlu0 %v1433, 64
        %v1660 = vpop.permute.xlu0 %1659
        %v1662 = vsel %vm1435, %v1658, 0
        %v1665 = vsel %vm1435, %v1660, 0
        %1667 = vmatprep.subr.bf16.mxu0 0
        %1668 = vmatpush1.bf16.xpose.msra.mxu0 %v1665
        %1669 = vmatprep.subr.bf16.mxu0 0
        %1670 = vmatpush1.bf16.xpose.msra.mxu0 0
        %1671 = vmatprep.subr.bf16.mxu0 0
        %1672 = vmatpush1.bf16.xpose.msra.mxu0 0
        %1673 = vmatprep.subr.bf16.mxu0 0
        %1674 = vmatpush1.bf16.xpose.msra.mxu0 0
        %1675 = vmatprep.subr.bf16.mxu0 0
        %1676 = vmatpush1.bf16.xpose.msra.mxu0 0
        %1677 = vmatprep.subr.bf16.mxu0 0
        %1678 = vmatpush1.bf16.xpose.msra.mxu0 0
        %1679 = vmatprep.subr.bf16.mxu0 0
        %1680 = vmatpush1.bf16.xpose.msra.mxu0 0
        %1681 = vmatprep.subr.bf16.mxu0 0
        %1682 = vmatpush1.bf16.xpose.msra.mxu0 0
        %1683 = vmatprep.subr.bf16.mxu0 0
        %1684 = vmatpush1.bf16.xpose.msra.mxu0 0
        %1685 = vmatprep.subr.bf16.mxu0 0
        %1686 = vmatpush1.bf16.xpose.msra.mxu0 0
        %1687 = vmatprep.subr.bf16.mxu0 0
        %1688 = vmatpush1.bf16.xpose.msra.mxu0 0
        %1689 = vmatprep.subr.bf16.mxu0 0
        %1690 = vmatpush1.bf16.xpose.msra.mxu0 0
        %1691 = vmatprep.subr.bf16.mxu0 0
        %1692 = vmatpush1.bf16.xpose.msra.mxu0 0
        %1693 = vmatprep.subr.bf16.mxu0 0
        %1694 = vmatpush1.bf16.xpose.msra.mxu0 0
        %1695 = vmatprep.subr.bf16.mxu0 0
        %1696 = vmatpush1.bf16.xpose.msra.mxu0 0
        %1697 = vmatprep.subr.bf16.mxu0 0
        %1698 = vmatpush1.bf16.xpose.msra.mxu0 0
        %1699 = vmatprep.mubr.bf16.mxu0 0
        %1700 = vmatmul.mubr.bf16.gmra.mrb[0].mxu0 %v1662
        %v1701 = vpop.f32.mrb[0].mxu0
        %v1702 = vadd.f32 0.0, %v1701
        %v1703 = vpop.f32.mrb[0].mxu0
        %v1704 = vpop.f32.mrb[0].mxu0
        %v1705 = vpop.f32.mrb[0].mxu0
        %1706 = vdwg.mxu0
        %v1707 = vsel %vm1118, -1e+09, %v1702
        %v1708 = vsel %vm1483, %v1707, -inf
        %1709 = vmax.xlane.f32.xlu0 %v1708
        %v1710 = vpop.xlane.xlu0 %1709
        %v1711 = vsub.f32 %v1707, %v1710
        %v1712 = vmul.f32 %v1711, 1.442695
        %v1713 = vpow.pop %v1712
        %v1714 = vsel %vm1483, %v1713, 0.0
        %1715 = vadd.xlane.f32.xlu0 %v1714
        %v1716 = vpop.xlane.xlu0 %1715
        %v1717 = vrcp.pop %v1716
        %v1718 = vmul.f32 %v1713, %v1717
        %v1719 = vpack.c.bf16 %v1718, %v1718
        %1720 = vrot.lane.b32.xlu0 %v1434, 64
        %v1721 = vpop.permute.xlu0 %1720
        %v1723 = vsel %vm1483, %v1719, 0
        %v1726 = vsel %vm1499, %v1721, 0
        %1728 = vmatprep.subr.bf16.mxu0 0
        %1729 = vmatpush1.bf16.msra.mxu0 %v1726
        %1730 = vmatprep.subr.bf16.mxu0 0
        %1731 = vmatpush1.bf16.msra.mxu0 0
        %1732 = vmatprep.subr.bf16.mxu0 0
        %1733 = vmatpush1.bf16.msra.mxu0 0
        %1734 = vmatprep.subr.bf16.mxu0 0
        %1735 = vmatpush1.bf16.msra.mxu0 0
        %1736 = vmatprep.subr.bf16.mxu0 0
        %1737 = vmatpush1.bf16.msra.mxu0 0
        %1738 = vmatprep.subr.bf16.mxu0 0
        %1739 = vmatpush1.bf16.msra.mxu0 0
        %1740 = vmatprep.subr.bf16.mxu0 0
        %1741 = vmatpush1.bf16.msra.mxu0 0
        %1742 = vmatprep.subr.bf16.mxu0 0
        %1743 = vmatpush1.bf16.msra.mxu0 0
        %1744 = vmatprep.subr.bf16.mxu0 0
        %1745 = vmatpush1.bf16.msra.mxu0 0
        %1746 = vmatprep.subr.bf16.mxu0 0
        %1747 = vmatpush1.bf16.msra.mxu0 0
        %1748 = vmatprep.subr.bf16.mxu0 0
        %1749 = vmatpush1.bf16.msra.mxu0 0
        %1750 = vmatprep.subr.bf16.mxu0 0
        %1751 = vmatpush1.bf16.msra.mxu0 0
        %1752 = vmatprep.subr.bf16.mxu0 0
        %1753 = vmatpush1.bf16.msra.mxu0 0
        %1754 = vmatprep.subr.bf16.mxu0 0
        %1755 = vmatpush1.bf16.msra.mxu0 0
        %1756 = vmatprep.subr.bf16.mxu0 0
        %1757 = vmatpush1.bf16.msra.mxu0 0
        %1758 = vmatprep.subr.bf16.mxu0 0
        %1759 = vmatpush1.bf16.msra.mxu0 0
        %1760 = vmatprep.mubr.bf16.mxu0 0
        %1761 = vmatmul.mubr.bf16.gmra.mrb[0].mxu0 %v1723
        %v1762 = vpop.f32.mrb[0].mxu0
        %v1763 = vadd.f32 0.0, %v1762
        %v1764 = vpop.f32.mrb[0].mxu0
        %v1765 = vpop.f32.mrb[0].mxu0
        %v1766 = vpop.f32.mrb[0].mxu0
        %1767 = vdwg.mxu0
        %1768 = vrot.lane.b32.xlu0 %v1432, 32
        %v1769 = vpop.permute.xlu0 %1768
        %1770 = vrot.lane.b32.xlu0 %v1433, 32
        %v1771 = vpop.permute.xlu0 %1770
        %v1773 = vsel %vm1435, %v1769, 0
        %v1776 = vsel %vm1435, %v1771, 0
        %1778 = vmatprep.subr.bf16.mxu0 0
        %1779 = vmatpush1.bf16.xpose.msra.mxu0 %v1776
        %1780 = vmatprep.subr.bf16.mxu0 0
        %1781 = vmatpush1.bf16.xpose.msra.mxu0 0
        %1782 = vmatprep.subr.bf16.mxu0 0
        %1783 = vmatpush1.bf16.xpose.msra.mxu0 0
        %1784 = vmatprep.subr.bf16.mxu0 0
        %1785 = vmatpush1.bf16.xpose.msra.mxu0 0
        %1786 = vmatprep.subr.bf16.mxu0 0
        %1787 = vmatpush1.bf16.xpose.msra.mxu0 0
        %1788 = vmatprep.subr.bf16.mxu0 0
        %1789 = vmatpush1.bf16.xpose.msra.mxu0 0
        %1790 = vmatprep.subr.bf16.mxu0 0
        %1791 = vmatpush1.bf16.xpose.msra.mxu0 0
        %1792 = vmatprep.subr.bf16.mxu0 0
        %1793 = vmatpush1.bf16.xpose.msra.mxu0 0
        %1794 = vmatprep.subr.bf16.mxu0 0
        %1795 = vmatpush1.bf16.xpose.msra.mxu0 0
        %1796 = vmatprep.subr.bf16.mxu0 0
        %1797 = vmatpush1.bf16.xpose.msra.mxu0 0
        %1798 = vmatprep.subr.bf16.mxu0 0
        %1799 = vmatpush1.bf16.xpose.msra.mxu0 0
        %1800 = vmatprep.subr.bf16.mxu0 0
        %1801 = vmatpush1.bf16.xpose.msra.mxu0 0
        %1802 = vmatprep.subr.bf16.mxu0 0
        %1803 = vmatpush1.bf16.xpose.msra.mxu0 0
        %1804 = vmatprep.subr.bf16.mxu0 0
        %1805 = vmatpush1.bf16.xpose.msra.mxu0 0
        %1806 = vmatprep.subr.bf16.mxu0 0
        %1807 = vmatpush1.bf16.xpose.msra.mxu0 0
        %1808 = vmatprep.subr.bf16.mxu0 0
        %1809 = vmatpush1.bf16.xpose.msra.mxu0 0
        %1810 = vmatprep.mubr.bf16.mxu0 0
        %1811 = vmatmul.mubr.bf16.gmra.mrb[0].mxu0 %v1773
        %v1812 = vpop.f32.mrb[0].mxu0
        %v1813 = vadd.f32 0.0, %v1812
        %v1814 = vpop.f32.mrb[0].mxu0
        %v1815 = vpop.f32.mrb[0].mxu0
        %v1816 = vpop.f32.mrb[0].mxu0
        %1817 = vdwg.mxu0
        %v1818 = vsel %vm1118, -1e+09, %v1813
        %v1819 = vsel %vm1483, %v1818, -inf
        %1820 = vmax.xlane.f32.xlu0 %v1819
        %v1821 = vpop.xlane.xlu0 %1820
        %v1822 = vsub.f32 %v1818, %v1821
        %v1823 = vmul.f32 %v1822, 1.442695
        %v1824 = vpow.pop %v1823
        %v1825 = vsel %vm1483, %v1824, 0.0
        %1826 = vadd.xlane.f32.xlu0 %v1825
        %v1827 = vpop.xlane.xlu0 %1826
        %v1828 = vrcp.pop %v1827
        %v1829 = vmul.f32 %v1824, %v1828
        %v1830 = vpack.c.bf16 %v1829, %v1829
        %1831 = vrot.lane.b32.xlu0 %v1434, 32
        %v1832 = vpop.permute.xlu0 %1831
        %v1834 = vsel %vm1483, %v1830, 0
        %v1837 = vsel %vm1499, %v1832, 0
        %1839 = vmatprep.subr.bf16.mxu0 0
        %1840 = vmatpush1.bf16.msra.mxu0 %v1837
        %1841 = vmatprep.subr.bf16.mxu0 0
        %1842 = vmatpush1.bf16.msra.mxu0 0
        %1843 = vmatprep.subr.bf16.mxu0 0
        %1844 = vmatpush1.bf16.msra.mxu0 0
        %1845 = vmatprep.subr.bf16.mxu0 0
        %1846 = vmatpush1.bf16.msra.mxu0 0
        %1847 = vmatprep.subr.bf16.mxu0 0
        %1848 = vmatpush1.bf16.msra.mxu0 0
        %1849 = vmatprep.subr.bf16.mxu0 0
        %1850 = vmatpush1.bf16.msra.mxu0 0
        %1851 = vmatprep.subr.bf16.mxu0 0
        %1852 = vmatpush1.bf16.msra.mxu0 0
        %1853 = vmatprep.subr.bf16.mxu0 0
        %1854 = vmatpush1.bf16.msra.mxu0 0
        %1855 = vmatprep.subr.bf16.mxu0 0
        %1856 = vmatpush1.bf16.msra.mxu0 0
        %1857 = vmatprep.subr.bf16.mxu0 0
        %1858 = vmatpush1.bf16.msra.mxu0 0
        %1859 = vmatprep.subr.bf16.mxu0 0
        %1860 = vmatpush1.bf16.msra.mxu0 0
        %1861 = vmatprep.subr.bf16.mxu0 0
        %1862 = vmatpush1.bf16.msra.mxu0 0
        %1863 = vmatprep.subr.bf16.mxu0 0
        %1864 = vmatpush1.bf16.msra.mxu0 0
        %1865 = vmatprep.subr.bf16.mxu0 0
        %1866 = vmatpush1.bf16.msra.mxu0 0
        %1867 = vmatprep.subr.bf16.mxu0 0
        %1868 = vmatpush1.bf16.msra.mxu0 0
        %1869 = vmatprep.subr.bf16.mxu0 0
        %1870 = vmatpush1.bf16.msra.mxu0 0
        %1871 = vmatprep.mubr.bf16.mxu0 0
        %1872 = vmatmul.mubr.bf16.gmra.mrb[0].mxu0 %v1834
        %v1873 = vpop.f32.mrb[0].mxu0
        %v1874 = vadd.f32 0.0, %v1873
        %v1875 = vpop.f32.mrb[0].mxu0
        %v1876 = vpop.f32.mrb[0].mxu0
        %v1877 = vpop.f32.mrb[0].mxu0
        %1878 = vdwg.mxu0
        %1880 = vrot.lane.b32.xlu0 %v1652, 32
        %v1881 = vpop.permute.xlu0 %1880
        %1884 = vrot.lane.b32.xlu0 %v1763, 64
        %v1885 = vpop.permute.xlu0 %1884
        %1888 = vrot.lane.b32.xlu0 %v1874, 96
        %v1889 = vpop.permute.xlu0 %1888
        %v1891 = vsel %vm1435, %v1538, %v1881
        %vm1892 = vcmask 523264
        %v1893 = vsel %vm1892, %v1891, %v1885
        %vm1894 = vcmask 785408
        %v1895 = vsel %vm1894, %v1893, %v1889
        %v1896 = vpack.c.bf16 %v1895, %v1895
        %v1898 = vlaneseq
        %v1899 = vshrl.u32 %v1898, 7
        %v1900 = vsub.s32 0, %v1899
        %v1901 = vrot.slane %v1431, %v1900
        %v1919 = vunpack.c.l.b16 %v1415
        %v1920 = vunpack.c.l.b16 %v1416
        %v1921 = vunpack.c.l.b16 %v1417
        %v1922 = vunpack.c.l.b16 %v1418
        %v1923 = vunpack.c.l.b16 %v1419
        %v1924 = vunpack.c.l.b16 %v1420
        %v1925 = vunpack.c.l.b16 %v1421
        %v1926 = vunpack.c.l.b16 %v1422
        %v1927 = vunpack.c.l.b16 %v1423
        %v1928 = vunpack.c.l.b16 %v1424
        %v1929 = vunpack.c.l.b16 %v1425
        %v1930 = vunpack.c.l.b16 %v1426
        %v1931 = vunpack.c.l.b16 %v1427
        %v1932 = vunpack.c.l.b16 %v1428
        %v1933 = vunpack.c.l.b16 %v1429
        %v1934 = vunpack.c.l.b16 %v1430
        %v1935 = vpack.c.b16 %v1920, %v1919
        %v1936 = vpack.c.b16 %v1922, %v1921
        %v1937 = vpack.c.b16 %v1924, %v1923
        %v1938 = vpack.c.b16 %v1926, %v1925
        %v1939 = vpack.c.b16 %v1928, %v1927
        %v1940 = vpack.c.b16 %v1930, %v1929
        %v1941 = vpack.c.b16 %v1932, %v1931
        %v1942 = vpack.c.b16 %v1934, %v1933
        %1951 = vmatprep.subr.bf16.mxu0 0
        %1952 = vmatpush1.bf16.msra.mxu0 %v1935
        %1953 = vmatprep.subr.bf16.mxu0 0
        %1954 = vmatpush1.bf16.msra.mxu0 %v1936
        %1955 = vmatprep.subr.bf16.mxu0 0
        %1956 = vmatpush1.bf16.msra.mxu0 %v1937
        %1957 = vmatprep.subr.bf16.mxu0 0
        %1958 = vmatpush1.bf16.msra.mxu0 %v1938
        %1959 = vmatprep.subr.bf16.mxu0 0
        %1960 = vmatpush1.bf16.msra.mxu0 %v1939
        %1961 = vmatprep.subr.bf16.mxu0 0
        %1962 = vmatpush1.bf16.msra.mxu0 %v1940
        %1963 = vmatprep.subr.bf16.mxu0 0
        %1964 = vmatpush1.bf16.msra.mxu0 %v1941
        %1965 = vmatprep.subr.bf16.mxu0 0
        %1966 = vmatpush1.bf16.msra.mxu0 %v1942
        %1967 = vmatprep.subr.bf16.mxu0 0
        %1968 = vmatpush1.bf16.msra.mxu0 0
        %1969 = vmatprep.subr.bf16.mxu0 0
        %1970 = vmatpush1.bf16.msra.mxu0 0
        %1971 = vmatprep.subr.bf16.mxu0 0
        %1972 = vmatpush1.bf16.msra.mxu0 0
        %1973 = vmatprep.subr.bf16.mxu0 0
        %1974 = vmatpush1.bf16.msra.mxu0 0
        %1975 = vmatprep.subr.bf16.mxu0 0
        %1976 = vmatpush1.bf16.msra.mxu0 0
        %1977 = vmatprep.subr.bf16.mxu0 0
        %1978 = vmatpush1.bf16.msra.mxu0 0
        %1979 = vmatprep.subr.bf16.mxu0 0
        %1980 = vmatpush1.bf16.msra.mxu0 0
        %1981 = vmatprep.subr.bf16.mxu0 0
        %1982 = vmatpush1.bf16.msra.mxu0 0
        %1983 = vmatprep.mubr.bf16.mxu0 0
        %1984 = vmatmul.mubr.bf16.gmra.mrb[0].mxu0 %v1896
        %v1985 = vpop.f32.mrb[0].mxu0
        %v1986 = vadd.f32 %v1901, %v1985
        %v1987 = vpop.f32.mrb[0].mxu0
        %v1988 = vpop.f32.mrb[0].mxu0
        %v1989 = vpop.f32.mrb[0].mxu0
        %1990 = vdwg.mxu0
        %v1991 = vadd.f32 %v1113, %v1986
        %v1992 = vld [vmem:[#allocation13] sm:$0x1]
        %v1993 = vld [vmem:[#allocation14] sm:$0x1]
        %1994 = vadd.xlane.f32.xlu0 %v1991
        %v1995 = vpop.xlane.xlu0 %1994
        %v1996 = vmul.f32 %v1995, %v1125
        %v1997 = vsub.f32 %v1991, %v1996
        %v1998 = vmul.f32 %v1997, %v1997
        %1999 = vadd.xlane.f32.xlu0 %v1998
        %v2000 = vpop.xlane.xlu0 %1999
        %v2001 = vmul.f32 %v2000, 0.007874016
        %v2002 = vrsqrt.pop %v2001
        %v2003 = vmul.f32 %v2001, %v2002
        %vm2004 = vcmp.eq.f32.partialorder %v2001, inf
        %v2005 = vsel %vm2004, %v2001, %v2003
        %vm2006 = vcmp.eq.f32.partialorder %v2001, 0.0
        %v2007 = vand.u32 %v2001, 2147483648
        %v2008 = vsel %vm2006, %v2007, %v2005
        %v2009 = vadd.f32 %v2008, 1e-06
        %v2010 = vrcp.pop %v2009
        %v2012 = vlaneseq
        %v2013 = vshrl.u32 %v2012, 7
        %v2014 = vsub.s32 0, %v2013
        %v2015 = vrot.slane %v1992, %v2014
        %v2017 = vmul.f32 %v2015, %v1997
        %v2018 = vmul.f32 %v2017, %v2010
        %v2020 = vlaneseq
        %v2021 = vshrl.u32 %v2020, 7
        %v2022 = vsub.s32 0, %v2021
        %v2023 = vrot.slane %v1993, %v2022
        %v2025 = vadd.f32 %v2018, %v2023
        %v2026 = vpack.c.bf16 %v2025, %v2025
        %v2027 = vld [vmem:[#allocation16] sm:$0xf]
        %v2028 = vld [vmem:[#allocation16 + $0x4] sm:$0xf]
        %v2029 = vld [vmem:[#allocation16 + $0x8] sm:$0xf]
        %v2030 = vld [vmem:[#allocation16 + $0xc] sm:$0xf]
        %v2031 = vld [vmem:[#allocation16 + $0x10] sm:$0xf]
        %v2032 = vld [vmem:[#allocation16 + $0x14] sm:$0xf]
        %v2033 = vld [vmem:[#allocation16 + $0x18] sm:$0xf]
        %v2034 = vld [vmem:[#allocation16 + $0x1c] sm:$0xf]
        %v2035 = vld [vmem:[#allocation16 + $0x20] sm:$0xf]
        %v2036 = vld [vmem:[#allocation16 + $0x24] sm:$0xf]
        %v2037 = vld [vmem:[#allocation16 + $0x28] sm:$0xf]
        %v2038 = vld [vmem:[#allocation16 + $0x2c] sm:$0xf]
        %v2039 = vld [vmem:[#allocation16 + $0x30] sm:$0xf]
        %v2040 = vld [vmem:[#allocation16 + $0x34] sm:$0xf]
        %v2041 = vld [vmem:[#allocation16 + $0x38] sm:$0xf]
        %v2042 = vld [vmem:[#allocation16 + $0x3c] sm:$0xf]
        %v2043 = vld [vmem:[#allocation17] sm:$0x1]
        %v2045 = vlaneseq
        %v2046 = vshrl.u32 %v2045, 7
        %v2047 = vsub.s32 0, %v2046
        %v2048 = vrot.slane %v2043, %v2047
        %v2066 = vunpack.c.l.b16 %v2027
        %v2067 = vunpack.c.l.b16 %v2028
        %v2068 = vunpack.c.l.b16 %v2029
        %v2069 = vunpack.c.l.b16 %v2030
        %v2070 = vunpack.c.l.b16 %v2031
        %v2071 = vunpack.c.l.b16 %v2032
        %v2072 = vunpack.c.l.b16 %v2033
        %v2073 = vunpack.c.l.b16 %v2034
        %v2074 = vunpack.c.l.b16 %v2035
        %v2075 = vunpack.c.l.b16 %v2036
        %v2076 = vunpack.c.l.b16 %v2037
        %v2077 = vunpack.c.l.b16 %v2038
        %v2078 = vunpack.c.l.b16 %v2039
        %v2079 = vunpack.c.l.b16 %v2040
        %v2080 = vunpack.c.l.b16 %v2041
        %v2081 = vunpack.c.l.b16 %v2042
        %v2082 = vpack.c.b16 %v2067, %v2066
        %v2083 = vpack.c.b16 %v2069, %v2068
        %v2084 = vpack.c.b16 %v2071, %v2070
        %v2085 = vpack.c.b16 %v2073, %v2072
        %v2086 = vpack.c.b16 %v2075, %v2074
        %v2087 = vpack.c.b16 %v2077, %v2076
        %v2088 = vpack.c.b16 %v2079, %v2078
        %v2089 = vpack.c.b16 %v2081, %v2080
        %2098 = vmatprep.subr.bf16.mxu0 0
        %2099 = vmatpush1.bf16.msra.mxu0 %v2082
        %2100 = vmatprep.subr.bf16.mxu0 0
        %2101 = vmatpush1.bf16.msra.mxu0 %v2083
        %2102 = vmatprep.subr.bf16.mxu0 0
        %2103 = vmatpush1.bf16.msra.mxu0 %v2084
        %2104 = vmatprep.subr.bf16.mxu0 0
        %2105 = vmatpush1.bf16.msra.mxu0 %v2085
        %2106 = vmatprep.subr.bf16.mxu0 0
        %2107 = vmatpush1.bf16.msra.mxu0 %v2086
        %2108 = vmatprep.subr.bf16.mxu0 0
        %2109 = vmatpush1.bf16.msra.mxu0 %v2087
        %2110 = vmatprep.subr.bf16.mxu0 0
        %2111 = vmatpush1.bf16.msra.mxu0 %v2088
        %2112 = vmatprep.subr.bf16.mxu0 0
        %2113 = vmatpush1.bf16.msra.mxu0 %v2089
        %2114 = vmatprep.subr.bf16.mxu0 0
        %2115 = vmatpush1.bf16.msra.mxu0 0
        %2116 = vmatprep.subr.bf16.mxu0 0
        %2117 = vmatpush1.bf16.msra.mxu0 0
        %2118 = vmatprep.subr.bf16.mxu0 0
        %2119 = vmatpush1.bf16.msra.mxu0 0
        %2120 = vmatprep.subr.bf16.mxu0 0
        %2121 = vmatpush1.bf16.msra.mxu0 0
        %2122 = vmatprep.subr.bf16.mxu0 0
        %2123 = vmatpush1.bf16.msra.mxu0 0
        %2124 = vmatprep.subr.bf16.mxu0 0
        %2125 = vmatpush1.bf16.msra.mxu0 0
        %2126 = vmatprep.subr.bf16.mxu0 0
        %2127 = vmatpush1.bf16.msra.mxu0 0
        %2128 = vmatprep.subr.bf16.mxu0 0
        %2129 = vmatpush1.bf16.msra.mxu0 0
        %2130 = vmatprep.mubr.bf16.mxu0 0
        %2131 = vmatmul.mubr.bf16.gmra.mrb[0].mxu0 %v2026
        %v2132 = vpop.f32.mrb[0].mxu0
        %v2133 = vadd.f32 %v2048, %v2132
        %v2134 = vpop.f32.mrb[0].mxu0
        %v2135 = vpop.f32.mrb[0].mxu0
        %v2136 = vpop.f32.mrb[0].mxu0
        %2137 = vdwg.mxu0
        %v2138 = vld [vmem:[%s14] sm:$0xff]
        %v2139 = vld [vmem:[%s14 + $0x8] sm:$0xff]
        %v2140 = vld [vmem:[%s14 + $0x10] sm:$0xff]
        %v2141 = vld [vmem:[%s14 + $0x18] sm:$0xff]
        %v2142 = vld [vmem:[%s14 + $0x20] sm:$0xff]
        %v2143 = vld [vmem:[%s14 + $0x28] sm:$0xff]
        %v2144 = vld [vmem:[%s14 + $0x30] sm:$0xff]
        %v2145 = vld [vmem:[%s14 + $0x38] sm:$0xff]
        %v2146 = vld [vmem:[%s14 + $0x40] sm:$0xff]
        %v2147 = vld [vmem:[%s14 + $0x48] sm:$0xff]
        %v2148 = vld [vmem:[%s14 + $0x50] sm:$0xff]
        %v2149 = vld [vmem:[%s14 + $0x58] sm:$0xff]
        %v2150 = vld [vmem:[%s14 + $0x60] sm:$0xff]
        %v2151 = vld [vmem:[%s14 + $0x68] sm:$0xff]
        %v2152 = vld [vmem:[%s14 + $0x70] sm:$0xff]
        %v2153 = vld [vmem:[%s14 + $0x78] sm:$0xff]
        %v2154 = vld [vmem:[#allocation19] sm:$0x3]
        %v2156 = vlaneseq
        %v2157 = vshrl.u32 %v2156, 7
        %v2158 = vsub.s32 0, %v2157
        %v2159 = vrot.slane %v2154, %v2158
        %v2160 = vlaneseq
        %v2161 = vshrl.u32 %v2160, 7
        %v2162 = vsub.s32 1, %v2161
        %v2163 = vrot.slane %v2154, %v2162
        %v2182 = vunpack.c.l.b16 %v2138
        %v2183 = vunpack.c.h.b16 %v2138
        %v2184 = vunpack.c.l.b16 %v2139
        %v2185 = vunpack.c.h.b16 %v2139
        %v2186 = vunpack.c.l.b16 %v2140
        %v2187 = vunpack.c.h.b16 %v2140
        %v2188 = vunpack.c.l.b16 %v2141
        %v2189 = vunpack.c.h.b16 %v2141
        %v2190 = vunpack.c.l.b16 %v2142
        %v2191 = vunpack.c.h.b16 %v2142
        %v2192 = vunpack.c.l.b16 %v2143
        %v2193 = vunpack.c.h.b16 %v2143
        %v2194 = vunpack.c.l.b16 %v2144
        %v2195 = vunpack.c.h.b16 %v2144
        %v2196 = vunpack.c.l.b16 %v2145
        %v2197 = vunpack.c.h.b16 %v2145
        %v2198 = vunpack.c.l.b16 %v2146
        %v2199 = vunpack.c.h.b16 %v2146
        %v2200 = vunpack.c.l.b16 %v2147
        %v2201 = vunpack.c.h.b16 %v2147
        %v2202 = vunpack.c.l.b16 %v2148
        %v2203 = vunpack.c.h.b16 %v2148
        %v2204 = vunpack.c.l.b16 %v2149
        %v2205 = vunpack.c.h.b16 %v2149
        %v2206 = vunpack.c.l.b16 %v2150
        %v2207 = vunpack.c.h.b16 %v2150
        %v2208 = vunpack.c.l.b16 %v2151
        %v2209 = vunpack.c.h.b16 %v2151
        %v2210 = vunpack.c.l.b16 %v2152
        %v2211 = vunpack.c.h.b16 %v2152
        %v2212 = vunpack.c.l.b16 %v2153
        %v2213 = vunpack.c.h.b16 %v2153
        %v2214 = vpack.c.b16 %v2184, %v2182
        %v2215 = vpack.c.b16 %v2185, %v2183
        %v2216 = vpack.c.b16 %v2188, %v2186
        %v2217 = vpack.c.b16 %v2189, %v2187
        %v2218 = vpack.c.b16 %v2192, %v2190
        %v2219 = vpack.c.b16 %v2193, %v2191
        %v2220 = vpack.c.b16 %v2196, %v2194
        %v2221 = vpack.c.b16 %v2197, %v2195
        %v2222 = vpack.c.b16 %v2200, %v2198
        %v2223 = vpack.c.b16 %v2201, %v2199
        %v2224 = vpack.c.b16 %v2204, %v2202
        %v2225 = vpack.c.b16 %v2205, %v2203
        %v2226 = vpack.c.b16 %v2208, %v2206
        %v2227 = vpack.c.b16 %v2209, %v2207
        %v2228 = vpack.c.b16 %v2212, %v2210
        %v2229 = vpack.c.b16 %v2213, %v2211
        %2246 = vmatprep.subr.bf16.mxu0 %v2215
        %2247 = vmatpush1.bf16.msra.mxu0 %v2214
        %2248 = vmatprep.subr.bf16.mxu0 %v2217
        %2249 = vmatpush1.bf16.msra.mxu0 %v2216
        %2250 = vmatprep.subr.bf16.mxu0 %v2219
        %2251 = vmatpush1.bf16.msra.mxu0 %v2218
        %2252 = vmatprep.subr.bf16.mxu0 %v2221
        %2253 = vmatpush1.bf16.msra.mxu0 %v2220
        %2254 = vmatprep.subr.bf16.mxu0 %v2223
        %2255 = vmatpush1.bf16.msra.mxu0 %v2222
        %2256 = vmatprep.subr.bf16.mxu0 %v2225
        %2257 = vmatpush1.bf16.msra.mxu0 %v2224
        %2258 = vmatprep.subr.bf16.mxu0 %v2227
        %2259 = vmatpush1.bf16.msra.mxu0 %v2226
        %2260 = vmatprep.subr.bf16.mxu0 %v2229
        %2261 = vmatpush1.bf16.msra.mxu0 %v2228
        %2262 = vmatprep.subr.bf16.mxu0 0
        %2263 = vmatpush1.bf16.msra.mxu0 0
        %2264 = vmatprep.subr.bf16.mxu0 0
        %2265 = vmatpush1.bf16.msra.mxu0 0
        %2266 = vmatprep.subr.bf16.mxu0 0
        %2267 = vmatpush1.bf16.msra.mxu0 0
        %2268 = vmatprep.subr.bf16.mxu0 0
        %2269 = vmatpush1.bf16.msra.mxu0 0
        %2270 = vmatprep.subr.bf16.mxu0 0
        %2271 = vmatpush1.bf16.msra.mxu0 0
        %2272 = vmatprep.subr.bf16.mxu0 0
        %2273 = vmatpush1.bf16.msra.mxu0 0
        %2274 = vmatprep.subr.bf16.mxu0 0
        %2275 = vmatpush1.bf16.msra.mxu0 0
        %2276 = vmatprep.subr.bf16.mxu0 0
        %2277 = vmatpush1.bf16.msra.mxu0 0
        %2278 = vmatprep.mubr.bf16.mxu0 0
        %2279 = vmatmul.mubr.bf16.gmra.mrb[0].mxu0 %v1116
        %v2280 = vpop.f32.mrb[0].mxu0
        %v2281 = vadd.f32 %v2159, %v2280
        %v2282 = vpop.f32.mrb[0].mxu0
        %v2283 = vadd.f32 %v2163, %v2282
        %v2284 = vpop.f32.mrb[0].mxu0
        %v2285 = vadd.f32 %v2159, %v2284
        %v2286 = vpop.f32.mrb[0].mxu0
        %v2287 = vadd.f32 %v2163, %v2286
        %2288 = vdwg.mxu0
        %v2289 = vld [vmem:[#allocation20] sm:$0xf]
        %v2290 = vld [vmem:[#allocation20 + $0x4] sm:$0xf]
        %v2291 = vld [vmem:[#allocation20 + $0x8] sm:$0xf]
        %v2292 = vld [vmem:[#allocation20 + $0xc] sm:$0xf]
        %v2293 = vld [vmem:[#allocation20 + $0x10] sm:$0xf]
        %v2294 = vld [vmem:[#allocation20 + $0x14] sm:$0xf]
        %v2295 = vld [vmem:[#allocation20 + $0x18] sm:$0xf]
        %v2296 = vld [vmem:[#allocation20 + $0x1c] sm:$0xf]
        %v2297 = vld [vmem:[#allocation20 + $0x20] sm:$0xf]
        %v2298 = vld [vmem:[#allocation20 + $0x24] sm:$0xf]
        %v2299 = vld [vmem:[#allocation20 + $0x28] sm:$0xf]
        %v2300 = vld [vmem:[#allocation20 + $0x2c] sm:$0xf]
        %v2301 = vld [vmem:[#allocation20 + $0x30] sm:$0xf]
        %v2302 = vld [vmem:[#allocation20 + $0x34] sm:$0xf]
        %v2303 = vld [vmem:[#allocation20 + $0x38] sm:$0xf]
        %v2304 = vld [vmem:[#allocation20 + $0x3c] sm:$0xf]
        %v2305 = vld [vmem:[#allocation22] sm:$0x1]
        %v2306 = vpack.c.bf16 %v2133, %v2133
        %v2307 = vpack.c.bf16 %v2285, %v2281
        %v2308 = vpack.c.bf16 %v2287, %v2283
        %v2310 = vsel %vm1435, %v2306, 0
        %v2313 = vsel %vm1435, %v2307, 0
        %2315 = vmatprep.subr.bf16.mxu0 0
        %2316 = vmatpush1.bf16.xpose.msra.mxu0 %v2313
        %2317 = vmatprep.subr.bf16.mxu0 0
        %2318 = vmatpush1.bf16.xpose.msra.mxu0 0
        %2319 = vmatprep.subr.bf16.mxu0 0
        %2320 = vmatpush1.bf16.xpose.msra.mxu0 0
        %2321 = vmatprep.subr.bf16.mxu0 0
        %2322 = vmatpush1.bf16.xpose.msra.mxu0 0
        %2323 = vmatprep.subr.bf16.mxu0 0
        %2324 = vmatpush1.bf16.xpose.msra.mxu0 0
        %2325 = vmatprep.subr.bf16.mxu0 0
        %2326 = vmatpush1.bf16.xpose.msra.mxu0 0
        %2327 = vmatprep.subr.bf16.mxu0 0
        %2328 = vmatpush1.bf16.xpose.msra.mxu0 0
        %2329 = vmatprep.subr.bf16.mxu0 0
        %2330 = vmatpush1.bf16.xpose.msra.mxu0 0
        %2331 = vmatprep.subr.bf16.mxu0 0
        %2332 = vmatpush1.bf16.xpose.msra.mxu0 0
        %2333 = vmatprep.subr.bf16.mxu0 0
        %2334 = vmatpush1.bf16.xpose.msra.mxu0 0
        %2335 = vmatprep.subr.bf16.mxu0 0
        %2336 = vmatpush1.bf16.xpose.msra.mxu0 0
        %2337 = vmatprep.subr.bf16.mxu0 0
        %2338 = vmatpush1.bf16.xpose.msra.mxu0 0
        %2339 = vmatprep.subr.bf16.mxu0 0
        %2340 = vmatpush1.bf16.xpose.msra.mxu0 0
        %2341 = vmatprep.subr.bf16.mxu0 0
        %2342 = vmatpush1.bf16.xpose.msra.mxu0 0
        %2343 = vmatprep.subr.bf16.mxu0 0
        %2344 = vmatpush1.bf16.xpose.msra.mxu0 0
        %2345 = vmatprep.subr.bf16.mxu0 0
        %2346 = vmatpush1.bf16.xpose.msra.mxu0 0
        %2347 = vmatprep.mubr.bf16.mxu0 0
        %2348 = vmatmul.mubr.bf16.gmra.mrb[0].mxu0 %v2310
        %v2349 = vpop.f32.mrb[0].mxu0
        %v2350 = vadd.f32 0.0, %v2349
        %v2351 = vpop.f32.mrb[0].mxu0
        %v2352 = vpop.f32.mrb[0].mxu0
        %v2353 = vpop.f32.mrb[0].mxu0
        %2354 = vdwg.mxu0
        %v2355 = vsel %vm1120, 1, 0
        %v2356 = vlaneseq
        %v2357 = vshrl.u32 %v2356, 7
        %v2358 = vsub.s32 0, %v2357
        %v2359 = vrot.slane %v2355, %v2358
        %vm2360 = vcmp.eq.s32.totalorder %v2359, 1
        %v2361 = vsel %vm2360, -1e+09, %v2350
        %vm2362 = vcmask 80896
        %v2363 = vsel %vm2362, %v2361, -inf
        %2364 = vmax.xlane.f32.xlu0 %v2363
        %v2365 = vpop.xlane.xlu0 %2364
        %v2366 = vsub.f32 %v2361, %v2365
        %v2367 = vmul.f32 %v2366, 1.442695
        %v2368 = vpow.pop %v2367
        %v2369 = vsel %vm2362, %v2368, 0.0
        %2370 = vadd.xlane.f32.xlu0 %v2369
        %v2371 = vpop.xlane.xlu0 %2370
        %v2372 = vrcp.pop %v2371
        %v2373 = vmul.f32 %v2368, %v2372
        %v2374 = vpack.c.bf16 %v2373, %v2373
        %v2376 = vsel %vm2362, %v2374, 0
        %vm2378 = vcmask 1044480
        %v2380 = vsel %vm2378, %v2308, 0
        %2382 = vmatprep.subr.bf16.mxu0 0
        %2383 = vmatpush1.bf16.msra.mxu0 %v2380
        %2384 = vmatprep.subr.bf16.mxu0 0
        %2385 = vmatpush1.bf16.msra.mxu0 0
        %2386 = vmatprep.subr.bf16.mxu0 0
        %2387 = vmatpush1.bf16.msra.mxu0 0
        %2388 = vmatprep.subr.bf16.mxu0 0
        %2389 = vmatpush1.bf16.msra.mxu0 0
        %2390 = vmatprep.subr.bf16.mxu0 0
        %2391 = vmatpush1.bf16.msra.mxu0 0
        %2392 = vmatprep.subr.bf16.mxu0 0
        %2393 = vmatpush1.bf16.msra.mxu0 0
        %2394 = vmatprep.subr.bf16.mxu0 0
        %2395 = vmatpush1.bf16.msra.mxu0 0
        %2396 = vmatprep.subr.bf16.mxu0 0
        %2397 = vmatpush1.bf16.msra.mxu0 0
        %2398 = vmatprep.subr.bf16.mxu0 0
        %2399 = vmatpush1.bf16.msra.mxu0 0
        %2400 = vmatprep.subr.bf16.mxu0 0
        %2401 = vmatpush1.bf16.msra.mxu0 0
        %2402 = vmatprep.subr.bf16.mxu0 0
        %2403 = vmatpush1.bf16.msra.mxu0 0
        %2404 = vmatprep.subr.bf16.mxu0 0
        %2405 = vmatpush1.bf16.msra.mxu0 0
        %2406 = vmatprep.subr.bf16.mxu0 0
        %2407 = vmatpush1.bf16.msra.mxu0 0
        %2408 = vmatprep.subr.bf16.mxu0 0
        %2409 = vmatpush1.bf16.msra.mxu0 0
        %2410 = vmatprep.subr.bf16.mxu0 0
        %2411 = vmatpush1.bf16.msra.mxu0 0
        %2412 = vmatprep.subr.bf16.mxu0 0
        %2413 = vmatpush1.bf16.msra.mxu0 0
        %2414 = vmatprep.mubr.bf16.mxu0 0
        %2415 = vmatmul.mubr.bf16.gmra.mrb[0].mxu0 %v2376
        %v2416 = vpop.f32.mrb[0].mxu0
        %v2417 = vadd.f32 0.0, %v2416
        %v2418 = vpop.f32.mrb[0].mxu0
        %v2419 = vpop.f32.mrb[0].mxu0
        %v2420 = vpop.f32.mrb[0].mxu0
        %2421 = vdwg.mxu0
        %2423 = vrot.lane.b32.xlu0 %v2306, 96
        %v2424 = vpop.permute.xlu0 %2423
        %2426 = vrot.lane.b32.xlu0 %v2307, 96
        %v2427 = vpop.permute.xlu0 %2426
        %v2429 = vsel %vm1435, %v2424, 0
        %v2432 = vsel %vm1435, %v2427, 0
        %2434 = vmatprep.subr.bf16.mxu0 0
        %2435 = vmatpush1.bf16.xpose.msra.mxu0 %v2432
        %2436 = vmatprep.subr.bf16.mxu0 0
        %2437 = vmatpush1.bf16.xpose.msra.mxu0 0
        %2438 = vmatprep.subr.bf16.mxu0 0
        %2439 = vmatpush1.bf16.xpose.msra.mxu0 0
        %2440 = vmatprep.subr.bf16.mxu0 0
        %2441 = vmatpush1.bf16.xpose.msra.mxu0 0
        %2442 = vmatprep.subr.bf16.mxu0 0
        %2443 = vmatpush1.bf16.xpose.msra.mxu0 0
        %2444 = vmatprep.subr.bf16.mxu0 0
        %2445 = vmatpush1.bf16.xpose.msra.mxu0 0
        %2446 = vmatprep.subr.bf16.mxu0 0
        %2447 = vmatpush1.bf16.xpose.msra.mxu0 0
        %2448 = vmatprep.subr.bf16.mxu0 0
        %2449 = vmatpush1.bf16.xpose.msra.mxu0 0
        %2450 = vmatprep.subr.bf16.mxu0 0
        %2451 = vmatpush1.bf16.xpose.msra.mxu0 0
        %2452 = vmatprep.subr.bf16.mxu0 0
        %2453 = vmatpush1.bf16.xpose.msra.mxu0 0
        %2454 = vmatprep.subr.bf16.mxu0 0
        %2455 = vmatpush1.bf16.xpose.msra.mxu0 0
        %2456 = vmatprep.subr.bf16.mxu0 0
        %2457 = vmatpush1.bf16.xpose.msra.mxu0 0
        %2458 = vmatprep.subr.bf16.mxu0 0
        %2459 = vmatpush1.bf16.xpose.msra.mxu0 0
        %2460 = vmatprep.subr.bf16.mxu0 0
        %2461 = vmatpush1.bf16.xpose.msra.mxu0 0
        %2462 = vmatprep.subr.bf16.mxu0 0
        %2463 = vmatpush1.bf16.xpose.msra.mxu0 0
        %2464 = vmatprep.subr.bf16.mxu0 0
        %2465 = vmatpush1.bf16.xpose.msra.mxu0 0
        %2466 = vmatprep.mubr.bf16.mxu0 0
        %2467 = vmatmul.mubr.bf16.gmra.mrb[0].mxu0 %v2429
        %v2468 = vpop.f32.mrb[0].mxu0
        %v2469 = vadd.f32 0.0, %v2468
        %v2470 = vpop.f32.mrb[0].mxu0
        %v2471 = vpop.f32.mrb[0].mxu0
        %v2472 = vpop.f32.mrb[0].mxu0
        %2473 = vdwg.mxu0
        %v2474 = vsel %vm2360, -1e+09, %v2469
        %v2475 = vsel %vm2362, %v2474, -inf
        %2476 = vmax.xlane.f32.xlu0 %v2475
        %v2477 = vpop.xlane.xlu0 %2476
        %v2478 = vsub.f32 %v2474, %v2477
        %v2479 = vmul.f32 %v2478, 1.442695
        %v2480 = vpow.pop %v2479
        %v2481 = vsel %vm2362, %v2480, 0.0
        %2482 = vadd.xlane.f32.xlu0 %v2481
        %v2483 = vpop.xlane.xlu0 %2482
        %v2484 = vrcp.pop %v2483
        %v2485 = vmul.f32 %v2480, %v2484
        %v2486 = vpack.c.bf16 %v2485, %v2485
        %2488 = vrot.lane.b32.xlu0 %v2308, 96
        %v2489 = vpop.permute.xlu0 %2488
        %v2491 = vsel %vm2362, %v2486, 0
        %v2494 = vsel %vm2378, %v2489, 0
        %2496 = vmatprep.subr.bf16.mxu0 0
        %2497 = vmatpush1.bf16.msra.mxu0 %v2494
        %2498 = vmatprep.subr.bf16.mxu0 0
        %2499 = vmatpush1.bf16.msra.mxu0 0
        %2500 = vmatprep.subr.bf16.mxu0 0
        %2501 = vmatpush1.bf16.msra.mxu0 0
        %2502 = vmatprep.subr.bf16.mxu0 0
        %2503 = vmatpush1.bf16.msra.mxu0 0
        %2504 = vmatprep.subr.bf16.mxu0 0
        %2505 = vmatpush1.bf16.msra.mxu0 0
        %2506 = vmatprep.subr.bf16.mxu0 0
        %2507 = vmatpush1.bf16.msra.mxu0 0
        %2508 = vmatprep.subr.bf16.mxu0 0
        %2509 = vmatpush1.bf16.msra.mxu0 0
        %2510 = vmatprep.subr.bf16.mxu0 0
        %2511 = vmatpush1.bf16.msra.mxu0 0
        %2512 = vmatprep.subr.bf16.mxu0 0
        %2513 = vmatpush1.bf16.msra.mxu0 0
        %2514 = vmatprep.subr.bf16.mxu0 0
        %2515 = vmatpush1.bf16.msra.mxu0 0
        %2516 = vmatprep.subr.bf16.mxu0 0
        %2517 = vmatpush1.bf16.msra.mxu0 0
        %2518 = vmatprep.subr.bf16.mxu0 0
        %2519 = vmatpush1.bf16.msra.mxu0 0
        %2520 = vmatprep.subr.bf16.mxu0 0
        %2521 = vmatpush1.bf16.msra.mxu0 0
        %2522 = vmatprep.subr.bf16.mxu0 0
        %2523 = vmatpush1.bf16.msra.mxu0 0
        %2524 = vmatprep.subr.bf16.mxu0 0
        %2525 = vmatpush1.bf16.msra.mxu0 0
        %2526 = vmatprep.subr.bf16.mxu0 0
        %2527 = vmatpush1.bf16.msra.mxu0 0
        %2528 = vmatprep.mubr.bf16.mxu0 0
        %2529 = vmatmul.mubr.bf16.gmra.mrb[0].mxu0 %v2491
        %v2530 = vpop.f32.mrb[0].mxu0
        %v2531 = vadd.f32 0.0, %v2530
        %v2532 = vpop.f32.mrb[0].mxu0
        %v2533 = vpop.f32.mrb[0].mxu0
        %v2534 = vpop.f32.mrb[0].mxu0
        %2535 = vdwg.mxu0
        %2536 = vrot.lane.b32.xlu0 %v2306, 64
        %v2537 = vpop.permute.xlu0 %2536
        %2538 = vrot.lane.b32.xlu0 %v2307, 64
        %v2539 = vpop.permute.xlu0 %2538
        %v2541 = vsel %vm1435, %v2537, 0
        %v2544 = vsel %vm1435, %v2539, 0
        %2546 = vmatprep.subr.bf16.mxu0 0
        %2547 = vmatpush1.bf16.xpose.msra.mxu0 %v2544
        %2548 = vmatprep.subr.bf16.mxu0 0
        %2549 = vmatpush1.bf16.xpose.msra.mxu0 0
        %2550 = vmatprep.subr.bf16.mxu0 0
        %2551 = vmatpush1.bf16.xpose.msra.mxu0 0
        %2552 = vmatprep.subr.bf16.mxu0 0
        %2553 = vmatpush1.bf16.xpose.msra.mxu0 0
        %2554 = vmatprep.subr.bf16.mxu0 0
        %2555 = vmatpush1.bf16.xpose.msra.mxu0 0
        %2556 = vmatprep.subr.bf16.mxu0 0
        %2557 = vmatpush1.bf16.xpose.msra.mxu0 0
        %2558 = vmatprep.subr.bf16.mxu0 0
        %2559 = vmatpush1.bf16.xpose.msra.mxu0 0
        %2560 = vmatprep.subr.bf16.mxu0 0
        %2561 = vmatpush1.bf16.xpose.msra.mxu0 0
        %2562 = vmatprep.subr.bf16.mxu0 0
        %2563 = vmatpush1.bf16.xpose.msra.mxu0 0
        %2564 = vmatprep.subr.bf16.mxu0 0
        %2565 = vmatpush1.bf16.xpose.msra.mxu0 0
        %2566 = vmatprep.subr.bf16.mxu0 0
        %2567 = vmatpush1.bf16.xpose.msra.mxu0 0
        %2568 = vmatprep.subr.bf16.mxu0 0
        %2569 = vmatpush1.bf16.xpose.msra.mxu0 0
        %2570 = vmatprep.subr.bf16.mxu0 0
        %2571 = vmatpush1.bf16.xpose.msra.mxu0 0
        %2572 = vmatprep.subr.bf16.mxu0 0
        %2573 = vmatpush1.bf16.xpose.msra.mxu0 0
        %2574 = vmatprep.subr.bf16.mxu0 0
        %2575 = vmatpush1.bf16.xpose.msra.mxu0 0
        %2576 = vmatprep.subr.bf16.mxu0 0
        %2577 = vmatpush1.bf16.xpose.msra.mxu0 0
        %2578 = vmatprep.mubr.bf16.mxu0 0
        %2579 = vmatmul.mubr.bf16.gmra.mrb[0].mxu0 %v2541
        %v2580 = vpop.f32.mrb[0].mxu0
        %v2581 = vadd.f32 0.0, %v2580
        %v2582 = vpop.f32.mrb[0].mxu0
        %v2583 = vpop.f32.mrb[0].mxu0
        %v2584 = vpop.f32.mrb[0].mxu0
        %2585 = vdwg.mxu0
        %v2586 = vsel %vm2360, -1e+09, %v2581
        %v2587 = vsel %vm2362, %v2586, -inf
        %2588 = vmax.xlane.f32.xlu0 %v2587
        %v2589 = vpop.xlane.xlu0 %2588
        %v2590 = vsub.f32 %v2586, %v2589
        %v2591 = vmul.f32 %v2590, 1.442695
        %v2592 = vpow.pop %v2591
        %v2593 = vsel %vm2362, %v2592, 0.0
        %2594 = vadd.xlane.f32.xlu0 %v2593
        %v2595 = vpop.xlane.xlu0 %2594
        %v2596 = vrcp.pop %v2595
        %v2597 = vmul.f32 %v2592, %v2596
        %v2598 = vpack.c.bf16 %v2597, %v2597
        %2599 = vrot.lane.b32.xlu0 %v2308, 64
        %v2600 = vpop.permute.xlu0 %2599
        %v2602 = vsel %vm2362, %v2598, 0
        %v2605 = vsel %vm2378, %v2600, 0
        %2607 = vmatprep.subr.bf16.mxu0 0
        %2608 = vmatpush1.bf16.msra.mxu0 %v2605
        %2609 = vmatprep.subr.bf16.mxu0 0
        %2610 = vmatpush1.bf16.msra.mxu0 0
        %2611 = vmatprep.subr.bf16.mxu0 0
        %2612 = vmatpush1.bf16.msra.mxu0 0
        %2613 = vmatprep.subr.bf16.mxu0 0
        %2614 = vmatpush1.bf16.msra.mxu0 0
        %2615 = vmatprep.subr.bf16.mxu0 0
        %2616 = vmatpush1.bf16.msra.mxu0 0
        %2617 = vmatprep.subr.bf16.mxu0 0
        %2618 = vmatpush1.bf16.msra.mxu0 0
        %2619 = vmatprep.subr.bf16.mxu0 0
        %2620 = vmatpush1.bf16.msra.mxu0 0
        %2621 = vmatprep.subr.bf16.mxu0 0
        %2622 = vmatpush1.bf16.msra.mxu0 0
        %2623 = vmatprep.subr.bf16.mxu0 0
        %2624 = vmatpush1.bf16.msra.mxu0 0
        %2625 = vmatprep.subr.bf16.mxu0 0
        %2626 = vmatpush1.bf16.msra.mxu0 0
        %2627 = vmatprep.subr.bf16.mxu0 0
        %2628 = vmatpush1.bf16.msra.mxu0 0
        %2629 = vmatprep.subr.bf16.mxu0 0
        %2630 = vmatpush1.bf16.msra.mxu0 0
        %2631 = vmatprep.subr.bf16.mxu0 0
        %2632 = vmatpush1.bf16.msra.mxu0 0
        %2633 = vmatprep.subr.bf16.mxu0 0
        %2634 = vmatpush1.bf16.msra.mxu0 0
        %2635 = vmatprep.subr.bf16.mxu0 0
        %2636 = vmatpush1.bf16.msra.mxu0 0
        %2637 = vmatprep.subr.bf16.mxu0 0
        %2638 = vmatpush1.bf16.msra.mxu0 0
        %2639 = vmatprep.mubr.bf16.mxu0 0
        %2640 = vmatmul.mubr.bf16.gmra.mrb[0].mxu0 %v2602
        %v2641 = vpop.f32.mrb[0].mxu0
        %v2642 = vadd.f32 0.0, %v2641
        %v2643 = vpop.f32.mrb[0].mxu0
        %v2644 = vpop.f32.mrb[0].mxu0
        %v2645 = vpop.f32.mrb[0].mxu0
        %2646 = vdwg.mxu0
        %2647 = vrot.lane.b32.xlu0 %v2306, 32
        %v2648 = vpop.permute.xlu0 %2647
        %2649 = vrot.lane.b32.xlu0 %v2307, 32
        %v2650 = vpop.permute.xlu0 %2649
        %v2652 = vsel %vm1435, %v2648, 0
        %v2655 = vsel %vm1435, %v2650, 0
        %2657 = vmatprep.subr.bf16.mxu0 0
        %2658 = vmatpush1.bf16.xpose.msra.mxu0 %v2655
        %2659 = vmatprep.subr.bf16.mxu0 0
        %2660 = vmatpush1.bf16.xpose.msra.mxu0 0
        %2661 = vmatprep.subr.bf16.mxu0 0
        %2662 = vmatpush1.bf16.xpose.msra.mxu0 0
        %2663 = vmatprep.subr.bf16.mxu0 0
        %2664 = vmatpush1.bf16.xpose.msra.mxu0 0
        %2665 = vmatprep.subr.bf16.mxu0 0
        %2666 = vmatpush1.bf16.xpose.msra.mxu0 0
        %2667 = vmatprep.subr.bf16.mxu0 0
        %2668 = vmatpush1.bf16.xpose.msra.mxu0 0
        %2669 = vmatprep.subr.bf16.mxu0 0
        %2670 = vmatpush1.bf16.xpose.msra.mxu0 0
        %2671 = vmatprep.subr.bf16.mxu0 0
        %2672 = vmatpush1.bf16.xpose.msra.mxu0 0
        %2673 = vmatprep.subr.bf16.mxu0 0
        %2674 = vmatpush1.bf16.xpose.msra.mxu0 0
        %2675 = vmatprep.subr.bf16.mxu0 0
        %2676 = vmatpush1.bf16.xpose.msra.mxu0 0
        %2677 = vmatprep.subr.bf16.mxu0 0
        %2678 = vmatpush1.bf16.xpose.msra.mxu0 0
        %2679 = vmatprep.subr.bf16.mxu0 0
        %2680 = vmatpush1.bf16.xpose.msra.mxu0 0
        %2681 = vmatprep.subr.bf16.mxu0 0
        %2682 = vmatpush1.bf16.xpose.msra.mxu0 0
        %2683 = vmatprep.subr.bf16.mxu0 0
        %2684 = vmatpush1.bf16.xpose.msra.mxu0 0
        %2685 = vmatprep.subr.bf16.mxu0 0
        %2686 = vmatpush1.bf16.xpose.msra.mxu0 0
        %2687 = vmatprep.subr.bf16.mxu0 0
        %2688 = vmatpush1.bf16.xpose.msra.mxu0 0
        %2689 = vmatprep.mubr.bf16.mxu0 0
        %2690 = vmatmul.mubr.bf16.gmra.mrb[0].mxu0 %v2652
        %v2691 = vpop.f32.mrb[0].mxu0
        %v2692 = vadd.f32 0.0, %v2691
        %v2693 = vpop.f32.mrb[0].mxu0
        %v2694 = vpop.f32.mrb[0].mxu0
        %v2695 = vpop.f32.mrb[0].mxu0
        %2696 = vdwg.mxu0
        %v2697 = vsel %vm2360, -1e+09, %v2692
        %v2698 = vsel %vm2362, %v2697, -inf
        %2699 = vmax.xlane.f32.xlu0 %v2698
        %v2700 = vpop.xlane.xlu0 %2699
        %v2701 = vsub.f32 %v2697, %v2700
        %v2702 = vmul.f32 %v2701, 1.442695
        %v2703 = vpow.pop %v2702
        %v2704 = vsel %vm2362, %v2703, 0.0
        %2705 = vadd.xlane.f32.xlu0 %v2704
        %v2706 = vpop.xlane.xlu0 %2705
        %v2707 = vrcp.pop %v2706
        %v2708 = vmul.f32 %v2703, %v2707
        %v2709 = vpack.c.bf16 %v2708, %v2708
        %2710 = vrot.lane.b32.xlu0 %v2308, 32
        %v2711 = vpop.permute.xlu0 %2710
        %v2713 = vsel %vm2362, %v2709, 0
        %v2716 = vsel %vm2378, %v2711, 0
        %2718 = vmatprep.subr.bf16.mxu0 0
        %2719 = vmatpush1.bf16.msra.mxu0 %v2716
        %2720 = vmatprep.subr.bf16.mxu0 0
        %2721 = vmatpush1.bf16.msra.mxu0 0
        %2722 = vmatprep.subr.bf16.mxu0 0
        %2723 = vmatpush1.bf16.msra.mxu0 0
        %2724 = vmatprep.subr.bf16.mxu0 0
        %2725 = vmatpush1.bf16.msra.mxu0 0
        %2726 = vmatprep.subr.bf16.mxu0 0
        %2727 = vmatpush1.bf16.msra.mxu0 0
        %2728 = vmatprep.subr.bf16.mxu0 0
        %2729 = vmatpush1.bf16.msra.mxu0 0
        %2730 = vmatprep.subr.bf16.mxu0 0
        %2731 = vmatpush1.bf16.msra.mxu0 0
        %2732 = vmatprep.subr.bf16.mxu0 0
        %2733 = vmatpush1.bf16.msra.mxu0 0
        %2734 = vmatprep.subr.bf16.mxu0 0
        %2735 = vmatpush1.bf16.msra.mxu0 0
        %2736 = vmatprep.subr.bf16.mxu0 0
        %2737 = vmatpush1.bf16.msra.mxu0 0
        %2738 = vmatprep.subr.bf16.mxu0 0
        %2739 = vmatpush1.bf16.msra.mxu0 0
        %2740 = vmatprep.subr.bf16.mxu0 0
        %2741 = vmatpush1.bf16.msra.mxu0 0
        %2742 = vmatprep.subr.bf16.mxu0 0
        %2743 = vmatpush1.bf16.msra.mxu0 0
        %2744 = vmatprep.subr.bf16.mxu0 0
        %2745 = vmatpush1.bf16.msra.mxu0 0
        %2746 = vmatprep.subr.bf16.mxu0 0
        %2747 = vmatpush1.bf16.msra.mxu0 0
        %2748 = vmatprep.subr.bf16.mxu0 0
        %2749 = vmatpush1.bf16.msra.mxu0 0
        %2750 = vmatprep.mubr.bf16.mxu0 0
        %2751 = vmatmul.mubr.bf16.gmra.mrb[0].mxu0 %v2713
        %v2752 = vpop.f32.mrb[0].mxu0
        %v2753 = vadd.f32 0.0, %v2752
        %v2754 = vpop.f32.mrb[0].mxu0
        %v2755 = vpop.f32.mrb[0].mxu0
        %v2756 = vpop.f32.mrb[0].mxu0
        %2757 = vdwg.mxu0
        %2759 = vrot.lane.b32.xlu0 %v2531, 32
        %v2760 = vpop.permute.xlu0 %2759
        %2763 = vrot.lane.b32.xlu0 %v2642, 64
        %v2764 = vpop.permute.xlu0 %2763
        %2767 = vrot.lane.b32.xlu0 %v2753, 96
        %v2768 = vpop.permute.xlu0 %2767
        %v2770 = vsel %vm1435, %v2417, %v2760
        %v2771 = vsel %vm1892, %v2770, %v2764
        %v2772 = vsel %vm1894, %v2771, %v2768
        %v2773 = vpack.c.bf16 %v2772, %v2772
        %v2775 = vlaneseq
        %v2776 = vshrl.u32 %v2775, 7
        %v2777 = vsub.s32 0, %v2776
        %v2778 = vrot.slane %v2305, %v2777
        %v2796 = vunpack.c.l.b16 %v2289
        %v2797 = vunpack.c.l.b16 %v2290
        %v2798 = vunpack.c.l.b16 %v2291
        %v2799 = vunpack.c.l.b16 %v2292
        %v2800 = vunpack.c.l.b16 %v2293
        %v2801 = vunpack.c.l.b16 %v2294
        %v2802 = vunpack.c.l.b16 %v2295
        %v2803 = vunpack.c.l.b16 %v2296
        %v2804 = vunpack.c.l.b16 %v2297
        %v2805 = vunpack.c.l.b16 %v2298
        %v2806 = vunpack.c.l.b16 %v2299
        %v2807 = vunpack.c.l.b16 %v2300
        %v2808 = vunpack.c.l.b16 %v2301
        %v2809 = vunpack.c.l.b16 %v2302
        %v2810 = vunpack.c.l.b16 %v2303
        %v2811 = vunpack.c.l.b16 %v2304
        %v2812 = vpack.c.b16 %v2797, %v2796
        %v2813 = vpack.c.b16 %v2799, %v2798
        %v2814 = vpack.c.b16 %v2801, %v2800
        %v2815 = vpack.c.b16 %v2803, %v2802
        %v2816 = vpack.c.b16 %v2805, %v2804
        %v2817 = vpack.c.b16 %v2807, %v2806
        %v2818 = vpack.c.b16 %v2809, %v2808
        %v2819 = vpack.c.b16 %v2811, %v2810
        %2828 = vmatprep.subr.bf16.mxu0 0
        %2829 = vmatpush1.bf16.msra.mxu0 %v2812
        %2830 = vmatprep.subr.bf16.mxu0 0
        %2831 = vmatpush1.bf16.msra.mxu0 %v2813
        %2832 = vmatprep.subr.bf16.mxu0 0
        %2833 = vmatpush1.bf16.msra.mxu0 %v2814
        %2834 = vmatprep.subr.bf16.mxu0 0
        %2835 = vmatpush1.bf16.msra.mxu0 %v2815
        %2836 = vmatprep.subr.bf16.mxu0 0
        %2837 = vmatpush1.bf16.msra.mxu0 %v2816
        %2838 = vmatprep.subr.bf16.mxu0 0
        %2839 = vmatpush1.bf16.msra.mxu0 %v2817
        %2840 = vmatprep.subr.bf16.mxu0 0
        %2841 = vmatpush1.bf16.msra.mxu0 %v2818
        %2842 = vmatprep.subr.bf16.mxu0 0
        %2843 = vmatpush1.bf16.msra.mxu0 %v2819
        %2844 = vmatprep.subr.bf16.mxu0 0
        %2845 = vmatpush1.bf16.msra.mxu0 0
        %2846 = vmatprep.subr.bf16.mxu0 0
        %2847 = vmatpush1.bf16.msra.mxu0 0
        %2848 = vmatprep.subr.bf16.mxu0 0
        %2849 = vmatpush1.bf16.msra.mxu0 0
        %2850 = vmatprep.subr.bf16.mxu0 0
        %2851 = vmatpush1.bf16.msra.mxu0 0
        %2852 = vmatprep.subr.bf16.mxu0 0
        %2853 = vmatpush1.bf16.msra.mxu0 0
        %2854 = vmatprep.subr.bf16.mxu0 0
        %2855 = vmatpush1.bf16.msra.mxu0 0
        %2856 = vmatprep.subr.bf16.mxu0 0
        %2857 = vmatpush1.bf16.msra.mxu0 0
        %2858 = vmatprep.subr.bf16.mxu0 0
        %2859 = vmatpush1.bf16.msra.mxu0 0
        %2860 = vmatprep.mubr.bf16.mxu0 0
        %2861 = vmatmul.mubr.bf16.gmra.mrb[0].mxu0 %v2773
        %v2862 = vpop.f32.mrb[0].mxu0
        %v2863 = vadd.f32 %v2778, %v2862
        %v2864 = vpop.f32.mrb[0].mxu0
        %v2865 = vpop.f32.mrb[0].mxu0
        %v2866 = vpop.f32.mrb[0].mxu0
        %2867 = vdwg.mxu0
        %v2868 = vadd.f32 %v1991, %v2863
        %v2869 = vld [vmem:[#allocation23] sm:$0x1]
        %v2870 = vld [vmem:[#allocation25] sm:$0x1]
        %2871 = vadd.xlane.f32.xlu0 %v2868
        %v2872 = vpop.xlane.xlu0 %2871
        %v2873 = vmul.f32 %v2872, %v1125
        %v2874 = vsub.f32 %v2868, %v2873
        %v2875 = vmul.f32 %v2874, %v2874
        %2876 = vadd.xlane.f32.xlu0 %v2875
        %v2877 = vpop.xlane.xlu0 %2876
        %v2878 = vmul.f32 %v2877, 0.007874016
        %v2879 = vrsqrt.pop %v2878
        %v2880 = vmul.f32 %v2878, %v2879
        %vm2881 = vcmp.eq.f32.partialorder %v2878, inf
        %v2882 = vsel %vm2881, %v2878, %v2880
        %vm2883 = vcmp.eq.f32.partialorder %v2878, 0.0
        %v2884 = vand.u32 %v2878, 2147483648
        %v2885 = vsel %vm2883, %v2884, %v2882
        %v2886 = vadd.f32 %v2885, 1e-06
        %v2887 = vrcp.pop %v2886
        %v2889 = vlaneseq
        %v2890 = vshrl.u32 %v2889, 7
        %v2891 = vsub.s32 0, %v2890
        %v2892 = vrot.slane %v2869, %v2891
        %v2894 = vmul.f32 %v2892, %v2874
        %v2895 = vmul.f32 %v2894, %v2887
        %v2897 = vlaneseq
        %v2898 = vshrl.u32 %v2897, 7
        %v2899 = vsub.s32 0, %v2898
        %v2900 = vrot.slane %v2870, %v2899
        %v2902 = vadd.f32 %v2895, %v2900
        %v2903 = vpack.c.bf16 %v2902, %v2902
        %v2904 = vld [vmem:[#allocation26] sm:$0xff]
        %v2905 = vld [vmem:[#allocation26 + $0x8] sm:$0xff]
        %v2906 = vld [vmem:[#allocation26 + $0x10] sm:$0xff]
        %v2907 = vld [vmem:[#allocation26 + $0x18] sm:$0xff]
        %v2908 = vld [vmem:[#allocation26 + $0x20] sm:$0xff]
        %v2909 = vld [vmem:[#allocation26 + $0x28] sm:$0xff]
        %v2910 = vld [vmem:[#allocation26 + $0x30] sm:$0xff]
        %v2911 = vld [vmem:[#allocation26 + $0x38] sm:$0xff]
        %v2912 = vld [vmem:[#allocation26 + $0x40] sm:$0xff]
        %v2913 = vld [vmem:[#allocation26 + $0x48] sm:$0xff]
        %v2914 = vld [vmem:[#allocation26 + $0x50] sm:$0xff]
        %v2915 = vld [vmem:[#allocation26 + $0x58] sm:$0xff]
        %v2916 = vld [vmem:[#allocation26 + $0x60] sm:$0xff]
        %v2917 = vld [vmem:[#allocation26 + $0x68] sm:$0xff]
        %v2918 = vld [vmem:[#allocation26 + $0x70] sm:$0xff]
        %v2919 = vld [vmem:[#allocation26 + $0x78] sm:$0xff]
        %v2920 = vld [vmem:[#allocation26 + $0x80] sm:$0xff]
        %v2921 = vld [vmem:[#allocation26 + $0x88] sm:$0xff]
        %v2922 = vld [vmem:[#allocation26 + $0x90] sm:$0xff]
        %v2923 = vld [vmem:[#allocation26 + $0x98] sm:$0xff]
        %v2924 = vld [vmem:[#allocation26 + $0xa0] sm:$0xff]
        %v2925 = vld [vmem:[#allocation26 + $0xa8] sm:$0xff]
        %v2926 = vld [vmem:[#allocation26 + $0xb0] sm:$0xff]
        %v2927 = vld [vmem:[#allocation26 + $0xb8] sm:$0xff]
        %v2928 = vld [vmem:[#allocation26 + $0xc0] sm:$0xff]
        %v2929 = vld [vmem:[#allocation26 + $0xc8] sm:$0xff]
        %v2930 = vld [vmem:[#allocation26 + $0xd0] sm:$0xff]
        %v2931 = vld [vmem:[#allocation26 + $0xd8] sm:$0xff]
        %v2932 = vld [vmem:[#allocation26 + $0xe0] sm:$0xff]
        %v2933 = vld [vmem:[#allocation26 + $0xe8] sm:$0xff]
        %v2934 = vld [vmem:[#allocation26 + $0xf0] sm:$0xff]
        %v2935 = vld [vmem:[#allocation26 + $0xf8] sm:$0xff]
        %v2936 = vld [vmem:[#allocation26 + $0x100] sm:$0xff]
        %v2937 = vld [vmem:[#allocation26 + $0x108] sm:$0xff]
        %v2938 = vld [vmem:[#allocation26 + $0x110] sm:$0xff]
        %v2939 = vld [vmem:[#allocation26 + $0x118] sm:$0xff]
        %v2940 = vld [vmem:[#allocation26 + $0x120] sm:$0xff]
        %v2941 = vld [vmem:[#allocation26 + $0x128] sm:$0xff]
        %v2942 = vld [vmem:[#allocation26 + $0x130] sm:$0xff]
        %v2943 = vld [vmem:[#allocation26 + $0x138] sm:$0xff]
        %v2944 = vld [vmem:[#allocation26 + $0x140] sm:$0xff]
        %v2945 = vld [vmem:[#allocation26 + $0x148] sm:$0xff]
        %v2946 = vld [vmem:[#allocation26 + $0x150] sm:$0xff]
        %v2947 = vld [vmem:[#allocation26 + $0x158] sm:$0xff]
        %v2948 = vld [vmem:[#allocation26 + $0x160] sm:$0xff]
        %v2949 = vld [vmem:[#allocation26 + $0x168] sm:$0xff]
        %v2950 = vld [vmem:[#allocation26 + $0x170] sm:$0xff]
        %v2951 = vld [vmem:[#allocation26 + $0x178] sm:$0xff]
        %v2952 = vld [vmem:[#allocation26 + $0x180] sm:$0xff]
        %v2953 = vld [vmem:[#allocation26 + $0x188] sm:$0xff]
        %v2954 = vld [vmem:[#allocation26 + $0x190] sm:$0xff]
        %v2955 = vld [vmem:[#allocation26 + $0x198] sm:$0xff]
        %v2956 = vld [vmem:[#allocation26 + $0x1a0] sm:$0xff]
        %v2957 = vld [vmem:[#allocation26 + $0x1a8] sm:$0xff]
        %v2958 = vld [vmem:[#allocation26 + $0x1b0] sm:$0xff]
        %v2959 = vld [vmem:[#allocation26 + $0x1b8] sm:$0xff]
        %v2960 = vld [vmem:[#allocation26 + $0x1c0] sm:$0xff]
        %v2961 = vld [vmem:[#allocation26 + $0x1c8] sm:$0xff]
        %v2962 = vld [vmem:[#allocation26 + $0x1d0] sm:$0xff]
        %v2963 = vld [vmem:[#allocation26 + $0x1d8] sm:$0xff]
        %v2964 = vld [vmem:[#allocation26 + $0x1e0] sm:$0xff]
        %v2965 = vld [vmem:[#allocation26 + $0x1e8] sm:$0xff]
        %v2966 = vld [vmem:[#allocation26 + $0x1f0] sm:$0xff]
        %v2967 = vld [vmem:[#allocation26 + $0x1f8] sm:$0xff]
        %v2968 = vld [vmem:[#allocation26 + $0x200] sm:$0xff]
        %v2969 = vld [vmem:[#allocation26 + $0x208] sm:$0xff]
        %v2970 = vld [vmem:[#allocation26 + $0x210] sm:$0xff]
        %v2971 = vld [vmem:[#allocation26 + $0x218] sm:$0xff]
        %v2972 = vld [vmem:[#allocation26 + $0x220] sm:$0xff]
        %v2973 = vld [vmem:[#allocation26 + $0x228] sm:$0xff]
        %v2974 = vld [vmem:[#allocation26 + $0x230] sm:$0xff]
        %v2975 = vld [vmem:[#allocation26 + $0x238] sm:$0xff]
        %v2976 = vld [vmem:[#allocation26 + $0x240] sm:$0xff]
        %v2977 = vld [vmem:[#allocation26 + $0x248] sm:$0xff]
        %v2978 = vld [vmem:[#allocation26 + $0x250] sm:$0xff]
        %v2979 = vld [vmem:[#allocation26 + $0x258] sm:$0xff]
        %v2980 = vld [vmem:[#allocation26 + $0x260] sm:$0xff]
        %v2981 = vld [vmem:[#allocation26 + $0x268] sm:$0xff]
        %v2982 = vld [vmem:[#allocation26 + $0x270] sm:$0xff]
        %v2983 = vld [vmem:[#allocation26 + $0x278] sm:$0xff]
        %v2984 = vld [vmem:[#allocation26 + $0x280] sm:$0xff]
        %v2985 = vld [vmem:[#allocation26 + $0x288] sm:$0xff]
        %v2986 = vld [vmem:[#allocation26 + $0x290] sm:$0xff]
        %v2987 = vld [vmem:[#allocation26 + $0x298] sm:$0xff]
        %v2988 = vld [vmem:[#allocation26 + $0x2a0] sm:$0xff]
        %v2989 = vld [vmem:[#allocation26 + $0x2a8] sm:$0xff]
        %v2990 = vld [vmem:[#allocation26 + $0x2b0] sm:$0xff]
        %v2991 = vld [vmem:[#allocation26 + $0x2b8] sm:$0xff]
        %v2992 = vld [vmem:[#allocation26 + $0x2c0] sm:$0xff]
        %v2993 = vld [vmem:[#allocation26 + $0x2c8] sm:$0xff]
        %v2994 = vld [vmem:[#allocation26 + $0x2d0] sm:$0xff]
        %v2995 = vld [vmem:[#allocation26 + $0x2d8] sm:$0xff]
        %v2996 = vld [vmem:[#allocation26 + $0x2e0] sm:$0xff]
        %v2997 = vld [vmem:[#allocation26 + $0x2e8] sm:$0xff]
        %v2998 = vld [vmem:[#allocation26 + $0x2f0] sm:$0xff]
        %v2999 = vld [vmem:[#allocation26 + $0x2f8] sm:$0xff]
        %v3000 = vld [vmem:[#allocation26 + $0x300] sm:$0xff]
        %v3001 = vld [vmem:[#allocation26 + $0x308] sm:$0xff]
        %v3002 = vld [vmem:[#allocation26 + $0x310] sm:$0xff]
        %v3003 = vld [vmem:[#allocation26 + $0x318] sm:$0xff]
        %v3004 = vld [vmem:[#allocation26 + $0x320] sm:$0xff]
        %v3005 = vld [vmem:[#allocation26 + $0x328] sm:$0xff]
        %v3006 = vld [vmem:[#allocation26 + $0x330] sm:$0xff]
        %v3007 = vld [vmem:[#allocation26 + $0x338] sm:$0xff]
        %v3008 = vld [vmem:[#allocation26 + $0x340] sm:$0xff]
        %v3009 = vld [vmem:[#allocation26 + $0x348] sm:$0xff]
        %v3010 = vld [vmem:[#allocation26 + $0x350] sm:$0xff]
        %v3011 = vld [vmem:[#allocation26 + $0x358] sm:$0xff]
        %v3012 = vld [vmem:[#allocation26 + $0x360] sm:$0xff]
        %v3013 = vld [vmem:[#allocation26 + $0x368] sm:$0xff]
        %v3014 = vld [vmem:[#allocation26 + $0x370] sm:$0xff]
        %v3015 = vld [vmem:[#allocation26 + $0x378] sm:$0xff]
        %v3016 = vld [vmem:[#allocation26 + $0x380] sm:$0xff]
        %v3017 = vld [vmem:[#allocation26 + $0x388] sm:$0xff]
        %v3018 = vld [vmem:[#allocation26 + $0x390] sm:$0xff]
        %v3019 = vld [vmem:[#allocation26 + $0x398] sm:$0xff]
        %v3020 = vld [vmem:[#allocation26 + $0x3a0] sm:$0xff]
        %v3021 = vld [vmem:[#allocation26 + $0x3a8] sm:$0xff]
        %v3022 = vld [vmem:[#allocation26 + $0x3b0] sm:$0xff]
        %v3023 = vld [vmem:[#allocation26 + $0x3b8] sm:$0xff]
        %v3024 = vld [vmem:[#allocation26 + $0x3c0] sm:$0xff]
        %v3025 = vld [vmem:[#allocation26 + $0x3c8] sm:$0xff]
        %v3026 = vld [vmem:[#allocation26 + $0x3d0] sm:$0xff]
        %v3027 = vld [vmem:[#allocation26 + $0x3d8] sm:$0xff]
        %v3028 = vld [vmem:[#allocation26 + $0x3e0] sm:$0xff]
        %v3029 = vld [vmem:[#allocation26 + $0x3e8] sm:$0xff]
        %v3030 = vld [vmem:[#allocation26 + $0x3f0] sm:$0xff]
        %v3031 = vld [vmem:[#allocation26 + $0x3f8] sm:$0xff]
        %v3032 = vld [vmem:[%s21] sm:$0xff]
        %v3033 = vld [vmem:[%s21 + $0x8] sm:$0xff]
        %v3036 = vlaneseq
        %v3037 = vshrl.u32 %v3036, 7
        %v3038 = vsub.s32 0, %v3037
        %v3039 = vrot.slane %v3032, %v3038
        %v3040 = vlaneseq
        %v3041 = vshrl.u32 %v3040, 7
        %v3042 = vsub.s32 1, %v3041
        %v3043 = vrot.slane %v3032, %v3042
        %v3044 = vlaneseq
        %v3045 = vshrl.u32 %v3044, 7
        %v3046 = vsub.s32 2, %v3045
        %v3047 = vrot.slane %v3032, %v3046
        %v3048 = vlaneseq
        %v3049 = vshrl.u32 %v3048, 7
        %v3050 = vsub.s32 3, %v3049
        %v3051 = vrot.slane %v3032, %v3050
        %v3052 = vlaneseq
        %v3053 = vshrl.u32 %v3052, 7
        %v3054 = vsub.s32 4, %v3053
        %v3055 = vrot.slane %v3032, %v3054
        %v3056 = vlaneseq
        %v3057 = vshrl.u32 %v3056, 7
        %v3058 = vsub.s32 5, %v3057
        %v3059 = vrot.slane %v3032, %v3058
        %v3060 = vlaneseq
        %v3061 = vshrl.u32 %v3060, 7
        %v3062 = vsub.s32 6, %v3061
        %v3063 = vrot.slane %v3032, %v3062
        %v3064 = vlaneseq
        %v3065 = vshrl.u32 %v3064, 7
        %v3066 = vsub.s32 7, %v3065
        %v3067 = vrot.slane %v3032, %v3066
        %v3068 = vlaneseq
        %v3069 = vshrl.u32 %v3068, 7
        %v3070 = vsub.s32 0, %v3069
        %v3071 = vrot.slane %v3033, %v3070
        %v3072 = vlaneseq
        %v3073 = vshrl.u32 %v3072, 7
        %v3074 = vsub.s32 1, %v3073
        %v3075 = vrot.slane %v3033, %v3074
        %v3076 = vlaneseq
        %v3077 = vshrl.u32 %v3076, 7
        %v3078 = vsub.s32 2, %v3077
        %v3079 = vrot.slane %v3033, %v3078
        %v3080 = vlaneseq
        %v3081 = vshrl.u32 %v3080, 7
        %v3082 = vsub.s32 3, %v3081
        %v3083 = vrot.slane %v3033, %v3082
        %v3084 = vlaneseq
        %v3085 = vshrl.u32 %v3084, 7
        %v3086 = vsub.s32 4, %v3085
        %v3087 = vrot.slane %v3033, %v3086
        %v3088 = vlaneseq
        %v3089 = vshrl.u32 %v3088, 7
        %v3090 = vsub.s32 5, %v3089
        %v3091 = vrot.slane %v3033, %v3090
        %v3092 = vlaneseq
        %v3093 = vshrl.u32 %v3092, 7
        %v3094 = vsub.s32 6, %v3093
        %v3095 = vrot.slane %v3033, %v3094
        %v3096 = vlaneseq
        %v3097 = vshrl.u32 %v3096, 7
        %v3098 = vsub.s32 7, %v3097
        %v3099 = vrot.slane %v3033, %v3098
        %v3244 = vunpack.c.l.b16 %v2904
        %v3245 = vunpack.c.h.b16 %v2904
        %v3246 = vunpack.c.l.b16 %v2905
        %v3247 = vunpack.c.h.b16 %v2905
        %v3248 = vunpack.c.l.b16 %v2906
        %v3249 = vunpack.c.h.b16 %v2906
        %v3250 = vunpack.c.l.b16 %v2907
        %v3251 = vunpack.c.h.b16 %v2907
        %v3252 = vunpack.c.l.b16 %v2908
        %v3253 = vunpack.c.h.b16 %v2908
        %v3254 = vunpack.c.l.b16 %v2909
        %v3255 = vunpack.c.h.b16 %v2909
        %v3256 = vunpack.c.l.b16 %v2910
        %v3257 = vunpack.c.h.b16 %v2910
        %v3258 = vunpack.c.l.b16 %v2911
        %v3259 = vunpack.c.h.b16 %v2911
        %v3260 = vunpack.c.l.b16 %v2912
        %v3261 = vunpack.c.h.b16 %v2912
        %v3262 = vunpack.c.l.b16 %v2913
        %v3263 = vunpack.c.h.b16 %v2913
        %v3264 = vunpack.c.l.b16 %v2914
        %v3265 = vunpack.c.h.b16 %v2914
        %v3266 = vunpack.c.l.b16 %v2915
        %v3267 = vunpack.c.h.b16 %v2915
        %v3268 = vunpack.c.l.b16 %v2916
        %v3269 = vunpack.c.h.b16 %v2916
        %v3270 = vunpack.c.l.b16 %v2917
        %v3271 = vunpack.c.h.b16 %v2917
        %v3272 = vunpack.c.l.b16 %v2918
        %v3273 = vunpack.c.h.b16 %v2918
        %v3274 = vunpack.c.l.b16 %v2919
        %v3275 = vunpack.c.h.b16 %v2919
        %v3276 = vunpack.c.l.b16 %v2920
        %v3277 = vunpack.c.h.b16 %v2920
        %v3278 = vunpack.c.l.b16 %v2921
        %v3279 = vunpack.c.h.b16 %v2921
        %v3280 = vunpack.c.l.b16 %v2922
        %v3281 = vunpack.c.h.b16 %v2922
        %v3282 = vunpack.c.l.b16 %v2923
        %v3283 = vunpack.c.h.b16 %v2923
        %v3284 = vunpack.c.l.b16 %v2924
        %v3285 = vunpack.c.h.b16 %v2924
        %v3286 = vunpack.c.l.b16 %v2925
        %v3287 = vunpack.c.h.b16 %v2925
        %v3288 = vunpack.c.l.b16 %v2926
        %v3289 = vunpack.c.h.b16 %v2926
        %v3290 = vunpack.c.l.b16 %v2927
        %v3291 = vunpack.c.h.b16 %v2927
        %v3292 = vunpack.c.l.b16 %v2928
        %v3293 = vunpack.c.h.b16 %v2928
        %v3294 = vunpack.c.l.b16 %v2929
        %v3295 = vunpack.c.h.b16 %v2929
        %v3296 = vunpack.c.l.b16 %v2930
        %v3297 = vunpack.c.h.b16 %v2930
        %v3298 = vunpack.c.l.b16 %v2931
        %v3299 = vunpack.c.h.b16 %v2931
        %v3300 = vunpack.c.l.b16 %v2932
        %v3301 = vunpack.c.h.b16 %v2932
        %v3302 = vunpack.c.l.b16 %v2933
        %v3303 = vunpack.c.h.b16 %v2933
        %v3304 = vunpack.c.l.b16 %v2934
        %v3305 = vunpack.c.h.b16 %v2934
        %v3306 = vunpack.c.l.b16 %v2935
        %v3307 = vunpack.c.h.b16 %v2935
        %v3308 = vunpack.c.l.b16 %v2936
        %v3309 = vunpack.c.h.b16 %v2936
        %v3310 = vunpack.c.l.b16 %v2937
        %v3311 = vunpack.c.h.b16 %v2937
        %v3312 = vunpack.c.l.b16 %v2938
        %v3313 = vunpack.c.h.b16 %v2938
        %v3314 = vunpack.c.l.b16 %v2939
        %v3315 = vunpack.c.h.b16 %v2939
        %v3316 = vunpack.c.l.b16 %v2940
        %v3317 = vunpack.c.h.b16 %v2940
        %v3318 = vunpack.c.l.b16 %v2941
        %v3319 = vunpack.c.h.b16 %v2941
        %v3320 = vunpack.c.l.b16 %v2942
        %v3321 = vunpack.c.h.b16 %v2942
        %v3322 = vunpack.c.l.b16 %v2943
        %v3323 = vunpack.c.h.b16 %v2943
        %v3324 = vunpack.c.l.b16 %v2944
        %v3325 = vunpack.c.h.b16 %v2944
        %v3326 = vunpack.c.l.b16 %v2945
        %v3327 = vunpack.c.h.b16 %v2945
        %v3328 = vunpack.c.l.b16 %v2946
        %v3329 = vunpack.c.h.b16 %v2946
        %v3330 = vunpack.c.l.b16 %v2947
        %v3331 = vunpack.c.h.b16 %v2947
        %v3332 = vunpack.c.l.b16 %v2948
        %v3333 = vunpack.c.h.b16 %v2948
        %v3334 = vunpack.c.l.b16 %v2949
        %v3335 = vunpack.c.h.b16 %v2949
        %v3336 = vunpack.c.l.b16 %v2950
        %v3337 = vunpack.c.h.b16 %v2950
        %v3338 = vunpack.c.l.b16 %v2951
        %v3339 = vunpack.c.h.b16 %v2951
        %v3340 = vunpack.c.l.b16 %v2952
        %v3341 = vunpack.c.h.b16 %v2952
        %v3342 = vunpack.c.l.b16 %v2953
        %v3343 = vunpack.c.h.b16 %v2953
        %v3344 = vunpack.c.l.b16 %v2954
        %v3345 = vunpack.c.h.b16 %v2954
        %v3346 = vunpack.c.l.b16 %v2955
        %v3347 = vunpack.c.h.b16 %v2955
        %v3348 = vunpack.c.l.b16 %v2956
        %v3349 = vunpack.c.h.b16 %v2956
        %v3350 = vunpack.c.l.b16 %v2957
        %v3351 = vunpack.c.h.b16 %v2957
        %v3352 = vunpack.c.l.b16 %v2958
        %v3353 = vunpack.c.h.b16 %v2958
        %v3354 = vunpack.c.l.b16 %v2959
        %v3355 = vunpack.c.h.b16 %v2959
        %v3356 = vunpack.c.l.b16 %v2960
        %v3357 = vunpack.c.h.b16 %v2960
        %v3358 = vunpack.c.l.b16 %v2961
        %v3359 = vunpack.c.h.b16 %v2961
        %v3360 = vunpack.c.l.b16 %v2962
        %v3361 = vunpack.c.h.b16 %v2962
        %v3362 = vunpack.c.l.b16 %v2963
        %v3363 = vunpack.c.h.b16 %v2963
        %v3364 = vunpack.c.l.b16 %v2964
        %v3365 = vunpack.c.h.b16 %v2964
        %v3366 = vunpack.c.l.b16 %v2965
        %v3367 = vunpack.c.h.b16 %v2965
        %v3368 = vunpack.c.l.b16 %v2966
        %v3369 = vunpack.c.h.b16 %v2966
        %v3370 = vunpack.c.l.b16 %v2967
        %v3371 = vunpack.c.h.b16 %v2967
        %v3372 = vunpack.c.l.b16 %v2968
        %v3373 = vunpack.c.h.b16 %v2968
        %v3374 = vunpack.c.l.b16 %v2969
        %v3375 = vunpack.c.h.b16 %v2969
        %v3376 = vunpack.c.l.b16 %v2970
        %v3377 = vunpack.c.h.b16 %v2970
        %v3378 = vunpack.c.l.b16 %v2971
        %v3379 = vunpack.c.h.b16 %v2971
        %v3380 = vunpack.c.l.b16 %v2972
        %v3381 = vunpack.c.h.b16 %v2972
        %v3382 = vunpack.c.l.b16 %v2973
        %v3383 = vunpack.c.h.b16 %v2973
        %v3384 = vunpack.c.l.b16 %v2974
        %v3385 = vunpack.c.h.b16 %v2974
        %v3386 = vunpack.c.l.b16 %v2975
        %v3387 = vunpack.c.h.b16 %v2975
        %v3388 = vunpack.c.l.b16 %v2976
        %v3389 = vunpack.c.h.b16 %v2976
        %v3390 = vunpack.c.l.b16 %v2977
        %v3391 = vunpack.c.h.b16 %v2977
        %v3392 = vunpack.c.l.b16 %v2978
        %v3393 = vunpack.c.h.b16 %v2978
        %v3394 = vunpack.c.l.b16 %v2979
        %v3395 = vunpack.c.h.b16 %v2979
        %v3396 = vunpack.c.l.b16 %v2980
        %v3397 = vunpack.c.h.b16 %v2980
        %v3398 = vunpack.c.l.b16 %v2981
        %v3399 = vunpack.c.h.b16 %v2981
        %v3400 = vunpack.c.l.b16 %v2982
        %v3401 = vunpack.c.h.b16 %v2982
        %v3402 = vunpack.c.l.b16 %v2983
        %v3403 = vunpack.c.h.b16 %v2983
        %v3404 = vunpack.c.l.b16 %v2984
        %v3405 = vunpack.c.h.b16 %v2984
        %v3406 = vunpack.c.l.b16 %v2985
        %v3407 = vunpack.c.h.b16 %v2985
        %v3408 = vunpack.c.l.b16 %v2986
        %v3409 = vunpack.c.h.b16 %v2986
        %v3410 = vunpack.c.l.b16 %v2987
        %v3411 = vunpack.c.h.b16 %v2987
        %v3412 = vunpack.c.l.b16 %v2988
        %v3413 = vunpack.c.h.b16 %v2988
        %v3414 = vunpack.c.l.b16 %v2989
        %v3415 = vunpack.c.h.b16 %v2989
        %v3416 = vunpack.c.l.b16 %v2990
        %v3417 = vunpack.c.h.b16 %v2990
        %v3418 = vunpack.c.l.b16 %v2991
        %v3419 = vunpack.c.h.b16 %v2991
        %v3420 = vunpack.c.l.b16 %v2992
        %v3421 = vunpack.c.h.b16 %v2992
        %v3422 = vunpack.c.l.b16 %v2993
        %v3423 = vunpack.c.h.b16 %v2993
        %v3424 = vunpack.c.l.b16 %v2994
        %v3425 = vunpack.c.h.b16 %v2994
        %v3426 = vunpack.c.l.b16 %v2995
        %v3427 = vunpack.c.h.b16 %v2995
        %v3428 = vunpack.c.l.b16 %v2996
        %v3429 = vunpack.c.h.b16 %v2996
        %v3430 = vunpack.c.l.b16 %v2997
        %v3431 = vunpack.c.h.b16 %v2997
        %v3432 = vunpack.c.l.b16 %v2998
        %v3433 = vunpack.c.h.b16 %v2998
        %v3434 = vunpack.c.l.b16 %v2999
        %v3435 = vunpack.c.h.b16 %v2999
        %v3436 = vunpack.c.l.b16 %v3000
        %v3437 = vunpack.c.h.b16 %v3000
        %v3438 = vunpack.c.l.b16 %v3001
        %v3439 = vunpack.c.h.b16 %v3001
        %v3440 = vunpack.c.l.b16 %v3002
        %v3441 = vunpack.c.h.b16 %v3002
        %v3442 = vunpack.c.l.b16 %v3003
        %v3443 = vunpack.c.h.b16 %v3003
        %v3444 = vunpack.c.l.b16 %v3004
        %v3445 = vunpack.c.h.b16 %v3004
        %v3446 = vunpack.c.l.b16 %v3005
        %v3447 = vunpack.c.h.b16 %v3005
        %v3448 = vunpack.c.l.b16 %v3006
        %v3449 = vunpack.c.h.b16 %v3006
        %v3450 = vunpack.c.l.b16 %v3007
        %v3451 = vunpack.c.h.b16 %v3007
        %v3452 = vunpack.c.l.b16 %v3008
        %v3453 = vunpack.c.h.b16 %v3008
        %v3454 = vunpack.c.l.b16 %v3009
        %v3455 = vunpack.c.h.b16 %v3009
        %v3456 = vunpack.c.l.b16 %v3010
        %v3457 = vunpack.c.h.b16 %v3010
        %v3458 = vunpack.c.l.b16 %v3011
        %v3459 = vunpack.c.h.b16 %v3011
        %v3460 = vunpack.c.l.b16 %v3012
        %v3461 = vunpack.c.h.b16 %v3012
        %v3462 = vunpack.c.l.b16 %v3013
        %v3463 = vunpack.c.h.b16 %v3013
        %v3464 = vunpack.c.l.b16 %v3014
        %v3465 = vunpack.c.h.b16 %v3014
        %v3466 = vunpack.c.l.b16 %v3015
        %v3467 = vunpack.c.h.b16 %v3015
        %v3468 = vunpack.c.l.b16 %v3016
        %v3469 = vunpack.c.h.b16 %v3016
        %v3470 = vunpack.c.l.b16 %v3017
        %v3471 = vunpack.c.h.b16 %v3017
        %v3472 = vunpack.c.l.b16 %v3018
        %v3473 = vunpack.c.h.b16 %v3018
        %v3474 = vunpack.c.l.b16 %v3019
        %v3475 = vunpack.c.h.b16 %v3019
        %v3476 = vunpack.c.l.b16 %v3020
        %v3477 = vunpack.c.h.b16 %v3020
        %v3478 = vunpack.c.l.b16 %v3021
        %v3479 = vunpack.c.h.b16 %v3021
        %v3480 = vunpack.c.l.b16 %v3022
        %v3481 = vunpack.c.h.b16 %v3022
        %v3482 = vunpack.c.l.b16 %v3023
        %v3483 = vunpack.c.h.b16 %v3023
        %v3484 = vunpack.c.l.b16 %v3024
        %v3485 = vunpack.c.h.b16 %v3024
        %v3486 = vunpack.c.l.b16 %v3025
        %v3487 = vunpack.c.h.b16 %v3025
        %v3488 = vunpack.c.l.b16 %v3026
        %v3489 = vunpack.c.h.b16 %v3026
        %v3490 = vunpack.c.l.b16 %v3027
        %v3491 = vunpack.c.h.b16 %v3027
        %v3492 = vunpack.c.l.b16 %v3028
        %v3493 = vunpack.c.h.b16 %v3028
        %v3494 = vunpack.c.l.b16 %v3029
        %v3495 = vunpack.c.h.b16 %v3029
        %v3496 = vunpack.c.l.b16 %v3030
        %v3497 = vunpack.c.h.b16 %v3030
        %v3498 = vunpack.c.l.b16 %v3031
        %v3499 = vunpack.c.h.b16 %v3031
        %v3500 = vpack.c.b16 %v3260, %v3244
        %v3501 = vpack.c.b16 %v3261, %v3245
        %v3502 = vpack.c.b16 %v3262, %v3246
        %v3503 = vpack.c.b16 %v3263, %v3247
        %v3504 = vpack.c.b16 %v3264, %v3248
        %v3505 = vpack.c.b16 %v3265, %v3249
        %v3506 = vpack.c.b16 %v3266, %v3250
        %v3507 = vpack.c.b16 %v3267, %v3251
        %v3508 = vpack.c.b16 %v3268, %v3252
        %v3509 = vpack.c.b16 %v3269, %v3253
        %v3510 = vpack.c.b16 %v3270, %v3254
        %v3511 = vpack.c.b16 %v3271, %v3255
        %v3512 = vpack.c.b16 %v3272, %v3256
        %v3513 = vpack.c.b16 %v3273, %v3257
        %v3514 = vpack.c.b16 %v3274, %v3258
        %v3515 = vpack.c.b16 %v3275, %v3259
        %v3516 = vpack.c.b16 %v3292, %v3276
        %v3517 = vpack.c.b16 %v3293, %v3277
        %v3518 = vpack.c.b16 %v3294, %v3278
        %v3519 = vpack.c.b16 %v3295, %v3279
        %v3520 = vpack.c.b16 %v3296, %v3280
        %v3521 = vpack.c.b16 %v3297, %v3281
        %v3522 = vpack.c.b16 %v3298, %v3282
        %v3523 = vpack.c.b16 %v3299, %v3283
        %v3524 = vpack.c.b16 %v3300, %v3284
        %v3525 = vpack.c.b16 %v3301, %v3285
        %v3526 = vpack.c.b16 %v3302, %v3286
        %v3527 = vpack.c.b16 %v3303, %v3287
        %v3528 = vpack.c.b16 %v3304, %v3288
        %v3529 = vpack.c.b16 %v3305, %v3289
        %v3530 = vpack.c.b16 %v3306, %v3290
        %v3531 = vpack.c.b16 %v3307, %v3291
        %v3532 = vpack.c.b16 %v3324, %v3308
        %v3533 = vpack.c.b16 %v3325, %v3309
        %v3534 = vpack.c.b16 %v3326, %v3310
        %v3535 = vpack.c.b16 %v3327, %v3311
        %v3536 = vpack.c.b16 %v3328, %v3312
        %v3537 = vpack.c.b16 %v3329, %v3313
        %v3538 = vpack.c.b16 %v3330, %v3314
        %v3539 = vpack.c.b16 %v3331, %v3315
        %v3540 = vpack.c.b16 %v3332, %v3316
        %v3541 = vpack.c.b16 %v3333, %v3317
        %v3542 = vpack.c.b16 %v3334, %v3318
        %v3543 = vpack.c.b16 %v3335, %v3319
        %v3544 = vpack.c.b16 %v3336, %v3320
        %v3545 = vpack.c.b16 %v3337, %v3321
        %v3546 = vpack.c.b16 %v3338, %v3322
        %v3547 = vpack.c.b16 %v3339, %v3323
        %v3548 = vpack.c.b16 %v3356, %v3340
        %v3549 = vpack.c.b16 %v3357, %v3341
        %v3550 = vpack.c.b16 %v3358, %v3342
        %v3551 = vpack.c.b16 %v3359, %v3343
        %v3552 = vpack.c.b16 %v3360, %v3344
        %v3553 = vpack.c.b16 %v3361, %v3345
        %v3554 = vpack.c.b16 %v3362, %v3346
        %v3555 = vpack.c.b16 %v3363, %v3347
        %v3556 = vpack.c.b16 %v3364, %v3348
        %v3557 = vpack.c.b16 %v3365, %v3349
        %v3558 = vpack.c.b16 %v3366, %v3350
        %v3559 = vpack.c.b16 %v3367, %v3351
        %v3560 = vpack.c.b16 %v3368, %v3352
        %v3561 = vpack.c.b16 %v3369, %v3353
        %v3562 = vpack.c.b16 %v3370, %v3354
        %v3563 = vpack.c.b16 %v3371, %v3355
        %v3564 = vpack.c.b16 %v3388, %v3372
        %v3565 = vpack.c.b16 %v3389, %v3373
        %v3566 = vpack.c.b16 %v3390, %v3374
        %v3567 = vpack.c.b16 %v3391, %v3375
        %v3568 = vpack.c.b16 %v3392, %v3376
        %v3569 = vpack.c.b16 %v3393, %v3377
        %v3570 = vpack.c.b16 %v3394, %v3378
        %v3571 = vpack.c.b16 %v3395, %v3379
        %v3572 = vpack.c.b16 %v3396, %v3380
        %v3573 = vpack.c.b16 %v3397, %v3381
        %v3574 = vpack.c.b16 %v3398, %v3382
        %v3575 = vpack.c.b16 %v3399, %v3383
        %v3576 = vpack.c.b16 %v3400, %v3384
        %v3577 = vpack.c.b16 %v3401, %v3385
        %v3578 = vpack.c.b16 %v3402, %v3386
        %v3579 = vpack.c.b16 %v3403, %v3387
        %v3580 = vpack.c.b16 %v3420, %v3404
        %v3581 = vpack.c.b16 %v3421, %v3405
        %v3582 = vpack.c.b16 %v3422, %v3406
        %v3583 = vpack.c.b16 %v3423, %v3407
        %v3584 = vpack.c.b16 %v3424, %v3408
        %v3585 = vpack.c.b16 %v3425, %v3409
        %v3586 = vpack.c.b16 %v3426, %v3410
        %v3587 = vpack.c.b16 %v3427, %v3411
        %v3588 = vpack.c.b16 %v3428, %v3412
        %v3589 = vpack.c.b16 %v3429, %v3413
        %v3590 = vpack.c.b16 %v3430, %v3414
        %v3591 = vpack.c.b16 %v3431, %v3415
        %v3592 = vpack.c.b16 %v3432, %v3416
        %v3593 = vpack.c.b16 %v3433, %v3417
        %v3594 = vpack.c.b16 %v3434, %v3418
        %v3595 = vpack.c.b16 %v3435, %v3419
        %v3596 = vpack.c.b16 %v3452, %v3436
        %v3597 = vpack.c.b16 %v3453, %v3437
        %v3598 = vpack.c.b16 %v3454, %v3438
        %v3599 = vpack.c.b16 %v3455, %v3439
        %v3600 = vpack.c.b16 %v3456, %v3440
        %v3601 = vpack.c.b16 %v3457, %v3441
        %v3602 = vpack.c.b16 %v3458, %v3442
        %v3603 = vpack.c.b16 %v3459, %v3443
        %v3604 = vpack.c.b16 %v3460, %v3444
        %v3605 = vpack.c.b16 %v3461, %v3445
        %v3606 = vpack.c.b16 %v3462, %v3446
        %v3607 = vpack.c.b16 %v3463, %v3447
        %v3608 = vpack.c.b16 %v3464, %v3448
        %v3609 = vpack.c.b16 %v3465, %v3449
        %v3610 = vpack.c.b16 %v3466, %v3450
        %v3611 = vpack.c.b16 %v3467, %v3451
        %v3612 = vpack.c.b16 %v3484, %v3468
        %v3613 = vpack.c.b16 %v3485, %v3469
        %v3614 = vpack.c.b16 %v3486, %v3470
        %v3615 = vpack.c.b16 %v3487, %v3471
        %v3616 = vpack.c.b16 %v3488, %v3472
        %v3617 = vpack.c.b16 %v3489, %v3473
        %v3618 = vpack.c.b16 %v3490, %v3474
        %v3619 = vpack.c.b16 %v3491, %v3475
        %v3620 = vpack.c.b16 %v3492, %v3476
        %v3621 = vpack.c.b16 %v3493, %v3477
        %v3622 = vpack.c.b16 %v3494, %v3478
        %v3623 = vpack.c.b16 %v3495, %v3479
        %v3624 = vpack.c.b16 %v3496, %v3480
        %v3625 = vpack.c.b16 %v3497, %v3481
        %v3626 = vpack.c.b16 %v3498, %v3482
        %v3627 = vpack.c.b16 %v3499, %v3483
        %3756 = vmatprep.subr.bf16.mxu0 %v3501
        %3757 = vmatpush1.bf16.msra.mxu0 %v3500
        %3758 = vmatprep.subr.bf16.mxu0 %v3517
        %3759 = vmatpush1.bf16.msra.mxu0 %v3516
        %3760 = vmatprep.subr.bf16.mxu0 %v3533
        %3761 = vmatpush1.bf16.msra.mxu0 %v3532
        %3762 = vmatprep.subr.bf16.mxu0 %v3549
        %3763 = vmatpush1.bf16.msra.mxu0 %v3548
        %3764 = vmatprep.subr.bf16.mxu0 %v3565
        %3765 = vmatpush1.bf16.msra.mxu0 %v3564
        %3766 = vmatprep.subr.bf16.mxu0 %v3581
        %3767 = vmatpush1.bf16.msra.mxu0 %v3580
        %3768 = vmatprep.subr.bf16.mxu0 %v3597
        %3769 = vmatpush1.bf16.msra.mxu0 %v3596
        %3770 = vmatprep.subr.bf16.mxu0 %v3613
        %3771 = vmatpush1.bf16.msra.mxu0 %v3612
        %3772 = vmatprep.subr.bf16.mxu0 0
        %3773 = vmatpush1.bf16.msra.mxu0 0
        %3774 = vmatprep.subr.bf16.mxu0 0
        %3775 = vmatpush1.bf16.msra.mxu0 0
        %3776 = vmatprep.subr.bf16.mxu0 0
        %3777 = vmatpush1.bf16.msra.mxu0 0
        %3778 = vmatprep.subr.bf16.mxu0 0
        %3779 = vmatpush1.bf16.msra.mxu0 0
        %3780 = vmatprep.subr.bf16.mxu0 0
        %3781 = vmatpush1.bf16.msra.mxu0 0
        %3782 = vmatprep.subr.bf16.mxu0 0
        %3783 = vmatpush1.bf16.msra.mxu0 0
        %3784 = vmatprep.subr.bf16.mxu0 0
        %3785 = vmatpush1.bf16.msra.mxu0 0
        %3786 = vmatprep.subr.bf16.mxu0 0
        %3787 = vmatpush1.bf16.msra.mxu0 0
        %3788 = vmatprep.mubr.bf16.mxu0 0
        %3789 = vmatmul.mubr.bf16.gmra.mrb[0].mxu0 %v2903
        %v3790 = vpop.f32.mrb[0].mxu0
        %v3791 = vadd.f32 %v3039, %v3790
        %v3792 = vpop.f32.mrb[0].mxu0
        %v3793 = vadd.f32 %v3043, %v3792
        %v3794 = vpop.f32.mrb[0].mxu0
        %v3795 = vpop.f32.mrb[0].mxu0
        %3796 = vdwg.mxu0
        %3797 = vmatprep.subr.bf16.mxu0 %v3503
        %3798 = vmatpush1.bf16.msra.mxu0 %v3502
        %3799 = vmatprep.subr.bf16.mxu0 %v3519
        %3800 = vmatpush1.bf16.msra.mxu0 %v3518
        %3801 = vmatprep.subr.bf16.mxu0 %v3535
        %3802 = vmatpush1.bf16.msra.mxu0 %v3534
        %3803 = vmatprep.subr.bf16.mxu0 %v3551
        %3804 = vmatpush1.bf16.msra.mxu0 %v3550
        %3805 = vmatprep.subr.bf16.mxu0 %v3567
        %3806 = vmatpush1.bf16.msra.mxu0 %v3566
        %3807 = vmatprep.subr.bf16.mxu0 %v3583
        %3808 = vmatpush1.bf16.msra.mxu0 %v3582
        %3809 = vmatprep.subr.bf16.mxu0 %v3599
        %3810 = vmatpush1.bf16.msra.mxu0 %v3598
        %3811 = vmatprep.subr.bf16.mxu0 %v3615
        %3812 = vmatpush1.bf16.msra.mxu0 %v3614
        %3813 = vmatprep.subr.bf16.mxu0 0
        %3814 = vmatpush1.bf16.msra.mxu0 0
        %3815 = vmatprep.subr.bf16.mxu0 0
        %3816 = vmatpush1.bf16.msra.mxu0 0
        %3817 = vmatprep.subr.bf16.mxu0 0
        %3818 = vmatpush1.bf16.msra.mxu0 0
        %3819 = vmatprep.subr.bf16.mxu0 0
        %3820 = vmatpush1.bf16.msra.mxu0 0
        %3821 = vmatprep.subr.bf16.mxu0 0
        %3822 = vmatpush1.bf16.msra.mxu0 0
        %3823 = vmatprep.subr.bf16.mxu0 0
        %3824 = vmatpush1.bf16.msra.mxu0 0
        %3825 = vmatprep.subr.bf16.mxu0 0
        %3826 = vmatpush1.bf16.msra.mxu0 0
        %3827 = vmatprep.subr.bf16.mxu0 0
        %3828 = vmatpush1.bf16.msra.mxu0 0
        %3829 = vmatprep.mubr.bf16.mxu0 0
        %3830 = vmatmul.mubr.bf16.gmra.mrb[0].mxu0 %v2903
        %v3831 = vpop.f32.mrb[0].mxu0
        %v3832 = vadd.f32 %v3047, %v3831
        %v3833 = vpop.f32.mrb[0].mxu0
        %v3834 = vadd.f32 %v3051, %v3833
        %v3835 = vpop.f32.mrb[0].mxu0
        %v3836 = vpop.f32.mrb[0].mxu0
        %3837 = vdwg.mxu0
        %3838 = vmatprep.subr.bf16.mxu0 %v3505
        %3839 = vmatpush1.bf16.msra.mxu0 %v3504
        %3840 = vmatprep.subr.bf16.mxu0 %v3521
        %3841 = vmatpush1.bf16.msra.mxu0 %v3520
        %3842 = vmatprep.subr.bf16.mxu0 %v3537
        %3843 = vmatpush1.bf16.msra.mxu0 %v3536
        %3844 = vmatprep.subr.bf16.mxu0 %v3553
        %3845 = vmatpush1.bf16.msra.mxu0 %v3552
        %3846 = vmatprep.subr.bf16.mxu0 %v3569
        %3847 = vmatpush1.bf16.msra.mxu0 %v3568
        %3848 = vmatprep.subr.bf16.mxu0 %v3585
        %3849 = vmatpush1.bf16.msra.mxu0 %v3584
        %3850 = vmatprep.subr.bf16.mxu0 %v3601
        %3851 = vmatpush1.bf16.msra.mxu0 %v3600
        %3852 = vmatprep.subr.bf16.mxu0 %v3617
        %3853 = vmatpush1.bf16.msra.mxu0 %v3616
        %3854 = vmatprep.subr.bf16.mxu0 0
        %3855 = vmatpush1.bf16.msra.mxu0 0
        %3856 = vmatprep.subr.bf16.mxu0 0
        %3857 = vmatpush1.bf16.msra.mxu0 0
        %3858 = vmatprep.subr.bf16.mxu0 0
        %3859 = vmatpush1.bf16.msra.mxu0 0
        %3860 = vmatprep.subr.bf16.mxu0 0
        %3861 = vmatpush1.bf16.msra.mxu0 0
        %3862 = vmatprep.subr.bf16.mxu0 0
        %3863 = vmatpush1.bf16.msra.mxu0 0
        %3864 = vmatprep.subr.bf16.mxu0 0
        %3865 = vmatpush1.bf16.msra.mxu0 0
        %3866 = vmatprep.subr.bf16.mxu0 0
        %3867 = vmatpush1.bf16.msra.mxu0 0
        %3868 = vmatprep.subr.bf16.mxu0 0
        %3869 = vmatpush1.bf16.msra.mxu0 0
        %3870 = vmatprep.mubr.bf16.mxu0 0
        %3871 = vmatmul.mubr.bf16.gmra.mrb[0].mxu0 %v2903
        %v3872 = vpop.f32.mrb[0].mxu0
        %v3873 = vadd.f32 %v3055, %v3872
        %v3874 = vpop.f32.mrb[0].mxu0
        %v3875 = vadd.f32 %v3059, %v3874
        %v3876 = vpop.f32.mrb[0].mxu0
        %v3877 = vpop.f32.mrb[0].mxu0
        %3878 = vdwg.mxu0
        %3879 = vmatprep.subr.bf16.mxu0 %v3507
        %3880 = vmatpush1.bf16.msra.mxu0 %v3506
        %3881 = vmatprep.subr.bf16.mxu0 %v3523
        %3882 = vmatpush1.bf16.msra.mxu0 %v3522
        %3883 = vmatprep.subr.bf16.mxu0 %v3539
        %3884 = vmatpush1.bf16.msra.mxu0 %v3538
        %3885 = vmatprep.subr.bf16.mxu0 %v3555
        %3886 = vmatpush1.bf16.msra.mxu0 %v3554
        %3887 = vmatprep.subr.bf16.mxu0 %v3571
        %3888 = vmatpush1.bf16.msra.mxu0 %v3570
        %3889 = vmatprep.subr.bf16.mxu0 %v3587
        %3890 = vmatpush1.bf16.msra.mxu0 %v3586
        %3891 = vmatprep.subr.bf16.mxu0 %v3603
        %3892 = vmatpush1.bf16.msra.mxu0 %v3602
        %3893 = vmatprep.subr.bf16.mxu0 %v3619
        %3894 = vmatpush1.bf16.msra.mxu0 %v3618
        %3895 = vmatprep.subr.bf16.mxu0 0
        %3896 = vmatpush1.bf16.msra.mxu0 0
        %3897 = vmatprep.subr.bf16.mxu0 0
        %3898 = vmatpush1.bf16.msra.mxu0 0
        %3899 = vmatprep.subr.bf16.mxu0 0
        %3900 = vmatpush1.bf16.msra.mxu0 0
        %3901 = vmatprep.subr.bf16.mxu0 0
        %3902 = vmatpush1.bf16.msra.mxu0 0
        %3903 = vmatprep.subr.bf16.mxu0 0
        %3904 = vmatpush1.bf16.msra.mxu0 0
        %3905 = vmatprep.subr.bf16.mxu0 0
        %3906 = vmatpush1.bf16.msra.mxu0 0
        %3907 = vmatprep.subr.bf16.mxu0 0
        %3908 = vmatpush1.bf16.msra.mxu0 0
        %3909 = vmatprep.subr.bf16.mxu0 0
        %3910 = vmatpush1.bf16.msra.mxu0 0
        %3911 = vmatprep.mubr.bf16.mxu0 0
        %3912 = vmatmul.mubr.bf16.gmra.mrb[0].mxu0 %v2903
        %v3913 = vpop.f32.mrb[0].mxu0
        %v3914 = vadd.f32 %v3063, %v3913
        %v3915 = vpop.f32.mrb[0].mxu0
        %v3916 = vadd.f32 %v3067, %v3915
        %v3917 = vpop.f32.mrb[0].mxu0
        %v3918 = vpop.f32.mrb[0].mxu0
        %3919 = vdwg.mxu0
        %3920 = vmatprep.subr.bf16.mxu0 %v3509
        %3921 = vmatpush1.bf16.msra.mxu0 %v3508
        %3922 = vmatprep.subr.bf16.mxu0 %v3525
        %3923 = vmatpush1.bf16.msra.mxu0 %v3524
        %3924 = vmatprep.subr.bf16.mxu0 %v3541
        %3925 = vmatpush1.bf16.msra.mxu0 %v3540
        %3926 = vmatprep.subr.bf16.mxu0 %v3557
        %3927 = vmatpush1.bf16.msra.mxu0 %v3556
        %3928 = vmatprep.subr.bf16.mxu0 %v3573
        %3929 = vmatpush1.bf16.msra.mxu0 %v3572
        %3930 = vmatprep.subr.bf16.mxu0 %v3589
        %3931 = vmatpush1.bf16.msra.mxu0 %v3588
        %3932 = vmatprep.subr.bf16.mxu0 %v3605
        %3933 = vmatpush1.bf16.msra.mxu0 %v3604
        %3934 = vmatprep.subr.bf16.mxu0 %v3621
        %3935 = vmatpush1.bf16.msra.mxu0 %v3620
        %3936 = vmatprep.subr.bf16.mxu0 0
        %3937 = vmatpush1.bf16.msra.mxu0 0
        %3938 = vmatprep.subr.bf16.mxu0 0
        %3939 = vmatpush1.bf16.msra.mxu0 0
        %3940 = vmatprep.subr.bf16.mxu0 0
        %3941 = vmatpush1.bf16.msra.mxu0 0
        %3942 = vmatprep.subr.bf16.mxu0 0
        %3943 = vmatpush1.bf16.msra.mxu0 0
        %3944 = vmatprep.subr.bf16.mxu0 0
        %3945 = vmatpush1.bf16.msra.mxu0 0
        %3946 = vmatprep.subr.bf16.mxu0 0
        %3947 = vmatpush1.bf16.msra.mxu0 0
        %3948 = vmatprep.subr.bf16.mxu0 0
        %3949 = vmatpush1.bf16.msra.mxu0 0
        %3950 = vmatprep.subr.bf16.mxu0 0
        %3951 = vmatpush1.bf16.msra.mxu0 0
        %3952 = vmatprep.mubr.bf16.mxu0 0
        %3953 = vmatmul.mubr.bf16.gmra.mrb[0].mxu0 %v2903
        %v3954 = vpop.f32.mrb[0].mxu0
        %v3955 = vadd.f32 %v3071, %v3954
        %v3956 = vpop.f32.mrb[0].mxu0
        %v3957 = vadd.f32 %v3075, %v3956
        %v3958 = vpop.f32.mrb[0].mxu0
        %v3959 = vpop.f32.mrb[0].mxu0
        %3960 = vdwg.mxu0
        %3961 = vmatprep.subr.bf16.mxu0 %v3511
        %3962 = vmatpush1.bf16.msra.mxu0 %v3510
        %3963 = vmatprep.subr.bf16.mxu0 %v3527
        %3964 = vmatpush1.bf16.msra.mxu0 %v3526
        %3965 = vmatprep.subr.bf16.mxu0 %v3543
        %3966 = vmatpush1.bf16.msra.mxu0 %v3542
        %3967 = vmatprep.subr.bf16.mxu0 %v3559
        %3968 = vmatpush1.bf16.msra.mxu0 %v3558
        %3969 = vmatprep.subr.bf16.mxu0 %v3575
        %3970 = vmatpush1.bf16.msra.mxu0 %v3574
        %3971 = vmatprep.subr.bf16.mxu0 %v3591
        %3972 = vmatpush1.bf16.msra.mxu0 %v3590
        %3973 = vmatprep.subr.bf16.mxu0 %v3607
        %3974 = vmatpush1.bf16.msra.mxu0 %v3606
        %3975 = vmatprep.subr.bf16.mxu0 %v3623
        %3976 = vmatpush1.bf16.msra.mxu0 %v3622
        %3977 = vmatprep.subr.bf16.mxu0 0
        %3978 = vmatpush1.bf16.msra.mxu0 0
        %3979 = vmatprep.subr.bf16.mxu0 0
        %3980 = vmatpush1.bf16.msra.mxu0 0
        %3981 = vmatprep.subr.bf16.mxu0 0
        %3982 = vmatpush1.bf16.msra.mxu0 0
        %3983 = vmatprep.subr.bf16.mxu0 0
        %3984 = vmatpush1.bf16.msra.mxu0 0
        %3985 = vmatprep.subr.bf16.mxu0 0
        %3986 = vmatpush1.bf16.msra.mxu0 0
        %3987 = vmatprep.subr.bf16.mxu0 0
        %3988 = vmatpush1.bf16.msra.mxu0 0
        %3989 = vmatprep.subr.bf16.mxu0 0
        %3990 = vmatpush1.bf16.msra.mxu0 0
        %3991 = vmatprep.subr.bf16.mxu0 0
        %3992 = vmatpush1.bf16.msra.mxu0 0
        %3993 = vmatprep.mubr.bf16.mxu0 0
        %3994 = vmatmul.mubr.bf16.gmra.mrb[0].mxu0 %v2903
        %v3995 = vpop.f32.mrb[0].mxu0
        %v3996 = vadd.f32 %v3079, %v3995
        %v3997 = vpop.f32.mrb[0].mxu0
        %v3998 = vadd.f32 %v3083, %v3997
        %v3999 = vpop.f32.mrb[0].mxu0
        %v4000 = vpop.f32.mrb[0].mxu0
        %4001 = vdwg.mxu0
        %4002 = vmatprep.subr.bf16.mxu0 %v3513
        %4003 = vmatpush1.bf16.msra.mxu0 %v3512
        %4004 = vmatprep.subr.bf16.mxu0 %v3529
        %4005 = vmatpush1.bf16.msra.mxu0 %v3528
        %4006 = vmatprep.subr.bf16.mxu0 %v3545
        %4007 = vmatpush1.bf16.msra.mxu0 %v3544
        %4008 = vmatprep.subr.bf16.mxu0 %v3561
        %4009 = vmatpush1.bf16.msra.mxu0 %v3560
        %4010 = vmatprep.subr.bf16.mxu0 %v3577
        %4011 = vmatpush1.bf16.msra.mxu0 %v3576
        %4012 = vmatprep.subr.bf16.mxu0 %v3593
        %4013 = vmatpush1.bf16.msra.mxu0 %v3592
        %4014 = vmatprep.subr.bf16.mxu0 %v3609
        %4015 = vmatpush1.bf16.msra.mxu0 %v3608
        %4016 = vmatprep.subr.bf16.mxu0 %v3625
        %4017 = vmatpush1.bf16.msra.mxu0 %v3624
        %4018 = vmatprep.subr.bf16.mxu0 0
        %4019 = vmatpush1.bf16.msra.mxu0 0
        %4020 = vmatprep.subr.bf16.mxu0 0
        %4021 = vmatpush1.bf16.msra.mxu0 0
        %4022 = vmatprep.subr.bf16.mxu0 0
        %4023 = vmatpush1.bf16.msra.mxu0 0
        %4024 = vmatprep.subr.bf16.mxu0 0
        %4025 = vmatpush1.bf16.msra.mxu0 0
        %4026 = vmatprep.subr.bf16.mxu0 0
        %4027 = vmatpush1.bf16.msra.mxu0 0
        %4028 = vmatprep.subr.bf16.mxu0 0
        %4029 = vmatpush1.bf16.msra.mxu0 0
        %4030 = vmatprep.subr.bf16.mxu0 0
        %4031 = vmatpush1.bf16.msra.mxu0 0
        %4032 = vmatprep.subr.bf16.mxu0 0
        %4033 = vmatpush1.bf16.msra.mxu0 0
        %4034 = vmatprep.mubr.bf16.mxu0 0
        %4035 = vmatmul.mubr.bf16.gmra.mrb[0].mxu0 %v2903
        %v4036 = vpop.f32.mrb[0].mxu0
        %v4037 = vadd.f32 %v3087, %v4036
        %v4038 = vpop.f32.mrb[0].mxu0
        %v4039 = vadd.f32 %v3091, %v4038
        %v4040 = vpop.f32.mrb[0].mxu0
        %v4041 = vpop.f32.mrb[0].mxu0
        %4042 = vdwg.mxu0
        %4043 = vmatprep.subr.bf16.mxu0 %v3515
        %4044 = vmatpush1.bf16.msra.mxu0 %v3514
        %4045 = vmatprep.subr.bf16.mxu0 %v3531
        %4046 = vmatpush1.bf16.msra.mxu0 %v3530
        %4047 = vmatprep.subr.bf16.mxu0 %v3547
        %4048 = vmatpush1.bf16.msra.mxu0 %v3546
        %4049 = vmatprep.subr.bf16.mxu0 %v3563
        %4050 = vmatpush1.bf16.msra.mxu0 %v3562
        %4051 = vmatprep.subr.bf16.mxu0 %v3579
        %4052 = vmatpush1.bf16.msra.mxu0 %v3578
        %4053 = vmatprep.subr.bf16.mxu0 %v3595
        %4054 = vmatpush1.bf16.msra.mxu0 %v3594
        %4055 = vmatprep.subr.bf16.mxu0 %v3611
        %4056 = vmatpush1.bf16.msra.mxu0 %v3610
        %4057 = vmatprep.subr.bf16.mxu0 %v3627
        %4058 = vmatpush1.bf16.msra.mxu0 %v3626
        %4059 = vmatprep.subr.bf16.mxu0 0
        %4060 = vmatpush1.bf16.msra.mxu0 0
        %4061 = vmatprep.subr.bf16.mxu0 0
        %4062 = vmatpush1.bf16.msra.mxu0 0
        %4063 = vmatprep.subr.bf16.mxu0 0
        %4064 = vmatpush1.bf16.msra.mxu0 0
        %4065 = vmatprep.subr.bf16.mxu0 0
        %4066 = vmatpush1.bf16.msra.mxu0 0
        %4067 = vmatprep.subr.bf16.mxu0 0
        %4068 = vmatpush1.bf16.msra.mxu0 0
        %4069 = vmatprep.subr.bf16.mxu0 0
        %4070 = vmatpush1.bf16.msra.mxu0 0
        %4071 = vmatprep.subr.bf16.mxu0 0
        %4072 = vmatpush1.bf16.msra.mxu0 0
        %4073 = vmatprep.subr.bf16.mxu0 0
        %4074 = vmatpush1.bf16.msra.mxu0 0
        %4075 = vmatprep.mubr.bf16.mxu0 0
        %4076 = vmatmul.mubr.bf16.gmra.mrb[0].mxu0 %v2903
        %v4077 = vpop.f32.mrb[0].mxu0
        %v4078 = vadd.f32 %v3095, %v4077
        %v4079 = vpop.f32.mrb[0].mxu0
        %v4080 = vadd.f32 %v3099, %v4079
        %v4081 = vpop.f32.mrb[0].mxu0
        %v4082 = vpop.f32.mrb[0].mxu0
        %4083 = vdwg.mxu0
        %v4084 = vmax.f32 %v3791, 0.0
        %v4085 = vmax.f32 %v3793, 0.0
        %v4086 = vmax.f32 %v3832, 0.0
        %v4087 = vmax.f32 %v3834, 0.0
        %v4088 = vmax.f32 %v3873, 0.0
        %v4089 = vmax.f32 %v3875, 0.0
        %v4090 = vmax.f32 %v3914, 0.0
        %v4091 = vmax.f32 %v3916, 0.0
        %v4092 = vmax.f32 %v3955, 0.0
        %v4093 = vmax.f32 %v3957, 0.0
        %v4094 = vmax.f32 %v3996, 0.0
        %v4095 = vmax.f32 %v3998, 0.0
        %v4096 = vmax.f32 %v4037, 0.0
        %v4097 = vmax.f32 %v4039, 0.0
        %v4098 = vmax.f32 %v4078, 0.0
        %v4099 = vmax.f32 %v4080, 0.0
        %v4100 = vpack.c.bf16 %v4084, %v4084
        %v4101 = vpack.c.bf16 %v4085, %v4085
        %v4102 = vpack.c.bf16 %v4086, %v4086
        %v4103 = vpack.c.bf16 %v4087, %v4087
        %v4104 = vpack.c.bf16 %v4088, %v4088
        %v4105 = vpack.c.bf16 %v4089, %v4089
        %v4106 = vpack.c.bf16 %v4090, %v4090
        %v4107 = vpack.c.bf16 %v4091, %v4091
        %v4108 = vpack.c.bf16 %v4092, %v4092
        %v4109 = vpack.c.bf16 %v4093, %v4093
        %v4110 = vpack.c.bf16 %v4094, %v4094
        %v4111 = vpack.c.bf16 %v4095, %v4095
        %v4112 = vpack.c.bf16 %v4096, %v4096
        %v4113 = vpack.c.bf16 %v4097, %v4097
        %v4114 = vpack.c.bf16 %v4098, %v4098
        %v4115 = vpack.c.bf16 %v4099, %v4099
        %v4116 = vld [vmem:[#allocation28] sm:$0xf]
        %v4117 = vld [vmem:[#allocation28 + $0x4] sm:$0xf]
        %v4118 = vld [vmem:[#allocation28 + $0x8] sm:$0xf]
        %v4119 = vld [vmem:[#allocation28 + $0xc] sm:$0xf]
        %v4120 = vld [vmem:[#allocation28 + $0x10] sm:$0xf]
        %v4121 = vld [vmem:[#allocation28 + $0x14] sm:$0xf]
        %v4122 = vld [vmem:[#allocation28 + $0x18] sm:$0xf]
        %v4123 = vld [vmem:[#allocation28 + $0x1c] sm:$0xf]
        %v4124 = vld [vmem:[#allocation28 + $0x20] sm:$0xf]
        %v4125 = vld [vmem:[#allocation28 + $0x24] sm:$0xf]
        %v4126 = vld [vmem:[#allocation28 + $0x28] sm:$0xf]
        %v4127 = vld [vmem:[#allocation28 + $0x2c] sm:$0xf]
        %v4128 = vld [vmem:[#allocation28 + $0x30] sm:$0xf]
        %v4129 = vld [vmem:[#allocation28 + $0x34] sm:$0xf]
        %v4130 = vld [vmem:[#allocation28 + $0x38] sm:$0xf]
        %v4131 = vld [vmem:[#allocation28 + $0x3c] sm:$0xf]
        %v4132 = vld [vmem:[#allocation28 + $0x40] sm:$0xf]
        %v4133 = vld [vmem:[#allocation28 + $0x44] sm:$0xf]
        %v4134 = vld [vmem:[#allocation28 + $0x48] sm:$0xf]
        %v4135 = vld [vmem:[#allocation28 + $0x4c] sm:$0xf]
        %v4136 = vld [vmem:[#allocation28 + $0x50] sm:$0xf]
        %v4137 = vld [vmem:[#allocation28 + $0x54] sm:$0xf]
        %v4138 = vld [vmem:[#allocation28 + $0x58] sm:$0xf]
        %v4139 = vld [vmem:[#allocation28 + $0x5c] sm:$0xf]
        %v4140 = vld [vmem:[#allocation28 + $0x60] sm:$0xf]
        %v4141 = vld [vmem:[#allocation28 + $0x64] sm:$0xf]
        %v4142 = vld [vmem:[#allocation28 + $0x68] sm:$0xf]
        %v4143 = vld [vmem:[#allocation28 + $0x6c] sm:$0xf]
        %v4144 = vld [vmem:[#allocation28 + $0x70] sm:$0xf]
        %v4145 = vld [vmem:[#allocation28 + $0x74] sm:$0xf]
        %v4146 = vld [vmem:[#allocation28 + $0x78] sm:$0xf]
        %v4147 = vld [vmem:[#allocation28 + $0x7c] sm:$0xf]
        %v4148 = vld [vmem:[#allocation28 + $0x80] sm:$0xf]
        %v4149 = vld [vmem:[#allocation28 + $0x84] sm:$0xf]
        %v4150 = vld [vmem:[#allocation28 + $0x88] sm:$0xf]
        %v4151 = vld [vmem:[#allocation28 + $0x8c] sm:$0xf]
        %v4152 = vld [vmem:[#allocation28 + $0x90] sm:$0xf]
        %v4153 = vld [vmem:[#allocation28 + $0x94] sm:$0xf]
        %v4154 = vld [vmem:[#allocation28 + $0x98] sm:$0xf]
        %v4155 = vld [vmem:[#allocation28 + $0x9c] sm:$0xf]
        %v4156 = vld [vmem:[#allocation28 + $0xa0] sm:$0xf]
        %v4157 = vld [vmem:[#allocation28 + $0xa4] sm:$0xf]
        %v4158 = vld [vmem:[#allocation28 + $0xa8] sm:$0xf]
        %v4159 = vld [vmem:[#allocation28 + $0xac] sm:$0xf]
        %v4160 = vld [vmem:[#allocation28 + $0xb0] sm:$0xf]
        %v4161 = vld [vmem:[#allocation28 + $0xb4] sm:$0xf]
        %v4162 = vld [vmem:[#allocation28 + $0xb8] sm:$0xf]
        %v4163 = vld [vmem:[#allocation28 + $0xbc] sm:$0xf]
        %v4164 = vld [vmem:[#allocation28 + $0xc0] sm:$0xf]
        %v4165 = vld [vmem:[#allocation28 + $0xc4] sm:$0xf]
        %v4166 = vld [vmem:[#allocation28 + $0xc8] sm:$0xf]
        %v4167 = vld [vmem:[#allocation28 + $0xcc] sm:$0xf]
        %v4168 = vld [vmem:[#allocation28 + $0xd0] sm:$0xf]
        %v4169 = vld [vmem:[#allocation28 + $0xd4] sm:$0xf]
        %v4170 = vld [vmem:[#allocation28 + $0xd8] sm:$0xf]
        %v4171 = vld [vmem:[#allocation28 + $0xdc] sm:$0xf]
        %v4172 = vld [vmem:[#allocation28 + $0xe0] sm:$0xf]
        %v4173 = vld [vmem:[#allocation28 + $0xe4] sm:$0xf]
        %v4174 = vld [vmem:[#allocation28 + $0xe8] sm:$0xf]
        %v4175 = vld [vmem:[#allocation28 + $0xec] sm:$0xf]
        %v4176 = vld [vmem:[#allocation28 + $0xf0] sm:$0xf]
        %v4177 = vld [vmem:[#allocation28 + $0xf4] sm:$0xf]
        %v4178 = vld [vmem:[#allocation28 + $0xf8] sm:$0xf]
        %v4179 = vld [vmem:[#allocation28 + $0xfc] sm:$0xf]
        %v4180 = vld [vmem:[#allocation28 + $0x100] sm:$0xf]
        %v4181 = vld [vmem:[#allocation28 + $0x104] sm:$0xf]
        %v4182 = vld [vmem:[#allocation28 + $0x108] sm:$0xf]
        %v4183 = vld [vmem:[#allocation28 + $0x10c] sm:$0xf]
        %v4184 = vld [vmem:[#allocation28 + $0x110] sm:$0xf]
        %v4185 = vld [vmem:[#allocation28 + $0x114] sm:$0xf]
        %v4186 = vld [vmem:[#allocation28 + $0x118] sm:$0xf]
        %v4187 = vld [vmem:[#allocation28 + $0x11c] sm:$0xf]
        %v4188 = vld [vmem:[#allocation28 + $0x120] sm:$0xf]
        %v4189 = vld [vmem:[#allocation28 + $0x124] sm:$0xf]
        %v4190 = vld [vmem:[#allocation28 + $0x128] sm:$0xf]
        %v4191 = vld [vmem:[#allocation28 + $0x12c] sm:$0xf]
        %v4192 = vld [vmem:[#allocation28 + $0x130] sm:$0xf]
        %v4193 = vld [vmem:[#allocation28 + $0x134] sm:$0xf]
        %v4194 = vld [vmem:[#allocation28 + $0x138] sm:$0xf]
        %v4195 = vld [vmem:[#allocation28 + $0x13c] sm:$0xf]
        %v4196 = vld [vmem:[#allocation28 + $0x140] sm:$0xf]
        %v4197 = vld [vmem:[#allocation28 + $0x144] sm:$0xf]
        %v4198 = vld [vmem:[#allocation28 + $0x148] sm:$0xf]
        %v4199 = vld [vmem:[#allocation28 + $0x14c] sm:$0xf]
        %v4200 = vld [vmem:[#allocation28 + $0x150] sm:$0xf]
        %v4201 = vld [vmem:[#allocation28 + $0x154] sm:$0xf]
        %v4202 = vld [vmem:[#allocation28 + $0x158] sm:$0xf]
        %v4203 = vld [vmem:[#allocation28 + $0x15c] sm:$0xf]
        %v4204 = vld [vmem:[#allocation28 + $0x160] sm:$0xf]
        %v4205 = vld [vmem:[#allocation28 + $0x164] sm:$0xf]
        %v4206 = vld [vmem:[#allocation28 + $0x168] sm:$0xf]
        %v4207 = vld [vmem:[#allocation28 + $0x16c] sm:$0xf]
        %v4208 = vld [vmem:[#allocation28 + $0x170] sm:$0xf]
        %v4209 = vld [vmem:[#allocation28 + $0x174] sm:$0xf]
        %v4210 = vld [vmem:[#allocation28 + $0x178] sm:$0xf]
        %v4211 = vld [vmem:[#allocation28 + $0x17c] sm:$0xf]
        %v4212 = vld [vmem:[#allocation28 + $0x180] sm:$0xf]
        %v4213 = vld [vmem:[#allocation28 + $0x184] sm:$0xf]
        %v4214 = vld [vmem:[#allocation28 + $0x188] sm:$0xf]
        %v4215 = vld [vmem:[#allocation28 + $0x18c] sm:$0xf]
        %v4216 = vld [vmem:[#allocation28 + $0x190] sm:$0xf]
        %v4217 = vld [vmem:[#allocation28 + $0x194] sm:$0xf]
        %v4218 = vld [vmem:[#allocation28 + $0x198] sm:$0xf]
        %v4219 = vld [vmem:[#allocation28 + $0x19c] sm:$0xf]
        %v4220 = vld [vmem:[#allocation28 + $0x1a0] sm:$0xf]
        %v4221 = vld [vmem:[#allocation28 + $0x1a4] sm:$0xf]
        %v4222 = vld [vmem:[#allocation28 + $0x1a8] sm:$0xf]
        %v4223 = vld [vmem:[#allocation28 + $0x1ac] sm:$0xf]
        %v4224 = vld [vmem:[#allocation28 + $0x1b0] sm:$0xf]
        %v4225 = vld [vmem:[#allocation28 + $0x1b4] sm:$0xf]
        %v4226 = vld [vmem:[#allocation28 + $0x1b8] sm:$0xf]
        %v4227 = vld [vmem:[#allocation28 + $0x1bc] sm:$0xf]
        %v4228 = vld [vmem:[#allocation28 + $0x1c0] sm:$0xf]
        %v4229 = vld [vmem:[#allocation28 + $0x1c4] sm:$0xf]
        %v4230 = vld [vmem:[#allocation28 + $0x1c8] sm:$0xf]
        %v4231 = vld [vmem:[#allocation28 + $0x1cc] sm:$0xf]
        %v4232 = vld [vmem:[#allocation28 + $0x1d0] sm:$0xf]
        %v4233 = vld [vmem:[#allocation28 + $0x1d4] sm:$0xf]
        %v4234 = vld [vmem:[#allocation28 + $0x1d8] sm:$0xf]
        %v4235 = vld [vmem:[#allocation28 + $0x1dc] sm:$0xf]
        %v4236 = vld [vmem:[#allocation28 + $0x1e0] sm:$0xf]
        %v4237 = vld [vmem:[#allocation28 + $0x1e4] sm:$0xf]
        %v4238 = vld [vmem:[#allocation28 + $0x1e8] sm:$0xf]
        %v4239 = vld [vmem:[#allocation28 + $0x1ec] sm:$0xf]
        %v4240 = vld [vmem:[#allocation28 + $0x1f0] sm:$0xf]
        %v4241 = vld [vmem:[#allocation28 + $0x1f4] sm:$0xf]
        %v4242 = vld [vmem:[#allocation28 + $0x1f8] sm:$0xf]
        %v4243 = vld [vmem:[#allocation28 + $0x1fc] sm:$0xf]
        %v4244 = vld [vmem:[#allocation28 + $0x200] sm:$0xf]
        %v4245 = vld [vmem:[#allocation28 + $0x204] sm:$0xf]
        %v4246 = vld [vmem:[#allocation28 + $0x208] sm:$0xf]
        %v4247 = vld [vmem:[#allocation28 + $0x20c] sm:$0xf]
        %v4248 = vld [vmem:[#allocation28 + $0x210] sm:$0xf]
        %v4249 = vld [vmem:[#allocation28 + $0x214] sm:$0xf]
        %v4250 = vld [vmem:[#allocation28 + $0x218] sm:$0xf]
        %v4251 = vld [vmem:[#allocation28 + $0x21c] sm:$0xf]
        %v4252 = vld [vmem:[#allocation28 + $0x220] sm:$0xf]
        %v4253 = vld [vmem:[#allocation28 + $0x224] sm:$0xf]
        %v4254 = vld [vmem:[#allocation28 + $0x228] sm:$0xf]
        %v4255 = vld [vmem:[#allocation28 + $0x22c] sm:$0xf]
        %v4256 = vld [vmem:[#allocation28 + $0x230] sm:$0xf]
        %v4257 = vld [vmem:[#allocation28 + $0x234] sm:$0xf]
        %v4258 = vld [vmem:[#allocation28 + $0x238] sm:$0xf]
        %v4259 = vld [vmem:[#allocation28 + $0x23c] sm:$0xf]
        %v4260 = vld [vmem:[#allocation28 + $0x240] sm:$0xf]
        %v4261 = vld [vmem:[#allocation28 + $0x244] sm:$0xf]
        %v4262 = vld [vmem:[#allocation28 + $0x248] sm:$0xf]
        %v4263 = vld [vmem:[#allocation28 + $0x24c] sm:$0xf]
        %v4264 = vld [vmem:[#allocation28 + $0x250] sm:$0xf]
        %v4265 = vld [vmem:[#allocation28 + $0x254] sm:$0xf]
        %v4266 = vld [vmem:[#allocation28 + $0x258] sm:$0xf]
        %v4267 = vld [vmem:[#allocation28 + $0x25c] sm:$0xf]
        %v4268 = vld [vmem:[#allocation28 + $0x260] sm:$0xf]
        %v4269 = vld [vmem:[#allocation28 + $0x264] sm:$0xf]
        %v4270 = vld [vmem:[#allocation28 + $0x268] sm:$0xf]
        %v4271 = vld [vmem:[#allocation28 + $0x26c] sm:$0xf]
        %v4272 = vld [vmem:[#allocation28 + $0x270] sm:$0xf]
        %v4273 = vld [vmem:[#allocation28 + $0x274] sm:$0xf]
        %v4274 = vld [vmem:[#allocation28 + $0x278] sm:$0xf]
        %v4275 = vld [vmem:[#allocation28 + $0x27c] sm:$0xf]
        %v4276 = vld [vmem:[#allocation28 + $0x280] sm:$0xf]
        %v4277 = vld [vmem:[#allocation28 + $0x284] sm:$0xf]
        %v4278 = vld [vmem:[#allocation28 + $0x288] sm:$0xf]
        %v4279 = vld [vmem:[#allocation28 + $0x28c] sm:$0xf]
        %v4280 = vld [vmem:[#allocation28 + $0x290] sm:$0xf]
        %v4281 = vld [vmem:[#allocation28 + $0x294] sm:$0xf]
        %v4282 = vld [vmem:[#allocation28 + $0x298] sm:$0xf]
        %v4283 = vld [vmem:[#allocation28 + $0x29c] sm:$0xf]
        %v4284 = vld [vmem:[#allocation28 + $0x2a0] sm:$0xf]
        %v4285 = vld [vmem:[#allocation28 + $0x2a4] sm:$0xf]
        %v4286 = vld [vmem:[#allocation28 + $0x2a8] sm:$0xf]
        %v4287 = vld [vmem:[#allocation28 + $0x2ac] sm:$0xf]
        %v4288 = vld [vmem:[#allocation28 + $0x2b0] sm:$0xf]
        %v4289 = vld [vmem:[#allocation28 + $0x2b4] sm:$0xf]
        %v4290 = vld [vmem:[#allocation28 + $0x2b8] sm:$0xf]
        %v4291 = vld [vmem:[#allocation28 + $0x2bc] sm:$0xf]
        %v4292 = vld [vmem:[#allocation28 + $0x2c0] sm:$0xf]
        %v4293 = vld [vmem:[#allocation28 + $0x2c4] sm:$0xf]
        %v4294 = vld [vmem:[#allocation28 + $0x2c8] sm:$0xf]
        %v4295 = vld [vmem:[#allocation28 + $0x2cc] sm:$0xf]
        %v4296 = vld [vmem:[#allocation28 + $0x2d0] sm:$0xf]
        %v4297 = vld [vmem:[#allocation28 + $0x2d4] sm:$0xf]
        %v4298 = vld [vmem:[#allocation28 + $0x2d8] sm:$0xf]
        %v4299 = vld [vmem:[#allocation28 + $0x2dc] sm:$0xf]
        %v4300 = vld [vmem:[#allocation28 + $0x2e0] sm:$0xf]
        %v4301 = vld [vmem:[#allocation28 + $0x2e4] sm:$0xf]
        %v4302 = vld [vmem:[#allocation28 + $0x2e8] sm:$0xf]
        %v4303 = vld [vmem:[#allocation28 + $0x2ec] sm:$0xf]
        %v4304 = vld [vmem:[#allocation28 + $0x2f0] sm:$0xf]
        %v4305 = vld [vmem:[#allocation28 + $0x2f4] sm:$0xf]
        %v4306 = vld [vmem:[#allocation28 + $0x2f8] sm:$0xf]
        %v4307 = vld [vmem:[#allocation28 + $0x2fc] sm:$0xf]
        %v4308 = vld [vmem:[#allocation28 + $0x300] sm:$0xf]
        %v4309 = vld [vmem:[#allocation28 + $0x304] sm:$0xf]
        %v4310 = vld [vmem:[#allocation28 + $0x308] sm:$0xf]
        %v4311 = vld [vmem:[#allocation28 + $0x30c] sm:$0xf]
        %v4312 = vld [vmem:[#allocation28 + $0x310] sm:$0xf]
        %v4313 = vld [vmem:[#allocation28 + $0x314] sm:$0xf]
        %v4314 = vld [vmem:[#allocation28 + $0x318] sm:$0xf]
        %v4315 = vld [vmem:[#allocation28 + $0x31c] sm:$0xf]
        %v4316 = vld [vmem:[#allocation28 + $0x320] sm:$0xf]
        %v4317 = vld [vmem:[#allocation28 + $0x324] sm:$0xf]
        %v4318 = vld [vmem:[#allocation28 + $0x328] sm:$0xf]
        %v4319 = vld [vmem:[#allocation28 + $0x32c] sm:$0xf]
        %v4320 = vld [vmem:[#allocation28 + $0x330] sm:$0xf]
        %v4321 = vld [vmem:[#allocation28 + $0x334] sm:$0xf]
        %v4322 = vld [vmem:[#allocation28 + $0x338] sm:$0xf]
        %v4323 = vld [vmem:[#allocation28 + $0x33c] sm:$0xf]
        %v4324 = vld [vmem:[#allocation28 + $0x340] sm:$0xf]
        %v4325 = vld [vmem:[#allocation28 + $0x344] sm:$0xf]
        %v4326 = vld [vmem:[#allocation28 + $0x348] sm:$0xf]
        %v4327 = vld [vmem:[#allocation28 + $0x34c] sm:$0xf]
        %v4328 = vld [vmem:[#allocation28 + $0x350] sm:$0xf]
        %v4329 = vld [vmem:[#allocation28 + $0x354] sm:$0xf]
        %v4330 = vld [vmem:[#allocation28 + $0x358] sm:$0xf]
        %v4331 = vld [vmem:[#allocation28 + $0x35c] sm:$0xf]
        %v4332 = vld [vmem:[#allocation28 + $0x360] sm:$0xf]
        %v4333 = vld [vmem:[#allocation28 + $0x364] sm:$0xf]
        %v4334 = vld [vmem:[#allocation28 + $0x368] sm:$0xf]
        %v4335 = vld [vmem:[#allocation28 + $0x36c] sm:$0xf]
        %v4336 = vld [vmem:[#allocation28 + $0x370] sm:$0xf]
        %v4337 = vld [vmem:[#allocation28 + $0x374] sm:$0xf]
        %v4338 = vld [vmem:[#allocation28 + $0x378] sm:$0xf]
        %v4339 = vld [vmem:[#allocation28 + $0x37c] sm:$0xf]
        %v4340 = vld [vmem:[#allocation28 + $0x380] sm:$0xf]
        %v4341 = vld [vmem:[#allocation28 + $0x384] sm:$0xf]
        %v4342 = vld [vmem:[#allocation28 + $0x388] sm:$0xf]
        %v4343 = vld [vmem:[#allocation28 + $0x38c] sm:$0xf]
        %v4344 = vld [vmem:[#allocation28 + $0x390] sm:$0xf]
        %v4345 = vld [vmem:[#allocation28 + $0x394] sm:$0xf]
        %v4346 = vld [vmem:[#allocation28 + $0x398] sm:$0xf]
        %v4347 = vld [vmem:[#allocation28 + $0x39c] sm:$0xf]
        %v4348 = vld [vmem:[#allocation28 + $0x3a0] sm:$0xf]
        %v4349 = vld [vmem:[#allocation28 + $0x3a4] sm:$0xf]
        %v4350 = vld [vmem:[#allocation28 + $0x3a8] sm:$0xf]
        %v4351 = vld [vmem:[#allocation28 + $0x3ac] sm:$0xf]
        %v4352 = vld [vmem:[#allocation28 + $0x3b0] sm:$0xf]
        %v4353 = vld [vmem:[#allocation28 + $0x3b4] sm:$0xf]
        %v4354 = vld [vmem:[#allocation28 + $0x3b8] sm:$0xf]
        %v4355 = vld [vmem:[#allocation28 + $0x3bc] sm:$0xf]
        %v4356 = vld [vmem:[#allocation28 + $0x3c0] sm:$0xf]
        %v4357 = vld [vmem:[#allocation28 + $0x3c4] sm:$0xf]
        %v4358 = vld [vmem:[#allocation28 + $0x3c8] sm:$0xf]
        %v4359 = vld [vmem:[#allocation28 + $0x3cc] sm:$0xf]
        %v4360 = vld [vmem:[#allocation28 + $0x3d0] sm:$0xf]
        %v4361 = vld [vmem:[#allocation28 + $0x3d4] sm:$0xf]
        %v4362 = vld [vmem:[#allocation28 + $0x3d8] sm:$0xf]
        %v4363 = vld [vmem:[#allocation28 + $0x3dc] sm:$0xf]
        %v4364 = vld [vmem:[#allocation28 + $0x3e0] sm:$0xf]
        %v4365 = vld [vmem:[#allocation28 + $0x3e4] sm:$0xf]
        %v4366 = vld [vmem:[#allocation28 + $0x3e8] sm:$0xf]
        %v4367 = vld [vmem:[#allocation28 + $0x3ec] sm:$0xf]
        %v4368 = vld [vmem:[#allocation28 + $0x3f0] sm:$0xf]
        %v4369 = vld [vmem:[#allocation28 + $0x3f4] sm:$0xf]
        %v4370 = vld [vmem:[#allocation28 + $0x3f8] sm:$0xf]
        %v4371 = vld [vmem:[#allocation28 + $0x3fc] sm:$0xf]
        %v4628 = vunpack.c.l.b16 %v4116
        %v4629 = vunpack.c.l.b16 %v4117
        %v4630 = vunpack.c.l.b16 %v4118
        %v4631 = vunpack.c.l.b16 %v4119
        %v4632 = vunpack.c.l.b16 %v4120
        %v4633 = vunpack.c.l.b16 %v4121
        %v4634 = vunpack.c.l.b16 %v4122
        %v4635 = vunpack.c.l.b16 %v4123
        %v4636 = vunpack.c.l.b16 %v4124
        %v4637 = vunpack.c.l.b16 %v4125
        %v4638 = vunpack.c.l.b16 %v4126
        %v4639 = vunpack.c.l.b16 %v4127
        %v4640 = vunpack.c.l.b16 %v4128
        %v4641 = vunpack.c.l.b16 %v4129
        %v4642 = vunpack.c.l.b16 %v4130
        %v4643 = vunpack.c.l.b16 %v4131
        %v4644 = vunpack.c.l.b16 %v4132
        %v4645 = vunpack.c.l.b16 %v4133
        %v4646 = vunpack.c.l.b16 %v4134
        %v4647 = vunpack.c.l.b16 %v4135
        %v4648 = vunpack.c.l.b16 %v4136
        %v4649 = vunpack.c.l.b16 %v4137
        %v4650 = vunpack.c.l.b16 %v4138
        %v4651 = vunpack.c.l.b16 %v4139
        %v4652 = vunpack.c.l.b16 %v4140
        %v4653 = vunpack.c.l.b16 %v4141
        %v4654 = vunpack.c.l.b16 %v4142
        %v4655 = vunpack.c.l.b16 %v4143
        %v4656 = vunpack.c.l.b16 %v4144
        %v4657 = vunpack.c.l.b16 %v4145
        %v4658 = vunpack.c.l.b16 %v4146
        %v4659 = vunpack.c.l.b16 %v4147
        %v4660 = vunpack.c.l.b16 %v4148
        %v4661 = vunpack.c.l.b16 %v4149
        %v4662 = vunpack.c.l.b16 %v4150
        %v4663 = vunpack.c.l.b16 %v4151
        %v4664 = vunpack.c.l.b16 %v4152
        %v4665 = vunpack.c.l.b16 %v4153
        %v4666 = vunpack.c.l.b16 %v4154
        %v4667 = vunpack.c.l.b16 %v4155
        %v4668 = vunpack.c.l.b16 %v4156
        %v4669 = vunpack.c.l.b16 %v4157
        %v4670 = vunpack.c.l.b16 %v4158
        %v4671 = vunpack.c.l.b16 %v4159
        %v4672 = vunpack.c.l.b16 %v4160
        %v4673 = vunpack.c.l.b16 %v4161
        %v4674 = vunpack.c.l.b16 %v4162
        %v4675 = vunpack.c.l.b16 %v4163
        %v4676 = vunpack.c.l.b16 %v4164
        %v4677 = vunpack.c.l.b16 %v4165
        %v4678 = vunpack.c.l.b16 %v4166
        %v4679 = vunpack.c.l.b16 %v4167
        %v4680 = vunpack.c.l.b16 %v4168
        %v4681 = vunpack.c.l.b16 %v4169
        %v4682 = vunpack.c.l.b16 %v4170
        %v4683 = vunpack.c.l.b16 %v4171
        %v4684 = vunpack.c.l.b16 %v4172
        %v4685 = vunpack.c.l.b16 %v4173
        %v4686 = vunpack.c.l.b16 %v4174
        %v4687 = vunpack.c.l.b16 %v4175
        %v4688 = vunpack.c.l.b16 %v4176
        %v4689 = vunpack.c.l.b16 %v4177
        %v4690 = vunpack.c.l.b16 %v4178
        %v4691 = vunpack.c.l.b16 %v4179
        %v4692 = vunpack.c.l.b16 %v4180
        %v4693 = vunpack.c.l.b16 %v4181
        %v4694 = vunpack.c.l.b16 %v4182
        %v4695 = vunpack.c.l.b16 %v4183
        %v4696 = vunpack.c.l.b16 %v4184
        %v4697 = vunpack.c.l.b16 %v4185
        %v4698 = vunpack.c.l.b16 %v4186
        %v4699 = vunpack.c.l.b16 %v4187
        %v4700 = vunpack.c.l.b16 %v4188
        %v4701 = vunpack.c.l.b16 %v4189
        %v4702 = vunpack.c.l.b16 %v4190
        %v4703 = vunpack.c.l.b16 %v4191
        %v4704 = vunpack.c.l.b16 %v4192
        %v4705 = vunpack.c.l.b16 %v4193
        %v4706 = vunpack.c.l.b16 %v4194
        %v4707 = vunpack.c.l.b16 %v4195
        %v4708 = vunpack.c.l.b16 %v4196
        %v4709 = vunpack.c.l.b16 %v4197
        %v4710 = vunpack.c.l.b16 %v4198
        %v4711 = vunpack.c.l.b16 %v4199
        %v4712 = vunpack.c.l.b16 %v4200
        %v4713 = vunpack.c.l.b16 %v4201
        %v4714 = vunpack.c.l.b16 %v4202
        %v4715 = vunpack.c.l.b16 %v4203
        %v4716 = vunpack.c.l.b16 %v4204
        %v4717 = vunpack.c.l.b16 %v4205
        %v4718 = vunpack.c.l.b16 %v4206
        %v4719 = vunpack.c.l.b16 %v4207
        %v4720 = vunpack.c.l.b16 %v4208
        %v4721 = vunpack.c.l.b16 %v4209
        %v4722 = vunpack.c.l.b16 %v4210
        %v4723 = vunpack.c.l.b16 %v4211
        %v4724 = vunpack.c.l.b16 %v4212
        %v4725 = vunpack.c.l.b16 %v4213
        %v4726 = vunpack.c.l.b16 %v4214
        %v4727 = vunpack.c.l.b16 %v4215
        %v4728 = vunpack.c.l.b16 %v4216
        %v4729 = vunpack.c.l.b16 %v4217
        %v4730 = vunpack.c.l.b16 %v4218
        %v4731 = vunpack.c.l.b16 %v4219
        %v4732 = vunpack.c.l.b16 %v4220
        %v4733 = vunpack.c.l.b16 %v4221
        %v4734 = vunpack.c.l.b16 %v4222
        %v4735 = vunpack.c.l.b16 %v4223
        %v4736 = vunpack.c.l.b16 %v4224
        %v4737 = vunpack.c.l.b16 %v4225
        %v4738 = vunpack.c.l.b16 %v4226
        %v4739 = vunpack.c.l.b16 %v4227
        %v4740 = vunpack.c.l.b16 %v4228
        %v4741 = vunpack.c.l.b16 %v4229
        %v4742 = vunpack.c.l.b16 %v4230
        %v4743 = vunpack.c.l.b16 %v4231
        %v4744 = vunpack.c.l.b16 %v4232
        %v4745 = vunpack.c.l.b16 %v4233
        %v4746 = vunpack.c.l.b16 %v4234
        %v4747 = vunpack.c.l.b16 %v4235
        %v4748 = vunpack.c.l.b16 %v4236
        %v4749 = vunpack.c.l.b16 %v4237
        %v4750 = vunpack.c.l.b16 %v4238
        %v4751 = vunpack.c.l.b16 %v4239
        %v4752 = vunpack.c.l.b16 %v4240
        %v4753 = vunpack.c.l.b16 %v4241
        %v4754 = vunpack.c.l.b16 %v4242
        %v4755 = vunpack.c.l.b16 %v4243
        %v4756 = vunpack.c.l.b16 %v4244
        %v4757 = vunpack.c.l.b16 %v4245
        %v4758 = vunpack.c.l.b16 %v4246
        %v4759 = vunpack.c.l.b16 %v4247
        %v4760 = vunpack.c.l.b16 %v4248
        %v4761 = vunpack.c.l.b16 %v4249
        %v4762 = vunpack.c.l.b16 %v4250
        %v4763 = vunpack.c.l.b16 %v4251
        %v4764 = vunpack.c.l.b16 %v4252
        %v4765 = vunpack.c.l.b16 %v4253
        %v4766 = vunpack.c.l.b16 %v4254
        %v4767 = vunpack.c.l.b16 %v4255
        %v4768 = vunpack.c.l.b16 %v4256
        %v4769 = vunpack.c.l.b16 %v4257
        %v4770 = vunpack.c.l.b16 %v4258
        %v4771 = vunpack.c.l.b16 %v4259
        %v4772 = vunpack.c.l.b16 %v4260
        %v4773 = vunpack.c.l.b16 %v4261
        %v4774 = vunpack.c.l.b16 %v4262
        %v4775 = vunpack.c.l.b16 %v4263
        %v4776 = vunpack.c.l.b16 %v4264
        %v4777 = vunpack.c.l.b16 %v4265
        %v4778 = vunpack.c.l.b16 %v4266
        %v4779 = vunpack.c.l.b16 %v4267
        %v4780 = vunpack.c.l.b16 %v4268
        %v4781 = vunpack.c.l.b16 %v4269
        %v4782 = vunpack.c.l.b16 %v4270
        %v4783 = vunpack.c.l.b16 %v4271
        %v4784 = vunpack.c.l.b16 %v4272
        %v4785 = vunpack.c.l.b16 %v4273
        %v4786 = vunpack.c.l.b16 %v4274
        %v4787 = vunpack.c.l.b16 %v4275
        %v4788 = vunpack.c.l.b16 %v4276
        %v4789 = vunpack.c.l.b16 %v4277
        %v4790 = vunpack.c.l.b16 %v4278
        %v4791 = vunpack.c.l.b16 %v4279
        %v4792 = vunpack.c.l.b16 %v4280
        %v4793 = vunpack.c.l.b16 %v4281
        %v4794 = vunpack.c.l.b16 %v4282
        %v4795 = vunpack.c.l.b16 %v4283
        %v4796 = vunpack.c.l.b16 %v4284
        %v4797 = vunpack.c.l.b16 %v4285
        %v4798 = vunpack.c.l.b16 %v4286
        %v4799 = vunpack.c.l.b16 %v4287
        %v4800 = vunpack.c.l.b16 %v4288
        %v4801 = vunpack.c.l.b16 %v4289
        %v4802 = vunpack.c.l.b16 %v4290
        %v4803 = vunpack.c.l.b16 %v4291
        %v4804 = vunpack.c.l.b16 %v4292
        %v4805 = vunpack.c.l.b16 %v4293
        %v4806 = vunpack.c.l.b16 %v4294
        %v4807 = vunpack.c.l.b16 %v4295
        %v4808 = vunpack.c.l.b16 %v4296
        %v4809 = vunpack.c.l.b16 %v4297
        %v4810 = vunpack.c.l.b16 %v4298
        %v4811 = vunpack.c.l.b16 %v4299
        %v4812 = vunpack.c.l.b16 %v4300
        %v4813 = vunpack.c.l.b16 %v4301
        %v4814 = vunpack.c.l.b16 %v4302
        %v4815 = vunpack.c.l.b16 %v4303
        %v4816 = vunpack.c.l.b16 %v4304
        %v4817 = vunpack.c.l.b16 %v4305
        %v4818 = vunpack.c.l.b16 %v4306
        %v4819 = vunpack.c.l.b16 %v4307
        %v4820 = vunpack.c.l.b16 %v4308
        %v4821 = vunpack.c.l.b16 %v4309
        %v4822 = vunpack.c.l.b16 %v4310
        %v4823 = vunpack.c.l.b16 %v4311
        %v4824 = vunpack.c.l.b16 %v4312
        %v4825 = vunpack.c.l.b16 %v4313
        %v4826 = vunpack.c.l.b16 %v4314
        %v4827 = vunpack.c.l.b16 %v4315
        %v4828 = vunpack.c.l.b16 %v4316
        %v4829 = vunpack.c.l.b16 %v4317
        %v4830 = vunpack.c.l.b16 %v4318
        %v4831 = vunpack.c.l.b16 %v4319
        %v4832 = vunpack.c.l.b16 %v4320
        %v4833 = vunpack.c.l.b16 %v4321
        %v4834 = vunpack.c.l.b16 %v4322
        %v4835 = vunpack.c.l.b16 %v4323
        %v4836 = vunpack.c.l.b16 %v4324
        %v4837 = vunpack.c.l.b16 %v4325
        %v4838 = vunpack.c.l.b16 %v4326
        %v4839 = vunpack.c.l.b16 %v4327
        %v4840 = vunpack.c.l.b16 %v4328
        %v4841 = vunpack.c.l.b16 %v4329
        %v4842 = vunpack.c.l.b16 %v4330
        %v4843 = vunpack.c.l.b16 %v4331
        %v4844 = vunpack.c.l.b16 %v4332
        %v4845 = vunpack.c.l.b16 %v4333
        %v4846 = vunpack.c.l.b16 %v4334
        %v4847 = vunpack.c.l.b16 %v4335
        %v4848 = vunpack.c.l.b16 %v4336
        %v4849 = vunpack.c.l.b16 %v4337
        %v4850 = vunpack.c.l.b16 %v4338
        %v4851 = vunpack.c.l.b16 %v4339
        %v4852 = vunpack.c.l.b16 %v4340
        %v4853 = vunpack.c.l.b16 %v4341
        %v4854 = vunpack.c.l.b16 %v4342
        %v4855 = vunpack.c.l.b16 %v4343
        %v4856 = vunpack.c.l.b16 %v4344
        %v4857 = vunpack.c.l.b16 %v4345
        %v4858 = vunpack.c.l.b16 %v4346
        %v4859 = vunpack.c.l.b16 %v4347
        %v4860 = vunpack.c.l.b16 %v4348
        %v4861 = vunpack.c.l.b16 %v4349
        %v4862 = vunpack.c.l.b16 %v4350
        %v4863 = vunpack.c.l.b16 %v4351
        %v4864 = vunpack.c.l.b16 %v4352
        %v4865 = vunpack.c.l.b16 %v4353
        %v4866 = vunpack.c.l.b16 %v4354
        %v4867 = vunpack.c.l.b16 %v4355
        %v4868 = vunpack.c.l.b16 %v4356
        %v4869 = vunpack.c.l.b16 %v4357
        %v4870 = vunpack.c.l.b16 %v4358
        %v4871 = vunpack.c.l.b16 %v4359
        %v4872 = vunpack.c.l.b16 %v4360
        %v4873 = vunpack.c.l.b16 %v4361
        %v4874 = vunpack.c.l.b16 %v4362
        %v4875 = vunpack.c.l.b16 %v4363
        %v4876 = vunpack.c.l.b16 %v4364
        %v4877 = vunpack.c.l.b16 %v4365
        %v4878 = vunpack.c.l.b16 %v4366
        %v4879 = vunpack.c.l.b16 %v4367
        %v4880 = vunpack.c.l.b16 %v4368
        %v4881 = vunpack.c.l.b16 %v4369
        %v4882 = vunpack.c.l.b16 %v4370
        %v4883 = vunpack.c.l.b16 %v4371
        %v4884 = vpack.c.b16 %v4629, %v4628
        %v4885 = vpack.c.b16 %v4631, %v4630
        %v4886 = vpack.c.b16 %v4633, %v4632
        %v4887 = vpack.c.b16 %v4635, %v4634
        %v4888 = vpack.c.b16 %v4637, %v4636
        %v4889 = vpack.c.b16 %v4639, %v4638
        %v4890 = vpack.c.b16 %v4641, %v4640
        %v4891 = vpack.c.b16 %v4643, %v4642
        %v4892 = vpack.c.b16 %v4645, %v4644
        %v4893 = vpack.c.b16 %v4647, %v4646
        %v4894 = vpack.c.b16 %v4649, %v4648
        %v4895 = vpack.c.b16 %v4651, %v4650
        %v4896 = vpack.c.b16 %v4653, %v4652
        %v4897 = vpack.c.b16 %v4655, %v4654
        %v4898 = vpack.c.b16 %v4657, %v4656
        %v4899 = vpack.c.b16 %v4659, %v4658
        %v4900 = vpack.c.b16 %v4661, %v4660
        %v4901 = vpack.c.b16 %v4663, %v4662
        %v4902 = vpack.c.b16 %v4665, %v4664
        %v4903 = vpack.c.b16 %v4667, %v4666
        %v4904 = vpack.c.b16 %v4669, %v4668
        %v4905 = vpack.c.b16 %v4671, %v4670
        %v4906 = vpack.c.b16 %v4673, %v4672
        %v4907 = vpack.c.b16 %v4675, %v4674
        %v4908 = vpack.c.b16 %v4677, %v4676
        %v4909 = vpack.c.b16 %v4679, %v4678
        %v4910 = vpack.c.b16 %v4681, %v4680
        %v4911 = vpack.c.b16 %v4683, %v4682
        %v4912 = vpack.c.b16 %v4685, %v4684
        %v4913 = vpack.c.b16 %v4687, %v4686
        %v4914 = vpack.c.b16 %v4689, %v4688
        %v4915 = vpack.c.b16 %v4691, %v4690
        %v4916 = vpack.c.b16 %v4693, %v4692
        %v4917 = vpack.c.b16 %v4695, %v4694
        %v4918 = vpack.c.b16 %v4697, %v4696
        %v4919 = vpack.c.b16 %v4699, %v4698
        %v4920 = vpack.c.b16 %v4701, %v4700
        %v4921 = vpack.c.b16 %v4703, %v4702
        %v4922 = vpack.c.b16 %v4705, %v4704
        %v4923 = vpack.c.b16 %v4707, %v4706
        %v4924 = vpack.c.b16 %v4709, %v4708
        %v4925 = vpack.c.b16 %v4711, %v4710
        %v4926 = vpack.c.b16 %v4713, %v4712
        %v4927 = vpack.c.b16 %v4715, %v4714
        %v4928 = vpack.c.b16 %v4717, %v4716
        %v4929 = vpack.c.b16 %v4719, %v4718
        %v4930 = vpack.c.b16 %v4721, %v4720
        %v4931 = vpack.c.b16 %v4723, %v4722
        %v4932 = vpack.c.b16 %v4725, %v4724
        %v4933 = vpack.c.b16 %v4727, %v4726
        %v4934 = vpack.c.b16 %v4729, %v4728
        %v4935 = vpack.c.b16 %v4731, %v4730
        %v4936 = vpack.c.b16 %v4733, %v4732
        %v4937 = vpack.c.b16 %v4735, %v4734
        %v4938 = vpack.c.b16 %v4737, %v4736
        %v4939 = vpack.c.b16 %v4739, %v4738
        %v4940 = vpack.c.b16 %v4741, %v4740
        %v4941 = vpack.c.b16 %v4743, %v4742
        %v4942 = vpack.c.b16 %v4745, %v4744
        %v4943 = vpack.c.b16 %v4747, %v4746
        %v4944 = vpack.c.b16 %v4749, %v4748
        %v4945 = vpack.c.b16 %v4751, %v4750
        %v4946 = vpack.c.b16 %v4753, %v4752
        %v4947 = vpack.c.b16 %v4755, %v4754
        %v4948 = vpack.c.b16 %v4757, %v4756
        %v4949 = vpack.c.b16 %v4759, %v4758
        %v4950 = vpack.c.b16 %v4761, %v4760
        %v4951 = vpack.c.b16 %v4763, %v4762
        %v4952 = vpack.c.b16 %v4765, %v4764
        %v4953 = vpack.c.b16 %v4767, %v4766
        %v4954 = vpack.c.b16 %v4769, %v4768
        %v4955 = vpack.c.b16 %v4771, %v4770
        %v4956 = vpack.c.b16 %v4773, %v4772
        %v4957 = vpack.c.b16 %v4775, %v4774
        %v4958 = vpack.c.b16 %v4777, %v4776
        %v4959 = vpack.c.b16 %v4779, %v4778
        %v4960 = vpack.c.b16 %v4781, %v4780
        %v4961 = vpack.c.b16 %v4783, %v4782
        %v4962 = vpack.c.b16 %v4785, %v4784
        %v4963 = vpack.c.b16 %v4787, %v4786
        %v4964 = vpack.c.b16 %v4789, %v4788
        %v4965 = vpack.c.b16 %v4791, %v4790
        %v4966 = vpack.c.b16 %v4793, %v4792
        %v4967 = vpack.c.b16 %v4795, %v4794
        %v4968 = vpack.c.b16 %v4797, %v4796
        %v4969 = vpack.c.b16 %v4799, %v4798
        %v4970 = vpack.c.b16 %v4801, %v4800
        %v4971 = vpack.c.b16 %v4803, %v4802
        %v4972 = vpack.c.b16 %v4805, %v4804
        %v4973 = vpack.c.b16 %v4807, %v4806
        %v4974 = vpack.c.b16 %v4809, %v4808
        %v4975 = vpack.c.b16 %v4811, %v4810
        %v4976 = vpack.c.b16 %v4813, %v4812
        %v4977 = vpack.c.b16 %v4815, %v4814
        %v4978 = vpack.c.b16 %v4817, %v4816
        %v4979 = vpack.c.b16 %v4819, %v4818
        %v4980 = vpack.c.b16 %v4821, %v4820
        %v4981 = vpack.c.b16 %v4823, %v4822
        %v4982 = vpack.c.b16 %v4825, %v4824
        %v4983 = vpack.c.b16 %v4827, %v4826
        %v4984 = vpack.c.b16 %v4829, %v4828
        %v4985 = vpack.c.b16 %v4831, %v4830
        %v4986 = vpack.c.b16 %v4833, %v4832
        %v4987 = vpack.c.b16 %v4835, %v4834
        %v4988 = vpack.c.b16 %v4837, %v4836
        %v4989 = vpack.c.b16 %v4839, %v4838
        %v4990 = vpack.c.b16 %v4841, %v4840
        %v4991 = vpack.c.b16 %v4843, %v4842
        %v4992 = vpack.c.b16 %v4845, %v4844
        %v4993 = vpack.c.b16 %v4847, %v4846
        %v4994 = vpack.c.b16 %v4849, %v4848
        %v4995 = vpack.c.b16 %v4851, %v4850
        %v4996 = vpack.c.b16 %v4853, %v4852
        %v4997 = vpack.c.b16 %v4855, %v4854
        %v4998 = vpack.c.b16 %v4857, %v4856
        %v4999 = vpack.c.b16 %v4859, %v4858
        %v5000 = vpack.c.b16 %v4861, %v4860
        %v5001 = vpack.c.b16 %v4863, %v4862
        %v5002 = vpack.c.b16 %v4865, %v4864
        %v5003 = vpack.c.b16 %v4867, %v4866
        %v5004 = vpack.c.b16 %v4869, %v4868
        %v5005 = vpack.c.b16 %v4871, %v4870
        %v5006 = vpack.c.b16 %v4873, %v4872
        %v5007 = vpack.c.b16 %v4875, %v4874
        %v5008 = vpack.c.b16 %v4877, %v4876
        %v5009 = vpack.c.b16 %v4879, %v4878
        %v5010 = vpack.c.b16 %v4881, %v4880
        %v5011 = vpack.c.b16 %v4883, %v4882
        %5140 = vmatprep.subr.bf16.mxu0 0
        %5141 = vmatpush1.bf16.msra.mxu0 %v4884
        %5142 = vmatprep.subr.bf16.mxu0 0
        %5143 = vmatpush1.bf16.msra.mxu0 %v4885
        %5144 = vmatprep.subr.bf16.mxu0 0
        %5145 = vmatpush1.bf16.msra.mxu0 %v4886
        %5146 = vmatprep.subr.bf16.mxu0 0
        %5147 = vmatpush1.bf16.msra.mxu0 %v4887
        %5148 = vmatprep.subr.bf16.mxu0 0
        %5149 = vmatpush1.bf16.msra.mxu0 %v4888
        %5150 = vmatprep.subr.bf16.mxu0 0
        %5151 = vmatpush1.bf16.msra.mxu0 %v4889
        %5152 = vmatprep.subr.bf16.mxu0 0
        %5153 = vmatpush1.bf16.msra.mxu0 %v4890
        %5154 = vmatprep.subr.bf16.mxu0 0
        %5155 = vmatpush1.bf16.msra.mxu0 %v4891
        %5156 = vmatprep.subr.bf16.mxu0 0
        %5157 = vmatpush1.bf16.msra.mxu0 %v4892
        %5158 = vmatprep.subr.bf16.mxu0 0
        %5159 = vmatpush1.bf16.msra.mxu0 %v4893
        %5160 = vmatprep.subr.bf16.mxu0 0
        %5161 = vmatpush1.bf16.msra.mxu0 %v4894
        %5162 = vmatprep.subr.bf16.mxu0 0
        %5163 = vmatpush1.bf16.msra.mxu0 %v4895
        %5164 = vmatprep.subr.bf16.mxu0 0
        %5165 = vmatpush1.bf16.msra.mxu0 %v4896
        %5166 = vmatprep.subr.bf16.mxu0 0
        %5167 = vmatpush1.bf16.msra.mxu0 %v4897
        %5168 = vmatprep.subr.bf16.mxu0 0
        %5169 = vmatpush1.bf16.msra.mxu0 %v4898
        %5170 = vmatprep.subr.bf16.mxu0 0
        %5171 = vmatpush1.bf16.msra.mxu0 %v4899
        %5172 = vmatprep.mubr.bf16.mxu0 %v4101
        %5173 = vmatmul.mubr.bf16.gmra.mrb[0].mxu0 %v4100
        %v5174 = vpop.f32.mrb[0].mxu0
        %v5175 = vadd.f32 0.0, %v5174
        %v5176 = vpop.f32.mrb[0].mxu0
        %v5177 = vpop.f32.mrb[0].mxu0
        %v5178 = vpop.f32.mrb[0].mxu0
        %5179 = vdwg.mxu0
        %5180 = vmatprep.subr.bf16.mxu0 0
        %5181 = vmatpush1.bf16.msra.mxu0 %v4900
        %5182 = vmatprep.subr.bf16.mxu0 0
        %5183 = vmatpush1.bf16.msra.mxu0 %v4901
        %5184 = vmatprep.subr.bf16.mxu0 0
        %5185 = vmatpush1.bf16.msra.mxu0 %v4902
        %5186 = vmatprep.subr.bf16.mxu0 0
        %5187 = vmatpush1.bf16.msra.mxu0 %v4903
        %5188 = vmatprep.subr.bf16.mxu0 0
        %5189 = vmatpush1.bf16.msra.mxu0 %v4904
        %5190 = vmatprep.subr.bf16.mxu0 0
        %5191 = vmatpush1.bf16.msra.mxu0 %v4905
        %5192 = vmatprep.subr.bf16.mxu0 0
        %5193 = vmatpush1.bf16.msra.mxu0 %v4906
        %5194 = vmatprep.subr.bf16.mxu0 0
        %5195 = vmatpush1.bf16.msra.mxu0 %v4907
        %5196 = vmatprep.subr.bf16.mxu0 0
        %5197 = vmatpush1.bf16.msra.mxu0 %v4908
        %5198 = vmatprep.subr.bf16.mxu0 0
        %5199 = vmatpush1.bf16.msra.mxu0 %v4909
        %5200 = vmatprep.subr.bf16.mxu0 0
        %5201 = vmatpush1.bf16.msra.mxu0 %v4910
        %5202 = vmatprep.subr.bf16.mxu0 0
        %5203 = vmatpush1.bf16.msra.mxu0 %v4911
        %5204 = vmatprep.subr.bf16.mxu0 0
        %5205 = vmatpush1.bf16.msra.mxu0 %v4912
        %5206 = vmatprep.subr.bf16.mxu0 0
        %5207 = vmatpush1.bf16.msra.mxu0 %v4913
        %5208 = vmatprep.subr.bf16.mxu0 0
        %5209 = vmatpush1.bf16.msra.mxu0 %v4914
        %5210 = vmatprep.subr.bf16.mxu0 0
        %5211 = vmatpush1.bf16.msra.mxu0 %v4915
        %5212 = vmatprep.mubr.bf16.mxu0 %v4103
        %5213 = vmatmul.mubr.bf16.gmra.mrb[0].mxu0 %v4102
        %v5214 = vpop.f32.mrb[0].mxu0
        %v5215 = vadd.f32 %v5175, %v5214
        %v5216 = vpop.f32.mrb[0].mxu0
        %v5217 = vpop.f32.mrb[0].mxu0
        %v5218 = vpop.f32.mrb[0].mxu0
        %5219 = vdwg.mxu0
        %5220 = vmatprep.subr.bf16.mxu0 0
        %5221 = vmatpush1.bf16.msra.mxu0 %v4916
        %5222 = vmatprep.subr.bf16.mxu0 0
        %5223 = vmatpush1.bf16.msra.mxu0 %v4917
        %5224 = vmatprep.subr.bf16.mxu0 0
        %5225 = vmatpush1.bf16.msra.mxu0 %v4918
        %5226 = vmatprep.subr.bf16.mxu0 0
        %5227 = vmatpush1.bf16.msra.mxu0 %v4919
        %5228 = vmatprep.subr.bf16.mxu0 0
        %5229 = vmatpush1.bf16.msra.mxu0 %v4920
        %5230 = vmatprep.subr.bf16.mxu0 0
        %5231 = vmatpush1.bf16.msra.mxu0 %v4921
        %5232 = vmatprep.subr.bf16.mxu0 0
        %5233 = vmatpush1.bf16.msra.mxu0 %v4922
        %5234 = vmatprep.subr.bf16.mxu0 0
        %5235 = vmatpush1.bf16.msra.mxu0 %v4923
        %5236 = vmatprep.subr.bf16.mxu0 0
        %5237 = vmatpush1.bf16.msra.mxu0 %v4924
        %5238 = vmatprep.subr.bf16.mxu0 0
        %5239 = vmatpush1.bf16.msra.mxu0 %v4925
        %5240 = vmatprep.subr.bf16.mxu0 0
        %5241 = vmatpush1.bf16.msra.mxu0 %v4926
        %5242 = vmatprep.subr.bf16.mxu0 0
        %5243 = vmatpush1.bf16.msra.mxu0 %v4927
        %5244 = vmatprep.subr.bf16.mxu0 0
        %5245 = vmatpush1.bf16.msra.mxu0 %v4928
        %5246 = vmatprep.subr.bf16.mxu0 0
        %5247 = vmatpush1.bf16.msra.mxu0 %v4929
        %5248 = vmatprep.subr.bf16.mxu0 0
        %5249 = vmatpush1.bf16.msra.mxu0 %v4930
        %5250 = vmatprep.subr.bf16.mxu0 0
        %5251 = vmatpush1.bf16.msra.mxu0 %v4931
        %5252 = vmatprep.mubr.bf16.mxu0 %v4105
        %5253 = vmatmul.mubr.bf16.gmra.mrb[0].mxu0 %v4104
        %v5254 = vpop.f32.mrb[0].mxu0
        %v5255 = vadd.f32 %v5215, %v5254
        %v5256 = vpop.f32.mrb[0].mxu0
        %v5257 = vpop.f32.mrb[0].mxu0
        %v5258 = vpop.f32.mrb[0].mxu0
        %5259 = vdwg.mxu0
        %5260 = vmatprep.subr.bf16.mxu0 0
        %5261 = vmatpush1.bf16.msra.mxu0 %v4932
        %5262 = vmatprep.subr.bf16.mxu0 0
        %5263 = vmatpush1.bf16.msra.mxu0 %v4933
        %5264 = vmatprep.subr.bf16.mxu0 0
        %5265 = vmatpush1.bf16.msra.mxu0 %v4934
        %5266 = vmatprep.subr.bf16.mxu0 0
        %5267 = vmatpush1.bf16.msra.mxu0 %v4935
        %5268 = vmatprep.subr.bf16.mxu0 0
        %5269 = vmatpush1.bf16.msra.mxu0 %v4936
        %5270 = vmatprep.subr.bf16.mxu0 0
        %5271 = vmatpush1.bf16.msra.mxu0 %v4937
        %5272 = vmatprep.subr.bf16.mxu0 0
        %5273 = vmatpush1.bf16.msra.mxu0 %v4938
        %5274 = vmatprep.subr.bf16.mxu0 0
        %5275 = vmatpush1.bf16.msra.mxu0 %v4939
        %5276 = vmatprep.subr.bf16.mxu0 0
        %5277 = vmatpush1.bf16.msra.mxu0 %v4940
        %5278 = vmatprep.subr.bf16.mxu0 0
        %5279 = vmatpush1.bf16.msra.mxu0 %v4941
        %5280 = vmatprep.subr.bf16.mxu0 0
        %5281 = vmatpush1.bf16.msra.mxu0 %v4942
        %5282 = vmatprep.subr.bf16.mxu0 0
        %5283 = vmatpush1.bf16.msra.mxu0 %v4943
        %5284 = vmatprep.subr.bf16.mxu0 0
        %5285 = vmatpush1.bf16.msra.mxu0 %v4944
        %5286 = vmatprep.subr.bf16.mxu0 0
        %5287 = vmatpush1.bf16.msra.mxu0 %v4945
        %5288 = vmatprep.subr.bf16.mxu0 0
        %5289 = vmatpush1.bf16.msra.mxu0 %v4946
        %5290 = vmatprep.subr.bf16.mxu0 0
        %5291 = vmatpush1.bf16.msra.mxu0 %v4947
        %5292 = vmatprep.mubr.bf16.mxu0 %v4107
        %5293 = vmatmul.mubr.bf16.gmra.mrb[0].mxu0 %v4106
        %v5294 = vpop.f32.mrb[0].mxu0
        %v5295 = vadd.f32 %v5255, %v5294
        %v5296 = vpop.f32.mrb[0].mxu0
        %v5297 = vpop.f32.mrb[0].mxu0
        %v5298 = vpop.f32.mrb[0].mxu0
        %5299 = vdwg.mxu0
        %5300 = vmatprep.subr.bf16.mxu0 0
        %5301 = vmatpush1.bf16.msra.mxu0 %v4948
        %5302 = vmatprep.subr.bf16.mxu0 0
        %5303 = vmatpush1.bf16.msra.mxu0 %v4949
        %5304 = vmatprep.subr.bf16.mxu0 0
        %5305 = vmatpush1.bf16.msra.mxu0 %v4950
        %5306 = vmatprep.subr.bf16.mxu0 0
        %5307 = vmatpush1.bf16.msra.mxu0 %v4951
        %5308 = vmatprep.subr.bf16.mxu0 0
        %5309 = vmatpush1.bf16.msra.mxu0 %v4952
        %5310 = vmatprep.subr.bf16.mxu0 0
        %5311 = vmatpush1.bf16.msra.mxu0 %v4953
        %5312 = vmatprep.subr.bf16.mxu0 0
        %5313 = vmatpush1.bf16.msra.mxu0 %v4954
        %5314 = vmatprep.subr.bf16.mxu0 0
        %5315 = vmatpush1.bf16.msra.mxu0 %v4955
        %5316 = vmatprep.subr.bf16.mxu0 0
        %5317 = vmatpush1.bf16.msra.mxu0 %v4956
        %5318 = vmatprep.subr.bf16.mxu0 0
        %5319 = vmatpush1.bf16.msra.mxu0 %v4957
        %5320 = vmatprep.subr.bf16.mxu0 0
        %5321 = vmatpush1.bf16.msra.mxu0 %v4958
        %5322 = vmatprep.subr.bf16.mxu0 0
        %5323 = vmatpush1.bf16.msra.mxu0 %v4959
        %5324 = vmatprep.subr.bf16.mxu0 0
        %5325 = vmatpush1.bf16.msra.mxu0 %v4960
        %5326 = vmatprep.subr.bf16.mxu0 0
        %5327 = vmatpush1.bf16.msra.mxu0 %v4961
        %5328 = vmatprep.subr.bf16.mxu0 0
        %5329 = vmatpush1.bf16.msra.mxu0 %v4962
        %5330 = vmatprep.subr.bf16.mxu0 0
        %5331 = vmatpush1.bf16.msra.mxu0 %v4963
        %5332 = vmatprep.mubr.bf16.mxu0 %v4109
        %5333 = vmatmul.mubr.bf16.gmra.mrb[0].mxu0 %v4108
        %v5334 = vpop.f32.mrb[0].mxu0
        %v5335 = vadd.f32 %v5295, %v5334
        %v5336 = vpop.f32.mrb[0].mxu0
        %v5337 = vpop.f32.mrb[0].mxu0
        %v5338 = vpop.f32.mrb[0].mxu0
        %5339 = vdwg.mxu0
        %5340 = vmatprep.subr.bf16.mxu0 0
        %5341 = vmatpush1.bf16.msra.mxu0 %v4964
        %5342 = vmatprep.subr.bf16.mxu0 0
        %5343 = vmatpush1.bf16.msra.mxu0 %v4965
        %5344 = vmatprep.subr.bf16.mxu0 0
        %5345 = vmatpush1.bf16.msra.mxu0 %v4966
        %5346 = vmatprep.subr.bf16.mxu0 0
        %5347 = vmatpush1.bf16.msra.mxu0 %v4967
        %5348 = vmatprep.subr.bf16.mxu0 0
        %5349 = vmatpush1.bf16.msra.mxu0 %v4968
        %5350 = vmatprep.subr.bf16.mxu0 0
        %5351 = vmatpush1.bf16.msra.mxu0 %v4969
        %5352 = vmatprep.subr.bf16.mxu0 0
        %5353 = vmatpush1.bf16.msra.mxu0 %v4970
        %5354 = vmatprep.subr.bf16.mxu0 0
        %5355 = vmatpush1.bf16.msra.mxu0 %v4971
        %5356 = vmatprep.subr.bf16.mxu0 0
        %5357 = vmatpush1.bf16.msra.mxu0 %v4972
        %5358 = vmatprep.subr.bf16.mxu0 0
        %5359 = vmatpush1.bf16.msra.mxu0 %v4973
        %5360 = vmatprep.subr.bf16.mxu0 0
        %5361 = vmatpush1.bf16.msra.mxu0 %v4974
        %5362 = vmatprep.subr.bf16.mxu0 0
        %5363 = vmatpush1.bf16.msra.mxu0 %v4975
        %5364 = vmatprep.subr.bf16.mxu0 0
        %5365 = vmatpush1.bf16.msra.mxu0 %v4976
        %5366 = vmatprep.subr.bf16.mxu0 0
        %5367 = vmatpush1.bf16.msra.mxu0 %v4977
        %5368 = vmatprep.subr.bf16.mxu0 0
        %5369 = vmatpush1.bf16.msra.mxu0 %v4978
        %5370 = vmatprep.subr.bf16.mxu0 0
        %5371 = vmatpush1.bf16.msra.mxu0 %v4979
        %5372 = vmatprep.mubr.bf16.mxu0 %v4111
        %5373 = vmatmul.mubr.bf16.gmra.mrb[0].mxu0 %v4110
        %v5374 = vpop.f32.mrb[0].mxu0
        %v5375 = vadd.f32 %v5335, %v5374
        %v5376 = vpop.f32.mrb[0].mxu0
        %v5377 = vpop.f32.mrb[0].mxu0
        %v5378 = vpop.f32.mrb[0].mxu0
        %5379 = vdwg.mxu0
        %5380 = vmatprep.subr.bf16.mxu0 0
        %5381 = vmatpush1.bf16.msra.mxu0 %v4980
        %5382 = vmatprep.subr.bf16.mxu0 0
        %5383 = vmatpush1.bf16.msra.mxu0 %v4981
        %5384 = vmatprep.subr.bf16.mxu0 0
        %5385 = vmatpush1.bf16.msra.mxu0 %v4982
        %5386 = vmatprep.subr.bf16.mxu0 0
        %5387 = vmatpush1.bf16.msra.mxu0 %v4983
        %5388 = vmatprep.subr.bf16.mxu0 0
        %5389 = vmatpush1.bf16.msra.mxu0 %v4984
        %5390 = vmatprep.subr.bf16.mxu0 0
        %5391 = vmatpush1.bf16.msra.mxu0 %v4985
        %5392 = vmatprep.subr.bf16.mxu0 0
        %5393 = vmatpush1.bf16.msra.mxu0 %v4986
        %5394 = vmatprep.subr.bf16.mxu0 0
        %5395 = vmatpush1.bf16.msra.mxu0 %v4987
        %5396 = vmatprep.subr.bf16.mxu0 0
        %5397 = vmatpush1.bf16.msra.mxu0 %v4988
        %5398 = vmatprep.subr.bf16.mxu0 0
        %5399 = vmatpush1.bf16.msra.mxu0 %v4989
        %5400 = vmatprep.subr.bf16.mxu0 0
        %5401 = vmatpush1.bf16.msra.mxu0 %v4990
        %5402 = vmatprep.subr.bf16.mxu0 0
        %5403 = vmatpush1.bf16.msra.mxu0 %v4991
        %5404 = vmatprep.subr.bf16.mxu0 0
        %5405 = vmatpush1.bf16.msra.mxu0 %v4992
        %5406 = vmatprep.subr.bf16.mxu0 0
        %5407 = vmatpush1.bf16.msra.mxu0 %v4993
        %5408 = vmatprep.subr.bf16.mxu0 0
        %5409 = vmatpush1.bf16.msra.mxu0 %v4994
        %5410 = vmatprep.subr.bf16.mxu0 0
        %5411 = vmatpush1.bf16.msra.mxu0 %v4995
        %5412 = vmatprep.mubr.bf16.mxu0 %v4113
        %5413 = vmatmul.mubr.bf16.gmra.mrb[0].mxu0 %v4112
        %v5414 = vpop.f32.mrb[0].mxu0
        %v5415 = vadd.f32 %v5375, %v5414
        %v5416 = vpop.f32.mrb[0].mxu0
        %v5417 = vpop.f32.mrb[0].mxu0
        %v5418 = vpop.f32.mrb[0].mxu0
        %5419 = vdwg.mxu0
        %5420 = vmatprep.subr.bf16.mxu0 0
        %5421 = vmatpush1.bf16.msra.mxu0 %v4996
        %5422 = vmatprep.subr.bf16.mxu0 0
        %5423 = vmatpush1.bf16.msra.mxu0 %v4997
        %5424 = vmatprep.subr.bf16.mxu0 0
        %5425 = vmatpush1.bf16.msra.mxu0 %v4998
        %5426 = vmatprep.subr.bf16.mxu0 0
        %5427 = vmatpush1.bf16.msra.mxu0 %v4999
        %5428 = vmatprep.subr.bf16.mxu0 0
        %5429 = vmatpush1.bf16.msra.mxu0 %v5000
        %5430 = vmatprep.subr.bf16.mxu0 0
        %5431 = vmatpush1.bf16.msra.mxu0 %v5001
        %5432 = vmatprep.subr.bf16.mxu0 0
        %5433 = vmatpush1.bf16.msra.mxu0 %v5002
        %5434 = vmatprep.subr.bf16.mxu0 0
        %5435 = vmatpush1.bf16.msra.mxu0 %v5003
        %5436 = vmatprep.subr.bf16.mxu0 0
        %5437 = vmatpush1.bf16.msra.mxu0 %v5004
        %5438 = vmatprep.subr.bf16.mxu0 0
        %5439 = vmatpush1.bf16.msra.mxu0 %v5005
        %5440 = vmatprep.subr.bf16.mxu0 0
        %5441 = vmatpush1.bf16.msra.mxu0 %v5006
        %5442 = vmatprep.subr.bf16.mxu0 0
        %5443 = vmatpush1.bf16.msra.mxu0 %v5007
        %5444 = vmatprep.subr.bf16.mxu0 0
        %5445 = vmatpush1.bf16.msra.mxu0 %v5008
        %5446 = vmatprep.subr.bf16.mxu0 0
        %5447 = vmatpush1.bf16.msra.mxu0 %v5009
        %5448 = vmatprep.subr.bf16.mxu0 0
        %5449 = vmatpush1.bf16.msra.mxu0 %v5010
        %5450 = vmatprep.subr.bf16.mxu0 0
        %5451 = vmatpush1.bf16.msra.mxu0 %v5011
        %5452 = vmatprep.mubr.bf16.mxu0 %v4115
        %5453 = vmatmul.mubr.bf16.gmra.mrb[0].mxu0 %v4114
        %v5454 = vpop.f32.mrb[0].mxu0
        %v5455 = vadd.f32 %v5415, %v5454
        %v5456 = vpop.f32.mrb[0].mxu0
        %v5457 = vpop.f32.mrb[0].mxu0
        %v5458 = vpop.f32.mrb[0].mxu0
        %5459 = vdwg.mxu0
        %v5460 = vadd.f32 %v2868, %v5455
        %v5461 = vld [vmem:[#allocation29] sm:$0x1]
        %v5463 = vlaneseq
        %v5464 = vshrl.u32 %v5463, 7
        %v5465 = vsub.s32 0, %v5464
        %v5466 = vrot.slane %v5461, %v5465
        %v5468 = vadd.f32 %v5460, %v5466
        %s5469 = scalar_lea.vmem [#allocation2], 1
        %v5470 = vld [vmem:[%s5469] sm:$0x1]
        %s5471 = scalar_lea.vmem [#allocation5], 1
        %v5472 = vld [vmem:[%s5471] sm:$0x1]
        %5473 = vadd.xlane.f32.xlu0 %v5468
        %v5474 = vpop.xlane.xlu0 %5473
        %v5475 = vmul.f32 %v5474, %v1125
        %v5476 = vsub.f32 %v5468, %v5475
        %v5477 = vmul.f32 %v5476, %v5476
        %5478 = vadd.xlane.f32.xlu0 %v5477
        %v5479 = vpop.xlane.xlu0 %5478
        %v5480 = vmul.f32 %v5479, 0.007874016
        %v5481 = vrsqrt.pop %v5480
        %v5482 = vmul.f32 %v5480, %v5481
        %vm5483 = vcmp.eq.f32.partialorder %v5480, inf
        %v5484 = vsel %vm5483, %v5480, %v5482
        %vm5485 = vcmp.eq.f32.partialorder %v5480, 0.0
        %v5486 = vand.u32 %v5480, 2147483648
        %v5487 = vsel %vm5485, %v5486, %v5484
        %v5488 = vadd.f32 %v5487, 1e-06
        %v5489 = vrcp.pop %v5488
        %v5491 = vlaneseq
        %v5492 = vshrl.u32 %v5491, 7
        %v5493 = vsub.s32 0, %v5492
        %v5494 = vrot.slane %v5470, %v5493
        %v5496 = vmul.f32 %v5494, %v5476
        %v5497 = vmul.f32 %v5496, %v5489
        %v5499 = vlaneseq
        %v5500 = vshrl.u32 %v5499, 7
        %v5501 = vsub.s32 0, %v5500
        %v5502 = vrot.slane %v5472, %v5501
        %v5504 = vadd.f32 %v5497, %v5502
        %v5505 = vpack.c.bf16 %v5504, %v5504
        %s5506 = scalar_lea.vmem [#allocation7], 192
        %v5507 = vld [vmem:[%s5506] sm:$0xff]
        %v5508 = vld [vmem:[%s5506 + $0x8] sm:$0xf]
        %v5509 = vld [vmem:[%s5506 + $0xc] sm:$0xff]
        %v5510 = vld [vmem:[%s5506 + $0x14] sm:$0xf]
        %v5511 = vld [vmem:[%s5506 + $0x18] sm:$0xff]
        %v5512 = vld [vmem:[%s5506 + $0x20] sm:$0xf]
        %v5513 = vld [vmem:[%s5506 + $0x24] sm:$0xff]
        %v5514 = vld [vmem:[%s5506 + $0x2c] sm:$0xf]
        %v5515 = vld [vmem:[%s5506 + $0x30] sm:$0xff]
        %v5516 = vld [vmem:[%s5506 + $0x38] sm:$0xf]
        %v5517 = vld [vmem:[%s5506 + $0x3c] sm:$0xff]
        %v5518 = vld [vmem:[%s5506 + $0x44] sm:$0xf]
        %v5519 = vld [vmem:[%s5506 + $0x48] sm:$0xff]
        %v5520 = vld [vmem:[%s5506 + $0x50] sm:$0xf]
        %v5521 = vld [vmem:[%s5506 + $0x54] sm:$0xff]
        %v5522 = vld [vmem:[%s5506 + $0x5c] sm:$0xf]
        %v5523 = vld [vmem:[%s5506 + $0x60] sm:$0xff]
        %v5524 = vld [vmem:[%s5506 + $0x68] sm:$0xf]
        %v5525 = vld [vmem:[%s5506 + $0x6c] sm:$0xff]
        %v5526 = vld [vmem:[%s5506 + $0x74] sm:$0xf]
        %v5527 = vld [vmem:[%s5506 + $0x78] sm:$0xff]
        %v5528 = vld [vmem:[%s5506 + $0x80] sm:$0xf]
        %v5529 = vld [vmem:[%s5506 + $0x84] sm:$0xff]
        %v5530 = vld [vmem:[%s5506 + $0x8c] sm:$0xf]
        %v5531 = vld [vmem:[%s5506 + $0x90] sm:$0xff]
        %v5532 = vld [vmem:[%s5506 + $0x98] sm:$0xf]
        %v5533 = vld [vmem:[%s5506 + $0x9c] sm:$0xff]
        %v5534 = vld [vmem:[%s5506 + $0xa4] sm:$0xf]
        %v5535 = vld [vmem:[%s5506 + $0xa8] sm:$0xff]
        %v5536 = vld [vmem:[%s5506 + $0xb0] sm:$0xf]
        %v5537 = vld [vmem:[%s5506 + $0xb4] sm:$0xff]
        %v5538 = vld [vmem:[%s5506 + $0xbc] sm:$0xf]
        %s5539 = scalar_lea.vmem [#allocation8], 3
        %v5540 = vld [vmem:[%s5539] sm:$0x7]
        %v5542 = vlaneseq
        %v5543 = vshrl.u32 %v5542, 7
        %v5544 = vsub.s32 0, %v5543
        %v5545 = vrot.slane %v5540, %v5544
        %v5546 = vlaneseq
        %v5547 = vshrl.u32 %v5546, 7
        %v5548 = vsub.s32 1, %v5547
        %v5549 = vrot.slane %v5540, %v5548
        %v5550 = vlaneseq
        %v5551 = vshrl.u32 %v5550, 7
        %v5552 = vsub.s32 2, %v5551
        %v5553 = vrot.slane %v5540, %v5552
        %v5589 = vunpack.c.l.b16 %v5507
        %v5590 = vunpack.c.h.b16 %v5507
        %v5591 = vunpack.c.l.b16 %v5508
        %v5592 = vunpack.c.l.b16 %v5509
        %v5593 = vunpack.c.h.b16 %v5509
        %v5594 = vunpack.c.l.b16 %v5510
        %v5595 = vunpack.c.l.b16 %v5511
        %v5596 = vunpack.c.h.b16 %v5511
        %v5597 = vunpack.c.l.b16 %v5512
        %v5598 = vunpack.c.l.b16 %v5513
        %v5599 = vunpack.c.h.b16 %v5513
        %v5600 = vunpack.c.l.b16 %v5514
        %v5601 = vunpack.c.l.b16 %v5515
        %v5602 = vunpack.c.h.b16 %v5515
        %v5603 = vunpack.c.l.b16 %v5516
        %v5604 = vunpack.c.l.b16 %v5517
        %v5605 = vunpack.c.h.b16 %v5517
        %v5606 = vunpack.c.l.b16 %v5518
        %v5607 = vunpack.c.l.b16 %v5519
        %v5608 = vunpack.c.h.b16 %v5519
        %v5609 = vunpack.c.l.b16 %v5520
        %v5610 = vunpack.c.l.b16 %v5521
        %v5611 = vunpack.c.h.b16 %v5521
        %v5612 = vunpack.c.l.b16 %v5522
        %v5613 = vunpack.c.l.b16 %v5523
        %v5614 = vunpack.c.h.b16 %v5523
        %v5615 = vunpack.c.l.b16 %v5524
        %v5616 = vunpack.c.l.b16 %v5525
        %v5617 = vunpack.c.h.b16 %v5525
        %v5618 = vunpack.c.l.b16 %v5526
        %v5619 = vunpack.c.l.b16 %v5527
        %v5620 = vunpack.c.h.b16 %v5527
        %v5621 = vunpack.c.l.b16 %v5528
        %v5622 = vunpack.c.l.b16 %v5529
        %v5623 = vunpack.c.h.b16 %v5529
        %v5624 = vunpack.c.l.b16 %v5530
        %v5625 = vunpack.c.l.b16 %v5531
        %v5626 = vunpack.c.h.b16 %v5531
        %v5627 = vunpack.c.l.b16 %v5532
        %v5628 = vunpack.c.l.b16 %v5533
        %v5629 = vunpack.c.h.b16 %v5533
        %v5630 = vunpack.c.l.b16 %v5534
        %v5631 = vunpack.c.l.b16 %v5535
        %v5632 = vunpack.c.h.b16 %v5535
        %v5633 = vunpack.c.l.b16 %v5536
        %v5634 = vunpack.c.l.b16 %v5537
        %v5635 = vunpack.c.h.b16 %v5537
        %v5636 = vunpack.c.l.b16 %v5538
        %v5637 = vpack.c.b16 %v5592, %v5589
        %v5638 = vpack.c.b16 %v5593, %v5590
        %v5639 = vpack.c.b16 %v5594, %v5591
        %v5640 = vpack.c.b16 %v5598, %v5595
        %v5641 = vpack.c.b16 %v5599, %v5596
        %v5642 = vpack.c.b16 %v5600, %v5597
        %v5643 = vpack.c.b16 %v5604, %v5601
        %v5644 = vpack.c.b16 %v5605, %v5602
        %v5645 = vpack.c.b16 %v5606, %v5603
        %v5646 = vpack.c.b16 %v5610, %v5607
        %v5647 = vpack.c.b16 %v5611, %v5608
        %v5648 = vpack.c.b16 %v5612, %v5609
        %v5649 = vpack.c.b16 %v5616, %v5613
        %v5650 = vpack.c.b16 %v5617, %v5614
        %v5651 = vpack.c.b16 %v5618, %v5615
        %v5652 = vpack.c.b16 %v5622, %v5619
        %v5653 = vpack.c.b16 %v5623, %v5620
        %v5654 = vpack.c.b16 %v5624, %v5621
        %v5655 = vpack.c.b16 %v5628, %v5625
        %v5656 = vpack.c.b16 %v5629, %v5626
        %v5657 = vpack.c.b16 %v5630, %v5627
        %v5658 = vpack.c.b16 %v5634, %v5631
        %v5659 = vpack.c.b16 %v5635, %v5632
        %v5660 = vpack.c.b16 %v5636, %v5633
        %5685 = vmatprep.subr.bf16.mxu0 %v5638
        %5686 = vmatpush1.bf16.msra.mxu0 %v5637
        %5687 = vmatprep.subr.bf16.mxu0 %v5641
        %5688 = vmatpush1.bf16.msra.mxu0 %v5640
        %5689 = vmatprep.subr.bf16.mxu0 %v5644
        %5690 = vmatpush1.bf16.msra.mxu0 %v5643
        %5691 = vmatprep.subr.bf16.mxu0 %v5647
        %5692 = vmatpush1.bf16.msra.mxu0 %v5646
        %5693 = vmatprep.subr.bf16.mxu0 %v5650
        %5694 = vmatpush1.bf16.msra.mxu0 %v5649
        %5695 = vmatprep.subr.bf16.mxu0 %v5653
        %5696 = vmatpush1.bf16.msra.mxu0 %v5652
        %5697 = vmatprep.subr.bf16.mxu0 %v5656
        %5698 = vmatpush1.bf16.msra.mxu0 %v5655
        %5699 = vmatprep.subr.bf16.mxu0 %v5659
        %5700 = vmatpush1.bf16.msra.mxu0 %v5658
        %5701 = vmatprep.subr.bf16.mxu0 0
        %5702 = vmatpush1.bf16.msra.mxu0 0
        %5703 = vmatprep.subr.bf16.mxu0 0
        %5704 = vmatpush1.bf16.msra.mxu0 0
        %5705 = vmatprep.subr.bf16.mxu0 0
        %5706 = vmatpush1.bf16.msra.mxu0 0
        %5707 = vmatprep.subr.bf16.mxu0 0
        %5708 = vmatpush1.bf16.msra.mxu0 0
        %5709 = vmatprep.subr.bf16.mxu0 0
        %5710 = vmatpush1.bf16.msra.mxu0 0
        %5711 = vmatprep.subr.bf16.mxu0 0
        %5712 = vmatpush1.bf16.msra.mxu0 0
        %5713 = vmatprep.subr.bf16.mxu0 0
        %5714 = vmatpush1.bf16.msra.mxu0 0
        %5715 = vmatprep.subr.bf16.mxu0 0
        %5716 = vmatpush1.bf16.msra.mxu0 0
        %5717 = vmatprep.mubr.bf16.mxu0 0
        %5718 = vmatmul.mubr.bf16.gmra.mrb[0].mxu0 %v5505
        %v5719 = vpop.f32.mrb[0].mxu0
        %v5720 = vadd.f32 %v5545, %v5719
        %v5721 = vpop.f32.mrb[0].mxu0
        %v5722 = vadd.f32 %v5549, %v5721
        %v5723 = vpop.f32.mrb[0].mxu0
        %v5724 = vpop.f32.mrb[0].mxu0
        %5725 = vdwg.mxu0
        %5726 = vmatprep.subr.bf16.mxu0 0
        %5727 = vmatpush1.bf16.msra.mxu0 %v5639
        %5728 = vmatprep.subr.bf16.mxu0 0
        %5729 = vmatpush1.bf16.msra.mxu0 %v5642
        %5730 = vmatprep.subr.bf16.mxu0 0
        %5731 = vmatpush1.bf16.msra.mxu0 %v5645
        %5732 = vmatprep.subr.bf16.mxu0 0
        %5733 = vmatpush1.bf16.msra.mxu0 %v5648
        %5734 = vmatprep.subr.bf16.mxu0 0
        %5735 = vmatpush1.bf16.msra.mxu0 %v5651
        %5736 = vmatprep.subr.bf16.mxu0 0
        %5737 = vmatpush1.bf16.msra.mxu0 %v5654
        %5738 = vmatprep.subr.bf16.mxu0 0
        %5739 = vmatpush1.bf16.msra.mxu0 %v5657
        %5740 = vmatprep.subr.bf16.mxu0 0
        %5741 = vmatpush1.bf16.msra.mxu0 %v5660
        %5742 = vmatprep.subr.bf16.mxu0 0
        %5743 = vmatpush1.bf16.msra.mxu0 0
        %5744 = vmatprep.subr.bf16.mxu0 0
        %5745 = vmatpush1.bf16.msra.mxu0 0
        %5746 = vmatprep.subr.bf16.mxu0 0
        %5747 = vmatpush1.bf16.msra.mxu0 0
        %5748 = vmatprep.subr.bf16.mxu0 0
        %5749 = vmatpush1.bf16.msra.mxu0 0
        %5750 = vmatprep.subr.bf16.mxu0 0
        %5751 = vmatpush1.bf16.msra.mxu0 0
        %5752 = vmatprep.subr.bf16.mxu0 0
        %5753 = vmatpush1.bf16.msra.mxu0 0
        %5754 = vmatprep.subr.bf16.mxu0 0
        %5755 = vmatpush1.bf16.msra.mxu0 0
        %5756 = vmatprep.subr.bf16.mxu0 0
        %5757 = vmatpush1.bf16.msra.mxu0 0
        %5758 = vmatprep.mubr.bf16.mxu0 0
        %5759 = vmatmul.mubr.bf16.gmra.mrb[0].mxu0 %v5505
        %v5760 = vpop.f32.mrb[0].mxu0
        %v5761 = vadd.f32 %v5553, %v5760
        %v5762 = vpop.f32.mrb[0].mxu0
        %v5763 = vpop.f32.mrb[0].mxu0
        %v5764 = vpop.f32.mrb[0].mxu0
        %5765 = vdwg.mxu0
        %s5766 = scalar_lea.vmem [#allocation10], 64
        %v5767 = vld [vmem:[%s5766] sm:$0xf]
        %v5768 = vld [vmem:[%s5766 + $0x4] sm:$0xf]
        %v5769 = vld [vmem:[%s5766 + $0x8] sm:$0xf]
        %v5770 = vld [vmem:[%s5766 + $0xc] sm:$0xf]
        %v5771 = vld [vmem:[%s5766 + $0x10] sm:$0xf]
        %v5772 = vld [vmem:[%s5766 + $0x14] sm:$0xf]
        %v5773 = vld [vmem:[%s5766 + $0x18] sm:$0xf]
        %v5774 = vld [vmem:[%s5766 + $0x1c] sm:$0xf]
        %v5775 = vld [vmem:[%s5766 + $0x20] sm:$0xf]
        %v5776 = vld [vmem:[%s5766 + $0x24] sm:$0xf]
        %v5777 = vld [vmem:[%s5766 + $0x28] sm:$0xf]
        %v5778 = vld [vmem:[%s5766 + $0x2c] sm:$0xf]
        %v5779 = vld [vmem:[%s5766 + $0x30] sm:$0xf]
        %v5780 = vld [vmem:[%s5766 + $0x34] sm:$0xf]
        %v5781 = vld [vmem:[%s5766 + $0x38] sm:$0xf]
        %v5782 = vld [vmem:[%s5766 + $0x3c] sm:$0xf]
        %s5783 = scalar_lea.vmem [#allocation11], 1
        %v5784 = vld [vmem:[%s5783] sm:$0x1]
        %v5785 = vpack.c.bf16 %v5720, %v5720
        %v5786 = vpack.c.bf16 %v5722, %v5722
        %v5787 = vpack.c.bf16 %v5761, %v5761
        %v5789 = vsel %vm1435, %v5785, 0
        %v5792 = vsel %vm1435, %v5786, 0
        %5794 = vmatprep.subr.bf16.mxu0 0
        %5795 = vmatpush1.bf16.xpose.msra.mxu0 %v5792
        %5796 = vmatprep.subr.bf16.mxu0 0
        %5797 = vmatpush1.bf16.xpose.msra.mxu0 0
        %5798 = vmatprep.subr.bf16.mxu0 0
        %5799 = vmatpush1.bf16.xpose.msra.mxu0 0
        %5800 = vmatprep.subr.bf16.mxu0 0
        %5801 = vmatpush1.bf16.xpose.msra.mxu0 0
        %5802 = vmatprep.subr.bf16.mxu0 0
        %5803 = vmatpush1.bf16.xpose.msra.mxu0 0
        %5804 = vmatprep.subr.bf16.mxu0 0
        %5805 = vmatpush1.bf16.xpose.msra.mxu0 0
        %5806 = vmatprep.subr.bf16.mxu0 0
        %5807 = vmatpush1.bf16.xpose.msra.mxu0 0
        %5808 = vmatprep.subr.bf16.mxu0 0
        %5809 = vmatpush1.bf16.xpose.msra.mxu0 0
        %5810 = vmatprep.subr.bf16.mxu0 0
        %5811 = vmatpush1.bf16.xpose.msra.mxu0 0
        %5812 = vmatprep.subr.bf16.mxu0 0
        %5813 = vmatpush1.bf16.xpose.msra.mxu0 0
        %5814 = vmatprep.subr.bf16.mxu0 0
        %5815 = vmatpush1.bf16.xpose.msra.mxu0 0
        %5816 = vmatprep.subr.bf16.mxu0 0
        %5817 = vmatpush1.bf16.xpose.msra.mxu0 0
        %5818 = vmatprep.subr.bf16.mxu0 0
        %5819 = vmatpush1.bf16.xpose.msra.mxu0 0
        %5820 = vmatprep.subr.bf16.mxu0 0
        %5821 = vmatpush1.bf16.xpose.msra.mxu0 0
        %5822 = vmatprep.subr.bf16.mxu0 0
        %5823 = vmatpush1.bf16.xpose.msra.mxu0 0
        %5824 = vmatprep.subr.bf16.mxu0 0
        %5825 = vmatpush1.bf16.xpose.msra.mxu0 0
        %5826 = vmatprep.mubr.bf16.mxu0 0
        %5827 = vmatmul.mubr.bf16.gmra.mrb[0].mxu0 %v5789
        %v5828 = vpop.f32.mrb[0].mxu0
        %v5829 = vadd.f32 0.0, %v5828
        %v5830 = vpop.f32.mrb[0].mxu0
        %v5831 = vpop.f32.mrb[0].mxu0
        %v5832 = vpop.f32.mrb[0].mxu0
        %5833 = vdwg.mxu0
        %v5834 = vsel %vm1118, -1e+09, %v5829
        %v5835 = vsel %vm1483, %v5834, -inf
        %5836 = vmax.xlane.f32.xlu0 %v5835
        %v5837 = vpop.xlane.xlu0 %5836
        %v5838 = vsub.f32 %v5834, %v5837
        %v5839 = vmul.f32 %v5838, 1.442695
        %v5840 = vpow.pop %v5839
        %v5841 = vsel %vm1483, %v5840, 0.0
        %5842 = vadd.xlane.f32.xlu0 %v5841
        %v5843 = vpop.xlane.xlu0 %5842
        %v5844 = vrcp.pop %v5843
        %v5845 = vmul.f32 %v5840, %v5844
        %v5846 = vpack.c.bf16 %v5845, %v5845
        %v5848 = vsel %vm1483, %v5846, 0
        %v5851 = vsel %vm1499, %v5787, 0
        %5853 = vmatprep.subr.bf16.mxu0 0
        %5854 = vmatpush1.bf16.msra.mxu0 %v5851
        %5855 = vmatprep.subr.bf16.mxu0 0
        %5856 = vmatpush1.bf16.msra.mxu0 0
        %5857 = vmatprep.subr.bf16.mxu0 0
        %5858 = vmatpush1.bf16.msra.mxu0 0
        %5859 = vmatprep.subr.bf16.mxu0 0
        %5860 = vmatpush1.bf16.msra.mxu0 0
        %5861 = vmatprep.subr.bf16.mxu0 0
        %5862 = vmatpush1.bf16.msra.mxu0 0
        %5863 = vmatprep.subr.bf16.mxu0 0
        %5864 = vmatpush1.bf16.msra.mxu0 0
        %5865 = vmatprep.subr.bf16.mxu0 0
        %5866 = vmatpush1.bf16.msra.mxu0 0
        %5867 = vmatprep.subr.bf16.mxu0 0
        %5868 = vmatpush1.bf16.msra.mxu0 0
        %5869 = vmatprep.subr.bf16.mxu0 0
        %5870 = vmatpush1.bf16.msra.mxu0 0
        %5871 = vmatprep.subr.bf16.mxu0 0
        %5872 = vmatpush1.bf16.msra.mxu0 0
        %5873 = vmatprep.subr.bf16.mxu0 0
        %5874 = vmatpush1.bf16.msra.mxu0 0
        %5875 = vmatprep.subr.bf16.mxu0 0
        %5876 = vmatpush1.bf16.msra.mxu0 0
        %5877 = vmatprep.subr.bf16.mxu0 0
        %5878 = vmatpush1.bf16.msra.mxu0 0
        %5879 = vmatprep.subr.bf16.mxu0 0
        %5880 = vmatpush1.bf16.msra.mxu0 0
        %5881 = vmatprep.subr.bf16.mxu0 0
        %5882 = vmatpush1.bf16.msra.mxu0 0
        %5883 = vmatprep.subr.bf16.mxu0 0
        %5884 = vmatpush1.bf16.msra.mxu0 0
        %5885 = vmatprep.mubr.bf16.mxu0 0
        %5886 = vmatmul.mubr.bf16.gmra.mrb[0].mxu0 %v5848
        %v5887 = vpop.f32.mrb[0].mxu0
        %v5888 = vadd.f32 0.0, %v5887
        %v5889 = vpop.f32.mrb[0].mxu0
        %v5890 = vpop.f32.mrb[0].mxu0
        %v5891 = vpop.f32.mrb[0].mxu0
        %5892 = vdwg.mxu0
        %5894 = vrot.lane.b32.xlu0 %v5785, 96
        %v5895 = vpop.permute.xlu0 %5894
        %5897 = vrot.lane.b32.xlu0 %v5786, 96
        %v5898 = vpop.permute.xlu0 %5897
        %v5900 = vsel %vm1435, %v5895, 0
        %v5903 = vsel %vm1435, %v5898, 0
        %5905 = vmatprep.subr.bf16.mxu0 0
        %5906 = vmatpush1.bf16.xpose.msra.mxu0 %v5903
        %5907 = vmatprep.subr.bf16.mxu0 0
        %5908 = vmatpush1.bf16.xpose.msra.mxu0 0
        %5909 = vmatprep.subr.bf16.mxu0 0
        %5910 = vmatpush1.bf16.xpose.msra.mxu0 0
        %5911 = vmatprep.subr.bf16.mxu0 0
        %5912 = vmatpush1.bf16.xpose.msra.mxu0 0
        %5913 = vmatprep.subr.bf16.mxu0 0
        %5914 = vmatpush1.bf16.xpose.msra.mxu0 0
        %5915 = vmatprep.subr.bf16.mxu0 0
        %5916 = vmatpush1.bf16.xpose.msra.mxu0 0
        %5917 = vmatprep.subr.bf16.mxu0 0
        %5918 = vmatpush1.bf16.xpose.msra.mxu0 0
        %5919 = vmatprep.subr.bf16.mxu0 0
        %5920 = vmatpush1.bf16.xpose.msra.mxu0 0
        %5921 = vmatprep.subr.bf16.mxu0 0
        %5922 = vmatpush1.bf16.xpose.msra.mxu0 0
        %5923 = vmatprep.subr.bf16.mxu0 0
        %5924 = vmatpush1.bf16.xpose.msra.mxu0 0
        %5925 = vmatprep.subr.bf16.mxu0 0
        %5926 = vmatpush1.bf16.xpose.msra.mxu0 0
        %5927 = vmatprep.subr.bf16.mxu0 0
        %5928 = vmatpush1.bf16.xpose.msra.mxu0 0
        %5929 = vmatprep.subr.bf16.mxu0 0
        %5930 = vmatpush1.bf16.xpose.msra.mxu0 0
        %5931 = vmatprep.subr.bf16.mxu0 0
        %5932 = vmatpush1.bf16.xpose.msra.mxu0 0
        %5933 = vmatprep.subr.bf16.mxu0 0
        %5934 = vmatpush1.bf16.xpose.msra.mxu0 0
        %5935 = vmatprep.subr.bf16.mxu0 0
        %5936 = vmatpush1.bf16.xpose.msra.mxu0 0
        %5937 = vmatprep.mubr.bf16.mxu0 0
        %5938 = vmatmul.mubr.bf16.gmra.mrb[0].mxu0 %v5900
        %v5939 = vpop.f32.mrb[0].mxu0
        %v5940 = vadd.f32 0.0, %v5939
        %v5941 = vpop.f32.mrb[0].mxu0
        %v5942 = vpop.f32.mrb[0].mxu0
        %v5943 = vpop.f32.mrb[0].mxu0
        %5944 = vdwg.mxu0
        %v5945 = vsel %vm1118, -1e+09, %v5940
        %v5946 = vsel %vm1483, %v5945, -inf
        %5947 = vmax.xlane.f32.xlu0 %v5946
        %v5948 = vpop.xlane.xlu0 %5947
        %v5949 = vsub.f32 %v5945, %v5948
        %v5950 = vmul.f32 %v5949, 1.442695
        %v5951 = vpow.pop %v5950
        %v5952 = vsel %vm1483, %v5951, 0.0
        %5953 = vadd.xlane.f32.xlu0 %v5952
        %v5954 = vpop.xlane.xlu0 %5953
        %v5955 = vrcp.pop %v5954
        %v5956 = vmul.f32 %v5951, %v5955
        %v5957 = vpack.c.bf16 %v5956, %v5956
        %5959 = vrot.lane.b32.xlu0 %v5787, 96
        %v5960 = vpop.permute.xlu0 %5959
        %v5962 = vsel %vm1483, %v5957, 0
        %v5965 = vsel %vm1499, %v5960, 0
        %5967 = vmatprep.subr.bf16.mxu0 0
        %5968 = vmatpush1.bf16.msra.mxu0 %v5965
        %5969 = vmatprep.subr.bf16.mxu0 0
        %5970 = vmatpush1.bf16.msra.mxu0 0
        %5971 = vmatprep.subr.bf16.mxu0 0
        %5972 = vmatpush1.bf16.msra.mxu0 0
        %5973 = vmatprep.subr.bf16.mxu0 0
        %5974 = vmatpush1.bf16.msra.mxu0 0
        %5975 = vmatprep.subr.bf16.mxu0 0
        %5976 = vmatpush1.bf16.msra.mxu0 0
        %5977 = vmatprep.subr.bf16.mxu0 0
        %5978 = vmatpush1.bf16.msra.mxu0 0
        %5979 = vmatprep.subr.bf16.mxu0 0
        %5980 = vmatpush1.bf16.msra.mxu0 0
        %5981 = vmatprep.subr.bf16.mxu0 0
        %5982 = vmatpush1.bf16.msra.mxu0 0
        %5983 = vmatprep.subr.bf16.mxu0 0
        %5984 = vmatpush1.bf16.msra.mxu0 0
        %5985 = vmatprep.subr.bf16.mxu0 0
        %5986 = vmatpush1.bf16.msra.mxu0 0
        %5987 = vmatprep.subr.bf16.mxu0 0
        %5988 = vmatpush1.bf16.msra.mxu0 0
        %5989 = vmatprep.subr.bf16.mxu0 0
        %5990 = vmatpush1.bf16.msra.mxu0 0
        %5991 = vmatprep.subr.bf16.mxu0 0
        %5992 = vmatpush1.bf16.msra.mxu0 0
        %5993 = vmatprep.subr.bf16.mxu0 0
        %5994 = vmatpush1.bf16.msra.mxu0 0
        %5995 = vmatprep.subr.bf16.mxu0 0
        %5996 = vmatpush1.bf16.msra.mxu0 0
        %5997 = vmatprep.subr.bf16.mxu0 0
        %5998 = vmatpush1.bf16.msra.mxu0 0
        %5999 = vmatprep.mubr.bf16.mxu0 0
        %6000 = vmatmul.mubr.bf16.gmra.mrb[0].mxu0 %v5962
        %v6001 = vpop.f32.mrb[0].mxu0
        %v6002 = vadd.f32 0.0, %v6001
        %v6003 = vpop.f32.mrb[0].mxu0
        %v6004 = vpop.f32.mrb[0].mxu0
        %v6005 = vpop.f32.mrb[0].mxu0
        %6006 = vdwg.mxu0
        %6007 = vrot.lane.b32.xlu0 %v5785, 64
        %v6008 = vpop.permute.xlu0 %6007
        %6009 = vrot.lane.b32.xlu0 %v5786, 64
        %v6010 = vpop.permute.xlu0 %6009
        %v6012 = vsel %vm1435, %v6008, 0
        %v6015 = vsel %vm1435, %v6010, 0
        %6017 = vmatprep.subr.bf16.mxu0 0
        %6018 = vmatpush1.bf16.xpose.msra.mxu0 %v6015
        %6019 = vmatprep.subr.bf16.mxu0 0
        %6020 = vmatpush1.bf16.xpose.msra.mxu0 0
        %6021 = vmatprep.subr.bf16.mxu0 0
        %6022 = vmatpush1.bf16.xpose.msra.mxu0 0
        %6023 = vmatprep.subr.bf16.mxu0 0
        %6024 = vmatpush1.bf16.xpose.msra.mxu0 0
        %6025 = vmatprep.subr.bf16.mxu0 0
        %6026 = vmatpush1.bf16.xpose.msra.mxu0 0
        %6027 = vmatprep.subr.bf16.mxu0 0
        %6028 = vmatpush1.bf16.xpose.msra.mxu0 0
        %6029 = vmatprep.subr.bf16.mxu0 0
        %6030 = vmatpush1.bf16.xpose.msra.mxu0 0
        %6031 = vmatprep.subr.bf16.mxu0 0
        %6032 = vmatpush1.bf16.xpose.msra.mxu0 0
        %6033 = vmatprep.subr.bf16.mxu0 0
        %6034 = vmatpush1.bf16.xpose.msra.mxu0 0
        %6035 = vmatprep.subr.bf16.mxu0 0
        %6036 = vmatpush1.bf16.xpose.msra.mxu0 0
        %6037 = vmatprep.subr.bf16.mxu0 0
        %6038 = vmatpush1.bf16.xpose.msra.mxu0 0
        %6039 = vmatprep.subr.bf16.mxu0 0
        %6040 = vmatpush1.bf16.xpose.msra.mxu0 0
        %6041 = vmatprep.subr.bf16.mxu0 0
        %6042 = vmatpush1.bf16.xpose.msra.mxu0 0
        %6043 = vmatprep.subr.bf16.mxu0 0
        %6044 = vmatpush1.bf16.xpose.msra.mxu0 0
        %6045 = vmatprep.subr.bf16.mxu0 0
        %6046 = vmatpush1.bf16.xpose.msra.mxu0 0
        %6047 = vmatprep.subr.bf16.mxu0 0
        %6048 = vmatpush1.bf16.xpose.msra.mxu0 0
        %6049 = vmatprep.mubr.bf16.mxu0 0
        %6050 = vmatmul.mubr.bf16.gmra.mrb[0].mxu0 %v6012
        %v6051 = vpop.f32.mrb[0].mxu0
        %v6052 = vadd.f32 0.0, %v6051
        %v6053 = vpop.f32.mrb[0].mxu0
        %v6054 = vpop.f32.mrb[0].mxu0
        %v6055 = vpop.f32.mrb[0].mxu0
        %6056 = vdwg.mxu0
        %v6057 = vsel %vm1118, -1e+09, %v6052
        %v6058 = vsel %vm1483, %v6057, -inf
        %6059 = vmax.xlane.f32.xlu0 %v6058
        %v6060 = vpop.xlane.xlu0 %6059
        %v6061 = vsub.f32 %v6057, %v6060
        %v6062 = vmul.f32 %v6061, 1.442695
        %v6063 = vpow.pop %v6062
        %v6064 = vsel %vm1483, %v6063, 0.0
        %6065 = vadd.xlane.f32.xlu0 %v6064
        %v6066 = vpop.xlane.xlu0 %6065
        %v6067 = vrcp.pop %v6066
        %v6068 = vmul.f32 %v6063, %v6067
        %v6069 = vpack.c.bf16 %v6068, %v6068
        %6070 = vrot.lane.b32.xlu0 %v5787, 64
        %v6071 = vpop.permute.xlu0 %6070
        %v6073 = vsel %vm1483, %v6069, 0
        %v6076 = vsel %vm1499, %v6071, 0
        %6078 = vmatprep.subr.bf16.mxu0 0
        %6079 = vmatpush1.bf16.msra.mxu0 %v6076
        %6080 = vmatprep.subr.bf16.mxu0 0
        %6081 = vmatpush1.bf16.msra.mxu0 0
        %6082 = vmatprep.subr.bf16.mxu0 0
        %6083 = vmatpush1.bf16.msra.mxu0 0
        %6084 = vmatprep.subr.bf16.mxu0 0
        %6085 = vmatpush1.bf16.msra.mxu0 0
        %6086 = vmatprep.subr.bf16.mxu0 0
        %6087 = vmatpush1.bf16.msra.mxu0 0
        %6088 = vmatprep.subr.bf16.mxu0 0
        %6089 = vmatpush1.bf16.msra.mxu0 0
        %6090 = vmatprep.subr.bf16.mxu0 0
        %6091 = vmatpush1.bf16.msra.mxu0 0
        %6092 = vmatprep.subr.bf16.mxu0 0
        %6093 = vmatpush1.bf16.msra.mxu0 0
        %6094 = vmatprep.subr.bf16.mxu0 0
        %6095 = vmatpush1.bf16.msra.mxu0 0
        %6096 = vmatprep.subr.bf16.mxu0 0
        %6097 = vmatpush1.bf16.msra.mxu0 0
        %6098 = vmatprep.subr.bf16.mxu0 0
        %6099 = vmatpush1.bf16.msra.mxu0 0
        %6100 = vmatprep.subr.bf16.mxu0 0
        %6101 = vmatpush1.bf16.msra.mxu0 0
        %6102 = vmatprep.subr.bf16.mxu0 0
        %6103 = vmatpush1.bf16.msra.mxu0 0
        %6104 = vmatprep.subr.bf16.mxu0 0
        %6105 = vmatpush1.bf16.msra.mxu0 0
        %6106 = vmatprep.subr.bf16.mxu0 0
        %6107 = vmatpush1.bf16.msra.mxu0 0
        %6108 = vmatprep.subr.bf16.mxu0 0
        %6109 = vmatpush1.bf16.msra.mxu0 0
        %6110 = vmatprep.mubr.bf16.mxu0 0
        %6111 = vmatmul.mubr.bf16.gmra.mrb[0].mxu0 %v6073
        %v6112 = vpop.f32.mrb[0].mxu0
        %v6113 = vadd.f32 0.0, %v6112
        %v6114 = vpop.f32.mrb[0].mxu0
        %v6115 = vpop.f32.mrb[0].mxu0
        %v6116 = vpop.f32.mrb[0].mxu0
        %6117 = vdwg.mxu0
        %6118 = vrot.lane.b32.xlu0 %v5785, 32
        %v6119 = vpop.permute.xlu0 %6118
        %6120 = vrot.lane.b32.xlu0 %v5786, 32
        %v6121 = vpop.permute.xlu0 %6120
        %v6123 = vsel %vm1435, %v6119, 0
        %v6126 = vsel %vm1435, %v6121, 0
        %6128 = vmatprep.subr.bf16.mxu0 0
        %6129 = vmatpush1.bf16.xpose.msra.mxu0 %v6126
        %6130 = vmatprep.subr.bf16.mxu0 0
        %6131 = vmatpush1.bf16.xpose.msra.mxu0 0
        %6132 = vmatprep.subr.bf16.mxu0 0
        %6133 = vmatpush1.bf16.xpose.msra.mxu0 0
        %6134 = vmatprep.subr.bf16.mxu0 0
        %6135 = vmatpush1.bf16.xpose.msra.mxu0 0
        %6136 = vmatprep.subr.bf16.mxu0 0
        %6137 = vmatpush1.bf16.xpose.msra.mxu0 0
        %6138 = vmatprep.subr.bf16.mxu0 0
        %6139 = vmatpush1.bf16.xpose.msra.mxu0 0
        %6140 = vmatprep.subr.bf16.mxu0 0
        %6141 = vmatpush1.bf16.xpose.msra.mxu0 0
        %6142 = vmatprep.subr.bf16.mxu0 0
        %6143 = vmatpush1.bf16.xpose.msra.mxu0 0
        %6144 = vmatprep.subr.bf16.mxu0 0
        %6145 = vmatpush1.bf16.xpose.msra.mxu0 0
        %6146 = vmatprep.subr.bf16.mxu0 0
        %6147 = vmatpush1.bf16.xpose.msra.mxu0 0
        %6148 = vmatprep.subr.bf16.mxu0 0
        %6149 = vmatpush1.bf16.xpose.msra.mxu0 0
        %6150 = vmatprep.subr.bf16.mxu0 0
        %6151 = vmatpush1.bf16.xpose.msra.mxu0 0
        %6152 = vmatprep.subr.bf16.mxu0 0
        %6153 = vmatpush1.bf16.xpose.msra.mxu0 0
        %6154 = vmatprep.subr.bf16.mxu0 0
        %6155 = vmatpush1.bf16.xpose.msra.mxu0 0
        %6156 = vmatprep.subr.bf16.mxu0 0
        %6157 = vmatpush1.bf16.xpose.msra.mxu0 0
        %6158 = vmatprep.subr.bf16.mxu0 0
        %6159 = vmatpush1.bf16.xpose.msra.mxu0 0
        %6160 = vmatprep.mubr.bf16.mxu0 0
        %6161 = vmatmul.mubr.bf16.gmra.mrb[0].mxu0 %v6123
        %v6162 = vpop.f32.mrb[0].mxu0
        %v6163 = vadd.f32 0.0, %v6162
        %v6164 = vpop.f32.mrb[0].mxu0
        %v6165 = vpop.f32.mrb[0].mxu0
        %v6166 = vpop.f32.mrb[0].mxu0
        %6167 = vdwg.mxu0
        %v6168 = vsel %vm1118, -1e+09, %v6163
        %v6169 = vsel %vm1483, %v6168, -inf
        %6170 = vmax.xlane.f32.xlu0 %v6169
        %v6171 = vpop.xlane.xlu0 %6170
        %v6172 = vsub.f32 %v6168, %v6171
        %v6173 = vmul.f32 %v6172, 1.442695
        %v6174 = vpow.pop %v6173
        %v6175 = vsel %vm1483, %v6174, 0.0
        %6176 = vadd.xlane.f32.xlu0 %v6175
        %v6177 = vpop.xlane.xlu0 %6176
        %v6178 = vrcp.pop %v6177
        %v6179 = vmul.f32 %v6174, %v6178
        %v6180 = vpack.c.bf16 %v6179, %v6179
        %6181 = vrot.lane.b32.xlu0 %v5787, 32
        %v6182 = vpop.permute.xlu0 %6181
        %v6184 = vsel %vm1483, %v6180, 0
        %v6187 = vsel %vm1499, %v6182, 0
        %6189 = vmatprep.subr.bf16.mxu0 0
        %6190 = vmatpush1.bf16.msra.mxu0 %v6187
        %6191 = vmatprep.subr.bf16.mxu0 0
        %6192 = vmatpush1.bf16.msra.mxu0 0
        %6193 = vmatprep.subr.bf16.mxu0 0
        %6194 = vmatpush1.bf16.msra.mxu0 0
        %6195 = vmatprep.subr.bf16.mxu0 0
        %6196 = vmatpush1.bf16.msra.mxu0 0
        %6197 = vmatprep.subr.bf16.mxu0 0
        %6198 = vmatpush1.bf16.msra.mxu0 0
        %6199 = vmatprep.subr.bf16.mxu0 0
        %6200 = vmatpush1.bf16.msra.mxu0 0
        %6201 = vmatprep.subr.bf16.mxu0 0
        %6202 = vmatpush1.bf16.msra.mxu0 0
        %6203 = vmatprep.subr.bf16.mxu0 0
        %6204 = vmatpush1.bf16.msra.mxu0 0
        %6205 = vmatprep.subr.bf16.mxu0 0
        %6206 = vmatpush1.bf16.msra.mxu0 0
        %6207 = vmatprep.subr.bf16.mxu0 0
        %6208 = vmatpush1.bf16.msra.mxu0 0
        %6209 = vmatprep.subr.bf16.mxu0 0
        %6210 = vmatpush1.bf16.msra.mxu0 0
        %6211 = vmatprep.subr.bf16.mxu0 0
        %6212 = vmatpush1.bf16.msra.mxu0 0
        %6213 = vmatprep.subr.bf16.mxu0 0
        %6214 = vmatpush1.bf16.msra.mxu0 0
        %6215 = vmatprep.subr.bf16.mxu0 0
        %6216 = vmatpush1.bf16.msra.mxu0 0
        %6217 = vmatprep.subr.bf16.mxu0 0
        %6218 = vmatpush1.bf16.msra.mxu0 0
        %6219 = vmatprep.subr.bf16.mxu0 0
        %6220 = vmatpush1.bf16.msra.mxu0 0
        %6221 = vmatprep.mubr.bf16.mxu0 0
        %6222 = vmatmul.mubr.bf16.gmra.mrb[0].mxu0 %v6184
        %v6223 = vpop.f32.mrb[0].mxu0
        %v6224 = vadd.f32 0.0, %v6223
        %v6225 = vpop.f32.mrb[0].mxu0
        %v6226 = vpop.f32.mrb[0].mxu0
        %v6227 = vpop.f32.mrb[0].mxu0
        %6228 = vdwg.mxu0
        %6230 = vrot.lane.b32.xlu0 %v6002, 32
        %v6231 = vpop.permute.xlu0 %6230
        %6234 = vrot.lane.b32.xlu0 %v6113, 64
        %v6235 = vpop.permute.xlu0 %6234
        %6238 = vrot.lane.b32.xlu0 %v6224, 96
        %v6239 = vpop.permute.xlu0 %6238
        %v6241 = vsel %vm1435, %v5888, %v6231
        %v6242 = vsel %vm1892, %v6241, %v6235
        %v6243 = vsel %vm1894, %v6242, %v6239
        %v6244 = vpack.c.bf16 %v6243, %v6243
        %v6246 = vlaneseq
        %v6247 = vshrl.u32 %v6246, 7
        %v6248 = vsub.s32 0, %v6247
        %v6249 = vrot.slane %v5784, %v6248
        %v6267 = vunpack.c.l.b16 %v5767
        %v6268 = vunpack.c.l.b16 %v5768
        %v6269 = vunpack.c.l.b16 %v5769
        %v6270 = vunpack.c.l.b16 %v5770
        %v6271 = vunpack.c.l.b16 %v5771
        %v6272 = vunpack.c.l.b16 %v5772
        %v6273 = vunpack.c.l.b16 %v5773
        %v6274 = vunpack.c.l.b16 %v5774
        %v6275 = vunpack.c.l.b16 %v5775
        %v6276 = vunpack.c.l.b16 %v5776
        %v6277 = vunpack.c.l.b16 %v5777
        %v6278 = vunpack.c.l.b16 %v5778
        %v6279 = vunpack.c.l.b16 %v5779
        %v6280 = vunpack.c.l.b16 %v5780
        %v6281 = vunpack.c.l.b16 %v5781
        %v6282 = vunpack.c.l.b16 %v5782
        %v6283 = vpack.c.b16 %v6268, %v6267
        %v6284 = vpack.c.b16 %v6270, %v6269
        %v6285 = vpack.c.b16 %v6272, %v6271
        %v6286 = vpack.c.b16 %v6274, %v6273
        %v6287 = vpack.c.b16 %v6276, %v6275
        %v6288 = vpack.c.b16 %v6278, %v6277
        %v6289 = vpack.c.b16 %v6280, %v6279
        %v6290 = vpack.c.b16 %v6282, %v6281
        %6299 = vmatprep.subr.bf16.mxu0 0
        %6300 = vmatpush1.bf16.msra.mxu0 %v6283
        %6301 = vmatprep.subr.bf16.mxu0 0
        %6302 = vmatpush1.bf16.msra.mxu0 %v6284
        %6303 = vmatprep.subr.bf16.mxu0 0
        %6304 = vmatpush1.bf16.msra.mxu0 %v6285
        %6305 = vmatprep.subr.bf16.mxu0 0
        %6306 = vmatpush1.bf16.msra.mxu0 %v6286
        %6307 = vmatprep.subr.bf16.mxu0 0
        %6308 = vmatpush1.bf16.msra.mxu0 %v6287
        %6309 = vmatprep.subr.bf16.mxu0 0
        %6310 = vmatpush1.bf16.msra.mxu0 %v6288
        %6311 = vmatprep.subr.bf16.mxu0 0
        %6312 = vmatpush1.bf16.msra.mxu0 %v6289
        %6313 = vmatprep.subr.bf16.mxu0 0
        %6314 = vmatpush1.bf16.msra.mxu0 %v6290
        %6315 = vmatprep.subr.bf16.mxu0 0
        %6316 = vmatpush1.bf16.msra.mxu0 0
        %6317 = vmatprep.subr.bf16.mxu0 0
        %6318 = vmatpush1.bf16.msra.mxu0 0
        %6319 = vmatprep.subr.bf16.mxu0 0
        %6320 = vmatpush1.bf16.msra.mxu0 0
        %6321 = vmatprep.subr.bf16.mxu0 0
        %6322 = vmatpush1.bf16.msra.mxu0 0
        %6323 = vmatprep.subr.bf16.mxu0 0
        %6324 = vmatpush1.bf16.msra.mxu0 0
        %6325 = vmatprep.subr.bf16.mxu0 0
        %6326 = vmatpush1.bf16.msra.mxu0 0
        %6327 = vmatprep.subr.bf16.mxu0 0
        %6328 = vmatpush1.bf16.msra.mxu0 0
        %6329 = vmatprep.subr.bf16.mxu0 0
        %6330 = vmatpush1.bf16.msra.mxu0 0
        %6331 = vmatprep.mubr.bf16.mxu0 0
        %6332 = vmatmul.mubr.bf16.gmra.mrb[0].mxu0 %v6244
        %v6333 = vpop.f32.mrb[0].mxu0
        %v6334 = vadd.f32 %v6249, %v6333
        %v6335 = vpop.f32.mrb[0].mxu0
        %v6336 = vpop.f32.mrb[0].mxu0
        %v6337 = vpop.f32.mrb[0].mxu0
        %6338 = vdwg.mxu0
        %v6339 = vadd.f32 %v5468, %v6334
        %s6340 = scalar_lea.vmem [#allocation13], 1
        %v6341 = vld [vmem:[%s6340] sm:$0x1]
        %s6342 = scalar_lea.vmem [#allocation14], 1
        %v6343 = vld [vmem:[%s6342] sm:$0x1]
        %6344 = vadd.xlane.f32.xlu0 %v6339
        %v6345 = vpop.xlane.xlu0 %6344
        %v6346 = vmul.f32 %v6345, %v1125
        %v6347 = vsub.f32 %v6339, %v6346
        %v6348 = vmul.f32 %v6347, %v6347
        %6349 = vadd.xlane.f32.xlu0 %v6348
        %v6350 = vpop.xlane.xlu0 %6349
        %v6351 = vmul.f32 %v6350, 0.007874016
        %v6352 = vrsqrt.pop %v6351
        %v6353 = vmul.f32 %v6351, %v6352
        %vm6354 = vcmp.eq.f32.partialorder %v6351, inf
        %v6355 = vsel %vm6354, %v6351, %v6353
        %vm6356 = vcmp.eq.f32.partialorder %v6351, 0.0
        %v6357 = vand.u32 %v6351, 2147483648
        %v6358 = vsel %vm6356, %v6357, %v6355
        %v6359 = vadd.f32 %v6358, 1e-06
        %v6360 = vrcp.pop %v6359
        %v6362 = vlaneseq
        %v6363 = vshrl.u32 %v6362, 7
        %v6364 = vsub.s32 0, %v6363
        %v6365 = vrot.slane %v6341, %v6364
        %v6367 = vmul.f32 %v6365, %v6347
        %v6368 = vmul.f32 %v6367, %v6360
        %v6370 = vlaneseq
        %v6371 = vshrl.u32 %v6370, 7
        %v6372 = vsub.s32 0, %v6371
        %v6373 = vrot.slane %v6343, %v6372
        %v6375 = vadd.f32 %v6368, %v6373
        %v6376 = vpack.c.bf16 %v6375, %v6375
        %s6377 = scalar_lea.vmem [#allocation16], 64
        %v6378 = vld [vmem:[%s6377] sm:$0xf]
        %v6379 = vld [vmem:[%s6377 + $0x4] sm:$0xf]
        %v6380 = vld [vmem:[%s6377 + $0x8] sm:$0xf]
        %v6381 = vld [vmem:[%s6377 + $0xc] sm:$0xf]
        %v6382 = vld [vmem:[%s6377 + $0x10] sm:$0xf]
        %v6383 = vld [vmem:[%s6377 + $0x14] sm:$0xf]
        %v6384 = vld [vmem:[%s6377 + $0x18] sm:$0xf]
        %v6385 = vld [vmem:[%s6377 + $0x1c] sm:$0xf]
        %v6386 = vld [vmem:[%s6377 + $0x20] sm:$0xf]
        %v6387 = vld [vmem:[%s6377 + $0x24] sm:$0xf]
        %v6388 = vld [vmem:[%s6377 + $0x28] sm:$0xf]
        %v6389 = vld [vmem:[%s6377 + $0x2c] sm:$0xf]
        %v6390 = vld [vmem:[%s6377 + $0x30] sm:$0xf]
        %v6391 = vld [vmem:[%s6377 + $0x34] sm:$0xf]
        %v6392 = vld [vmem:[%s6377 + $0x38] sm:$0xf]
        %v6393 = vld [vmem:[%s6377 + $0x3c] sm:$0xf]
        %s6394 = scalar_lea.vmem [#allocation17], 1
        %v6395 = vld [vmem:[%s6394] sm:$0x1]
        %v6397 = vlaneseq
        %v6398 = vshrl.u32 %v6397, 7
        %v6399 = vsub.s32 0, %v6398
        %v6400 = vrot.slane %v6395, %v6399
        %v6418 = vunpack.c.l.b16 %v6378
        %v6419 = vunpack.c.l.b16 %v6379
        %v6420 = vunpack.c.l.b16 %v6380
        %v6421 = vunpack.c.l.b16 %v6381
        %v6422 = vunpack.c.l.b16 %v6382
        %v6423 = vunpack.c.l.b16 %v6383
        %v6424 = vunpack.c.l.b16 %v6384
        %v6425 = vunpack.c.l.b16 %v6385
        %v6426 = vunpack.c.l.b16 %v6386
        %v6427 = vunpack.c.l.b16 %v6387
        %v6428 = vunpack.c.l.b16 %v6388
        %v6429 = vunpack.c.l.b16 %v6389
        %v6430 = vunpack.c.l.b16 %v6390
        %v6431 = vunpack.c.l.b16 %v6391
        %v6432 = vunpack.c.l.b16 %v6392
        %v6433 = vunpack.c.l.b16 %v6393
        %v6434 = vpack.c.b16 %v6419, %v6418
        %v6435 = vpack.c.b16 %v6421, %v6420
        %v6436 = vpack.c.b16 %v6423, %v6422
        %v6437 = vpack.c.b16 %v6425, %v6424
        %v6438 = vpack.c.b16 %v6427, %v6426
        %v6439 = vpack.c.b16 %v6429, %v6428
        %v6440 = vpack.c.b16 %v6431, %v6430
        %v6441 = vpack.c.b16 %v6433, %v6432
        %6450 = vmatprep.subr.bf16.mxu0 0
        %6451 = vmatpush1.bf16.msra.mxu0 %v6434
        %6452 = vmatprep.subr.bf16.mxu0 0
        %6453 = vmatpush1.bf16.msra.mxu0 %v6435
        %6454 = vmatprep.subr.bf16.mxu0 0
        %6455 = vmatpush1.bf16.msra.mxu0 %v6436
        %6456 = vmatprep.subr.bf16.mxu0 0
        %6457 = vmatpush1.bf16.msra.mxu0 %v6437
        %6458 = vmatprep.subr.bf16.mxu0 0
        %6459 = vmatpush1.bf16.msra.mxu0 %v6438
        %6460 = vmatprep.subr.bf16.mxu0 0
        %6461 = vmatpush1.bf16.msra.mxu0 %v6439
        %6462 = vmatprep.subr.bf16.mxu0 0
        %6463 = vmatpush1.bf16.msra.mxu0 %v6440
        %6464 = vmatprep.subr.bf16.mxu0 0
        %6465 = vmatpush1.bf16.msra.mxu0 %v6441
        %6466 = vmatprep.subr.bf16.mxu0 0
        %6467 = vmatpush1.bf16.msra.mxu0 0
        %6468 = vmatprep.subr.bf16.mxu0 0
        %6469 = vmatpush1.bf16.msra.mxu0 0
        %6470 = vmatprep.subr.bf16.mxu0 0
        %6471 = vmatpush1.bf16.msra.mxu0 0
        %6472 = vmatprep.subr.bf16.mxu0 0
        %6473 = vmatpush1.bf16.msra.mxu0 0
        %6474 = vmatprep.subr.bf16.mxu0 0
        %6475 = vmatpush1.bf16.msra.mxu0 0
        %6476 = vmatprep.subr.bf16.mxu0 0
        %6477 = vmatpush1.bf16.msra.mxu0 0
        %6478 = vmatprep.subr.bf16.mxu0 0
        %6479 = vmatpush1.bf16.msra.mxu0 0
        %6480 = vmatprep.subr.bf16.mxu0 0
        %6481 = vmatpush1.bf16.msra.mxu0 0
        %6482 = vmatprep.mubr.bf16.mxu0 0
        %6483 = vmatmul.mubr.bf16.gmra.mrb[0].mxu0 %v6376
        %v6484 = vpop.f32.mrb[0].mxu0
        %v6485 = vadd.f32 %v6400, %v6484
        %v6486 = vpop.f32.mrb[0].mxu0
        %v6487 = vpop.f32.mrb[0].mxu0
        %v6488 = vpop.f32.mrb[0].mxu0
        %6489 = vdwg.mxu0
        %s6490 = scalar_lea.vmem %s14, 128
        %v6491 = vld [vmem:[%s6490] sm:$0xff]
        %v6492 = vld [vmem:[%s6490 + $0x8] sm:$0xff]
        %v6493 = vld [vmem:[%s6490 + $0x10] sm:$0xff]
        %v6494 = vld [vmem:[%s6490 + $0x18] sm:$0xff]
        %v6495 = vld [vmem:[%s6490 + $0x20] sm:$0xff]
        %v6496 = vld [vmem:[%s6490 + $0x28] sm:$0xff]
        %v6497 = vld [vmem:[%s6490 + $0x30] sm:$0xff]
        %v6498 = vld [vmem:[%s6490 + $0x38] sm:$0xff]
        %v6499 = vld [vmem:[%s6490 + $0x40] sm:$0xff]
        %v6500 = vld [vmem:[%s6490 + $0x48] sm:$0xff]
        %v6501 = vld [vmem:[%s6490 + $0x50] sm:$0xff]
        %v6502 = vld [vmem:[%s6490 + $0x58] sm:$0xff]
        %v6503 = vld [vmem:[%s6490 + $0x60] sm:$0xff]
        %v6504 = vld [vmem:[%s6490 + $0x68] sm:$0xff]
        %v6505 = vld [vmem:[%s6490 + $0x70] sm:$0xff]
        %v6506 = vld [vmem:[%s6490 + $0x78] sm:$0xff]
        %s6507 = scalar_lea.vmem [#allocation19], 2
        %v6508 = vld [vmem:[%s6507] sm:$0x3]
        %v6510 = vlaneseq
        %v6511 = vshrl.u32 %v6510, 7
        %v6512 = vsub.s32 0, %v6511
        %v6513 = vrot.slane %v6508, %v6512
        %v6514 = vlaneseq
        %v6515 = vshrl.u32 %v6514, 7
        %v6516 = vsub.s32 1, %v6515
        %v6517 = vrot.slane %v6508, %v6516
        %v6536 = vunpack.c.l.b16 %v6491
        %v6537 = vunpack.c.h.b16 %v6491
        %v6538 = vunpack.c.l.b16 %v6492
        %v6539 = vunpack.c.h.b16 %v6492
        %v6540 = vunpack.c.l.b16 %v6493
        %v6541 = vunpack.c.h.b16 %v6493
        %v6542 = vunpack.c.l.b16 %v6494
        %v6543 = vunpack.c.h.b16 %v6494
        %v6544 = vunpack.c.l.b16 %v6495
        %v6545 = vunpack.c.h.b16 %v6495
        %v6546 = vunpack.c.l.b16 %v6496
        %v6547 = vunpack.c.h.b16 %v6496
        %v6548 = vunpack.c.l.b16 %v6497
        %v6549 = vunpack.c.h.b16 %v6497
        %v6550 = vunpack.c.l.b16 %v6498
        %v6551 = vunpack.c.h.b16 %v6498
        %v6552 = vunpack.c.l.b16 %v6499
        %v6553 = vunpack.c.h.b16 %v6499
        %v6554 = vunpack.c.l.b16 %v6500
        %v6555 = vunpack.c.h.b16 %v6500
        %v6556 = vunpack.c.l.b16 %v6501
        %v6557 = vunpack.c.h.b16 %v6501
        %v6558 = vunpack.c.l.b16 %v6502
        %v6559 = vunpack.c.h.b16 %v6502
        %v6560 = vunpack.c.l.b16 %v6503
        %v6561 = vunpack.c.h.b16 %v6503
        %v6562 = vunpack.c.l.b16 %v6504
        %v6563 = vunpack.c.h.b16 %v6504
        %v6564 = vunpack.c.l.b16 %v6505
        %v6565 = vunpack.c.h.b16 %v6505
        %v6566 = vunpack.c.l.b16 %v6506
        %v6567 = vunpack.c.h.b16 %v6506
        %v6568 = vpack.c.b16 %v6538, %v6536
        %v6569 = vpack.c.b16 %v6539, %v6537
        %v6570 = vpack.c.b16 %v6542, %v6540
        %v6571 = vpack.c.b16 %v6543, %v6541
        %v6572 = vpack.c.b16 %v6546, %v6544
        %v6573 = vpack.c.b16 %v6547, %v6545
        %v6574 = vpack.c.b16 %v6550, %v6548
        %v6575 = vpack.c.b16 %v6551, %v6549
        %v6576 = vpack.c.b16 %v6554, %v6552
        %v6577 = vpack.c.b16 %v6555, %v6553
        %v6578 = vpack.c.b16 %v6558, %v6556
        %v6579 = vpack.c.b16 %v6559, %v6557
        %v6580 = vpack.c.b16 %v6562, %v6560
        %v6581 = vpack.c.b16 %v6563, %v6561
        %v6582 = vpack.c.b16 %v6566, %v6564
        %v6583 = vpack.c.b16 %v6567, %v6565
        %6600 = vmatprep.subr.bf16.mxu0 %v6569
        %6601 = vmatpush1.bf16.msra.mxu0 %v6568
        %6602 = vmatprep.subr.bf16.mxu0 %v6571
        %6603 = vmatpush1.bf16.msra.mxu0 %v6570
        %6604 = vmatprep.subr.bf16.mxu0 %v6573
        %6605 = vmatpush1.bf16.msra.mxu0 %v6572
        %6606 = vmatprep.subr.bf16.mxu0 %v6575
        %6607 = vmatpush1.bf16.msra.mxu0 %v6574
        %6608 = vmatprep.subr.bf16.mxu0 %v6577
        %6609 = vmatpush1.bf16.msra.mxu0 %v6576
        %6610 = vmatprep.subr.bf16.mxu0 %v6579
        %6611 = vmatpush1.bf16.msra.mxu0 %v6578
        %6612 = vmatprep.subr.bf16.mxu0 %v6581
        %6613 = vmatpush1.bf16.msra.mxu0 %v6580
        %6614 = vmatprep.subr.bf16.mxu0 %v6583
        %6615 = vmatpush1.bf16.msra.mxu0 %v6582
        %6616 = vmatprep.subr.bf16.mxu0 0
        %6617 = vmatpush1.bf16.msra.mxu0 0
        %6618 = vmatprep.subr.bf16.mxu0 0
        %6619 = vmatpush1.bf16.msra.mxu0 0
        %6620 = vmatprep.subr.bf16.mxu0 0
        %6621 = vmatpush1.bf16.msra.mxu0 0
        %6622 = vmatprep.subr.bf16.mxu0 0
        %6623 = vmatpush1.bf16.msra.mxu0 0
        %6624 = vmatprep.subr.bf16.mxu0 0
        %6625 = vmatpush1.bf16.msra.mxu0 0
        %6626 = vmatprep.subr.bf16.mxu0 0
        %6627 = vmatpush1.bf16.msra.mxu0 0
        %6628 = vmatprep.subr.bf16.mxu0 0
        %6629 = vmatpush1.bf16.msra.mxu0 0
        %6630 = vmatprep.subr.bf16.mxu0 0
        %6631 = vmatpush1.bf16.msra.mxu0 0
        %6632 = vmatprep.mubr.bf16.mxu0 0
        %6633 = vmatmul.mubr.bf16.gmra.mrb[0].mxu0 %v1116
        %v6634 = vpop.f32.mrb[0].mxu0
        %v6635 = vadd.f32 %v6513, %v6634
        %v6636 = vpop.f32.mrb[0].mxu0
        %v6637 = vadd.f32 %v6517, %v6636
        %v6638 = vpop.f32.mrb[0].mxu0
        %v6639 = vadd.f32 %v6513, %v6638
        %v6640 = vpop.f32.mrb[0].mxu0
        %v6641 = vadd.f32 %v6517, %v6640
        %6642 = vdwg.mxu0
        %s6643 = scalar_lea.vmem [#allocation20], 64
        %v6644 = vld [vmem:[%s6643] sm:$0xf]
        %v6645 = vld [vmem:[%s6643 + $0x4] sm:$0xf]
        %v6646 = vld [vmem:[%s6643 + $0x8] sm:$0xf]
        %v6647 = vld [vmem:[%s6643 + $0xc] sm:$0xf]
        %v6648 = vld [vmem:[%s6643 + $0x10] sm:$0xf]
        %v6649 = vld [vmem:[%s6643 + $0x14] sm:$0xf]
        %v6650 = vld [vmem:[%s6643 + $0x18] sm:$0xf]
        %v6651 = vld [vmem:[%s6643 + $0x1c] sm:$0xf]
        %v6652 = vld [vmem:[%s6643 + $0x20] sm:$0xf]
        %v6653 = vld [vmem:[%s6643 + $0x24] sm:$0xf]
        %v6654 = vld [vmem:[%s6643 + $0x28] sm:$0xf]
        %v6655 = vld [vmem:[%s6643 + $0x2c] sm:$0xf]
        %v6656 = vld [vmem:[%s6643 + $0x30] sm:$0xf]
        %v6657 = vld [vmem:[%s6643 + $0x34] sm:$0xf]
        %v6658 = vld [vmem:[%s6643 + $0x38] sm:$0xf]
        %v6659 = vld [vmem:[%s6643 + $0x3c] sm:$0xf]
        %s6660 = scalar_lea.vmem [#allocation22], 1
        %v6661 = vld [vmem:[%s6660] sm:$0x1]
        %v6662 = vpack.c.bf16 %v6485, %v6485
        %v6663 = vpack.c.bf16 %v6639, %v6635
        %v6664 = vpack.c.bf16 %v6641, %v6637
        %v6666 = vsel %vm1435, %v6662, 0
        %v6669 = vsel %vm1435, %v6663, 0
        %6671 = vmatprep.subr.bf16.mxu0 0
        %6672 = vmatpush1.bf16.xpose.msra.mxu0 %v6669
        %6673 = vmatprep.subr.bf16.mxu0 0
        %6674 = vmatpush1.bf16.xpose.msra.mxu0 0
        %6675 = vmatprep.subr.bf16.mxu0 0
        %6676 = vmatpush1.bf16.xpose.msra.mxu0 0
        %6677 = vmatprep.subr.bf16.mxu0 0
        %6678 = vmatpush1.bf16.xpose.msra.mxu0 0
        %6679 = vmatprep.subr.bf16.mxu0 0
        %6680 = vmatpush1.bf16.xpose.msra.mxu0 0
        %6681 = vmatprep.subr.bf16.mxu0 0
        %6682 = vmatpush1.bf16.xpose.msra.mxu0 0
        %6683 = vmatprep.subr.bf16.mxu0 0
        %6684 = vmatpush1.bf16.xpose.msra.mxu0 0
        %6685 = vmatprep.subr.bf16.mxu0 0
        %6686 = vmatpush1.bf16.xpose.msra.mxu0 0
        %6687 = vmatprep.subr.bf16.mxu0 0
        %6688 = vmatpush1.bf16.xpose.msra.mxu0 0
        %6689 = vmatprep.subr.bf16.mxu0 0
        %6690 = vmatpush1.bf16.xpose.msra.mxu0 0
        %6691 = vmatprep.subr.bf16.mxu0 0
        %6692 = vmatpush1.bf16.xpose.msra.mxu0 0
        %6693 = vmatprep.subr.bf16.mxu0 0
        %6694 = vmatpush1.bf16.xpose.msra.mxu0 0
        %6695 = vmatprep.subr.bf16.mxu0 0
        %6696 = vmatpush1.bf16.xpose.msra.mxu0 0
        %6697 = vmatprep.subr.bf16.mxu0 0
        %6698 = vmatpush1.bf16.xpose.msra.mxu0 0
        %6699 = vmatprep.subr.bf16.mxu0 0
        %6700 = vmatpush1.bf16.xpose.msra.mxu0 0
        %6701 = vmatprep.subr.bf16.mxu0 0
        %6702 = vmatpush1.bf16.xpose.msra.mxu0 0
        %6703 = vmatprep.mubr.bf16.mxu0 0
        %6704 = vmatmul.mubr.bf16.gmra.mrb[0].mxu0 %v6666
        %v6705 = vpop.f32.mrb[0].mxu0
        %v6706 = vadd.f32 0.0, %v6705
        %v6707 = vpop.f32.mrb[0].mxu0
        %v6708 = vpop.f32.mrb[0].mxu0
        %v6709 = vpop.f32.mrb[0].mxu0
        %6710 = vdwg.mxu0
        %v6711 = vsel %vm2360, -1e+09, %v6706
        %v6712 = vsel %vm2362, %v6711, -inf
        %6713 = vmax.xlane.f32.xlu0 %v6712
        %v6714 = vpop.xlane.xlu0 %6713
        %v6715 = vsub.f32 %v6711, %v6714
        %v6716 = vmul.f32 %v6715, 1.442695
        %v6717 = vpow.pop %v6716
        %v6718 = vsel %vm2362, %v6717, 0.0
        %6719 = vadd.xlane.f32.xlu0 %v6718
        %v6720 = vpop.xlane.xlu0 %6719
        %v6721 = vrcp.pop %v6720
        %v6722 = vmul.f32 %v6717, %v6721
        %v6723 = vpack.c.bf16 %v6722, %v6722
        %v6725 = vsel %vm2362, %v6723, 0
        %v6728 = vsel %vm2378, %v6664, 0
        %6730 = vmatprep.subr.bf16.mxu0 0
        %6731 = vmatpush1.bf16.msra.mxu0 %v6728
        %6732 = vmatprep.subr.bf16.mxu0 0
        %6733 = vmatpush1.bf16.msra.mxu0 0
        %6734 = vmatprep.subr.bf16.mxu0 0
        %6735 = vmatpush1.bf16.msra.mxu0 0
        %6736 = vmatprep.subr.bf16.mxu0 0
        %6737 = vmatpush1.bf16.msra.mxu0 0
        %6738 = vmatprep.subr.bf16.mxu0 0
        %6739 = vmatpush1.bf16.msra.mxu0 0
        %6740 = vmatprep.subr.bf16.mxu0 0
        %6741 = vmatpush1.bf16.msra.mxu0 0
        %6742 = vmatprep.subr.bf16.mxu0 0
        %6743 = vmatpush1.bf16.msra.mxu0 0
        %6744 = vmatprep.subr.bf16.mxu0 0
        %6745 = vmatpush1.bf16.msra.mxu0 0
        %6746 = vmatprep.subr.bf16.mxu0 0
        %6747 = vmatpush1.bf16.msra.mxu0 0
        %6748 = vmatprep.subr.bf16.mxu0 0
        %6749 = vmatpush1.bf16.msra.mxu0 0
        %6750 = vmatprep.subr.bf16.mxu0 0
        %6751 = vmatpush1.bf16.msra.mxu0 0
        %6752 = vmatprep.subr.bf16.mxu0 0
        %6753 = vmatpush1.bf16.msra.mxu0 0
        %6754 = vmatprep.subr.bf16.mxu0 0
        %6755 = vmatpush1.bf16.msra.mxu0 0
        %6756 = vmatprep.subr.bf16.mxu0 0
        %6757 = vmatpush1.bf16.msra.mxu0 0
        %6758 = vmatprep.subr.bf16.mxu0 0
        %6759 = vmatpush1.bf16.msra.mxu0 0
        %6760 = vmatprep.subr.bf16.mxu0 0
        %6761 = vmatpush1.bf16.msra.mxu0 0
        %6762 = vmatprep.mubr.bf16.mxu0 0
        %6763 = vmatmul.mubr.bf16.gmra.mrb[0].mxu0 %v6725
        %v6764 = vpop.f32.mrb[0].mxu0
        %v6765 = vadd.f32 0.0, %v6764
        %v6766 = vpop.f32.mrb[0].mxu0
        %v6767 = vpop.f32.mrb[0].mxu0
        %v6768 = vpop.f32.mrb[0].mxu0
        %6769 = vdwg.mxu0
        %6771 = vrot.lane.b32.xlu0 %v6662, 96
        %v6772 = vpop.permute.xlu0 %6771
        %6774 = vrot.lane.b32.xlu0 %v6663, 96
        %v6775 = vpop.permute.xlu0 %6774
        %v6777 = vsel %vm1435, %v6772, 0
        %v6780 = vsel %vm1435, %v6775, 0
        %6782 = vmatprep.subr.bf16.mxu0 0
        %6783 = vmatpush1.bf16.xpose.msra.mxu0 %v6780
        %6784 = vmatprep.subr.bf16.mxu0 0
        %6785 = vmatpush1.bf16.xpose.msra.mxu0 0
        %6786 = vmatprep.subr.bf16.mxu0 0
        %6787 = vmatpush1.bf16.xpose.msra.mxu0 0
        %6788 = vmatprep.subr.bf16.mxu0 0
        %6789 = vmatpush1.bf16.xpose.msra.mxu0 0
        %6790 = vmatprep.subr.bf16.mxu0 0
        %6791 = vmatpush1.bf16.xpose.msra.mxu0 0
        %6792 = vmatprep.subr.bf16.mxu0 0
        %6793 = vmatpush1.bf16.xpose.msra.mxu0 0
        %6794 = vmatprep.subr.bf16.mxu0 0
        %6795 = vmatpush1.bf16.xpose.msra.mxu0 0
        %6796 = vmatprep.subr.bf16.mxu0 0
        %6797 = vmatpush1.bf16.xpose.msra.mxu0 0
        %6798 = vmatprep.subr.bf16.mxu0 0
        %6799 = vmatpush1.bf16.xpose.msra.mxu0 0
        %6800 = vmatprep.subr.bf16.mxu0 0
        %6801 = vmatpush1.bf16.xpose.msra.mxu0 0
        %6802 = vmatprep.subr.bf16.mxu0 0
        %6803 = vmatpush1.bf16.xpose.msra.mxu0 0
        %6804 = vmatprep.subr.bf16.mxu0 0
        %6805 = vmatpush1.bf16.xpose.msra.mxu0 0
        %6806 = vmatprep.subr.bf16.mxu0 0
        %6807 = vmatpush1.bf16.xpose.msra.mxu0 0
        %6808 = vmatprep.subr.bf16.mxu0 0
        %6809 = vmatpush1.bf16.xpose.msra.mxu0 0
        %6810 = vmatprep.subr.bf16.mxu0 0
        %6811 = vmatpush1.bf16.xpose.msra.mxu0 0
        %6812 = vmatprep.subr.bf16.mxu0 0
        %6813 = vmatpush1.bf16.xpose.msra.mxu0 0
        %6814 = vmatprep.mubr.bf16.mxu0 0
        %6815 = vmatmul.mubr.bf16.gmra.mrb[0].mxu0 %v6777
        %v6816 = vpop.f32.mrb[0].mxu0
        %v6817 = vadd.f32 0.0, %v6816
        %v6818 = vpop.f32.mrb[0].mxu0
        %v6819 = vpop.f32.mrb[0].mxu0
        %v6820 = vpop.f32.mrb[0].mxu0
        %6821 = vdwg.mxu0
        %v6822 = vsel %vm2360, -1e+09, %v6817
        %v6823 = vsel %vm2362, %v6822, -inf
        %6824 = vmax.xlane.f32.xlu0 %v6823
        %v6825 = vpop.xlane.xlu0 %6824
        %v6826 = vsub.f32 %v6822, %v6825
        %v6827 = vmul.f32 %v6826, 1.442695
        %v6828 = vpow.pop %v6827
        %v6829 = vsel %vm2362, %v6828, 0.0
        %6830 = vadd.xlane.f32.xlu0 %v6829
        %v6831 = vpop.xlane.xlu0 %6830
        %v6832 = vrcp.pop %v6831
        %v6833 = vmul.f32 %v6828, %v6832
        %v6834 = vpack.c.bf16 %v6833, %v6833
        %6836 = vrot.lane.b32.xlu0 %v6664, 96
        %v6837 = vpop.permute.xlu0 %6836
        %v6839 = vsel %vm2362, %v6834, 0
        %v6842 = vsel %vm2378, %v6837, 0
        %6844 = vmatprep.subr.bf16.mxu0 0
        %6845 = vmatpush1.bf16.msra.mxu0 %v6842
        %6846 = vmatprep.subr.bf16.mxu0 0
        %6847 = vmatpush1.bf16.msra.mxu0 0
        %6848 = vmatprep.subr.bf16.mxu0 0
        %6849 = vmatpush1.bf16.msra.mxu0 0
        %6850 = vmatprep.subr.bf16.mxu0 0
        %6851 = vmatpush1.bf16.msra.mxu0 0
        %6852 = vmatprep.subr.bf16.mxu0 0
        %6853 = vmatpush1.bf16.msra.mxu0 0
        %6854 = vmatprep.subr.bf16.mxu0 0
        %6855 = vmatpush1.bf16.msra.mxu0 0
        %6856 = vmatprep.subr.bf16.mxu0 0
        %6857 = vmatpush1.bf16.msra.mxu0 0
        %6858 = vmatprep.subr.bf16.mxu0 0
        %6859 = vmatpush1.bf16.msra.mxu0 0
        %6860 = vmatprep.subr.bf16.mxu0 0
        %6861 = vmatpush1.bf16.msra.mxu0 0
        %6862 = vmatprep.subr.bf16.mxu0 0
        %6863 = vmatpush1.bf16.msra.mxu0 0
        %6864 = vmatprep.subr.bf16.mxu0 0
        %6865 = vmatpush1.bf16.msra.mxu0 0
        %6866 = vmatprep.subr.bf16.mxu0 0
        %6867 = vmatpush1.bf16.msra.mxu0 0
        %6868 = vmatprep.subr.bf16.mxu0 0
        %6869 = vmatpush1.bf16.msra.mxu0 0
        %6870 = vmatprep.subr.bf16.mxu0 0
        %6871 = vmatpush1.bf16.msra.mxu0 0
        %6872 = vmatprep.subr.bf16.mxu0 0
        %6873 = vmatpush1.bf16.msra.mxu0 0
        %6874 = vmatprep.subr.bf16.mxu0 0
        %6875 = vmatpush1.bf16.msra.mxu0 0
        %6876 = vmatprep.mubr.bf16.mxu0 0
        %6877 = vmatmul.mubr.bf16.gmra.mrb[0].mxu0 %v6839
        %v6878 = vpop.f32.mrb[0].mxu0
        %v6879 = vadd.f32 0.0, %v6878
        %v6880 = vpop.f32.mrb[0].mxu0
        %v6881 = vpop.f32.mrb[0].mxu0
        %v6882 = vpop.f32.mrb[0].mxu0
        %6883 = vdwg.mxu0
        %6884 = vrot.lane.b32.xlu0 %v6662, 64
        %v6885 = vpop.permute.xlu0 %6884
        %6886 = vrot.lane.b32.xlu0 %v6663, 64
        %v6887 = vpop.permute.xlu0 %6886
        %v6889 = vsel %vm1435, %v6885, 0
        %v6892 = vsel %vm1435, %v6887, 0
        %6894 = vmatprep.subr.bf16.mxu0 0
        %6895 = vmatpush1.bf16.xpose.msra.mxu0 %v6892
        %6896 = vmatprep.subr.bf16.mxu0 0
        %6897 = vmatpush1.bf16.xpose.msra.mxu0 0
        %6898 = vmatprep.subr.bf16.mxu0 0
        %6899 = vmatpush1.bf16.xpose.msra.mxu0 0
        %6900 = vmatprep.subr.bf16.mxu0 0
        %6901 = vmatpush1.bf16.xpose.msra.mxu0 0
        %6902 = vmatprep.subr.bf16.mxu0 0
        %6903 = vmatpush1.bf16.xpose.msra.mxu0 0
        %6904 = vmatprep.subr.bf16.mxu0 0
        %6905 = vmatpush1.bf16.xpose.msra.mxu0 0
        %6906 = vmatprep.subr.bf16.mxu0 0
        %6907 = vmatpush1.bf16.xpose.msra.mxu0 0
        %6908 = vmatprep.subr.bf16.mxu0 0
        %6909 = vmatpush1.bf16.xpose.msra.mxu0 0
        %6910 = vmatprep.subr.bf16.mxu0 0
        %6911 = vmatpush1.bf16.xpose.msra.mxu0 0
        %6912 = vmatprep.subr.bf16.mxu0 0
        %6913 = vmatpush1.bf16.xpose.msra.mxu0 0
        %6914 = vmatprep.subr.bf16.mxu0 0
        %6915 = vmatpush1.bf16.xpose.msra.mxu0 0
        %6916 = vmatprep.subr.bf16.mxu0 0
        %6917 = vmatpush1.bf16.xpose.msra.mxu0 0
        %6918 = vmatprep.subr.bf16.mxu0 0
        %6919 = vmatpush1.bf16.xpose.msra.mxu0 0
        %6920 = vmatprep.subr.bf16.mxu0 0
        %6921 = vmatpush1.bf16.xpose.msra.mxu0 0
        %6922 = vmatprep.subr.bf16.mxu0 0
        %6923 = vmatpush1.bf16.xpose.msra.mxu0 0
        %6924 = vmatprep.subr.bf16.mxu0 0
        %6925 = vmatpush1.bf16.xpose.msra.mxu0 0
        %6926 = vmatprep.mubr.bf16.mxu0 0
        %6927 = vmatmul.mubr.bf16.gmra.mrb[0].mxu0 %v6889
        %v6928 = vpop.f32.mrb[0].mxu0
        %v6929 = vadd.f32 0.0, %v6928
        %v6930 = vpop.f32.mrb[0].mxu0
        %v6931 = vpop.f32.mrb[0].mxu0
        %v6932 = vpop.f32.mrb[0].mxu0
        %6933 = vdwg.mxu0
        %v6934 = vsel %vm2360, -1e+09, %v6929
        %v6935 = vsel %vm2362, %v6934, -inf
        %6936 = vmax.xlane.f32.xlu0 %v6935
        %v6937 = vpop.xlane.xlu0 %6936
        %v6938 = vsub.f32 %v6934, %v6937
        %v6939 = vmul.f32 %v6938, 1.442695
        %v6940 = vpow.pop %v6939
        %v6941 = vsel %vm2362, %v6940, 0.0
        %6942 = vadd.xlane.f32.xlu0 %v6941
        %v6943 = vpop.xlane.xlu0 %6942
        %v6944 = vrcp.pop %v6943
        %v6945 = vmul.f32 %v6940, %v6944
        %v6946 = vpack.c.bf16 %v6945, %v6945
        %6947 = vrot.lane.b32.xlu0 %v6664, 64
        %v6948 = vpop.permute.xlu0 %6947
        %v6950 = vsel %vm2362, %v6946, 0
        %v6953 = vsel %vm2378, %v6948, 0
        %6955 = vmatprep.subr.bf16.mxu0 0
        %6956 = vmatpush1.bf16.msra.mxu0 %v6953
        %6957 = vmatprep.subr.bf16.mxu0 0
        %6958 = vmatpush1.bf16.msra.mxu0 0
        %6959 = vmatprep.subr.bf16.mxu0 0
        %6960 = vmatpush1.bf16.msra.mxu0 0
        %6961 = vmatprep.subr.bf16.mxu0 0
        %6962 = vmatpush1.bf16.msra.mxu0 0
        %6963 = vmatprep.subr.bf16.mxu0 0
        %6964 = vmatpush1.bf16.msra.mxu0 0
        %6965 = vmatprep.subr.bf16.mxu0 0
        %6966 = vmatpush1.bf16.msra.mxu0 0
        %6967 = vmatprep.subr.bf16.mxu0 0
        %6968 = vmatpush1.bf16.msra.mxu0 0
        %6969 = vmatprep.subr.bf16.mxu0 0
        %6970 = vmatpush1.bf16.msra.mxu0 0
        %6971 = vmatprep.subr.bf16.mxu0 0
        %6972 = vmatpush1.bf16.msra.mxu0 0
        %6973 = vmatprep.subr.bf16.mxu0 0
        %6974 = vmatpush1.bf16.msra.mxu0 0
        %6975 = vmatprep.subr.bf16.mxu0 0
        %6976 = vmatpush1.bf16.msra.mxu0 0
        %6977 = vmatprep.subr.bf16.mxu0 0
        %6978 = vmatpush1.bf16.msra.mxu0 0
        %6979 = vmatprep.subr.bf16.mxu0 0
        %6980 = vmatpush1.bf16.msra.mxu0 0
        %6981 = vmatprep.subr.bf16.mxu0 0
        %6982 = vmatpush1.bf16.msra.mxu0 0
        %6983 = vmatprep.subr.bf16.mxu0 0
        %6984 = vmatpush1.bf16.msra.mxu0 0
        %6985 = vmatprep.subr.bf16.mxu0 0
        %6986 = vmatpush1.bf16.msra.mxu0 0
        %6987 = vmatprep.mubr.bf16.mxu0 0
        %6988 = vmatmul.mubr.bf16.gmra.mrb[0].mxu0 %v6950
        %v6989 = vpop.f32.mrb[0].mxu0
        %v6990 = vadd.f32 0.0, %v6989
        %v6991 = vpop.f32.mrb[0].mxu0
        %v6992 = vpop.f32.mrb[0].mxu0
        %v6993 = vpop.f32.mrb[0].mxu0
        %6994 = vdwg.mxu0
        %6995 = vrot.lane.b32.xlu0 %v6662, 32
        %v6996 = vpop.permute.xlu0 %6995
        %6997 = vrot.lane.b32.xlu0 %v6663, 32
        %v6998 = vpop.permute.xlu0 %6997
        %v7000 = vsel %vm1435, %v6996, 0
        %v7003 = vsel %vm1435, %v6998, 0
        %7005 = vmatprep.subr.bf16.mxu0 0
        %7006 = vmatpush1.bf16.xpose.msra.mxu0 %v7003
        %7007 = vmatprep.subr.bf16.mxu0 0
        %7008 = vmatpush1.bf16.xpose.msra.mxu0 0
        %7009 = vmatprep.subr.bf16.mxu0 0
        %7010 = vmatpush1.bf16.xpose.msra.mxu0 0
        %7011 = vmatprep.subr.bf16.mxu0 0
        %7012 = vmatpush1.bf16.xpose.msra.mxu0 0
        %7013 = vmatprep.subr.bf16.mxu0 0
        %7014 = vmatpush1.bf16.xpose.msra.mxu0 0
        %7015 = vmatprep.subr.bf16.mxu0 0
        %7016 = vmatpush1.bf16.xpose.msra.mxu0 0
        %7017 = vmatprep.subr.bf16.mxu0 0
        %7018 = vmatpush1.bf16.xpose.msra.mxu0 0
        %7019 = vmatprep.subr.bf16.mxu0 0
        %7020 = vmatpush1.bf16.xpose.msra.mxu0 0
        %7021 = vmatprep.subr.bf16.mxu0 0
        %7022 = vmatpush1.bf16.xpose.msra.mxu0 0
        %7023 = vmatprep.subr.bf16.mxu0 0
        %7024 = vmatpush1.bf16.xpose.msra.mxu0 0
        %7025 = vmatprep.subr.bf16.mxu0 0
        %7026 = vmatpush1.bf16.xpose.msra.mxu0 0
        %7027 = vmatprep.subr.bf16.mxu0 0
        %7028 = vmatpush1.bf16.xpose.msra.mxu0 0
        %7029 = vmatprep.subr.bf16.mxu0 0
        %7030 = vmatpush1.bf16.xpose.msra.mxu0 0
        %7031 = vmatprep.subr.bf16.mxu0 0
        %7032 = vmatpush1.bf16.xpose.msra.mxu0 0
        %7033 = vmatprep.subr.bf16.mxu0 0
        %7034 = vmatpush1.bf16.xpose.msra.mxu0 0
        %7035 = vmatprep.subr.bf16.mxu0 0
        %7036 = vmatpush1.bf16.xpose.msra.mxu0 0
        %7037 = vmatprep.mubr.bf16.mxu0 0
        %7038 = vmatmul.mubr.bf16.gmra.mrb[0].mxu0 %v7000
        %v7039 = vpop.f32.mrb[0].mxu0
        %v7040 = vadd.f32 0.0, %v7039
        %v7041 = vpop.f32.mrb[0].mxu0
        %v7042 = vpop.f32.mrb[0].mxu0
        %v7043 = vpop.f32.mrb[0].mxu0
        %7044 = vdwg.mxu0
        %v7045 = vsel %vm2360, -1e+09, %v7040
        %v7046 = vsel %vm2362, %v7045, -inf
        %7047 = vmax.xlane.f32.xlu0 %v7046
        %v7048 = vpop.xlane.xlu0 %7047
        %v7049 = vsub.f32 %v7045, %v7048
        %v7050 = vmul.f32 %v7049, 1.442695
        %v7051 = vpow.pop %v7050
        %v7052 = vsel %vm2362, %v7051, 0.0
        %7053 = vadd.xlane.f32.xlu0 %v7052
        %v7054 = vpop.xlane.xlu0 %7053
        %v7055 = vrcp.pop %v7054
        %v7056 = vmul.f32 %v7051, %v7055
        %v7057 = vpack.c.bf16 %v7056, %v7056
        %7058 = vrot.lane.b32.xlu0 %v6664, 32
        %v7059 = vpop.permute.xlu0 %7058
        %v7061 = vsel %vm2362, %v7057, 0
        %v7064 = vsel %vm2378, %v7059, 0
        %7066 = vmatprep.subr.bf16.mxu0 0
        %7067 = vmatpush1.bf16.msra.mxu0 %v7064
        %7068 = vmatprep.subr.bf16.mxu0 0
        %7069 = vmatpush1.bf16.msra.mxu0 0
        %7070 = vmatprep.subr.bf16.mxu0 0
        %7071 = vmatpush1.bf16.msra.mxu0 0
        %7072 = vmatprep.subr.bf16.mxu0 0
        %7073 = vmatpush1.bf16.msra.mxu0 0
        %7074 = vmatprep.subr.bf16.mxu0 0
        %7075 = vmatpush1.bf16.msra.mxu0 0
        %7076 = vmatprep.subr.bf16.mxu0 0
        %7077 = vmatpush1.bf16.msra.mxu0 0
        %7078 = vmatprep.subr.bf16.mxu0 0
        %7079 = vmatpush1.bf16.msra.mxu0 0
        %7080 = vmatprep.subr.bf16.mxu0 0
        %7081 = vmatpush1.bf16.msra.mxu0 0
        %7082 = vmatprep.subr.bf16.mxu0 0
        %7083 = vmatpush1.bf16.msra.mxu0 0
        %7084 = vmatprep.subr.bf16.mxu0 0
        %7085 = vmatpush1.bf16.msra.mxu0 0
        %7086 = vmatprep.subr.bf16.mxu0 0
        %7087 = vmatpush1.bf16.msra.mxu0 0
        %7088 = vmatprep.subr.bf16.mxu0 0
        %7089 = vmatpush1.bf16.msra.mxu0 0
        %7090 = vmatprep.subr.bf16.mxu0 0
        %7091 = vmatpush1.bf16.msra.mxu0 0
        %7092 = vmatprep.subr.bf16.mxu0 0
        %7093 = vmatpush1.bf16.msra.mxu0 0
        %7094 = vmatprep.subr.bf16.mxu0 0
        %7095 = vmatpush1.bf16.msra.mxu0 0
        %7096 = vmatprep.subr.bf16.mxu0 0
        %7097 = vmatpush1.bf16.msra.mxu0 0
        %7098 = vmatprep.mubr.bf16.mxu0 0
        %7099 = vmatmul.mubr.bf16.gmra.mrb[0].mxu0 %v7061
        %v7100 = vpop.f32.mrb[0].mxu0
        %v7101 = vadd.f32 0.0, %v7100
        %v7102 = vpop.f32.mrb[0].mxu0
        %v7103 = vpop.f32.mrb[0].mxu0
        %v7104 = vpop.f32.mrb[0].mxu0
        %7105 = vdwg.mxu0
        %7107 = vrot.lane.b32.xlu0 %v6879, 32
        %v7108 = vpop.permute.xlu0 %7107
        %7111 = vrot.lane.b32.xlu0 %v6990, 64
        %v7112 = vpop.permute.xlu0 %7111
        %7115 = vrot.lane.b32.xlu0 %v7101, 96
        %v7116 = vpop.permute.xlu0 %7115
        %v7118 = vsel %vm1435, %v6765, %v7108
        %v7119 = vsel %vm1892, %v7118, %v7112
        %v7120 = vsel %vm1894, %v7119, %v7116
        %v7121 = vpack.c.bf16 %v7120, %v7120
        %v7123 = vlaneseq
        %v7124 = vshrl.u32 %v7123, 7
        %v7125 = vsub.s32 0, %v7124
        %v7126 = vrot.slane %v6661, %v7125
        %v7144 = vunpack.c.l.b16 %v6644
        %v7145 = vunpack.c.l.b16 %v6645
        %v7146 = vunpack.c.l.b16 %v6646
        %v7147 = vunpack.c.l.b16 %v6647
        %v7148 = vunpack.c.l.b16 %v6648
        %v7149 = vunpack.c.l.b16 %v6649
        %v7150 = vunpack.c.l.b16 %v6650
        %v7151 = vunpack.c.l.b16 %v6651
        %v7152 = vunpack.c.l.b16 %v6652
        %v7153 = vunpack.c.l.b16 %v6653
        %v7154 = vunpack.c.l.b16 %v6654
        %v7155 = vunpack.c.l.b16 %v6655
        %v7156 = vunpack.c.l.b16 %v6656
        %v7157 = vunpack.c.l.b16 %v6657
        %v7158 = vunpack.c.l.b16 %v6658
        %v7159 = vunpack.c.l.b16 %v6659
        %v7160 = vpack.c.b16 %v7145, %v7144
        %v7161 = vpack.c.b16 %v7147, %v7146
        %v7162 = vpack.c.b16 %v7149, %v7148
        %v7163 = vpack.c.b16 %v7151, %v7150
        %v7164 = vpack.c.b16 %v7153, %v7152
        %v7165 = vpack.c.b16 %v7155, %v7154
        %v7166 = vpack.c.b16 %v7157, %v7156
        %v7167 = vpack.c.b16 %v7159, %v7158
        %7176 = vmatprep.subr.bf16.mxu0 0
        %7177 = vmatpush1.bf16.msra.mxu0 %v7160
        %7178 = vmatprep.subr.bf16.mxu0 0
        %7179 = vmatpush1.bf16.msra.mxu0 %v7161
        %7180 = vmatprep.subr.bf16.mxu0 0
        %7181 = vmatpush1.bf16.msra.mxu0 %v7162
        %7182 = vmatprep.subr.bf16.mxu0 0
        %7183 = vmatpush1.bf16.msra.mxu0 %v7163
        %7184 = vmatprep.subr.bf16.mxu0 0
        %7185 = vmatpush1.bf16.msra.mxu0 %v7164
        %7186 = vmatprep.subr.bf16.mxu0 0
        %7187 = vmatpush1.bf16.msra.mxu0 %v7165
        %7188 = vmatprep.subr.bf16.mxu0 0
        %7189 = vmatpush1.bf16.msra.mxu0 %v7166
        %7190 = vmatprep.subr.bf16.mxu0 0
        %7191 = vmatpush1.bf16.msra.mxu0 %v7167
        %7192 = vmatprep.subr.bf16.mxu0 0
        %7193 = vmatpush1.bf16.msra.mxu0 0
        %7194 = vmatprep.subr.bf16.mxu0 0
        %7195 = vmatpush1.bf16.msra.mxu0 0
        %7196 = vmatprep.subr.bf16.mxu0 0
        %7197 = vmatpush1.bf16.msra.mxu0 0
        %7198 = vmatprep.subr.bf16.mxu0 0
        %7199 = vmatpush1.bf16.msra.mxu0 0
        %7200 = vmatprep.subr.bf16.mxu0 0
        %7201 = vmatpush1.bf16.msra.mxu0 0
        %7202 = vmatprep.subr.bf16.mxu0 0
        %7203 = vmatpush1.bf16.msra.mxu0 0
        %7204 = vmatprep.subr.bf16.mxu0 0
        %7205 = vmatpush1.bf16.msra.mxu0 0
        %7206 = vmatprep.subr.bf16.mxu0 0
        %7207 = vmatpush1.bf16.msra.mxu0 0
        %7208 = vmatprep.mubr.bf16.mxu0 0
        %7209 = vmatmul.mubr.bf16.gmra.mrb[0].mxu0 %v7121
        %v7210 = vpop.f32.mrb[0].mxu0
        %v7211 = vadd.f32 %v7126, %v7210
        %v7212 = vpop.f32.mrb[0].mxu0
        %v7213 = vpop.f32.mrb[0].mxu0
        %v7214 = vpop.f32.mrb[0].mxu0
        %7215 = vdwg.mxu0
        %v7216 = vadd.f32 %v6339, %v7211
        %s7217 = scalar_lea.vmem [#allocation23], 1
        %v7218 = vld [vmem:[%s7217] sm:$0x1]
        %s7219 = scalar_lea.vmem [#allocation25], 1
        %v7220 = vld [vmem:[%s7219] sm:$0x1]
        %7221 = vadd.xlane.f32.xlu0 %v7216
        %v7222 = vpop.xlane.xlu0 %7221
        %v7223 = vmul.f32 %v7222, %v1125
        %v7224 = vsub.f32 %v7216, %v7223
        %v7225 = vmul.f32 %v7224, %v7224
        %7226 = vadd.xlane.f32.xlu0 %v7225
        %v7227 = vpop.xlane.xlu0 %7226
        %v7228 = vmul.f32 %v7227, 0.007874016
        %v7229 = vrsqrt.pop %v7228
        %v7230 = vmul.f32 %v7228, %v7229
        %vm7231 = vcmp.eq.f32.partialorder %v7228, inf
        %v7232 = vsel %vm7231, %v7228, %v7230
        %vm7233 = vcmp.eq.f32.partialorder %v7228, 0.0
        %v7234 = vand.u32 %v7228, 2147483648
        %v7235 = vsel %vm7233, %v7234, %v7232
        %v7236 = vadd.f32 %v7235, 1e-06
        %v7237 = vrcp.pop %v7236
        %v7239 = vlaneseq
        %v7240 = vshrl.u32 %v7239, 7
        %v7241 = vsub.s32 0, %v7240
        %v7242 = vrot.slane %v7218, %v7241
        %v7244 = vmul.f32 %v7242, %v7224
        %v7245 = vmul.f32 %v7244, %v7237
        %v7247 = vlaneseq
        %v7248 = vshrl.u32 %v7247, 7
        %v7249 = vsub.s32 0, %v7248
        %v7250 = vrot.slane %v7220, %v7249
        %v7252 = vadd.f32 %v7245, %v7250
        %v7253 = vpack.c.bf16 %v7252, %v7252
        %s7254 = scalar_lea.vmem [#allocation26], 1024
        %v7255 = vld [vmem:[%s7254] sm:$0xff]
        %v7256 = vld [vmem:[%s7254 + $0x8] sm:$0xff]
        %v7257 = vld [vmem:[%s7254 + $0x10] sm:$0xff]
        %v7258 = vld [vmem:[%s7254 + $0x18] sm:$0xff]
        %v7259 = vld [vmem:[%s7254 + $0x20] sm:$0xff]
        %v7260 = vld [vmem:[%s7254 + $0x28] sm:$0xff]
        %v7261 = vld [vmem:[%s7254 + $0x30] sm:$0xff]
        %v7262 = vld [vmem:[%s7254 + $0x38] sm:$0xff]
        %v7263 = vld [vmem:[%s7254 + $0x40] sm:$0xff]
        %v7264 = vld [vmem:[%s7254 + $0x48] sm:$0xff]
        %v7265 = vld [vmem:[%s7254 + $0x50] sm:$0xff]
        %v7266 = vld [vmem:[%s7254 + $0x58] sm:$0xff]
        %v7267 = vld [vmem:[%s7254 + $0x60] sm:$0xff]
        %v7268 = vld [vmem:[%s7254 + $0x68] sm:$0xff]
        %v7269 = vld [vmem:[%s7254 + $0x70] sm:$0xff]
        %v7270 = vld [vmem:[%s7254 + $0x78] sm:$0xff]
        %v7271 = vld [vmem:[%s7254 + $0x80] sm:$0xff]
        %v7272 = vld [vmem:[%s7254 + $0x88] sm:$0xff]
        %v7273 = vld [vmem:[%s7254 + $0x90] sm:$0xff]
        %v7274 = vld [vmem:[%s7254 + $0x98] sm:$0xff]
        %v7275 = vld [vmem:[%s7254 + $0xa0] sm:$0xff]
        %v7276 = vld [vmem:[%s7254 + $0xa8] sm:$0xff]
        %v7277 = vld [vmem:[%s7254 + $0xb0] sm:$0xff]
        %v7278 = vld [vmem:[%s7254 + $0xb8] sm:$0xff]
        %v7279 = vld [vmem:[%s7254 + $0xc0] sm:$0xff]
        %v7280 = vld [vmem:[%s7254 + $0xc8] sm:$0xff]
        %v7281 = vld [vmem:[%s7254 + $0xd0] sm:$0xff]
        %v7282 = vld [vmem:[%s7254 + $0xd8] sm:$0xff]
        %v7283 = vld [vmem:[%s7254 + $0xe0] sm:$0xff]
        %v7284 = vld [vmem:[%s7254 + $0xe8] sm:$0xff]
        %v7285 = vld [vmem:[%s7254 + $0xf0] sm:$0xff]
        %v7286 = vld [vmem:[%s7254 + $0xf8] sm:$0xff]
        %v7287 = vld [vmem:[%s7254 + $0x100] sm:$0xff]
        %v7288 = vld [vmem:[%s7254 + $0x108] sm:$0xff]
        %v7289 = vld [vmem:[%s7254 + $0x110] sm:$0xff]
        %v7290 = vld [vmem:[%s7254 + $0x118] sm:$0xff]
        %v7291 = vld [vmem:[%s7254 + $0x120] sm:$0xff]
        %v7292 = vld [vmem:[%s7254 + $0x128] sm:$0xff]
        %v7293 = vld [vmem:[%s7254 + $0x130] sm:$0xff]
        %v7294 = vld [vmem:[%s7254 + $0x138] sm:$0xff]
        %v7295 = vld [vmem:[%s7254 + $0x140] sm:$0xff]
        %v7296 = vld [vmem:[%s7254 + $0x148] sm:$0xff]
        %v7297 = vld [vmem:[%s7254 + $0x150] sm:$0xff]
        %v7298 = vld [vmem:[%s7254 + $0x158] sm:$0xff]
        %v7299 = vld [vmem:[%s7254 + $0x160] sm:$0xff]
        %v7300 = vld [vmem:[%s7254 + $0x168] sm:$0xff]
        %v7301 = vld [vmem:[%s7254 + $0x170] sm:$0xff]
        %v7302 = vld [vmem:[%s7254 + $0x178] sm:$0xff]
        %v7303 = vld [vmem:[%s7254 + $0x180] sm:$0xff]
        %v7304 = vld [vmem:[%s7254 + $0x188] sm:$0xff]
        %v7305 = vld [vmem:[%s7254 + $0x190] sm:$0xff]
        %v7306 = vld [vmem:[%s7254 + $0x198] sm:$0xff]
        %v7307 = vld [vmem:[%s7254 + $0x1a0] sm:$0xff]
        %v7308 = vld [vmem:[%s7254 + $0x1a8] sm:$0xff]
        %v7309 = vld [vmem:[%s7254 + $0x1b0] sm:$0xff]
        %v7310 = vld [vmem:[%s7254 + $0x1b8] sm:$0xff]
        %v7311 = vld [vmem:[%s7254 + $0x1c0] sm:$0xff]
        %v7312 = vld [vmem:[%s7254 + $0x1c8] sm:$0xff]
        %v7313 = vld [vmem:[%s7254 + $0x1d0] sm:$0xff]
        %v7314 = vld [vmem:[%s7254 + $0x1d8] sm:$0xff]
        %v7315 = vld [vmem:[%s7254 + $0x1e0] sm:$0xff]
        %v7316 = vld [vmem:[%s7254 + $0x1e8] sm:$0xff]
        %v7317 = vld [vmem:[%s7254 + $0x1f0] sm:$0xff]
        %v7318 = vld [vmem:[%s7254 + $0x1f8] sm:$0xff]
        %v7319 = vld [vmem:[%s7254 + $0x200] sm:$0xff]
        %v7320 = vld [vmem:[%s7254 + $0x208] sm:$0xff]
        %v7321 = vld [vmem:[%s7254 + $0x210] sm:$0xff]
        %v7322 = vld [vmem:[%s7254 + $0x218] sm:$0xff]
        %v7323 = vld [vmem:[%s7254 + $0x220] sm:$0xff]
        %v7324 = vld [vmem:[%s7254 + $0x228] sm:$0xff]
        %v7325 = vld [vmem:[%s7254 + $0x230] sm:$0xff]
        %v7326 = vld [vmem:[%s7254 + $0x238] sm:$0xff]
        %v7327 = vld [vmem:[%s7254 + $0x240] sm:$0xff]
        %v7328 = vld [vmem:[%s7254 + $0x248] sm:$0xff]
        %v7329 = vld [vmem:[%s7254 + $0x250] sm:$0xff]
        %v7330 = vld [vmem:[%s7254 + $0x258] sm:$0xff]
        %v7331 = vld [vmem:[%s7254 + $0x260] sm:$0xff]
        %v7332 = vld [vmem:[%s7254 + $0x268] sm:$0xff]
        %v7333 = vld [vmem:[%s7254 + $0x270] sm:$0xff]
        %v7334 = vld [vmem:[%s7254 + $0x278] sm:$0xff]
        %v7335 = vld [vmem:[%s7254 + $0x280] sm:$0xff]
        %v7336 = vld [vmem:[%s7254 + $0x288] sm:$0xff]
        %v7337 = vld [vmem:[%s7254 + $0x290] sm:$0xff]
        %v7338 = vld [vmem:[%s7254 + $0x298] sm:$0xff]
        %v7339 = vld [vmem:[%s7254 + $0x2a0] sm:$0xff]
        %v7340 = vld [vmem:[%s7254 + $0x2a8] sm:$0xff]
        %v7341 = vld [vmem:[%s7254 + $0x2b0] sm:$0xff]
        %v7342 = vld [vmem:[%s7254 + $0x2b8] sm:$0xff]
        %v7343 = vld [vmem:[%s7254 + $0x2c0] sm:$0xff]
        %v7344 = vld [vmem:[%s7254 + $0x2c8] sm:$0xff]
        %v7345 = vld [vmem:[%s7254 + $0x2d0] sm:$0xff]
        %v7346 = vld [vmem:[%s7254 + $0x2d8] sm:$0xff]
        %v7347 = vld [vmem:[%s7254 + $0x2e0] sm:$0xff]
        %v7348 = vld [vmem:[%s7254 + $0x2e8] sm:$0xff]
        %v7349 = vld [vmem:[%s7254 + $0x2f0] sm:$0xff]
        %v7350 = vld [vmem:[%s7254 + $0x2f8] sm:$0xff]
        %v7351 = vld [vmem:[%s7254 + $0x300] sm:$0xff]
        %v7352 = vld [vmem:[%s7254 + $0x308] sm:$0xff]
        %v7353 = vld [vmem:[%s7254 + $0x310] sm:$0xff]
        %v7354 = vld [vmem:[%s7254 + $0x318] sm:$0xff]
        %v7355 = vld [vmem:[%s7254 + $0x320] sm:$0xff]
        %v7356 = vld [vmem:[%s7254 + $0x328] sm:$0xff]
        %v7357 = vld [vmem:[%s7254 + $0x330] sm:$0xff]
        %v7358 = vld [vmem:[%s7254 + $0x338] sm:$0xff]
        %v7359 = vld [vmem:[%s7254 + $0x340] sm:$0xff]
        %v7360 = vld [vmem:[%s7254 + $0x348] sm:$0xff]
        %v7361 = vld [vmem:[%s7254 + $0x350] sm:$0xff]
        %v7362 = vld [vmem:[%s7254 + $0x358] sm:$0xff]
        %v7363 = vld [vmem:[%s7254 + $0x360] sm:$0xff]
        %v7364 = vld [vmem:[%s7254 + $0x368] sm:$0xff]
        %v7365 = vld [vmem:[%s7254 + $0x370] sm:$0xff]
        %v7366 = vld [vmem:[%s7254 + $0x378] sm:$0xff]
        %v7367 = vld [vmem:[%s7254 + $0x380] sm:$0xff]
        %v7368 = vld [vmem:[%s7254 + $0x388] sm:$0xff]
        %v7369 = vld [vmem:[%s7254 + $0x390] sm:$0xff]
        %v7370 = vld [vmem:[%s7254 + $0x398] sm:$0xff]
        %v7371 = vld [vmem:[%s7254 + $0x3a0] sm:$0xff]
        %v7372 = vld [vmem:[%s7254 + $0x3a8] sm:$0xff]
        %v7373 = vld [vmem:[%s7254 + $0x3b0] sm:$0xff]
        %v7374 = vld [vmem:[%s7254 + $0x3b8] sm:$0xff]
        %v7375 = vld [vmem:[%s7254 + $0x3c0] sm:$0xff]
        %v7376 = vld [vmem:[%s7254 + $0x3c8] sm:$0xff]
        %v7377 = vld [vmem:[%s7254 + $0x3d0] sm:$0xff]
        %v7378 = vld [vmem:[%s7254 + $0x3d8] sm:$0xff]
        %v7379 = vld [vmem:[%s7254 + $0x3e0] sm:$0xff]
        %v7380 = vld [vmem:[%s7254 + $0x3e8] sm:$0xff]
        %v7381 = vld [vmem:[%s7254 + $0x3f0] sm:$0xff]
        %v7382 = vld [vmem:[%s7254 + $0x3f8] sm:$0xff]
        %s7383 = scalar_lea.vmem %s21, 16
        %v7384 = vld [vmem:[%s7383] sm:$0xff]
        %v7385 = vld [vmem:[%s7383 + $0x8] sm:$0xff]
        %v7388 = vlaneseq
        %v7389 = vshrl.u32 %v7388, 7
        %v7390 = vsub.s32 0, %v7389
        %v7391 = vrot.slane %v7384, %v7390
        %v7392 = vlaneseq
        %v7393 = vshrl.u32 %v7392, 7
        %v7394 = vsub.s32 1, %v7393
        %v7395 = vrot.slane %v7384, %v7394
        %v7396 = vlaneseq
        %v7397 = vshrl.u32 %v7396, 7
        %v7398 = vsub.s32 2, %v7397
        %v7399 = vrot.slane %v7384, %v7398
        %v7400 = vlaneseq
        %v7401 = vshrl.u32 %v7400, 7
        %v7402 = vsub.s32 3, %v7401
        %v7403 = vrot.slane %v7384, %v7402
        %v7404 = vlaneseq
        %v7405 = vshrl.u32 %v7404, 7
        %v7406 = vsub.s32 4, %v7405
        %v7407 = vrot.slane %v7384, %v7406
        %v7408 = vlaneseq
        %v7409 = vshrl.u32 %v7408, 7
        %v7410 = vsub.s32 5, %v7409
        %v7411 = vrot.slane %v7384, %v7410
        %v7412 = vlaneseq
        %v7413 = vshrl.u32 %v7412, 7
        %v7414 = vsub.s32 6, %v7413
        %v7415 = vrot.slane %v7384, %v7414
        %v7416 = vlaneseq
        %v7417 = vshrl.u32 %v7416, 7
        %v7418 = vsub.s32 7, %v7417
        %v7419 = vrot.slane %v7384, %v7418
        %v7420 = vlaneseq
        %v7421 = vshrl.u32 %v7420, 7
        %v7422 = vsub.s32 0, %v7421
        %v7423 = vrot.slane %v7385, %v7422
        %v7424 = vlaneseq
        %v7425 = vshrl.u32 %v7424, 7
        %v7426 = vsub.s32 1, %v7425
        %v7427 = vrot.slane %v7385, %v7426
        %v7428 = vlaneseq
        %v7429 = vshrl.u32 %v7428, 7
        %v7430 = vsub.s32 2, %v7429
        %v7431 = vrot.slane %v7385, %v7430
        %v7432 = vlaneseq
        %v7433 = vshrl.u32 %v7432, 7
        %v7434 = vsub.s32 3, %v7433
        %v7435 = vrot.slane %v7385, %v7434
        %v7436 = vlaneseq
        %v7437 = vshrl.u32 %v7436, 7
        %v7438 = vsub.s32 4, %v7437
        %v7439 = vrot.slane %v7385, %v7438
        %v7440 = vlaneseq
        %v7441 = vshrl.u32 %v7440, 7
        %v7442 = vsub.s32 5, %v7441
        %v7443 = vrot.slane %v7385, %v7442
        %v7444 = vlaneseq
        %v7445 = vshrl.u32 %v7444, 7
        %v7446 = vsub.s32 6, %v7445
        %v7447 = vrot.slane %v7385, %v7446
        %v7448 = vlaneseq
        %v7449 = vshrl.u32 %v7448, 7
        %v7450 = vsub.s32 7, %v7449
        %v7451 = vrot.slane %v7385, %v7450
        %v7596 = vunpack.c.l.b16 %v7255
        %v7597 = vunpack.c.h.b16 %v7255
        %v7598 = vunpack.c.l.b16 %v7256
        %v7599 = vunpack.c.h.b16 %v7256
        %v7600 = vunpack.c.l.b16 %v7257
        %v7601 = vunpack.c.h.b16 %v7257
        %v7602 = vunpack.c.l.b16 %v7258
        %v7603 = vunpack.c.h.b16 %v7258
        %v7604 = vunpack.c.l.b16 %v7259
        %v7605 = vunpack.c.h.b16 %v7259
        %v7606 = vunpack.c.l.b16 %v7260
        %v7607 = vunpack.c.h.b16 %v7260
        %v7608 = vunpack.c.l.b16 %v7261
        %v7609 = vunpack.c.h.b16 %v7261
        %v7610 = vunpack.c.l.b16 %v7262
        %v7611 = vunpack.c.h.b16 %v7262
        %v7612 = vunpack.c.l.b16 %v7263
        %v7613 = vunpack.c.h.b16 %v7263
        %v7614 = vunpack.c.l.b16 %v7264
        %v7615 = vunpack.c.h.b16 %v7264
        %v7616 = vunpack.c.l.b16 %v7265
        %v7617 = vunpack.c.h.b16 %v7265
        %v7618 = vunpack.c.l.b16 %v7266
        %v7619 = vunpack.c.h.b16 %v7266
        %v7620 = vunpack.c.l.b16 %v7267
        %v7621 = vunpack.c.h.b16 %v7267
        %v7622 = vunpack.c.l.b16 %v7268
        %v7623 = vunpack.c.h.b16 %v7268
        %v7624 = vunpack.c.l.b16 %v7269
        %v7625 = vunpack.c.h.b16 %v7269
        %v7626 = vunpack.c.l.b16 %v7270
        %v7627 = vunpack.c.h.b16 %v7270
        %v7628 = vunpack.c.l.b16 %v7271
        %v7629 = vunpack.c.h.b16 %v7271
        %v7630 = vunpack.c.l.b16 %v7272
        %v7631 = vunpack.c.h.b16 %v7272
        %v7632 = vunpack.c.l.b16 %v7273
        %v7633 = vunpack.c.h.b16 %v7273
        %v7634 = vunpack.c.l.b16 %v7274
        %v7635 = vunpack.c.h.b16 %v7274
        %v7636 = vunpack.c.l.b16 %v7275
        %v7637 = vunpack.c.h.b16 %v7275
        %v7638 = vunpack.c.l.b16 %v7276
        %v7639 = vunpack.c.h.b16 %v7276
        %v7640 = vunpack.c.l.b16 %v7277
        %v7641 = vunpack.c.h.b16 %v7277
        %v7642 = vunpack.c.l.b16 %v7278
        %v7643 = vunpack.c.h.b16 %v7278
        %v7644 = vunpack.c.l.b16 %v7279
        %v7645 = vunpack.c.h.b16 %v7279
        %v7646 = vunpack.c.l.b16 %v7280
        %v7647 = vunpack.c.h.b16 %v7280
        %v7648 = vunpack.c.l.b16 %v7281
        %v7649 = vunpack.c.h.b16 %v7281
        %v7650 = vunpack.c.l.b16 %v7282
        %v7651 = vunpack.c.h.b16 %v7282
        %v7652 = vunpack.c.l.b16 %v7283
        %v7653 = vunpack.c.h.b16 %v7283
        %v7654 = vunpack.c.l.b16 %v7284
        %v7655 = vunpack.c.h.b16 %v7284
        %v7656 = vunpack.c.l.b16 %v7285
        %v7657 = vunpack.c.h.b16 %v7285
        %v7658 = vunpack.c.l.b16 %v7286
        %v7659 = vunpack.c.h.b16 %v7286
        %v7660 = vunpack.c.l.b16 %v7287
        %v7661 = vunpack.c.h.b16 %v7287
        %v7662 = vunpack.c.l.b16 %v7288
        %v7663 = vunpack.c.h.b16 %v7288
        %v7664 = vunpack.c.l.b16 %v7289
        %v7665 = vunpack.c.h.b16 %v7289
        %v7666 = vunpack.c.l.b16 %v7290
        %v7667 = vunpack.c.h.b16 %v7290
        %v7668 = vunpack.c.l.b16 %v7291
        %v7669 = vunpack.c.h.b16 %v7291
        %v7670 = vunpack.c.l.b16 %v7292
        %v7671 = vunpack.c.h.b16 %v7292
        %v7672 = vunpack.c.l.b16 %v7293
        %v7673 = vunpack.c.h.b16 %v7293
        %v7674 = vunpack.c.l.b16 %v7294
        %v7675 = vunpack.c.h.b16 %v7294
        %v7676 = vunpack.c.l.b16 %v7295
        %v7677 = vunpack.c.h.b16 %v7295
        %v7678 = vunpack.c.l.b16 %v7296
        %v7679 = vunpack.c.h.b16 %v7296
        %v7680 = vunpack.c.l.b16 %v7297
        %v7681 = vunpack.c.h.b16 %v7297
        %v7682 = vunpack.c.l.b16 %v7298
        %v7683 = vunpack.c.h.b16 %v7298
        %v7684 = vunpack.c.l.b16 %v7299
        %v7685 = vunpack.c.h.b16 %v7299
        %v7686 = vunpack.c.l.b16 %v7300
        %v7687 = vunpack.c.h.b16 %v7300
        %v7688 = vunpack.c.l.b16 %v7301
        %v7689 = vunpack.c.h.b16 %v7301
        %v7690 = vunpack.c.l.b16 %v7302
        %v7691 = vunpack.c.h.b16 %v7302
        %v7692 = vunpack.c.l.b16 %v7303
        %v7693 = vunpack.c.h.b16 %v7303
        %v7694 = vunpack.c.l.b16 %v7304
        %v7695 = vunpack.c.h.b16 %v7304
        %v7696 = vunpack.c.l.b16 %v7305
        %v7697 = vunpack.c.h.b16 %v7305
        %v7698 = vunpack.c.l.b16 %v7306
        %v7699 = vunpack.c.h.b16 %v7306
        %v7700 = vunpack.c.l.b16 %v7307
        %v7701 = vunpack.c.h.b16 %v7307
        %v7702 = vunpack.c.l.b16 %v7308
        %v7703 = vunpack.c.h.b16 %v7308
        %v7704 = vunpack.c.l.b16 %v7309
        %v7705 = vunpack.c.h.b16 %v7309
        %v7706 = vunpack.c.l.b16 %v7310
        %v7707 = vunpack.c.h.b16 %v7310
        %v7708 = vunpack.c.l.b16 %v7311
        %v7709 = vunpack.c.h.b16 %v7311
        %v7710 = vunpack.c.l.b16 %v7312
        %v7711 = vunpack.c.h.b16 %v7312
        %v7712 = vunpack.c.l.b16 %v7313
        %v7713 = vunpack.c.h.b16 %v7313
        %v7714 = vunpack.c.l.b16 %v7314
        %v7715 = vunpack.c.h.b16 %v7314
        %v7716 = vunpack.c.l.b16 %v7315
        %v7717 = vunpack.c.h.b16 %v7315
        %v7718 = vunpack.c.l.b16 %v7316
        %v7719 = vunpack.c.h.b16 %v7316
        %v7720 = vunpack.c.l.b16 %v7317
        %v7721 = vunpack.c.h.b16 %v7317
        %v7722 = vunpack.c.l.b16 %v7318
        %v7723 = vunpack.c.h.b16 %v7318
        %v7724 = vunpack.c.l.b16 %v7319
        %v7725 = vunpack.c.h.b16 %v7319
        %v7726 = vunpack.c.l.b16 %v7320
        %v7727 = vunpack.c.h.b16 %v7320
        %v7728 = vunpack.c.l.b16 %v7321
        %v7729 = vunpack.c.h.b16 %v7321
        %v7730 = vunpack.c.l.b16 %v7322
        %v7731 = vunpack.c.h.b16 %v7322
        %v7732 = vunpack.c.l.b16 %v7323
        %v7733 = vunpack.c.h.b16 %v7323
        %v7734 = vunpack.c.l.b16 %v7324
        %v7735 = vunpack.c.h.b16 %v7324
        %v7736 = vunpack.c.l.b16 %v7325
        %v7737 = vunpack.c.h.b16 %v7325
        %v7738 = vunpack.c.l.b16 %v7326
        %v7739 = vunpack.c.h.b16 %v7326
        %v7740 = vunpack.c.l.b16 %v7327
        %v7741 = vunpack.c.h.b16 %v7327
        %v7742 = vunpack.c.l.b16 %v7328
        %v7743 = vunpack.c.h.b16 %v7328
        %v7744 = vunpack.c.l.b16 %v7329
        %v7745 = vunpack.c.h.b16 %v7329
        %v7746 = vunpack.c.l.b16 %v7330
        %v7747 = vunpack.c.h.b16 %v7330
        %v7748 = vunpack.c.l.b16 %v7331
        %v7749 = vunpack.c.h.b16 %v7331
        %v7750 = vunpack.c.l.b16 %v7332
        %v7751 = vunpack.c.h.b16 %v7332
        %v7752 = vunpack.c.l.b16 %v7333
        %v7753 = vunpack.c.h.b16 %v7333
        %v7754 = vunpack.c.l.b16 %v7334
        %v7755 = vunpack.c.h.b16 %v7334
        %v7756 = vunpack.c.l.b16 %v7335
        %v7757 = vunpack.c.h.b16 %v7335
        %v7758 = vunpack.c.l.b16 %v7336
        %v7759 = vunpack.c.h.b16 %v7336
        %v7760 = vunpack.c.l.b16 %v7337
        %v7761 = vunpack.c.h.b16 %v7337
        %v7762 = vunpack.c.l.b16 %v7338
        %v7763 = vunpack.c.h.b16 %v7338
        %v7764 = vunpack.c.l.b16 %v7339
        %v7765 = vunpack.c.h.b16 %v7339
        %v7766 = vunpack.c.l.b16 %v7340
        %v7767 = vunpack.c.h.b16 %v7340
        %v7768 = vunpack.c.l.b16 %v7341
        %v7769 = vunpack.c.h.b16 %v7341
        %v7770 = vunpack.c.l.b16 %v7342
        %v7771 = vunpack.c.h.b16 %v7342
        %v7772 = vunpack.c.l.b16 %v7343
        %v7773 = vunpack.c.h.b16 %v7343
        %v7774 = vunpack.c.l.b16 %v7344
        %v7775 = vunpack.c.h.b16 %v7344
        %v7776 = vunpack.c.l.b16 %v7345
        %v7777 = vunpack.c.h.b16 %v7345
        %v7778 = vunpack.c.l.b16 %v7346
        %v7779 = vunpack.c.h.b16 %v7346
        %v7780 = vunpack.c.l.b16 %v7347
        %v7781 = vunpack.c.h.b16 %v7347
        %v7782 = vunpack.c.l.b16 %v7348
        %v7783 = vunpack.c.h.b16 %v7348
        %v7784 = vunpack.c.l.b16 %v7349
        %v7785 = vunpack.c.h.b16 %v7349
        %v7786 = vunpack.c.l.b16 %v7350
        %v7787 = vunpack.c.h.b16 %v7350
        %v7788 = vunpack.c.l.b16 %v7351
        %v7789 = vunpack.c.h.b16 %v7351
        %v7790 = vunpack.c.l.b16 %v7352
        %v7791 = vunpack.c.h.b16 %v7352
        %v7792 = vunpack.c.l.b16 %v7353
        %v7793 = vunpack.c.h.b16 %v7353
        %v7794 = vunpack.c.l.b16 %v7354
        %v7795 = vunpack.c.h.b16 %v7354
        %v7796 = vunpack.c.l.b16 %v7355
        %v7797 = vunpack.c.h.b16 %v7355
        %v7798 = vunpack.c.l.b16 %v7356
        %v7799 = vunpack.c.h.b16 %v7356
        %v7800 = vunpack.c.l.b16 %v7357
        %v7801 = vunpack.c.h.b16 %v7357
        %v7802 = vunpack.c.l.b16 %v7358
        %v7803 = vunpack.c.h.b16 %v7358
        %v7804 = vunpack.c.l.b16 %v7359
        %v7805 = vunpack.c.h.b16 %v7359
        %v7806 = vunpack.c.l.b16 %v7360
        %v7807 = vunpack.c.h.b16 %v7360
        %v7808 = vunpack.c.l.b16 %v7361
        %v7809 = vunpack.c.h.b16 %v7361
        %v7810 = vunpack.c.l.b16 %v7362
        %v7811 = vunpack.c.h.b16 %v7362
        %v7812 = vunpack.c.l.b16 %v7363
        %v7813 = vunpack.c.h.b16 %v7363
        %v7814 = vunpack.c.l.b16 %v7364
        %v7815 = vunpack.c.h.b16 %v7364
        %v7816 = vunpack.c.l.b16 %v7365
        %v7817 = vunpack.c.h.b16 %v7365
        %v7818 = vunpack.c.l.b16 %v7366
        %v7819 = vunpack.c.h.b16 %v7366
        %v7820 = vunpack.c.l.b16 %v7367
        %v7821 = vunpack.c.h.b16 %v7367
        %v7822 = vunpack.c.l.b16 %v7368
        %v7823 = vunpack.c.h.b16 %v7368
        %v7824 = vunpack.c.l.b16 %v7369
        %v7825 = vunpack.c.h.b16 %v7369
        %v7826 = vunpack.c.l.b16 %v7370
        %v7827 = vunpack.c.h.b16 %v7370
        %v7828 = vunpack.c.l.b16 %v7371
        %v7829 = vunpack.c.h.b16 %v7371
        %v7830 = vunpack.c.l.b16 %v7372
        %v7831 = vunpack.c.h.b16 %v7372
        %v7832 = vunpack.c.l.b16 %v7373
        %v7833 = vunpack.c.h.b16 %v7373
        %v7834 = vunpack.c.l.b16 %v7374
        %v7835 = vunpack.c.h.b16 %v7374
        %v7836 = vunpack.c.l.b16 %v7375
        %v7837 = vunpack.c.h.b16 %v7375
        %v7838 = vunpack.c.l.b16 %v7376
        %v7839 = vunpack.c.h.b16 %v7376
        %v7840 = vunpack.c.l.b16 %v7377
        %v7841 = vunpack.c.h.b16 %v7377
        %v7842 = vunpack.c.l.b16 %v7378
        %v7843 = vunpack.c.h.b16 %v7378
        %v7844 = vunpack.c.l.b16 %v7379
        %v7845 = vunpack.c.h.b16 %v7379
        %v7846 = vunpack.c.l.b16 %v7380
        %v7847 = vunpack.c.h.b16 %v7380
        %v7848 = vunpack.c.l.b16 %v7381
        %v7849 = vunpack.c.h.b16 %v7381
        %v7850 = vunpack.c.l.b16 %v7382
        %v7851 = vunpack.c.h.b16 %v7382
        %v7852 = vpack.c.b16 %v7612, %v7596
        %v7853 = vpack.c.b16 %v7613, %v7597
        %v7854 = vpack.c.b16 %v7614, %v7598
        %v7855 = vpack.c.b16 %v7615, %v7599
        %v7856 = vpack.c.b16 %v7616, %v7600
        %v7857 = vpack.c.b16 %v7617, %v7601
        %v7858 = vpack.c.b16 %v7618, %v7602
        %v7859 = vpack.c.b16 %v7619, %v7603
        %v7860 = vpack.c.b16 %v7620, %v7604
        %v7861 = vpack.c.b16 %v7621, %v7605
        %v7862 = vpack.c.b16 %v7622, %v7606
        %v7863 = vpack.c.b16 %v7623, %v7607
        %v7864 = vpack.c.b16 %v7624, %v7608
        %v7865 = vpack.c.b16 %v7625, %v7609
        %v7866 = vpack.c.b16 %v7626, %v7610
        %v7867 = vpack.c.b16 %v7627, %v7611
        %v7868 = vpack.c.b16 %v7644, %v7628
        %v7869 = vpack.c.b16 %v7645, %v7629
        %v7870 = vpack.c.b16 %v7646, %v7630
        %v7871 = vpack.c.b16 %v7647, %v7631
        %v7872 = vpack.c.b16 %v7648, %v7632
        %v7873 = vpack.c.b16 %v7649, %v7633
        %v7874 = vpack.c.b16 %v7650, %v7634
        %v7875 = vpack.c.b16 %v7651, %v7635
        %v7876 = vpack.c.b16 %v7652, %v7636
        %v7877 = vpack.c.b16 %v7653, %v7637
        %v7878 = vpack.c.b16 %v7654, %v7638
        %v7879 = vpack.c.b16 %v7655, %v7639
        %v7880 = vpack.c.b16 %v7656, %v7640
        %v7881 = vpack.c.b16 %v7657, %v7641
        %v7882 = vpack.c.b16 %v7658, %v7642
        %v7883 = vpack.c.b16 %v7659, %v7643
        %v7884 = vpack.c.b16 %v7676, %v7660
        %v7885 = vpack.c.b16 %v7677, %v7661
        %v7886 = vpack.c.b16 %v7678, %v7662
        %v7887 = vpack.c.b16 %v7679, %v7663
        %v7888 = vpack.c.b16 %v7680, %v7664
        %v7889 = vpack.c.b16 %v7681, %v7665
        %v7890 = vpack.c.b16 %v7682, %v7666
        %v7891 = vpack.c.b16 %v7683, %v7667
        %v7892 = vpack.c.b16 %v7684, %v7668
        %v7893 = vpack.c.b16 %v7685, %v7669
        %v7894 = vpack.c.b16 %v7686, %v7670
        %v7895 = vpack.c.b16 %v7687, %v7671
        %v7896 = vpack.c.b16 %v7688, %v7672
        %v7897 = vpack.c.b16 %v7689, %v7673
        %v7898 = vpack.c.b16 %v7690, %v7674
        %v7899 = vpack.c.b16 %v7691, %v7675
        %v7900 = vpack.c.b16 %v7708, %v7692
        %v7901 = vpack.c.b16 %v7709, %v7693
        %v7902 = vpack.c.b16 %v7710, %v7694
        %v7903 = vpack.c.b16 %v7711, %v7695
        %v7904 = vpack.c.b16 %v7712, %v7696
        %v7905 = vpack.c.b16 %v7713, %v7697
        %v7906 = vpack.c.b16 %v7714, %v7698
        %v7907 = vpack.c.b16 %v7715, %v7699
        %v7908 = vpack.c.b16 %v7716, %v7700
        %v7909 = vpack.c.b16 %v7717, %v7701
        %v7910 = vpack.c.b16 %v7718, %v7702
        %v7911 = vpack.c.b16 %v7719, %v7703
        %v7912 = vpack.c.b16 %v7720, %v7704
        %v7913 = vpack.c.b16 %v7721, %v7705
        %v7914 = vpack.c.b16 %v7722, %v7706
        %v7915 = vpack.c.b16 %v7723, %v7707
        %v7916 = vpack.c.b16 %v7740, %v7724
        %v7917 = vpack.c.b16 %v7741, %v7725
        %v7918 = vpack.c.b16 %v7742, %v7726
        %v7919 = vpack.c.b16 %v7743, %v7727
        %v7920 = vpack.c.b16 %v7744, %v7728
        %v7921 = vpack.c.b16 %v7745, %v7729
        %v7922 = vpack.c.b16 %v7746, %v7730
        %v7923 = vpack.c.b16 %v7747, %v7731
        %v7924 = vpack.c.b16 %v7748, %v7732
        %v7925 = vpack.c.b16 %v7749, %v7733
        %v7926 = vpack.c.b16 %v7750, %v7734
        %v7927 = vpack.c.b16 %v7751, %v7735
        %v7928 = vpack.c.b16 %v7752, %v7736
        %v7929 = vpack.c.b16 %v7753, %v7737
        %v7930 = vpack.c.b16 %v7754, %v7738
        %v7931 = vpack.c.b16 %v7755, %v7739
        %v7932 = vpack.c.b16 %v7772, %v7756
        %v7933 = vpack.c.b16 %v7773, %v7757
        %v7934 = vpack.c.b16 %v7774, %v7758
        %v7935 = vpack.c.b16 %v7775, %v7759
        %v7936 = vpack.c.b16 %v7776, %v7760
        %v7937 = vpack.c.b16 %v7777, %v7761
        %v7938 = vpack.c.b16 %v7778, %v7762
        %v7939 = vpack.c.b16 %v7779, %v7763
        %v7940 = vpack.c.b16 %v7780, %v7764
        %v7941 = vpack.c.b16 %v7781, %v7765
        %v7942 = vpack.c.b16 %v7782, %v7766
        %v7943 = vpack.c.b16 %v7783, %v7767
        %v7944 = vpack.c.b16 %v7784, %v7768
        %v7945 = vpack.c.b16 %v7785, %v7769
        %v7946 = vpack.c.b16 %v7786, %v7770
        %v7947 = vpack.c.b16 %v7787, %v7771
        %v7948 = vpack.c.b16 %v7804, %v7788
        %v7949 = vpack.c.b16 %v7805, %v7789
        %v7950 = vpack.c.b16 %v7806, %v7790
        %v7951 = vpack.c.b16 %v7807, %v7791
        %v7952 = vpack.c.b16 %v7808, %v7792
        %v7953 = vpack.c.b16 %v7809, %v7793
        %v7954 = vpack.c.b16 %v7810, %v7794
        %v7955 = vpack.c.b16 %v7811, %v7795
        %v7956 = vpack.c.b16 %v7812, %v7796
        %v7957 = vpack.c.b16 %v7813, %v7797
        %v7958 = vpack.c.b16 %v7814, %v7798
        %v7959 = vpack.c.b16 %v7815, %v7799
        %v7960 = vpack.c.b16 %v7816, %v7800
        %v7961 = vpack.c.b16 %v7817, %v7801
        %v7962 = vpack.c.b16 %v7818, %v7802
        %v7963 = vpack.c.b16 %v7819, %v7803
        %v7964 = vpack.c.b16 %v7836, %v7820
        %v7965 = vpack.c.b16 %v7837, %v7821
        %v7966 = vpack.c.b16 %v7838, %v7822
        %v7967 = vpack.c.b16 %v7839, %v7823
        %v7968 = vpack.c.b16 %v7840, %v7824
        %v7969 = vpack.c.b16 %v7841, %v7825
        %v7970 = vpack.c.b16 %v7842, %v7826
        %v7971 = vpack.c.b16 %v7843, %v7827
        %v7972 = vpack.c.b16 %v7844, %v7828
        %v7973 = vpack.c.b16 %v7845, %v7829
        %v7974 = vpack.c.b16 %v7846, %v7830
        %v7975 = vpack.c.b16 %v7847, %v7831
        %v7976 = vpack.c.b16 %v7848, %v7832
        %v7977 = vpack.c.b16 %v7849, %v7833
        %v7978 = vpack.c.b16 %v7850, %v7834
        %v7979 = vpack.c.b16 %v7851, %v7835
        %8108 = vmatprep.subr.bf16.mxu0 %v7853
        %8109 = vmatpush1.bf16.msra.mxu0 %v7852
        %8110 = vmatprep.subr.bf16.mxu0 %v7869
        %8111 = vmatpush1.bf16.msra.mxu0 %v7868
        %8112 = vmatprep.subr.bf16.mxu0 %v7885
        %8113 = vmatpush1.bf16.msra.mxu0 %v7884
        %8114 = vmatprep.subr.bf16.mxu0 %v7901
        %8115 = vmatpush1.bf16.msra.mxu0 %v7900
        %8116 = vmatprep.subr.bf16.mxu0 %v7917
        %8117 = vmatpush1.bf16.msra.mxu0 %v7916
        %8118 = vmatprep.subr.bf16.mxu0 %v7933
        %8119 = vmatpush1.bf16.msra.mxu0 %v7932
        %8120 = vmatprep.subr.bf16.mxu0 %v7949
        %8121 = vmatpush1.bf16.msra.mxu0 %v7948
        %8122 = vmatprep.subr.bf16.mxu0 %v7965
        %8123 = vmatpush1.bf16.msra.mxu0 %v7964
        %8124 = vmatprep.subr.bf16.mxu0 0
        %8125 = vmatpush1.bf16.msra.mxu0 0
        %8126 = vmatprep.subr.bf16.mxu0 0
        %8127 = vmatpush1.bf16.msra.mxu0 0
        %8128 = vmatprep.subr.bf16.mxu0 0
        %8129 = vmatpush1.bf16.msra.mxu0 0
        %8130 = vmatprep.subr.bf16.mxu0 0
        %8131 = vmatpush1.bf16.msra.mxu0 0
        %8132 = vmatprep.subr.bf16.mxu0 0
        %8133 = vmatpush1.bf16.msra.mxu0 0
        %8134 = vmatprep.subr.bf16.mxu0 0
        %8135 = vmatpush1.bf16.msra.mxu0 0
        %8136 = vmatprep.subr.bf16.mxu0 0
        %8137 = vmatpush1.bf16.msra.mxu0 0
        %8138 = vmatprep.subr.bf16.mxu0 0
        %8139 = vmatpush1.bf16.msra.mxu0 0
        %8140 = vmatprep.mubr.bf16.mxu0 0
        %8141 = vmatmul.mubr.bf16.gmra.mrb[0].mxu0 %v7253
        %v8142 = vpop.f32.mrb[0].mxu0
        %v8143 = vadd.f32 %v7391, %v8142
        %v8144 = vpop.f32.mrb[0].mxu0
        %v8145 = vadd.f32 %v7395, %v8144
        %v8146 = vpop.f32.mrb[0].mxu0
        %v8147 = vpop.f32.mrb[0].mxu0
        %8148 = vdwg.mxu0
        %8149 = vmatprep.subr.bf16.mxu0 %v7855
        %8150 = vmatpush1.bf16.msra.mxu0 %v7854
        %8151 = vmatprep.subr.bf16.mxu0 %v7871
        %8152 = vmatpush1.bf16.msra.mxu0 %v7870
        %8153 = vmatprep.subr.bf16.mxu0 %v7887
        %8154 = vmatpush1.bf16.msra.mxu0 %v7886
        %8155 = vmatprep.subr.bf16.mxu0 %v7903
        %8156 = vmatpush1.bf16.msra.mxu0 %v7902
        %8157 = vmatprep.subr.bf16.mxu0 %v7919
        %8158 = vmatpush1.bf16.msra.mxu0 %v7918
        %8159 = vmatprep.subr.bf16.mxu0 %v7935
        %8160 = vmatpush1.bf16.msra.mxu0 %v7934
        %8161 = vmatprep.subr.bf16.mxu0 %v7951
        %8162 = vmatpush1.bf16.msra.mxu0 %v7950
        %8163 = vmatprep.subr.bf16.mxu0 %v7967
        %8164 = vmatpush1.bf16.msra.mxu0 %v7966
        %8165 = vmatprep.subr.bf16.mxu0 0
        %8166 = vmatpush1.bf16.msra.mxu0 0
        %8167 = vmatprep.subr.bf16.mxu0 0
        %8168 = vmatpush1.bf16.msra.mxu0 0
        %8169 = vmatprep.subr.bf16.mxu0 0
        %8170 = vmatpush1.bf16.msra.mxu0 0
        %8171 = vmatprep.subr.bf16.mxu0 0
        %8172 = vmatpush1.bf16.msra.mxu0 0
        %8173 = vmatprep.subr.bf16.mxu0 0
        %8174 = vmatpush1.bf16.msra.mxu0 0
        %8175 = vmatprep.subr.bf16.mxu0 0
        %8176 = vmatpush1.bf16.msra.mxu0 0
        %8177 = vmatprep.subr.bf16.mxu0 0
        %8178 = vmatpush1.bf16.msra.mxu0 0
        %8179 = vmatprep.subr.bf16.mxu0 0
        %8180 = vmatpush1.bf16.msra.mxu0 0
        %8181 = vmatprep.mubr.bf16.mxu0 0
        %8182 = vmatmul.mubr.bf16.gmra.mrb[0].mxu0 %v7253
        %v8183 = vpop.f32.mrb[0].mxu0
        %v8184 = vadd.f32 %v7399, %v8183
        %v8185 = vpop.f32.mrb[0].mxu0
        %v8186 = vadd.f32 %v7403, %v8185
        %v8187 = vpop.f32.mrb[0].mxu0
        %v8188 = vpop.f32.mrb[0].mxu0
        %8189 = vdwg.mxu0
        %8190 = vmatprep.subr.bf16.mxu0 %v7857
        %8191 = vmatpush1.bf16.msra.mxu0 %v7856
        %8192 = vmatprep.subr.bf16.mxu0 %v7873
        %8193 = vmatpush1.bf16.msra.mxu0 %v7872
        %8194 = vmatprep.subr.bf16.mxu0 %v7889
        %8195 = vmatpush1.bf16.msra.mxu0 %v7888
        %8196 = vmatprep.subr.bf16.mxu0 %v7905
        %8197 = vmatpush1.bf16.msra.mxu0 %v7904
        %8198 = vmatprep.subr.bf16.mxu0 %v7921
        %8199 = vmatpush1.bf16.msra.mxu0 %v7920
        %8200 = vmatprep.subr.bf16.mxu0 %v7937
        %8201 = vmatpush1.bf16.msra.mxu0 %v7936
        %8202 = vmatprep.subr.bf16.mxu0 %v7953
        %8203 = vmatpush1.bf16.msra.mxu0 %v7952
        %8204 = vmatprep.subr.bf16.mxu0 %v7969
        %8205 = vmatpush1.bf16.msra.mxu0 %v7968
        %8206 = vmatprep.subr.bf16.mxu0 0
        %8207 = vmatpush1.bf16.msra.mxu0 0
        %8208 = vmatprep.subr.bf16.mxu0 0
        %8209 = vmatpush1.bf16.msra.mxu0 0
        %8210 = vmatprep.subr.bf16.mxu0 0
        %8211 = vmatpush1.bf16.msra.mxu0 0
        %8212 = vmatprep.subr.bf16.mxu0 0
        %8213 = vmatpush1.bf16.msra.mxu0 0
        %8214 = vmatprep.subr.bf16.mxu0 0
        %8215 = vmatpush1.bf16.msra.mxu0 0
        %8216 = vmatprep.subr.bf16.mxu0 0
        %8217 = vmatpush1.bf16.msra.mxu0 0
        %8218 = vmatprep.subr.bf16.mxu0 0
        %8219 = vmatpush1.bf16.msra.mxu0 0
        %8220 = vmatprep.subr.bf16.mxu0 0
        %8221 = vmatpush1.bf16.msra.mxu0 0
        %8222 = vmatprep.mubr.bf16.mxu0 0
        %8223 = vmatmul.mubr.bf16.gmra.mrb[0].mxu0 %v7253
        %v8224 = vpop.f32.mrb[0].mxu0
        %v8225 = vadd.f32 %v7407, %v8224
        %v8226 = vpop.f32.mrb[0].mxu0
        %v8227 = vadd.f32 %v7411, %v8226
        %v8228 = vpop.f32.mrb[0].mxu0
        %v8229 = vpop.f32.mrb[0].mxu0
        %8230 = vdwg.mxu0
        %8231 = vmatprep.subr.bf16.mxu0 %v7859
        %8232 = vmatpush1.bf16.msra.mxu0 %v7858
        %8233 = vmatprep.subr.bf16.mxu0 %v7875
        %8234 = vmatpush1.bf16.msra.mxu0 %v7874
        %8235 = vmatprep.subr.bf16.mxu0 %v7891
        %8236 = vmatpush1.bf16.msra.mxu0 %v7890
        %8237 = vmatprep.subr.bf16.mxu0 %v7907
        %8238 = vmatpush1.bf16.msra.mxu0 %v7906
        %8239 = vmatprep.subr.bf16.mxu0 %v7923
        %8240 = vmatpush1.bf16.msra.mxu0 %v7922
        %8241 = vmatprep.subr.bf16.mxu0 %v7939
        %8242 = vmatpush1.bf16.msra.mxu0 %v7938
        %8243 = vmatprep.subr.bf16.mxu0 %v7955
        %8244 = vmatpush1.bf16.msra.mxu0 %v7954
        %8245 = vmatprep.subr.bf16.mxu0 %v7971
        %8246 = vmatpush1.bf16.msra.mxu0 %v7970
        %8247 = vmatprep.subr.bf16.mxu0 0
        %8248 = vmatpush1.bf16.msra.mxu0 0
        %8249 = vmatprep.subr.bf16.mxu0 0
        %8250 = vmatpush1.bf16.msra.mxu0 0
        %8251 = vmatprep.subr.bf16.mxu0 0
        %8252 = vmatpush1.bf16.msra.mxu0 0
        %8253 = vmatprep.subr.bf16.mxu0 0
        %8254 = vmatpush1.bf16.msra.mxu0 0
        %8255 = vmatprep.subr.bf16.mxu0 0
        %8256 = vmatpush1.bf16.msra.mxu0 0
        %8257 = vmatprep.subr.bf16.mxu0 0
        %8258 = vmatpush1.bf16.msra.mxu0 0
        %8259 = vmatprep.subr.bf16.mxu0 0
        %8260 = vmatpush1.bf16.msra.mxu0 0
        %8261 = vmatprep.subr.bf16.mxu0 0
        %8262 = vmatpush1.bf16.msra.mxu0 0
        %8263 = vmatprep.mubr.bf16.mxu0 0
        %8264 = vmatmul.mubr.bf16.gmra.mrb[0].mxu0 %v7253
        %v8265 = vpop.f32.mrb[0].mxu0
        %v8266 = vadd.f32 %v7415, %v8265
        %v8267 = vpop.f32.mrb[0].mxu0
        %v8268 = vadd.f32 %v7419, %v8267
        %v8269 = vpop.f32.mrb[0].mxu0
        %v8270 = vpop.f32.mrb[0].mxu0
        %8271 = vdwg.mxu0
        %8272 = vmatprep.subr.bf16.mxu0 %v7861
        %8273 = vmatpush1.bf16.msra.mxu0 %v7860
        %8274 = vmatprep.subr.bf16.mxu0 %v7877
        %8275 = vmatpush1.bf16.msra.mxu0 %v7876
        %8276 = vmatprep.subr.bf16.mxu0 %v7893
        %8277 = vmatpush1.bf16.msra.mxu0 %v7892
        %8278 = vmatprep.subr.bf16.mxu0 %v7909
        %8279 = vmatpush1.bf16.msra.mxu0 %v7908
        %8280 = vmatprep.subr.bf16.mxu0 %v7925
        %8281 = vmatpush1.bf16.msra.mxu0 %v7924
        %8282 = vmatprep.subr.bf16.mxu0 %v7941
        %8283 = vmatpush1.bf16.msra.mxu0 %v7940
        %8284 = vmatprep.subr.bf16.mxu0 %v7957
        %8285 = vmatpush1.bf16.msra.mxu0 %v7956
        %8286 = vmatprep.subr.bf16.mxu0 %v7973
        %8287 = vmatpush1.bf16.msra.mxu0 %v7972
        %8288 = vmatprep.subr.bf16.mxu0 0
        %8289 = vmatpush1.bf16.msra.mxu0 0
        %8290 = vmatprep.subr.bf16.mxu0 0
        %8291 = vmatpush1.bf16.msra.mxu0 0
        %8292 = vmatprep.subr.bf16.mxu0 0
        %8293 = vmatpush1.bf16.msra.mxu0 0
        %8294 = vmatprep.subr.bf16.mxu0 0
        %8295 = vmatpush1.bf16.msra.mxu0 0
        %8296 = vmatprep.subr.bf16.mxu0 0
        %8297 = vmatpush1.bf16.msra.mxu0 0
        %8298 = vmatprep.subr.bf16.mxu0 0
        %8299 = vmatpush1.bf16.msra.mxu0 0
        %8300 = vmatprep.subr.bf16.mxu0 0
        %8301 = vmatpush1.bf16.msra.mxu0 0
        %8302 = vmatprep.subr.bf16.mxu0 0
        %8303 = vmatpush1.bf16.msra.mxu0 0
        %8304 = vmatprep.mubr.bf16.mxu0 0
        %8305 = vmatmul.mubr.bf16.gmra.mrb[0].mxu0 %v7253
        %v8306 = vpop.f32.mrb[0].mxu0
        %v8307 = vadd.f32 %v7423, %v8306
        %v8308 = vpop.f32.mrb[0].mxu0
        %v8309 = vadd.f32 %v7427, %v8308
        %v8310 = vpop.f32.mrb[0].mxu0
        %v8311 = vpop.f32.mrb[0].mxu0
        %8312 = vdwg.mxu0
        %8313 = vmatprep.subr.bf16.mxu0 %v7863
        %8314 = vmatpush1.bf16.msra.mxu0 %v7862
        %8315 = vmatprep.subr.bf16.mxu0 %v7879
        %8316 = vmatpush1.bf16.msra.mxu0 %v7878
        %8317 = vmatprep.subr.bf16.mxu0 %v7895
        %8318 = vmatpush1.bf16.msra.mxu0 %v7894
        %8319 = vmatprep.subr.bf16.mxu0 %v7911
        %8320 = vmatpush1.bf16.msra.mxu0 %v7910
        %8321 = vmatprep.subr.bf16.mxu0 %v7927
        %8322 = vmatpush1.bf16.msra.mxu0 %v7926
        %8323 = vmatprep.subr.bf16.mxu0 %v7943
        %8324 = vmatpush1.bf16.msra.mxu0 %v7942
        %8325 = vmatprep.subr.bf16.mxu0 %v7959
        %8326 = vmatpush1.bf16.msra.mxu0 %v7958
        %8327 = vmatprep.subr.bf16.mxu0 %v7975
        %8328 = vmatpush1.bf16.msra.mxu0 %v7974
        %8329 = vmatprep.subr.bf16.mxu0 0
        %8330 = vmatpush1.bf16.msra.mxu0 0
        %8331 = vmatprep.subr.bf16.mxu0 0
        %8332 = vmatpush1.bf16.msra.mxu0 0
        %8333 = vmatprep.subr.bf16.mxu0 0
        %8334 = vmatpush1.bf16.msra.mxu0 0
        %8335 = vmatprep.subr.bf16.mxu0 0
        %8336 = vmatpush1.bf16.msra.mxu0 0
        %8337 = vmatprep.subr.bf16.mxu0 0
        %8338 = vmatpush1.bf16.msra.mxu0 0
        %8339 = vmatprep.subr.bf16.mxu0 0
        %8340 = vmatpush1.bf16.msra.mxu0 0
        %8341 = vmatprep.subr.bf16.mxu0 0
        %8342 = vmatpush1.bf16.msra.mxu0 0
        %8343 = vmatprep.subr.bf16.mxu0 0
        %8344 = vmatpush1.bf16.msra.mxu0 0
        %8345 = vmatprep.mubr.bf16.mxu0 0
        %8346 = vmatmul.mubr.bf16.gmra.mrb[0].mxu0 %v7253
        %v8347 = vpop.f32.mrb[0].mxu0
        %v8348 = vadd.f32 %v7431, %v8347
        %v8349 = vpop.f32.mrb[0].mxu0
        %v8350 = vadd.f32 %v7435, %v8349
        %v8351 = vpop.f32.mrb[0].mxu0
        %v8352 = vpop.f32.mrb[0].mxu0
        %8353 = vdwg.mxu0
        %8354 = vmatprep.subr.bf16.mxu0 %v7865
        %8355 = vmatpush1.bf16.msra.mxu0 %v7864
        %8356 = vmatprep.subr.bf16.mxu0 %v7881
        %8357 = vmatpush1.bf16.msra.mxu0 %v7880
        %8358 = vmatprep.subr.bf16.mxu0 %v7897
        %8359 = vmatpush1.bf16.msra.mxu0 %v7896
        %8360 = vmatprep.subr.bf16.mxu0 %v7913
        %8361 = vmatpush1.bf16.msra.mxu0 %v7912
        %8362 = vmatprep.subr.bf16.mxu0 %v7929
        %8363 = vmatpush1.bf16.msra.mxu0 %v7928
        %8364 = vmatprep.subr.bf16.mxu0 %v7945
        %8365 = vmatpush1.bf16.msra.mxu0 %v7944
        %8366 = vmatprep.subr.bf16.mxu0 %v7961
        %8367 = vmatpush1.bf16.msra.mxu0 %v7960
        %8368 = vmatprep.subr.bf16.mxu0 %v7977
        %8369 = vmatpush1.bf16.msra.mxu0 %v7976
        %8370 = vmatprep.subr.bf16.mxu0 0
        %8371 = vmatpush1.bf16.msra.mxu0 0
        %8372 = vmatprep.subr.bf16.mxu0 0
        %8373 = vmatpush1.bf16.msra.mxu0 0
        %8374 = vmatprep.subr.bf16.mxu0 0
        %8375 = vmatpush1.bf16.msra.mxu0 0
        %8376 = vmatprep.subr.bf16.mxu0 0
        %8377 = vmatpush1.bf16.msra.mxu0 0
        %8378 = vmatprep.subr.bf16.mxu0 0
        %8379 = vmatpush1.bf16.msra.mxu0 0
        %8380 = vmatprep.subr.bf16.mxu0 0
        %8381 = vmatpush1.bf16.msra.mxu0 0
        %8382 = vmatprep.subr.bf16.mxu0 0
        %8383 = vmatpush1.bf16.msra.mxu0 0
        %8384 = vmatprep.subr.bf16.mxu0 0
        %8385 = vmatpush1.bf16.msra.mxu0 0
        %8386 = vmatprep.mubr.bf16.mxu0 0
        %8387 = vmatmul.mubr.bf16.gmra.mrb[0].mxu0 %v7253
        %v8388 = vpop.f32.mrb[0].mxu0
        %v8389 = vadd.f32 %v7439, %v8388
        %v8390 = vpop.f32.mrb[0].mxu0
        %v8391 = vadd.f32 %v7443, %v8390
        %v8392 = vpop.f32.mrb[0].mxu0
        %v8393 = vpop.f32.mrb[0].mxu0
        %8394 = vdwg.mxu0
        %8395 = vmatprep.subr.bf16.mxu0 %v7867
        %8396 = vmatpush1.bf16.msra.mxu0 %v7866
        %8397 = vmatprep.subr.bf16.mxu0 %v7883
        %8398 = vmatpush1.bf16.msra.mxu0 %v7882
        %8399 = vmatprep.subr.bf16.mxu0 %v7899
        %8400 = vmatpush1.bf16.msra.mxu0 %v7898
        %8401 = vmatprep.subr.bf16.mxu0 %v7915
        %8402 = vmatpush1.bf16.msra.mxu0 %v7914
        %8403 = vmatprep.subr.bf16.mxu0 %v7931
        %8404 = vmatpush1.bf16.msra.mxu0 %v7930
        %8405 = vmatprep.subr.bf16.mxu0 %v7947
        %8406 = vmatpush1.bf16.msra.mxu0 %v7946
        %8407 = vmatprep.subr.bf16.mxu0 %v7963
        %8408 = vmatpush1.bf16.msra.mxu0 %v7962
        %8409 = vmatprep.subr.bf16.mxu0 %v7979
        %8410 = vmatpush1.bf16.msra.mxu0 %v7978
        %8411 = vmatprep.subr.bf16.mxu0 0
        %8412 = vmatpush1.bf16.msra.mxu0 0
        %8413 = vmatprep.subr.bf16.mxu0 0
        %8414 = vmatpush1.bf16.msra.mxu0 0
        %8415 = vmatprep.subr.bf16.mxu0 0
        %8416 = vmatpush1.bf16.msra.mxu0 0
        %8417 = vmatprep.subr.bf16.mxu0 0
        %8418 = vmatpush1.bf16.msra.mxu0 0
        %8419 = vmatprep.subr.bf16.mxu0 0
        %8420 = vmatpush1.bf16.msra.mxu0 0
        %8421 = vmatprep.subr.bf16.mxu0 0
        %8422 = vmatpush1.bf16.msra.mxu0 0
        %8423 = vmatprep.subr.bf16.mxu0 0
        %8424 = vmatpush1.bf16.msra.mxu0 0
        %8425 = vmatprep.subr.bf16.mxu0 0
        %8426 = vmatpush1.bf16.msra.mxu0 0
        %8427 = vmatprep.mubr.bf16.mxu0 0
        %8428 = vmatmul.mubr.bf16.gmra.mrb[0].mxu0 %v7253
        %v8429 = vpop.f32.mrb[0].mxu0
        %v8430 = vadd.f32 %v7447, %v8429
        %v8431 = vpop.f32.mrb[0].mxu0
        %v8432 = vadd.f32 %v7451, %v8431
        %v8433 = vpop.f32.mrb[0].mxu0
        %v8434 = vpop.f32.mrb[0].mxu0
        %8435 = vdwg.mxu0
        %v8436 = vmax.f32 %v8143, 0.0
        %v8437 = vmax.f32 %v8145, 0.0
        %v8438 = vmax.f32 %v8184, 0.0
        %v8439 = vmax.f32 %v8186, 0.0
        %v8440 = vmax.f32 %v8225, 0.0
        %v8441 = vmax.f32 %v8227, 0.0
        %v8442 = vmax.f32 %v8266, 0.0
        %v8443 = vmax.f32 %v8268, 0.0
        %v8444 = vmax.f32 %v8307, 0.0
        %v8445 = vmax.f32 %v8309, 0.0
        %v8446 = vmax.f32 %v8348, 0.0
        %v8447 = vmax.f32 %v8350, 0.0
        %v8448 = vmax.f32 %v8389, 0.0
        %v8449 = vmax.f32 %v8391, 0.0
        %v8450 = vmax.f32 %v8430, 0.0
        %v8451 = vmax.f32 %v8432, 0.0
        %v8452 = vpack.c.bf16 %v8436, %v8436
        %v8453 = vpack.c.bf16 %v8437, %v8437
        %v8454 = vpack.c.bf16 %v8438, %v8438
        %v8455 = vpack.c.bf16 %v8439, %v8439
        %v8456 = vpack.c.bf16 %v8440, %v8440
        %v8457 = vpack.c.bf16 %v8441, %v8441
        %v8458 = vpack.c.bf16 %v8442, %v8442
        %v8459 = vpack.c.bf16 %v8443, %v8443
        %v8460 = vpack.c.bf16 %v8444, %v8444
        %v8461 = vpack.c.bf16 %v8445, %v8445
        %v8462 = vpack.c.bf16 %v8446, %v8446
        %v8463 = vpack.c.bf16 %v8447, %v8447
        %v8464 = vpack.c.bf16 %v8448, %v8448
        %v8465 = vpack.c.bf16 %v8449, %v8449
        %v8466 = vpack.c.bf16 %v8450, %v8450
        %v8467 = vpack.c.bf16 %v8451, %v8451
        %s8468 = scalar_lea.vmem [#allocation28], 1024
        %v8469 = vld [vmem:[%s8468] sm:$0xf]
        %v8470 = vld [vmem:[%s8468 + $0x4] sm:$0xf]
        %v8471 = vld [vmem:[%s8468 + $0x8] sm:$0xf]
        %v8472 = vld [vmem:[%s8468 + $0xc] sm:$0xf]
        %v8473 = vld [vmem:[%s8468 + $0x10] sm:$0xf]
        %v8474 = vld [vmem:[%s8468 + $0x14] sm:$0xf]
        %v8475 = vld [vmem:[%s8468 + $0x18] sm:$0xf]
        %v8476 = vld [vmem:[%s8468 + $0x1c] sm:$0xf]
        %v8477 = vld [vmem:[%s8468 + $0x20] sm:$0xf]
        %v8478 = vld [vmem:[%s8468 + $0x24] sm:$0xf]
        %v8479 = vld [vmem:[%s8468 + $0x28] sm:$0xf]
        %v8480 = vld [vmem:[%s8468 + $0x2c] sm:$0xf]
        %v8481 = vld [vmem:[%s8468 + $0x30] sm:$0xf]
        %v8482 = vld [vmem:[%s8468 + $0x34] sm:$0xf]
        %v8483 = vld [vmem:[%s8468 + $0x38] sm:$0xf]
        %v8484 = vld [vmem:[%s8468 + $0x3c] sm:$0xf]
        %v8485 = vld [vmem:[%s8468 + $0x40] sm:$0xf]
        %v8486 = vld [vmem:[%s8468 + $0x44] sm:$0xf]
        %v8487 = vld [vmem:[%s8468 + $0x48] sm:$0xf]
        %v8488 = vld [vmem:[%s8468 + $0x4c] sm:$0xf]
        %v8489 = vld [vmem:[%s8468 + $0x50] sm:$0xf]
        %v8490 = vld [vmem:[%s8468 + $0x54] sm:$0xf]
        %v8491 = vld [vmem:[%s8468 + $0x58] sm:$0xf]
        %v8492 = vld [vmem:[%s8468 + $0x5c] sm:$0xf]
        %v8493 = vld [vmem:[%s8468 + $0x60] sm:$0xf]
        %v8494 = vld [vmem:[%s8468 + $0x64] sm:$0xf]
        %v8495 = vld [vmem:[%s8468 + $0x68] sm:$0xf]
        %v8496 = vld [vmem:[%s8468 + $0x6c] sm:$0xf]
        %v8497 = vld [vmem:[%s8468 + $0x70] sm:$0xf]
        %v8498 = vld [vmem:[%s8468 + $0x74] sm:$0xf]
        %v8499 = vld [vmem:[%s8468 + $0x78] sm:$0xf]
        %v8500 = vld [vmem:[%s8468 + $0x7c] sm:$0xf]
        %v8501 = vld [vmem:[%s8468 + $0x80] sm:$0xf]
        %v8502 = vld [vmem:[%s8468 + $0x84] sm:$0xf]
        %v8503 = vld [vmem:[%s8468 + $0x88] sm:$0xf]
        %v8504 = vld [vmem:[%s8468 + $0x8c] sm:$0xf]
        %v8505 = vld [vmem:[%s8468 + $0x90] sm:$0xf]
        %v8506 = vld [vmem:[%s8468 + $0x94] sm:$0xf]
        %v8507 = vld [vmem:[%s8468 + $0x98] sm:$0xf]
        %v8508 = vld [vmem:[%s8468 + $0x9c] sm:$0xf]
        %v8509 = vld [vmem:[%s8468 + $0xa0] sm:$0xf]
        %v8510 = vld [vmem:[%s8468 + $0xa4] sm:$0xf]
        %v8511 = vld [vmem:[%s8468 + $0xa8] sm:$0xf]
        %v8512 = vld [vmem:[%s8468 + $0xac] sm:$0xf]
        %v8513 = vld [vmem:[%s8468 + $0xb0] sm:$0xf]
        %v8514 = vld [vmem:[%s8468 + $0xb4] sm:$0xf]
        %v8515 = vld [vmem:[%s8468 + $0xb8] sm:$0xf]
        %v8516 = vld [vmem:[%s8468 + $0xbc] sm:$0xf]
        %v8517 = vld [vmem:[%s8468 + $0xc0] sm:$0xf]
        %v8518 = vld [vmem:[%s8468 + $0xc4] sm:$0xf]
        %v8519 = vld [vmem:[%s8468 + $0xc8] sm:$0xf]
        %v8520 = vld [vmem:[%s8468 + $0xcc] sm:$0xf]
        %v8521 = vld [vmem:[%s8468 + $0xd0] sm:$0xf]
        %v8522 = vld [vmem:[%s8468 + $0xd4] sm:$0xf]
        %v8523 = vld [vmem:[%s8468 + $0xd8] sm:$0xf]
        %v8524 = vld [vmem:[%s8468 + $0xdc] sm:$0xf]
        %v8525 = vld [vmem:[%s8468 + $0xe0] sm:$0xf]
        %v8526 = vld [vmem:[%s8468 + $0xe4] sm:$0xf]
        %v8527 = vld [vmem:[%s8468 + $0xe8] sm:$0xf]
        %v8528 = vld [vmem:[%s8468 + $0xec] sm:$0xf]
        %v8529 = vld [vmem:[%s8468 + $0xf0] sm:$0xf]
        %v8530 = vld [vmem:[%s8468 + $0xf4] sm:$0xf]
        %v8531 = vld [vmem:[%s8468 + $0xf8] sm:$0xf]
        %v8532 = vld [vmem:[%s8468 + $0xfc] sm:$0xf]
        %v8533 = vld [vmem:[%s8468 + $0x100] sm:$0xf]
        %v8534 = vld [vmem:[%s8468 + $0x104] sm:$0xf]
        %v8535 = vld [vmem:[%s8468 + $0x108] sm:$0xf]
        %v8536 = vld [vmem:[%s8468 + $0x10c] sm:$0xf]
        %v8537 = vld [vmem:[%s8468 + $0x110] sm:$0xf]
        %v8538 = vld [vmem:[%s8468 + $0x114] sm:$0xf]
        %v8539 = vld [vmem:[%s8468 + $0x118] sm:$0xf]
        %v8540 = vld [vmem:[%s8468 + $0x11c] sm:$0xf]
        %v8541 = vld [vmem:[%s8468 + $0x120] sm:$0xf]
        %v8542 = vld [vmem:[%s8468 + $0x124] sm:$0xf]
        %v8543 = vld [vmem:[%s8468 + $0x128] sm:$0xf]
        %v8544 = vld [vmem:[%s8468 + $0x12c] sm:$0xf]
        %v8545 = vld [vmem:[%s8468 + $0x130] sm:$0xf]
        %v8546 = vld [vmem:[%s8468 + $0x134] sm:$0xf]
        %v8547 = vld [vmem:[%s8468 + $0x138] sm:$0xf]
        %v8548 = vld [vmem:[%s8468 + $0x13c] sm:$0xf]
        %v8549 = vld [vmem:[%s8468 + $0x140] sm:$0xf]
        %v8550 = vld [vmem:[%s8468 + $0x144] sm:$0xf]
        %v8551 = vld [vmem:[%s8468 + $0x148] sm:$0xf]
        %v8552 = vld [vmem:[%s8468 + $0x14c] sm:$0xf]
        %v8553 = vld [vmem:[%s8468 + $0x150] sm:$0xf]
        %v8554 = vld [vmem:[%s8468 + $0x154] sm:$0xf]
        %v8555 = vld [vmem:[%s8468 + $0x158] sm:$0xf]
        %v8556 = vld [vmem:[%s8468 + $0x15c] sm:$0xf]
        %v8557 = vld [vmem:[%s8468 + $0x160] sm:$0xf]
        %v8558 = vld [vmem:[%s8468 + $0x164] sm:$0xf]
        %v8559 = vld [vmem:[%s8468 + $0x168] sm:$0xf]
        %v8560 = vld [vmem:[%s8468 + $0x16c] sm:$0xf]
        %v8561 = vld [vmem:[%s8468 + $0x170] sm:$0xf]
        %v8562 = vld [vmem:[%s8468 + $0x174] sm:$0xf]
        %v8563 = vld [vmem:[%s8468 + $0x178] sm:$0xf]
        %v8564 = vld [vmem:[%s8468 + $0x17c] sm:$0xf]
        %v8565 = vld [vmem:[%s8468 + $0x180] sm:$0xf]
        %v8566 = vld [vmem:[%s8468 + $0x184] sm:$0xf]
        %v8567 = vld [vmem:[%s8468 + $0x188] sm:$0xf]
        %v8568 = vld [vmem:[%s8468 + $0x18c] sm:$0xf]
        %v8569 = vld [vmem:[%s8468 + $0x190] sm:$0xf]
        %v8570 = vld [vmem:[%s8468 + $0x194] sm:$0xf]
        %v8571 = vld [vmem:[%s8468 + $0x198] sm:$0xf]
        %v8572 = vld [vmem:[%s8468 + $0x19c] sm:$0xf]
        %v8573 = vld [vmem:[%s8468 + $0x1a0] sm:$0xf]
        %v8574 = vld [vmem:[%s8468 + $0x1a4] sm:$0xf]
        %v8575 = vld [vmem:[%s8468 + $0x1a8] sm:$0xf]
        %v8576 = vld [vmem:[%s8468 + $0x1ac] sm:$0xf]
        %v8577 = vld [vmem:[%s8468 + $0x1b0] sm:$0xf]
        %v8578 = vld [vmem:[%s8468 + $0x1b4] sm:$0xf]
        %v8579 = vld [vmem:[%s8468 + $0x1b8] sm:$0xf]
        %v8580 = vld [vmem:[%s8468 + $0x1bc] sm:$0xf]
        %v8581 = vld [vmem:[%s8468 + $0x1c0] sm:$0xf]
        %v8582 = vld [vmem:[%s8468 + $0x1c4] sm:$0xf]
        %v8583 = vld [vmem:[%s8468 + $0x1c8] sm:$0xf]
        %v8584 = vld [vmem:[%s8468 + $0x1cc] sm:$0xf]
        %v8585 = vld [vmem:[%s8468 + $0x1d0] sm:$0xf]
        %v8586 = vld [vmem:[%s8468 + $0x1d4] sm:$0xf]
        %v8587 = vld [vmem:[%s8468 + $0x1d8] sm:$0xf]
        %v8588 = vld [vmem:[%s8468 + $0x1dc] sm:$0xf]
        %v8589 = vld [vmem:[%s8468 + $0x1e0] sm:$0xf]
        %v8590 = vld [vmem:[%s8468 + $0x1e4] sm:$0xf]
        %v8591 = vld [vmem:[%s8468 + $0x1e8] sm:$0xf]
        %v8592 = vld [vmem:[%s8468 + $0x1ec] sm:$0xf]
        %v8593 = vld [vmem:[%s8468 + $0x1f0] sm:$0xf]
        %v8594 = vld [vmem:[%s8468 + $0x1f4] sm:$0xf]
        %v8595 = vld [vmem:[%s8468 + $0x1f8] sm:$0xf]
        %v8596 = vld [vmem:[%s8468 + $0x1fc] sm:$0xf]
        %v8597 = vld [vmem:[%s8468 + $0x200] sm:$0xf]
        %v8598 = vld [vmem:[%s8468 + $0x204] sm:$0xf]
        %v8599 = vld [vmem:[%s8468 + $0x208] sm:$0xf]
        %v8600 = vld [vmem:[%s8468 + $0x20c] sm:$0xf]
        %v8601 = vld [vmem:[%s8468 + $0x210] sm:$0xf]
        %v8602 = vld [vmem:[%s8468 + $0x214] sm:$0xf]
        %v8603 = vld [vmem:[%s8468 + $0x218] sm:$0xf]
        %v8604 = vld [vmem:[%s8468 + $0x21c] sm:$0xf]
        %v8605 = vld [vmem:[%s8468 + $0x220] sm:$0xf]
        %v8606 = vld [vmem:[%s8468 + $0x224] sm:$0xf]
        %v8607 = vld [vmem:[%s8468 + $0x228] sm:$0xf]
        %v8608 = vld [vmem:[%s8468 + $0x22c] sm:$0xf]
        %v8609 = vld [vmem:[%s8468 + $0x230] sm:$0xf]
        %v8610 = vld [vmem:[%s8468 + $0x234] sm:$0xf]
        %v8611 = vld [vmem:[%s8468 + $0x238] sm:$0xf]
        %v8612 = vld [vmem:[%s8468 + $0x23c] sm:$0xf]
        %v8613 = vld [vmem:[%s8468 + $0x240] sm:$0xf]
        %v8614 = vld [vmem:[%s8468 + $0x244] sm:$0xf]
        %v8615 = vld [vmem:[%s8468 + $0x248] sm:$0xf]
        %v8616 = vld [vmem:[%s8468 + $0x24c] sm:$0xf]
        %v8617 = vld [vmem:[%s8468 + $0x250] sm:$0xf]
        %v8618 = vld [vmem:[%s8468 + $0x254] sm:$0xf]
        %v8619 = vld [vmem:[%s8468 + $0x258] sm:$0xf]
        %v8620 = vld [vmem:[%s8468 + $0x25c] sm:$0xf]
        %v8621 = vld [vmem:[%s8468 + $0x260] sm:$0xf]
        %v8622 = vld [vmem:[%s8468 + $0x264] sm:$0xf]
        %v8623 = vld [vmem:[%s8468 + $0x268] sm:$0xf]
        %v8624 = vld [vmem:[%s8468 + $0x26c] sm:$0xf]
        %v8625 = vld [vmem:[%s8468 + $0x270] sm:$0xf]
        %v8626 = vld [vmem:[%s8468 + $0x274] sm:$0xf]
        %v8627 = vld [vmem:[%s8468 + $0x278] sm:$0xf]
        %v8628 = vld [vmem:[%s8468 + $0x27c] sm:$0xf]
        %v8629 = vld [vmem:[%s8468 + $0x280] sm:$0xf]
        %v8630 = vld [vmem:[%s8468 + $0x284] sm:$0xf]
        %v8631 = vld [vmem:[%s8468 + $0x288] sm:$0xf]
        %v8632 = vld [vmem:[%s8468 + $0x28c] sm:$0xf]
        %v8633 = vld [vmem:[%s8468 + $0x290] sm:$0xf]
        %v8634 = vld [vmem:[%s8468 + $0x294] sm:$0xf]
        %v8635 = vld [vmem:[%s8468 + $0x298] sm:$0xf]
        %v8636 = vld [vmem:[%s8468 + $0x29c] sm:$0xf]
        %v8637 = vld [vmem:[%s8468 + $0x2a0] sm:$0xf]
        %v8638 = vld [vmem:[%s8468 + $0x2a4] sm:$0xf]
        %v8639 = vld [vmem:[%s8468 + $0x2a8] sm:$0xf]
        %v8640 = vld [vmem:[%s8468 + $0x2ac] sm:$0xf]
        %v8641 = vld [vmem:[%s8468 + $0x2b0] sm:$0xf]
        %v8642 = vld [vmem:[%s8468 + $0x2b4] sm:$0xf]
        %v8643 = vld [vmem:[%s8468 + $0x2b8] sm:$0xf]
        %v8644 = vld [vmem:[%s8468 + $0x2bc] sm:$0xf]
        %v8645 = vld [vmem:[%s8468 + $0x2c0] sm:$0xf]
        %v8646 = vld [vmem:[%s8468 + $0x2c4] sm:$0xf]
        %v8647 = vld [vmem:[%s8468 + $0x2c8] sm:$0xf]
        %v8648 = vld [vmem:[%s8468 + $0x2cc] sm:$0xf]
        %v8649 = vld [vmem:[%s8468 + $0x2d0] sm:$0xf]
        %v8650 = vld [vmem:[%s8468 + $0x2d4] sm:$0xf]
        %v8651 = vld [vmem:[%s8468 + $0x2d8] sm:$0xf]
        %v8652 = vld [vmem:[%s8468 + $0x2dc] sm:$0xf]
        %v8653 = vld [vmem:[%s8468 + $0x2e0] sm:$0xf]
        %v8654 = vld [vmem:[%s8468 + $0x2e4] sm:$0xf]
        %v8655 = vld [vmem:[%s8468 + $0x2e8] sm:$0xf]
        %v8656 = vld [vmem:[%s8468 + $0x2ec] sm:$0xf]
        %v8657 = vld [vmem:[%s8468 + $0x2f0] sm:$0xf]
        %v8658 = vld [vmem:[%s8468 + $0x2f4] sm:$0xf]
        %v8659 = vld [vmem:[%s8468 + $0x2f8] sm:$0xf]
        %v8660 = vld [vmem:[%s8468 + $0x2fc] sm:$0xf]
        %v8661 = vld [vmem:[%s8468 + $0x300] sm:$0xf]
        %v8662 = vld [vmem:[%s8468 + $0x304] sm:$0xf]
        %v8663 = vld [vmem:[%s8468 + $0x308] sm:$0xf]
        %v8664 = vld [vmem:[%s8468 + $0x30c] sm:$0xf]
        %v8665 = vld [vmem:[%s8468 + $0x310] sm:$0xf]
        %v8666 = vld [vmem:[%s8468 + $0x314] sm:$0xf]
        %v8667 = vld [vmem:[%s8468 + $0x318] sm:$0xf]
        %v8668 = vld [vmem:[%s8468 + $0x31c] sm:$0xf]
        %v8669 = vld [vmem:[%s8468 + $0x320] sm:$0xf]
        %v8670 = vld [vmem:[%s8468 + $0x324] sm:$0xf]
        %v8671 = vld [vmem:[%s8468 + $0x328] sm:$0xf]
        %v8672 = vld [vmem:[%s8468 + $0x32c] sm:$0xf]
        %v8673 = vld [vmem:[%s8468 + $0x330] sm:$0xf]
        %v8674 = vld [vmem:[%s8468 + $0x334] sm:$0xf]
        %v8675 = vld [vmem:[%s8468 + $0x338] sm:$0xf]
        %v8676 = vld [vmem:[%s8468 + $0x33c] sm:$0xf]
        %v8677 = vld [vmem:[%s8468 + $0x340] sm:$0xf]
        %v8678 = vld [vmem:[%s8468 + $0x344] sm:$0xf]
        %v8679 = vld [vmem:[%s8468 + $0x348] sm:$0xf]
        %v8680 = vld [vmem:[%s8468 + $0x34c] sm:$0xf]
        %v8681 = vld [vmem:[%s8468 + $0x350] sm:$0xf]
        %v8682 = vld [vmem:[%s8468 + $0x354] sm:$0xf]
        %v8683 = vld [vmem:[%s8468 + $0x358] sm:$0xf]
        %v8684 = vld [vmem:[%s8468 + $0x35c] sm:$0xf]
        %v8685 = vld [vmem:[%s8468 + $0x360] sm:$0xf]
        %v8686 = vld [vmem:[%s8468 + $0x364] sm:$0xf]
        %v8687 = vld [vmem:[%s8468 + $0x368] sm:$0xf]
        %v8688 = vld [vmem:[%s8468 + $0x36c] sm:$0xf]
        %v8689 = vld [vmem:[%s8468 + $0x370] sm:$0xf]
        %v8690 = vld [vmem:[%s8468 + $0x374] sm:$0xf]
        %v8691 = vld [vmem:[%s8468 + $0x378] sm:$0xf]
        %v8692 = vld [vmem:[%s8468 + $0x37c] sm:$0xf]
        %v8693 = vld [vmem:[%s8468 + $0x380] sm:$0xf]
        %v8694 = vld [vmem:[%s8468 + $0x384] sm:$0xf]
        %v8695 = vld [vmem:[%s8468 + $0x388] sm:$0xf]
        %v8696 = vld [vmem:[%s8468 + $0x38c] sm:$0xf]
        %v8697 = vld [vmem:[%s8468 + $0x390] sm:$0xf]
        %v8698 = vld [vmem:[%s8468 + $0x394] sm:$0xf]
        %v8699 = vld [vmem:[%s8468 + $0x398] sm:$0xf]
        %v8700 = vld [vmem:[%s8468 + $0x39c] sm:$0xf]
        %v8701 = vld [vmem:[%s8468 + $0x3a0] sm:$0xf]
        %v8702 = vld [vmem:[%s8468 + $0x3a4] sm:$0xf]
        %v8703 = vld [vmem:[%s8468 + $0x3a8] sm:$0xf]
        %v8704 = vld [vmem:[%s8468 + $0x3ac] sm:$0xf]
        %v8705 = vld [vmem:[%s8468 + $0x3b0] sm:$0xf]
        %v8706 = vld [vmem:[%s8468 + $0x3b4] sm:$0xf]
        %v8707 = vld [vmem:[%s8468 + $0x3b8] sm:$0xf]
        %v8708 = vld [vmem:[%s8468 + $0x3bc] sm:$0xf]
        %v8709 = vld [vmem:[%s8468 + $0x3c0] sm:$0xf]
        %v8710 = vld [vmem:[%s8468 + $0x3c4] sm:$0xf]
        %v8711 = vld [vmem:[%s8468 + $0x3c8] sm:$0xf]
        %v8712 = vld [vmem:[%s8468 + $0x3cc] sm:$0xf]
        %v8713 = vld [vmem:[%s8468 + $0x3d0] sm:$0xf]
        %v8714 = vld [vmem:[%s8468 + $0x3d4] sm:$0xf]
        %v8715 = vld [vmem:[%s8468 + $0x3d8] sm:$0xf]
        %v8716 = vld [vmem:[%s8468 + $0x3dc] sm:$0xf]
        %v8717 = vld [vmem:[%s8468 + $0x3e0] sm:$0xf]
        %v8718 = vld [vmem:[%s8468 + $0x3e4] sm:$0xf]
        %v8719 = vld [vmem:[%s8468 + $0x3e8] sm:$0xf]
        %v8720 = vld [vmem:[%s8468 + $0x3ec] sm:$0xf]
        %v8721 = vld [vmem:[%s8468 + $0x3f0] sm:$0xf]
        %v8722 = vld [vmem:[%s8468 + $0x3f4] sm:$0xf]
        %v8723 = vld [vmem:[%s8468 + $0x3f8] sm:$0xf]
        %v8724 = vld [vmem:[%s8468 + $0x3fc] sm:$0xf]
        %v8981 = vunpack.c.l.b16 %v8469
        %v8982 = vunpack.c.l.b16 %v8470
        %v8983 = vunpack.c.l.b16 %v8471
        %v8984 = vunpack.c.l.b16 %v8472
        %v8985 = vunpack.c.l.b16 %v8473
        %v8986 = vunpack.c.l.b16 %v8474
        %v8987 = vunpack.c.l.b16 %v8475
        %v8988 = vunpack.c.l.b16 %v8476
        %v8989 = vunpack.c.l.b16 %v8477
        %v8990 = vunpack.c.l.b16 %v8478
        %v8991 = vunpack.c.l.b16 %v8479
        %v8992 = vunpack.c.l.b16 %v8480
        %v8993 = vunpack.c.l.b16 %v8481
        %v8994 = vunpack.c.l.b16 %v8482
        %v8995 = vunpack.c.l.b16 %v8483
        %v8996 = vunpack.c.l.b16 %v8484
        %v8997 = vunpack.c.l.b16 %v8485
        %v8998 = vunpack.c.l.b16 %v8486
        %v8999 = vunpack.c.l.b16 %v8487
        %v9000 = vunpack.c.l.b16 %v8488
        %v9001 = vunpack.c.l.b16 %v8489
        %v9002 = vunpack.c.l.b16 %v8490
        %v9003 = vunpack.c.l.b16 %v8491
        %v9004 = vunpack.c.l.b16 %v8492
        %v9005 = vunpack.c.l.b16 %v8493
        %v9006 = vunpack.c.l.b16 %v8494
        %v9007 = vunpack.c.l.b16 %v8495
        %v9008 = vunpack.c.l.b16 %v8496
        %v9009 = vunpack.c.l.b16 %v8497
        %v9010 = vunpack.c.l.b16 %v8498
        %v9011 = vunpack.c.l.b16 %v8499
        %v9012 = vunpack.c.l.b16 %v8500
        %v9013 = vunpack.c.l.b16 %v8501
        %v9014 = vunpack.c.l.b16 %v8502
        %v9015 = vunpack.c.l.b16 %v8503
        %v9016 = vunpack.c.l.b16 %v8504
        %v9017 = vunpack.c.l.b16 %v8505
        %v9018 = vunpack.c.l.b16 %v8506
        %v9019 = vunpack.c.l.b16 %v8507
        %v9020 = vunpack.c.l.b16 %v8508
        %v9021 = vunpack.c.l.b16 %v8509
        %v9022 = vunpack.c.l.b16 %v8510
        %v9023 = vunpack.c.l.b16 %v8511
        %v9024 = vunpack.c.l.b16 %v8512
        %v9025 = vunpack.c.l.b16 %v8513
        %v9026 = vunpack.c.l.b16 %v8514
        %v9027 = vunpack.c.l.b16 %v8515
        %v9028 = vunpack.c.l.b16 %v8516
        %v9029 = vunpack.c.l.b16 %v8517
        %v9030 = vunpack.c.l.b16 %v8518
        %v9031 = vunpack.c.l.b16 %v8519
        %v9032 = vunpack.c.l.b16 %v8520
        %v9033 = vunpack.c.l.b16 %v8521
        %v9034 = vunpack.c.l.b16 %v8522
        %v9035 = vunpack.c.l.b16 %v8523
        %v9036 = vunpack.c.l.b16 %v8524
        %v9037 = vunpack.c.l.b16 %v8525
        %v9038 = vunpack.c.l.b16 %v8526
        %v9039 = vunpack.c.l.b16 %v8527
        %v9040 = vunpack.c.l.b16 %v8528
        %v9041 = vunpack.c.l.b16 %v8529
        %v9042 = vunpack.c.l.b16 %v8530
        %v9043 = vunpack.c.l.b16 %v8531
        %v9044 = vunpack.c.l.b16 %v8532
        %v9045 = vunpack.c.l.b16 %v8533
        %v9046 = vunpack.c.l.b16 %v8534
        %v9047 = vunpack.c.l.b16 %v8535
        %v9048 = vunpack.c.l.b16 %v8536
        %v9049 = vunpack.c.l.b16 %v8537
        %v9050 = vunpack.c.l.b16 %v8538
        %v9051 = vunpack.c.l.b16 %v8539
        %v9052 = vunpack.c.l.b16 %v8540
        %v9053 = vunpack.c.l.b16 %v8541
        %v9054 = vunpack.c.l.b16 %v8542
        %v9055 = vunpack.c.l.b16 %v8543
        %v9056 = vunpack.c.l.b16 %v8544
        %v9057 = vunpack.c.l.b16 %v8545
        %v9058 = vunpack.c.l.b16 %v8546
        %v9059 = vunpack.c.l.b16 %v8547
        %v9060 = vunpack.c.l.b16 %v8548
        %v9061 = vunpack.c.l.b16 %v8549
        %v9062 = vunpack.c.l.b16 %v8550
        %v9063 = vunpack.c.l.b16 %v8551
        %v9064 = vunpack.c.l.b16 %v8552
        %v9065 = vunpack.c.l.b16 %v8553
        %v9066 = vunpack.c.l.b16 %v8554
        %v9067 = vunpack.c.l.b16 %v8555
        %v9068 = vunpack.c.l.b16 %v8556
        %v9069 = vunpack.c.l.b16 %v8557
        %v9070 = vunpack.c.l.b16 %v8558
        %v9071 = vunpack.c.l.b16 %v8559
        %v9072 = vunpack.c.l.b16 %v8560
        %v9073 = vunpack.c.l.b16 %v8561
        %v9074 = vunpack.c.l.b16 %v8562
        %v9075 = vunpack.c.l.b16 %v8563
        %v9076 = vunpack.c.l.b16 %v8564
        %v9077 = vunpack.c.l.b16 %v8565
        %v9078 = vunpack.c.l.b16 %v8566
        %v9079 = vunpack.c.l.b16 %v8567
        %v9080 = vunpack.c.l.b16 %v8568
        %v9081 = vunpack.c.l.b16 %v8569
        %v9082 = vunpack.c.l.b16 %v8570
        %v9083 = vunpack.c.l.b16 %v8571
        %v9084 = vunpack.c.l.b16 %v8572
        %v9085 = vunpack.c.l.b16 %v8573
        %v9086 = vunpack.c.l.b16 %v8574
        %v9087 = vunpack.c.l.b16 %v8575
        %v9088 = vunpack.c.l.b16 %v8576
        %v9089 = vunpack.c.l.b16 %v8577
        %v9090 = vunpack.c.l.b16 %v8578
        %v9091 = vunpack.c.l.b16 %v8579
        %v9092 = vunpack.c.l.b16 %v8580
        %v9093 = vunpack.c.l.b16 %v8581
        %v9094 = vunpack.c.l.b16 %v8582
        %v9095 = vunpack.c.l.b16 %v8583
        %v9096 = vunpack.c.l.b16 %v8584
        %v9097 = vunpack.c.l.b16 %v8585
        %v9098 = vunpack.c.l.b16 %v8586
        %v9099 = vunpack.c.l.b16 %v8587
        %v9100 = vunpack.c.l.b16 %v8588
        %v9101 = vunpack.c.l.b16 %v8589
        %v9102 = vunpack.c.l.b16 %v8590
        %v9103 = vunpack.c.l.b16 %v8591
        %v9104 = vunpack.c.l.b16 %v8592
        %v9105 = vunpack.c.l.b16 %v8593
        %v9106 = vunpack.c.l.b16 %v8594
        %v9107 = vunpack.c.l.b16 %v8595
        %v9108 = vunpack.c.l.b16 %v8596
        %v9109 = vunpack.c.l.b16 %v8597
        %v9110 = vunpack.c.l.b16 %v8598
        %v9111 = vunpack.c.l.b16 %v8599
        %v9112 = vunpack.c.l.b16 %v8600
        %v9113 = vunpack.c.l.b16 %v8601
        %v9114 = vunpack.c.l.b16 %v8602
        %v9115 = vunpack.c.l.b16 %v8603
        %v9116 = vunpack.c.l.b16 %v8604
        %v9117 = vunpack.c.l.b16 %v8605
        %v9118 = vunpack.c.l.b16 %v8606
        %v9119 = vunpack.c.l.b16 %v8607
        %v9120 = vunpack.c.l.b16 %v8608
        %v9121 = vunpack.c.l.b16 %v8609
        %v9122 = vunpack.c.l.b16 %v8610
        %v9123 = vunpack.c.l.b16 %v8611
        %v9124 = vunpack.c.l.b16 %v8612
        %v9125 = vunpack.c.l.b16 %v8613
        %v9126 = vunpack.c.l.b16 %v8614
        %v9127 = vunpack.c.l.b16 %v8615
        %v9128 = vunpack.c.l.b16 %v8616
        %v9129 = vunpack.c.l.b16 %v8617
        %v9130 = vunpack.c.l.b16 %v8618
        %v9131 = vunpack.c.l.b16 %v8619
        %v9132 = vunpack.c.l.b16 %v8620
        %v9133 = vunpack.c.l.b16 %v8621
        %v9134 = vunpack.c.l.b16 %v8622
        %v9135 = vunpack.c.l.b16 %v8623
        %v9136 = vunpack.c.l.b16 %v8624
        %v9137 = vunpack.c.l.b16 %v8625
        %v9138 = vunpack.c.l.b16 %v8626
        %v9139 = vunpack.c.l.b16 %v8627
        %v9140 = vunpack.c.l.b16 %v8628
        %v9141 = vunpack.c.l.b16 %v8629
        %v9142 = vunpack.c.l.b16 %v8630
        %v9143 = vunpack.c.l.b16 %v8631
        %v9144 = vunpack.c.l.b16 %v8632
        %v9145 = vunpack.c.l.b16 %v8633
        %v9146 = vunpack.c.l.b16 %v8634
        %v9147 = vunpack.c.l.b16 %v8635
        %v9148 = vunpack.c.l.b16 %v8636
        %v9149 = vunpack.c.l.b16 %v8637
        %v9150 = vunpack.c.l.b16 %v8638
        %v9151 = vunpack.c.l.b16 %v8639
        %v9152 = vunpack.c.l.b16 %v8640
        %v9153 = vunpack.c.l.b16 %v8641
        %v9154 = vunpack.c.l.b16 %v8642
        %v9155 = vunpack.c.l.b16 %v8643
        %v9156 = vunpack.c.l.b16 %v8644
        %v9157 = vunpack.c.l.b16 %v8645
        %v9158 = vunpack.c.l.b16 %v8646
        %v9159 = vunpack.c.l.b16 %v8647
        %v9160 = vunpack.c.l.b16 %v8648
        %v9161 = vunpack.c.l.b16 %v8649
        %v9162 = vunpack.c.l.b16 %v8650
        %v9163 = vunpack.c.l.b16 %v8651
        %v9164 = vunpack.c.l.b16 %v8652
        %v9165 = vunpack.c.l.b16 %v8653
        %v9166 = vunpack.c.l.b16 %v8654
        %v9167 = vunpack.c.l.b16 %v8655
        %v9168 = vunpack.c.l.b16 %v8656
        %v9169 = vunpack.c.l.b16 %v8657
        %v9170 = vunpack.c.l.b16 %v8658
        %v9171 = vunpack.c.l.b16 %v8659
        %v9172 = vunpack.c.l.b16 %v8660
        %v9173 = vunpack.c.l.b16 %v8661
        %v9174 = vunpack.c.l.b16 %v8662
        %v9175 = vunpack.c.l.b16 %v8663
        %v9176 = vunpack.c.l.b16 %v8664
        %v9177 = vunpack.c.l.b16 %v8665
        %v9178 = vunpack.c.l.b16 %v8666
        %v9179 = vunpack.c.l.b16 %v8667
        %v9180 = vunpack.c.l.b16 %v8668
        %v9181 = vunpack.c.l.b16 %v8669
        %v9182 = vunpack.c.l.b16 %v8670
        %v9183 = vunpack.c.l.b16 %v8671
        %v9184 = vunpack.c.l.b16 %v8672
        %v9185 = vunpack.c.l.b16 %v8673
        %v9186 = vunpack.c.l.b16 %v8674
        %v9187 = vunpack.c.l.b16 %v8675
        %v9188 = vunpack.c.l.b16 %v8676
        %v9189 = vunpack.c.l.b16 %v8677
        %v9190 = vunpack.c.l.b16 %v8678
        %v9191 = vunpack.c.l.b16 %v8679
        %v9192 = vunpack.c.l.b16 %v8680
        %v9193 = vunpack.c.l.b16 %v8681
        %v9194 = vunpack.c.l.b16 %v8682
        %v9195 = vunpack.c.l.b16 %v8683
        %v9196 = vunpack.c.l.b16 %v8684
        %v9197 = vunpack.c.l.b16 %v8685
        %v9198 = vunpack.c.l.b16 %v8686
        %v9199 = vunpack.c.l.b16 %v8687
        %v9200 = vunpack.c.l.b16 %v8688
        %v9201 = vunpack.c.l.b16 %v8689
        %v9202 = vunpack.c.l.b16 %v8690
        %v9203 = vunpack.c.l.b16 %v8691
        %v9204 = vunpack.c.l.b16 %v8692
        %v9205 = vunpack.c.l.b16 %v8693
        %v9206 = vunpack.c.l.b16 %v8694
        %v9207 = vunpack.c.l.b16 %v8695
        %v9208 = vunpack.c.l.b16 %v8696
        %v9209 = vunpack.c.l.b16 %v8697
        %v9210 = vunpack.c.l.b16 %v8698
        %v9211 = vunpack.c.l.b16 %v8699
        %v9212 = vunpack.c.l.b16 %v8700
        %v9213 = vunpack.c.l.b16 %v8701
        %v9214 = vunpack.c.l.b16 %v8702
        %v9215 = vunpack.c.l.b16 %v8703
        %v9216 = vunpack.c.l.b16 %v8704
        %v9217 = vunpack.c.l.b16 %v8705
        %v9218 = vunpack.c.l.b16 %v8706
        %v9219 = vunpack.c.l.b16 %v8707
        %v9220 = vunpack.c.l.b16 %v8708
        %v9221 = vunpack.c.l.b16 %v8709
        %v9222 = vunpack.c.l.b16 %v8710
        %v9223 = vunpack.c.l.b16 %v8711
        %v9224 = vunpack.c.l.b16 %v8712
        %v9225 = vunpack.c.l.b16 %v8713
        %v9226 = vunpack.c.l.b16 %v8714
        %v9227 = vunpack.c.l.b16 %v8715
        %v9228 = vunpack.c.l.b16 %v8716
        %v9229 = vunpack.c.l.b16 %v8717
        %v9230 = vunpack.c.l.b16 %v8718
        %v9231 = vunpack.c.l.b16 %v8719
        %v9232 = vunpack.c.l.b16 %v8720
        %v9233 = vunpack.c.l.b16 %v8721
        %v9234 = vunpack.c.l.b16 %v8722
        %v9235 = vunpack.c.l.b16 %v8723
        %v9236 = vunpack.c.l.b16 %v8724
        %v9237 = vpack.c.b16 %v8982, %v8981
        %v9238 = vpack.c.b16 %v8984, %v8983
        %v9239 = vpack.c.b16 %v8986, %v8985
        %v9240 = vpack.c.b16 %v8988, %v8987
        %v9241 = vpack.c.b16 %v8990, %v8989
        %v9242 = vpack.c.b16 %v8992, %v8991
        %v9243 = vpack.c.b16 %v8994, %v8993
        %v9244 = vpack.c.b16 %v8996, %v8995
        %v9245 = vpack.c.b16 %v8998, %v8997
        %v9246 = vpack.c.b16 %v9000, %v8999
        %v9247 = vpack.c.b16 %v9002, %v9001
        %v9248 = vpack.c.b16 %v9004, %v9003
        %v9249 = vpack.c.b16 %v9006, %v9005
        %v9250 = vpack.c.b16 %v9008, %v9007
        %v9251 = vpack.c.b16 %v9010, %v9009
        %v9252 = vpack.c.b16 %v9012, %v9011
        %v9253 = vpack.c.b16 %v9014, %v9013
        %v9254 = vpack.c.b16 %v9016, %v9015
        %v9255 = vpack.c.b16 %v9018, %v9017
        %v9256 = vpack.c.b16 %v9020, %v9019
        %v9257 = vpack.c.b16 %v9022, %v9021
        %v9258 = vpack.c.b16 %v9024, %v9023
        %v9259 = vpack.c.b16 %v9026, %v9025
        %v9260 = vpack.c.b16 %v9028, %v9027
        %v9261 = vpack.c.b16 %v9030, %v9029
        %v9262 = vpack.c.b16 %v9032, %v9031
        %v9263 = vpack.c.b16 %v9034, %v9033
        %v9264 = vpack.c.b16 %v9036, %v9035
        %v9265 = vpack.c.b16 %v9038, %v9037
        %v9266 = vpack.c.b16 %v9040, %v9039
        %v9267 = vpack.c.b16 %v9042, %v9041
        %v9268 = vpack.c.b16 %v9044, %v9043
        %v9269 = vpack.c.b16 %v9046, %v9045
        %v9270 = vpack.c.b16 %v9048, %v9047
        %v9271 = vpack.c.b16 %v9050, %v9049
        %v9272 = vpack.c.b16 %v9052, %v9051
        %v9273 = vpack.c.b16 %v9054, %v9053
        %v9274 = vpack.c.b16 %v9056, %v9055
        %v9275 = vpack.c.b16 %v9058, %v9057
        %v9276 = vpack.c.b16 %v9060, %v9059
        %v9277 = vpack.c.b16 %v9062, %v9061
        %v9278 = vpack.c.b16 %v9064, %v9063
        %v9279 = vpack.c.b16 %v9066, %v9065
        %v9280 = vpack.c.b16 %v9068, %v9067
        %v9281 = vpack.c.b16 %v9070, %v9069
        %v9282 = vpack.c.b16 %v9072, %v9071
        %v9283 = vpack.c.b16 %v9074, %v9073
        %v9284 = vpack.c.b16 %v9076, %v9075
        %v9285 = vpack.c.b16 %v9078, %v9077
        %v9286 = vpack.c.b16 %v9080, %v9079
        %v9287 = vpack.c.b16 %v9082, %v9081
        %v9288 = vpack.c.b16 %v9084, %v9083
        %v9289 = vpack.c.b16 %v9086, %v9085
        %v9290 = vpack.c.b16 %v9088, %v9087
        %v9291 = vpack.c.b16 %v9090, %v9089
        %v9292 = vpack.c.b16 %v9092, %v9091
        %v9293 = vpack.c.b16 %v9094, %v9093
        %v9294 = vpack.c.b16 %v9096, %v9095
        %v9295 = vpack.c.b16 %v9098, %v9097
        %v9296 = vpack.c.b16 %v9100, %v9099
        %v9297 = vpack.c.b16 %v9102, %v9101
        %v9298 = vpack.c.b16 %v9104, %v9103
        %v9299 = vpack.c.b16 %v9106, %v9105
        %v9300 = vpack.c.b16 %v9108, %v9107
        %v9301 = vpack.c.b16 %v9110, %v9109
        %v9302 = vpack.c.b16 %v9112, %v9111
        %v9303 = vpack.c.b16 %v9114, %v9113
        %v9304 = vpack.c.b16 %v9116, %v9115
        %v9305 = vpack.c.b16 %v9118, %v9117
        %v9306 = vpack.c.b16 %v9120, %v9119
        %v9307 = vpack.c.b16 %v9122, %v9121
        %v9308 = vpack.c.b16 %v9124, %v9123
        %v9309 = vpack.c.b16 %v9126, %v9125
        %v9310 = vpack.c.b16 %v9128, %v9127
        %v9311 = vpack.c.b16 %v9130, %v9129
        %v9312 = vpack.c.b16 %v9132, %v9131
        %v9313 = vpack.c.b16 %v9134, %v9133
        %v9314 = vpack.c.b16 %v9136, %v9135
        %v9315 = vpack.c.b16 %v9138, %v9137
        %v9316 = vpack.c.b16 %v9140, %v9139
        %v9317 = vpack.c.b16 %v9142, %v9141
        %v9318 = vpack.c.b16 %v9144, %v9143
        %v9319 = vpack.c.b16 %v9146, %v9145
        %v9320 = vpack.c.b16 %v9148, %v9147
        %v9321 = vpack.c.b16 %v9150, %v9149
        %v9322 = vpack.c.b16 %v9152, %v9151
        %v9323 = vpack.c.b16 %v9154, %v9153
        %v9324 = vpack.c.b16 %v9156, %v9155
        %v9325 = vpack.c.b16 %v9158, %v9157
        %v9326 = vpack.c.b16 %v9160, %v9159
        %v9327 = vpack.c.b16 %v9162, %v9161
        %v9328 = vpack.c.b16 %v9164, %v9163
        %v9329 = vpack.c.b16 %v9166, %v9165
        %v9330 = vpack.c.b16 %v9168, %v9167
        %v9331 = vpack.c.b16 %v9170, %v9169
        %v9332 = vpack.c.b16 %v9172, %v9171
        %v9333 = vpack.c.b16 %v9174, %v9173
        %v9334 = vpack.c.b16 %v9176, %v9175
        %v9335 = vpack.c.b16 %v9178, %v9177
        %v9336 = vpack.c.b16 %v9180, %v9179
        %v9337 = vpack.c.b16 %v9182, %v9181
        %v9338 = vpack.c.b16 %v9184, %v9183
        %v9339 = vpack.c.b16 %v9186, %v9185
        %v9340 = vpack.c.b16 %v9188, %v9187
        %v9341 = vpack.c.b16 %v9190, %v9189
        %v9342 = vpack.c.b16 %v9192, %v9191
        %v9343 = vpack.c.b16 %v9194, %v9193
        %v9344 = vpack.c.b16 %v9196, %v9195
        %v9345 = vpack.c.b16 %v9198, %v9197
        %v9346 = vpack.c.b16 %v9200, %v9199
        %v9347 = vpack.c.b16 %v9202, %v9201
        %v9348 = vpack.c.b16 %v9204, %v9203
        %v9349 = vpack.c.b16 %v9206, %v9205
        %v9350 = vpack.c.b16 %v9208, %v9207
        %v9351 = vpack.c.b16 %v9210, %v9209
        %v9352 = vpack.c.b16 %v9212, %v9211
        %v9353 = vpack.c.b16 %v9214, %v9213
        %v9354 = vpack.c.b16 %v9216, %v9215
        %v9355 = vpack.c.b16 %v9218, %v9217
        %v9356 = vpack.c.b16 %v9220, %v9219
        %v9357 = vpack.c.b16 %v9222, %v9221
        %v9358 = vpack.c.b16 %v9224, %v9223
        %v9359 = vpack.c.b16 %v9226, %v9225
        %v9360 = vpack.c.b16 %v9228, %v9227
        %v9361 = vpack.c.b16 %v9230, %v9229
        %v9362 = vpack.c.b16 %v9232, %v9231
        %v9363 = vpack.c.b16 %v9234, %v9233
        %v9364 = vpack.c.b16 %v9236, %v9235
        %9493 = vmatprep.subr.bf16.mxu0 0
        %9494 = vmatpush1.bf16.msra.mxu0 %v9237
        %9495 = vmatprep.subr.bf16.mxu0 0
        %9496 = vmatpush1.bf16.msra.mxu0 %v9238
        %9497 = vmatprep.subr.bf16.mxu0 0
        %9498 = vmatpush1.bf16.msra.mxu0 %v9239
        %9499 = vmatprep.subr.bf16.mxu0 0
        %9500 = vmatpush1.bf16.msra.mxu0 %v9240
        %9501 = vmatprep.subr.bf16.mxu0 0
        %9502 = vmatpush1.bf16.msra.mxu0 %v9241
        %9503 = vmatprep.subr.bf16.mxu0 0
        %9504 = vmatpush1.bf16.msra.mxu0 %v9242
        %9505 = vmatprep.subr.bf16.mxu0 0
        %9506 = vmatpush1.bf16.msra.mxu0 %v9243
        %9507 = vmatprep.subr.bf16.mxu0 0
        %9508 = vmatpush1.bf16.msra.mxu0 %v9244
        %9509 = vmatprep.subr.bf16.mxu0 0
        %9510 = vmatpush1.bf16.msra.mxu0 %v9245
        %9511 = vmatprep.subr.bf16.mxu0 0
        %9512 = vmatpush1.bf16.msra.mxu0 %v9246
        %9513 = vmatprep.subr.bf16.mxu0 0
        %9514 = vmatpush1.bf16.msra.mxu0 %v9247
        %9515 = vmatprep.subr.bf16.mxu0 0
        %9516 = vmatpush1.bf16.msra.mxu0 %v9248
        %9517 = vmatprep.subr.bf16.mxu0 0
        %9518 = vmatpush1.bf16.msra.mxu0 %v9249
        %9519 = vmatprep.subr.bf16.mxu0 0
        %9520 = vmatpush1.bf16.msra.mxu0 %v9250
        %9521 = vmatprep.subr.bf16.mxu0 0
        %9522 = vmatpush1.bf16.msra.mxu0 %v9251
        %9523 = vmatprep.subr.bf16.mxu0 0
        %9524 = vmatpush1.bf16.msra.mxu0 %v9252
        %9525 = vmatprep.mubr.bf16.mxu0 %v8453
        %9526 = vmatmul.mubr.bf16.gmra.mrb[0].mxu0 %v8452
        %v9527 = vpop.f32.mrb[0].mxu0
        %v9528 = vadd.f32 0.0, %v9527
        %v9529 = vpop.f32.mrb[0].mxu0
        %v9530 = vpop.f32.mrb[0].mxu0
        %v9531 = vpop.f32.mrb[0].mxu0
        %9532 = vdwg.mxu0
        %9533 = vmatprep.subr.bf16.mxu0 0
        %9534 = vmatpush1.bf16.msra.mxu0 %v9253
        %9535 = vmatprep.subr.bf16.mxu0 0
        %9536 = vmatpush1.bf16.msra.mxu0 %v9254
        %9537 = vmatprep.subr.bf16.mxu0 0
        %9538 = vmatpush1.bf16.msra.mxu0 %v9255
        %9539 = vmatprep.subr.bf16.mxu0 0
        %9540 = vmatpush1.bf16.msra.mxu0 %v9256
        %9541 = vmatprep.subr.bf16.mxu0 0
        %9542 = vmatpush1.bf16.msra.mxu0 %v9257
        %9543 = vmatprep.subr.bf16.mxu0 0
        %9544 = vmatpush1.bf16.msra.mxu0 %v9258
        %9545 = vmatprep.subr.bf16.mxu0 0
        %9546 = vmatpush1.bf16.msra.mxu0 %v9259
        %9547 = vmatprep.subr.bf16.mxu0 0
        %9548 = vmatpush1.bf16.msra.mxu0 %v9260
        %9549 = vmatprep.subr.bf16.mxu0 0
        %9550 = vmatpush1.bf16.msra.mxu0 %v9261
        %9551 = vmatprep.subr.bf16.mxu0 0
        %9552 = vmatpush1.bf16.msra.mxu0 %v9262
        %9553 = vmatprep.subr.bf16.mxu0 0
        %9554 = vmatpush1.bf16.msra.mxu0 %v9263
        %9555 = vmatprep.subr.bf16.mxu0 0
        %9556 = vmatpush1.bf16.msra.mxu0 %v9264
        %9557 = vmatprep.subr.bf16.mxu0 0
        %9558 = vmatpush1.bf16.msra.mxu0 %v9265
        %9559 = vmatprep.subr.bf16.mxu0 0
        %9560 = vmatpush1.bf16.msra.mxu0 %v9266
        %9561 = vmatprep.subr.bf16.mxu0 0
        %9562 = vmatpush1.bf16.msra.mxu0 %v9267
        %9563 = vmatprep.subr.bf16.mxu0 0
        %9564 = vmatpush1.bf16.msra.mxu0 %v9268
        %9565 = vmatprep.mubr.bf16.mxu0 %v8455
        %9566 = vmatmul.mubr.bf16.gmra.mrb[0].mxu0 %v8454
        %v9567 = vpop.f32.mrb[0].mxu0
        %v9568 = vadd.f32 %v9528, %v9567
        %v9569 = vpop.f32.mrb[0].mxu0
        %v9570 = vpop.f32.mrb[0].mxu0
        %v9571 = vpop.f32.mrb[0].mxu0
        %9572 = vdwg.mxu0
        %9573 = vmatprep.subr.bf16.mxu0 0
        %9574 = vmatpush1.bf16.msra.mxu0 %v9269
        %9575 = vmatprep.subr.bf16.mxu0 0
        %9576 = vmatpush1.bf16.msra.mxu0 %v9270
        %9577 = vmatprep.subr.bf16.mxu0 0
        %9578 = vmatpush1.bf16.msra.mxu0 %v9271
        %9579 = vmatprep.subr.bf16.mxu0 0
        %9580 = vmatpush1.bf16.msra.mxu0 %v9272
        %9581 = vmatprep.subr.bf16.mxu0 0
        %9582 = vmatpush1.bf16.msra.mxu0 %v9273
        %9583 = vmatprep.subr.bf16.mxu0 0
        %9584 = vmatpush1.bf16.msra.mxu0 %v9274
        %9585 = vmatprep.subr.bf16.mxu0 0
        %9586 = vmatpush1.bf16.msra.mxu0 %v9275
        %9587 = vmatprep.subr.bf16.mxu0 0
        %9588 = vmatpush1.bf16.msra.mxu0 %v9276
        %9589 = vmatprep.subr.bf16.mxu0 0
        %9590 = vmatpush1.bf16.msra.mxu0 %v9277
        %9591 = vmatprep.subr.bf16.mxu0 0
        %9592 = vmatpush1.bf16.msra.mxu0 %v9278
        %9593 = vmatprep.subr.bf16.mxu0 0
        %9594 = vmatpush1.bf16.msra.mxu0 %v9279
        %9595 = vmatprep.subr.bf16.mxu0 0
        %9596 = vmatpush1.bf16.msra.mxu0 %v9280
        %9597 = vmatprep.subr.bf16.mxu0 0
        %9598 = vmatpush1.bf16.msra.mxu0 %v9281
        %9599 = vmatprep.subr.bf16.mxu0 0
        %9600 = vmatpush1.bf16.msra.mxu0 %v9282
        %9601 = vmatprep.subr.bf16.mxu0 0
        %9602 = vmatpush1.bf16.msra.mxu0 %v9283
        %9603 = vmatprep.subr.bf16.mxu0 0
        %9604 = vmatpush1.bf16.msra.mxu0 %v9284
        %9605 = vmatprep.mubr.bf16.mxu0 %v8457
        %9606 = vmatmul.mubr.bf16.gmra.mrb[0].mxu0 %v8456
        %v9607 = vpop.f32.mrb[0].mxu0
        %v9608 = vadd.f32 %v9568, %v9607
        %v9609 = vpop.f32.mrb[0].mxu0
        %v9610 = vpop.f32.mrb[0].mxu0
        %v9611 = vpop.f32.mrb[0].mxu0
        %9612 = vdwg.mxu0
        %9613 = vmatprep.subr.bf16.mxu0 0
        %9614 = vmatpush1.bf16.msra.mxu0 %v9285
        %9615 = vmatprep.subr.bf16.mxu0 0
        %9616 = vmatpush1.bf16.msra.mxu0 %v9286
        %9617 = vmatprep.subr.bf16.mxu0 0
        %9618 = vmatpush1.bf16.msra.mxu0 %v9287
        %9619 = vmatprep.subr.bf16.mxu0 0
        %9620 = vmatpush1.bf16.msra.mxu0 %v9288
        %9621 = vmatprep.subr.bf16.mxu0 0
        %9622 = vmatpush1.bf16.msra.mxu0 %v9289
        %9623 = vmatprep.subr.bf16.mxu0 0
        %9624 = vmatpush1.bf16.msra.mxu0 %v9290
        %9625 = vmatprep.subr.bf16.mxu0 0
        %9626 = vmatpush1.bf16.msra.mxu0 %v9291
        %9627 = vmatprep.subr.bf16.mxu0 0
        %9628 = vmatpush1.bf16.msra.mxu0 %v9292
        %9629 = vmatprep.subr.bf16.mxu0 0
        %9630 = vmatpush1.bf16.msra.mxu0 %v9293
        %9631 = vmatprep.subr.bf16.mxu0 0
        %9632 = vmatpush1.bf16.msra.mxu0 %v9294
        %9633 = vmatprep.subr.bf16.mxu0 0
        %9634 = vmatpush1.bf16.msra.mxu0 %v9295
        %9635 = vmatprep.subr.bf16.mxu0 0
        %9636 = vmatpush1.bf16.msra.mxu0 %v9296
        %9637 = vmatprep.subr.bf16.mxu0 0
        %9638 = vmatpush1.bf16.msra.mxu0 %v9297
        %9639 = vmatprep.subr.bf16.mxu0 0
        %9640 = vmatpush1.bf16.msra.mxu0 %v9298
        %9641 = vmatprep.subr.bf16.mxu0 0
        %9642 = vmatpush1.bf16.msra.mxu0 %v9299
        %9643 = vmatprep.subr.bf16.mxu0 0
        %9644 = vmatpush1.bf16.msra.mxu0 %v9300
        %9645 = vmatprep.mubr.bf16.mxu0 %v8459
        %9646 = vmatmul.mubr.bf16.gmra.mrb[0].mxu0 %v8458
        %v9647 = vpop.f32.mrb[0].mxu0
        %v9648 = vadd.f32 %v9608, %v9647
        %v9649 = vpop.f32.mrb[0].mxu0
        %v9650 = vpop.f32.mrb[0].mxu0
        %v9651 = vpop.f32.mrb[0].mxu0
        %9652 = vdwg.mxu0
        %9653 = vmatprep.subr.bf16.mxu0 0
        %9654 = vmatpush1.bf16.msra.mxu0 %v9301
        %9655 = vmatprep.subr.bf16.mxu0 0
        %9656 = vmatpush1.bf16.msra.mxu0 %v9302
        %9657 = vmatprep.subr.bf16.mxu0 0
        %9658 = vmatpush1.bf16.msra.mxu0 %v9303
        %9659 = vmatprep.subr.bf16.mxu0 0
        %9660 = vmatpush1.bf16.msra.mxu0 %v9304
        %9661 = vmatprep.subr.bf16.mxu0 0
        %9662 = vmatpush1.bf16.msra.mxu0 %v9305
        %9663 = vmatprep.subr.bf16.mxu0 0
        %9664 = vmatpush1.bf16.msra.mxu0 %v9306
        %9665 = vmatprep.subr.bf16.mxu0 0
        %9666 = vmatpush1.bf16.msra.mxu0 %v9307
        %9667 = vmatprep.subr.bf16.mxu0 0
        %9668 = vmatpush1.bf16.msra.mxu0 %v9308
        %9669 = vmatprep.subr.bf16.mxu0 0
        %9670 = vmatpush1.bf16.msra.mxu0 %v9309
        %9671 = vmatprep.subr.bf16.mxu0 0
        %9672 = vmatpush1.bf16.msra.mxu0 %v9310
        %9673 = vmatprep.subr.bf16.mxu0 0
        %9674 = vmatpush1.bf16.msra.mxu0 %v9311
        %9675 = vmatprep.subr.bf16.mxu0 0
        %9676 = vmatpush1.bf16.msra.mxu0 %v9312
        %9677 = vmatprep.subr.bf16.mxu0 0
        %9678 = vmatpush1.bf16.msra.mxu0 %v9313
        %9679 = vmatprep.subr.bf16.mxu0 0
        %9680 = vmatpush1.bf16.msra.mxu0 %v9314
        %9681 = vmatprep.subr.bf16.mxu0 0
        %9682 = vmatpush1.bf16.msra.mxu0 %v9315
        %9683 = vmatprep.subr.bf16.mxu0 0
        %9684 = vmatpush1.bf16.msra.mxu0 %v9316
        %9685 = vmatprep.mubr.bf16.mxu0 %v8461
        %9686 = vmatmul.mubr.bf16.gmra.mrb[0].mxu0 %v8460
        %v9687 = vpop.f32.mrb[0].mxu0
        %v9688 = vadd.f32 %v9648, %v9687
        %v9689 = vpop.f32.mrb[0].mxu0
        %v9690 = vpop.f32.mrb[0].mxu0
        %v9691 = vpop.f32.mrb[0].mxu0
        %9692 = vdwg.mxu0
        %9693 = vmatprep.subr.bf16.mxu0 0
        %9694 = vmatpush1.bf16.msra.mxu0 %v9317
        %9695 = vmatprep.subr.bf16.mxu0 0
        %9696 = vmatpush1.bf16.msra.mxu0 %v9318
        %9697 = vmatprep.subr.bf16.mxu0 0
        %9698 = vmatpush1.bf16.msra.mxu0 %v9319
        %9699 = vmatprep.subr.bf16.mxu0 0
        %9700 = vmatpush1.bf16.msra.mxu0 %v9320
        %9701 = vmatprep.subr.bf16.mxu0 0
        %9702 = vmatpush1.bf16.msra.mxu0 %v9321
        %9703 = vmatprep.subr.bf16.mxu0 0
        %9704 = vmatpush1.bf16.msra.mxu0 %v9322
        %9705 = vmatprep.subr.bf16.mxu0 0
        %9706 = vmatpush1.bf16.msra.mxu0 %v9323
        %9707 = vmatprep.subr.bf16.mxu0 0
        %9708 = vmatpush1.bf16.msra.mxu0 %v9324
        %9709 = vmatprep.subr.bf16.mxu0 0
        %9710 = vmatpush1.bf16.msra.mxu0 %v9325
        %9711 = vmatprep.subr.bf16.mxu0 0
        %9712 = vmatpush1.bf16.msra.mxu0 %v9326
        %9713 = vmatprep.subr.bf16.mxu0 0
        %9714 = vmatpush1.bf16.msra.mxu0 %v9327
        %9715 = vmatprep.subr.bf16.mxu0 0
        %9716 = vmatpush1.bf16.msra.mxu0 %v9328
        %9717 = vmatprep.subr.bf16.mxu0 0
        %9718 = vmatpush1.bf16.msra.mxu0 %v9329
        %9719 = vmatprep.subr.bf16.mxu0 0
        %9720 = vmatpush1.bf16.msra.mxu0 %v9330
        %9721 = vmatprep.subr.bf16.mxu0 0
        %9722 = vmatpush1.bf16.msra.mxu0 %v9331
        %9723 = vmatprep.subr.bf16.mxu0 0
        %9724 = vmatpush1.bf16.msra.mxu0 %v9332
        %9725 = vmatprep.mubr.bf16.mxu0 %v8463
        %9726 = vmatmul.mubr.bf16.gmra.mrb[0].mxu0 %v8462
        %v9727 = vpop.f32.mrb[0].mxu0
        %v9728 = vadd.f32 %v9688, %v9727
        %v9729 = vpop.f32.mrb[0].mxu0
        %v9730 = vpop.f32.mrb[0].mxu0
        %v9731 = vpop.f32.mrb[0].mxu0
        %9732 = vdwg.mxu0
        %9733 = vmatprep.subr.bf16.mxu0 0
        %9734 = vmatpush1.bf16.msra.mxu0 %v9333
        %9735 = vmatprep.subr.bf16.mxu0 0
        %9736 = vmatpush1.bf16.msra.mxu0 %v9334
        %9737 = vmatprep.subr.bf16.mxu0 0
        %9738 = vmatpush1.bf16.msra.mxu0 %v9335
        %9739 = vmatprep.subr.bf16.mxu0 0
        %9740 = vmatpush1.bf16.msra.mxu0 %v9336
        %9741 = vmatprep.subr.bf16.mxu0 0
        %9742 = vmatpush1.bf16.msra.mxu0 %v9337
        %9743 = vmatprep.subr.bf16.mxu0 0
        %9744 = vmatpush1.bf16.msra.mxu0 %v9338
        %9745 = vmatprep.subr.bf16.mxu0 0
        %9746 = vmatpush1.bf16.msra.mxu0 %v9339
        %9747 = vmatprep.subr.bf16.mxu0 0
        %9748 = vmatpush1.bf16.msra.mxu0 %v9340
        %9749 = vmatprep.subr.bf16.mxu0 0
        %9750 = vmatpush1.bf16.msra.mxu0 %v9341
        %9751 = vmatprep.subr.bf16.mxu0 0
        %9752 = vmatpush1.bf16.msra.mxu0 %v9342
        %9753 = vmatprep.subr.bf16.mxu0 0
        %9754 = vmatpush1.bf16.msra.mxu0 %v9343
        %9755 = vmatprep.subr.bf16.mxu0 0
        %9756 = vmatpush1.bf16.msra.mxu0 %v9344
        %9757 = vmatprep.subr.bf16.mxu0 0
        %9758 = vmatpush1.bf16.msra.mxu0 %v9345
        %9759 = vmatprep.subr.bf16.mxu0 0
        %9760 = vmatpush1.bf16.msra.mxu0 %v9346
        %9761 = vmatprep.subr.bf16.mxu0 0
        %9762 = vmatpush1.bf16.msra.mxu0 %v9347
        %9763 = vmatprep.subr.bf16.mxu0 0
        %9764 = vmatpush1.bf16.msra.mxu0 %v9348
        %9765 = vmatprep.mubr.bf16.mxu0 %v8465
        %9766 = vmatmul.mubr.bf16.gmra.mrb[0].mxu0 %v8464
        %v9767 = vpop.f32.mrb[0].mxu0
        %v9768 = vadd.f32 %v9728, %v9767
        %v9769 = vpop.f32.mrb[0].mxu0
        %v9770 = vpop.f32.mrb[0].mxu0
        %v9771 = vpop.f32.mrb[0].mxu0
        %9772 = vdwg.mxu0
        %9773 = vmatprep.subr.bf16.mxu0 0
        %9774 = vmatpush1.bf16.msra.mxu0 %v9349
        %9775 = vmatprep.subr.bf16.mxu0 0
        %9776 = vmatpush1.bf16.msra.mxu0 %v9350
        %9777 = vmatprep.subr.bf16.mxu0 0
        %9778 = vmatpush1.bf16.msra.mxu0 %v9351
        %9779 = vmatprep.subr.bf16.mxu0 0
        %9780 = vmatpush1.bf16.msra.mxu0 %v9352
        %9781 = vmatprep.subr.bf16.mxu0 0
        %9782 = vmatpush1.bf16.msra.mxu0 %v9353
        %9783 = vmatprep.subr.bf16.mxu0 0
        %9784 = vmatpush1.bf16.msra.mxu0 %v9354
        %9785 = vmatprep.subr.bf16.mxu0 0
        %9786 = vmatpush1.bf16.msra.mxu0 %v9355
        %9787 = vmatprep.subr.bf16.mxu0 0
        %9788 = vmatpush1.bf16.msra.mxu0 %v9356
        %9789 = vmatprep.subr.bf16.mxu0 0
        %9790 = vmatpush1.bf16.msra.mxu0 %v9357
        %9791 = vmatprep.subr.bf16.mxu0 0
        %9792 = vmatpush1.bf16.msra.mxu0 %v9358
        %9793 = vmatprep.subr.bf16.mxu0 0
        %9794 = vmatpush1.bf16.msra.mxu0 %v9359
        %9795 = vmatprep.subr.bf16.mxu0 0
        %9796 = vmatpush1.bf16.msra.mxu0 %v9360
        %9797 = vmatprep.subr.bf16.mxu0 0
        %9798 = vmatpush1.bf16.msra.mxu0 %v9361
        %9799 = vmatprep.subr.bf16.mxu0 0
        %9800 = vmatpush1.bf16.msra.mxu0 %v9362
        %9801 = vmatprep.subr.bf16.mxu0 0
        %9802 = vmatpush1.bf16.msra.mxu0 %v9363
        %9803 = vmatprep.subr.bf16.mxu0 0
        %9804 = vmatpush1.bf16.msra.mxu0 %v9364
        %9805 = vmatprep.mubr.bf16.mxu0 %v8467
        %9806 = vmatmul.mubr.bf16.gmra.mrb[0].mxu0 %v8466
        %v9807 = vpop.f32.mrb[0].mxu0
        %v9808 = vadd.f32 %v9768, %v9807
        %v9809 = vpop.f32.mrb[0].mxu0
        %v9810 = vpop.f32.mrb[0].mxu0
        %v9811 = vpop.f32.mrb[0].mxu0
        %9812 = vdwg.mxu0
        %v9813 = vadd.f32 %v7216, %v9808
        %s9814 = scalar_lea.vmem [#allocation29], 1
        %v9815 = vld [vmem:[%s9814] sm:$0x1]
        %v9817 = vlaneseq
        %v9818 = vshrl.u32 %v9817, 7
        %v9819 = vsub.s32 0, %v9818
        %v9820 = vrot.slane %v9815, %v9819
        %v9822 = vadd.f32 %v9813, %v9820
        %v9823 = vld [vmem:[%s24] sm:$0x1]
        %v9824 = vld [vmem:[#allocation31] sm:$0x1]
        %9825 = vadd.xlane.f32.xlu0 %v9822
        %v9826 = vpop.xlane.xlu0 %9825
        %v9827 = vmul.f32 %v9826, %v1125
        %v9828 = vsub.f32 %v9822, %v9827
        %v9829 = vmul.f32 %v9828, %v9828
        %9830 = vadd.xlane.f32.xlu0 %v9829
        %v9831 = vpop.xlane.xlu0 %9830
        %v9832 = vmul.f32 %v9831, 0.007874016
        %v9833 = vrsqrt.pop %v9832
        %v9834 = vmul.f32 %v9832, %v9833
        %vm9835 = vcmp.eq.f32.partialorder %v9832, inf
        %v9836 = vsel %vm9835, %v9832, %v9834
        %vm9837 = vcmp.eq.f32.partialorder %v9832, 0.0
        %v9838 = vand.u32 %v9832, 2147483648
        %v9839 = vsel %vm9837, %v9838, %v9836
        %v9840 = vadd.f32 %v9839, 1e-06
        %v9841 = vrcp.pop %v9840
        %v9843 = vlaneseq
        %v9844 = vshrl.u32 %v9843, 7
        %v9845 = vsub.s32 0, %v9844
        %v9846 = vrot.slane %v9823, %v9845
        %v9848 = vmul.f32 %v9846, %v9828
        %v9849 = vmul.f32 %v9848, %v9841
        %v9851 = vlaneseq
        %v9852 = vshrl.u32 %v9851, 7
        %v9853 = vsub.s32 0, %v9852
        %v9854 = vrot.slane %v9824, %v9853
        %v9856 = vadd.f32 %v9849, %v9854
        %9857 = vst [vmem:[%s1095] sm:$0xff] %v9856
        %s9858 = sand.u32 %s624, 1
        %s9859 = scalar_lea.sflag [#allocation4], %s9858
        %s9860 = sand.u32 %s624, 1
        %s9861 = smul.addr %s9860, 8
        %s9862 = scalar_lea.vmem [#allocation32], %s9861
        // Predicated region
        $region201: #{decoder_forward.1} parent=123 // pred_check
          %p9863 = pneg %p634
        $region202: #{decoder_forward.1} parent=123 // pred_check_branch
          %9865 = sbr.rel (%p9863) target = $region204
        $region203: #{decoder_forward.1} parent=123 // pred_region
          %s9867 = ssub.s32 128, 128
          %9868 = vsyncadd %s9859, %s9867
          %s9869 = smul.addr %s50, 128
          %s9870 = scalar_lea.hbm %s26, %s9869
          %s9872 = sshll.u32 %s9862, 4
          %s9873 = int_to_ptr.vmem [resolvable:$true] %s9872
          %9875 = dma.vmem_to_hbm [thread:$0]  %s9873, 128, %s9870, %s9859
        $region204: #{decoder_forward.1} parent=123 // pred_fallthru
          _
      $region124: #{decoder_forward.1} parent=5 // pred_fallthru
        _
      %p9876 = scmp.le.s32.totalorder 2, %s45
      // Predicated region
      $region205: #{decoder_forward.1} parent=5 // pred_check
        %p9877 = pneg %p9876
      $region206: #{decoder_forward.1} parent=5 // pred_check_branch
        %9879 = sbr.rel (%p9877) target = $region208
      $region207: #{decoder_forward.1} parent=5 // pred_region
        %s9880 = ssub.s32 %s45, 2
        // Predicated region
        $region209: #{decoder_forward.1} parent=207 // pred_check
          %p9881 = pneg %p640
        $region210: #{decoder_forward.1} parent=207 // pred_check_branch
          %9883 = sbr.rel (%p9881) target = $region212
        $region211: #{decoder_forward.1} parent=207 // pred_region
          %s9884 = sand.u32 %s625, 1
          %s9885 = scalar_lea.sflag [#allocation4], %s9884
          %s9886 = sand.u32 %s625, 1
          %s9887 = smul.addr %s9886, 8
          %s9888 = scalar_lea.vmem [#allocation32], %s9887
          %9889 = dma.done %s9885, 128
        $region212: #{decoder_forward.1} parent=207 // pred_fallthru
          _
      $region208: #{decoder_forward.1} parent=5 // pred_fallthru
        _
    $region6: #{decoder_forward.1} parent=1 // loop_footer
      %s49 = sadd.s32 1, %s45
    $region7: #{decoder_forward.1} parent=1 // loop_footer_branch
      %44 = sbr.rel target = $region3
    $region8: #{decoder_forward.1} parent=1 // loop_exit
      _
    %9890 = vsyncpa [#allocation3], 1
    %s9891 = scalar_lea.sflag [#allocation3], 1
    %9892 = vsyncpa %s9891, 1
    %9893 = vsyncpa [#allocation6], 1
    %9894 = vsyncpa [#allocation9], 1
    %9895 = vsyncpa [#allocation12], 1
    %9896 = vsyncpa [#allocation15], 1
    %9897 = vsyncpa [#allocation18], 1
    %9898 = vsyncpa [#allocation21], 1
    %9899 = vsyncpa [#allocation24], 1
    %9900 = vsyncpa [#allocation27], 1
    %9901 = vsyncpa [#allocation30], 1
    %9902 = vsyncpa [#allocation4], 1
    %s9903 = scalar_lea.sflag [#allocation4], 1
    %9904 = vsyncpa %s9903, 1

</llo_original>
